<compile_context>
chip_gen: v5e
topology: v5e:2x2
jax: 0.10.0
libtpu: 0.0.40
codegen_flags: <defaults>
</compile_context>

<pallas_src>
import functools

import jax
import jax.numpy as jnp
from jax.experimental import pallas as pl
from jax.experimental.pallas import tpu as pltpu

P = 128            # per-branch lane-dense padded feature width
P3 = 3 * P         # lane-concatenated width of the 3 branches
N_PAD = 128        # node dimension padded to a full lane/contraction width
HIDDEN = 64
OUT_C = 64
BN_EPS = 1e-5


# ---------------------------------------------------------------- fused kernel
def _mogonet_kernel(ahat_ref, x_ref, w_ref, vec_ref, wa_ref, wb_ref, hv_ref,
                    h_ref, logit_ref, *, n_real):
    inv_n = 1.0 / n_real

    def gcn_relu(hb, layer):
        # One merged feature transform for all 3 branches (block-diagonal W),
        # then per-branch adjacency aggregation on lane slices.
        xw = jnp.dot(hb, w_ref[layer], preferred_element_type=jnp.float32)
        xw16 = xw.astype(jnp.bfloat16)
        aggs = [jnp.dot(ahat_ref[b], xw16[:, b * P:(b + 1) * P],
                        preferred_element_type=jnp.float32)
                for b in range(3)]
        agg = jnp.concatenate(aggs, axis=1)                  # (N_PAD, P3) f32
        bias = vec_ref[layer:layer + 1, :]                   # static ref slice
        return jnp.maximum(agg + bias, 0.0)

    h = x_ref[...]                                           # (N_PAD, P3) bf16
    for layer in range(3):                                   # GCN+ReLU+BN x3
        hf = gcn_relu(h, layer)
        gamma = vec_ref[4 + layer:5 + layer, :]
        beta = vec_ref[7 + layer:8 + layer, :]
        # Batch stats over the REAL nodes only (sublane-aligned slice).
        hr = hf[:n_real, :]
        s = jnp.sum(hr, axis=0, keepdims=True)
        ss = jnp.sum(hr * hr, axis=0, keepdims=True)
        mean = s * inv_n
        var = ss * inv_n - mean * mean
        scale = gamma * jax.lax.rsqrt(var + BN_EPS)
        shift = beta - mean * scale
        h = (hf * scale + shift).astype(jnp.bfloat16)

    h4 = gcn_relu(h, 3)                                      # (N_PAD, P3) f32
    h_ref[...] = h4

    # VCDN head: cat([h1,h2,h3]) @ Wa is a single lane-concat matmul here.
    hh = (jnp.dot(h4.astype(jnp.bfloat16), wa_ref[...],
                  preferred_element_type=jnp.float32)
          + hv_ref[0:1, :])                                  # + ba
    hh = jnp.where(hh > 0.0, hh, 0.25 * hh)                  # LeakyReLU(0.25)
    logit_ref[...] = (jnp.dot(hh.astype(jnp.bfloat16), wb_ref[...],
                              preferred_element_type=jnp.float32)
                      + hv_ref[1:2, :])                      # + bb


# ---------------------------------------------------------------- packing helpers
def pack_params(params):
    """Pack the 3 GNN branches block-diagonally + the VCDN head, lane-dense."""
    w_bd = jnp.zeros((4, P3, P3), jnp.float32)
    vec = jnp.zeros((16, P3), jnp.float32)     # rows 0-3 bias, 4-6 gamma, 7-9 beta
    for b, name in enumerate(("gnn1", "gnn2", "gnn3")):
        p = params[name]
        for l in range(4):
            w = p[f"w{l + 1}"]
            w_bd = w_bd.at[l, b * P:b * P + w.shape[0],
                           b * P:b * P + w.shape[1]].set(w)
            bias = p[f"b{l + 1}"][0]
            vec = vec.at[l, b * P:b * P + bias.shape[0]].set(bias)
        for l in range(3):
            g = p[f"g{l + 1}"][0]
            be = p[f"be{l + 1}"][0]
            vec = vec.at[4 + l, b * P:b * P + g.shape[0]].set(g)
            vec = vec.at[7 + l, b * P:b * P + be.shape[0]].set(be)

    v = params["vcdn"]
    wa = jnp.zeros((P3, P), jnp.float32)
    for b in range(3):
        wa = wa.at[b * P:b * P + OUT_C, :v["wa"].shape[1]].set(
            v["wa"][b * OUT_C:(b + 1) * OUT_C])
    wb = (jnp.zeros((P, P), jnp.float32)
          .at[:v["wb"].shape[0], :v["wb"].shape[1]].set(v["wb"]))
    hv = (jnp.zeros((2, P), jnp.float32)
          .at[0, :v["ba"].shape[1]].set(v["ba"][0])
          .at[1, :v["bb"].shape[1]].set(v["bb"][0]))
    return {
        "w": w_bd.astype(jnp.bfloat16),    # (4, 384, 384) block-diag, bf16
        "vec": vec,                        # (16, 384) f32
        "wa": wa.astype(jnp.bfloat16),     # (384, 128) bf16
        "wb": wb.astype(jnp.bfloat16),     # (128, 128) bf16
        "hv": hv,                          # (2, 128)  f32
    }


def pack_inputs(ahats, xs):
    """Zero-pad nodes to 128 and lane-concatenate the 3 feature views."""
    n = xs[0].shape[0]
    ahat = jnp.zeros((3, N_PAD, N_PAD), jnp.float32)
    x = jnp.zeros((N_PAD, P3), jnp.float32)
    for b in range(3):
        ahat = ahat.at[b, :n, :n].set(ahats[b])
        x = x.at[:n, b * P:b * P + xs[b].shape[1]].set(xs[b])
    return ahat.astype(jnp.bfloat16), x.astype(jnp.bfloat16)


# ---------------------------------------------------------------- forward
@functools.partial(jax.jit, static_argnames=("n_nodes", "num_classes"))
def mogonet_forward(packed, ahat_stack, x_stack, n_nodes, num_classes):
    flops = 2 * (4 * N_PAD * P3 * P3          # merged H @ W_bd, 4 layers
                 + 12 * N_PAD * N_PAD * P     # per-branch A_hat aggs
                 + N_PAD * P3 * P             # head Wa
                 + N_PAD * P * P)             # head Wb
    bytes_accessed = (ahat_stack.size * 2 + x_stack.size * 2
                      + packed["w"].size * 2 + packed["vec"].size * 4
                      + packed["wa"].size * 2 + packed["wb"].size * 2
                      + packed["hv"].size * 4
                      + N_PAD * P3 * 4 + N_PAD * P * 4)       # outputs

    kernel = functools.partial(_mogonet_kernel, n_real=n_nodes)
    h_all, logits_pad = pl.pallas_call(
        kernel,
        out_shape=(jax.ShapeDtypeStruct((N_PAD, P3), jnp.float32),
                   jax.ShapeDtypeStruct((N_PAD, P), jnp.float32)),
        in_specs=[pl.BlockSpec(memory_space=pltpu.MemorySpace.VMEM)] * 7,
        out_specs=(pl.BlockSpec(memory_space=pltpu.MemorySpace.VMEM),
                   pl.BlockSpec(memory_space=pltpu.MemorySpace.VMEM)),
        cost_estimate=pl.CostEstimate(flops=flops, transcendentals=3 * P3,
                                      bytes_accessed=bytes_accessed),
    )(ahat_stack, x_stack, packed["w"], packed["vec"],
      packed["wa"], packed["wb"], packed["hv"])

    logits = logits_pad[:n_nodes, :num_classes]
    h1 = h_all[:n_nodes, 0 * P:0 * P + OUT_C]
    h2 = h_all[:n_nodes, 1 * P:1 * P + OUT_C]
    h3 = h_all[:n_nodes, 2 * P:2 * P + OUT_C]
    return logits, h1, h2, h3


# ---------------------------------------------------------------- glue (plain JAX)
def build_ahat(edge_index, n):
    """GCN symmetric normalization with self-loops: D^-1/2 (A+I) D^-1/2.

    Static per graph -> built once outside the jitted forward."""
    src, dst = edge_index[0], edge_index[1]
    a = jnp.zeros((n, n), jnp.float32).at[dst, src].add(1.0)
    a = a + jnp.eye(n, dtype=jnp.float32)
    deg = a.sum(axis=1)
    dinv = jnp.where(deg > 0, 1.0 / jnp.sqrt(deg), 0.0)
    return a * dinv[:, None] * dinv[None, :]


def init_gnn_params(key, in_c, hidden=64, out_c=64):
    def glorot(k, shape):
        s = (6.0 / (shape[0] + shape[1])) ** 0.5
        return jax.random.uniform(k, shape, jnp.float32, -s, s)

    ks = jax.random.split(key, 4)
    dims = [(in_c, hidden), (hidden, hidden), (hidden, hidden), (hidden, out_c)]
    p = {}
    for i, (fi, fo) in enumerate(dims, 1):
        p[f"w{i}"] = glorot(ks[i - 1], (fi, fo))
        p[f"b{i}"] = jnp.zeros((1, fo), jnp.float32)
    for i in (1, 2, 3):
        p[f"g{i}"] = jnp.ones((1, hidden), jnp.float32)
        p[f"be{i}"] = jnp.zeros((1, hidden), jnp.float32)
    return p


def init_vcdn_params(key, out_c, num_classes, vdcn_hidden=64):
    def glorot(k, shape):
        s = (6.0 / (shape[0] + shape[1])) ** 0.5
        return jax.random.uniform(k, shape, jnp.float32, -s, s)

    k1, k2 = jax.random.split(key, 2)
    return {
        "wa": glorot(k1, (3 * out_c, vdcn_hidden)),
        "ba": jnp.zeros((1, vdcn_hidden), jnp.float32),
        "wb": glorot(k2, (vdcn_hidden, num_classes)),
        "bb": jnp.zeros((1, num_classes), jnp.float32),
    }


# ---------------------------------------------------------------- main
if __name__ == "__main__":
    key = jax.random.PRNGKey(0)
    N = 64                       # number of graph nodes
    num_features = (32, 48, 64)  # in_channels per omics view
    num_classes = 8
    hidden = out_c = 64
    E = 256                      # edges per graph

    (k_p1, k_p2, k_p3, k_pv,
     k_x1, k_x2, k_x3, k_e1, k_e2, k_e3) = jax.random.split(key, 10)

    params = {
        "gnn1": init_gnn_params(k_p1, num_features[0], hidden, out_c),
        "gnn2": init_gnn_params(k_p2, num_features[1], hidden, out_c),
        "gnn3": init_gnn_params(k_p3, num_features[2], hidden, out_c),
        "vcdn": init_vcdn_params(k_pv, out_c, num_classes),
    }

    x1 = jax.random.normal(k_x1, (N, num_features[0]), jnp.float32)
    x2 = jax.random.normal(k_x2, (N, num_features[1]), jnp.float32)
    x3 = jax.random.normal(k_x3, (N, num_features[2]), jnp.float32)
    ei1 = jax.random.randint(k_e1, (2, E), 0, N, jnp.int32)
    ei2 = jax.random.randint(k_e2, (2, E), 0, N, jnp.int32)
    ei3 = jax.random.randint(k_e3, (2, E), 0, N, jnp.int32)

    # A_hat is static per graph: build + pack once, outside the jitted forward.
    a1, a2, a3 = build_ahat(ei1, N), build_ahat(ei2, N), build_ahat(ei3, N)
    packed = pack_params(params)
    ahat_stack, x_stack = pack_inputs((a1, a2, a3), (x1, x2, x3))

    out, h1, h2, h3 = mogonet_forward(packed, ahat_stack, x_stack,
                                      n_nodes=N, num_classes=num_classes)
    jax.block_until_ready((out, h1, h2, h3))

    assert out.shape == (N, num_classes)
    assert h1.shape == (N, out_c) and h2.shape == (N, out_c) and h3.shape == (N, out_c)
    assert bool(jnp.all(jnp.isfinite(out)))
    assert bool(jnp.all(jnp.isfinite(h1))) and bool(jnp.all(jnp.isfinite(h3)))
    print("KERNEL_OK")
</pallas_src>

<mosaic_0001>
module attributes {stable_mosaic.version = 11 : i64} {
  func.func @_mogonet_kernel(%arg0: memref<3x128x128xbf16, #tpu.memory_space<vmem>>, %arg1: memref<128x384xbf16, #tpu.memory_space<vmem>>, %arg2: memref<4x384x384xbf16, #tpu.memory_space<vmem>>, %arg3: memref<16x384xf32, #tpu.memory_space<vmem>>, %arg4: memref<384x128xbf16, #tpu.memory_space<vmem>>, %arg5: memref<128x128xbf16, #tpu.memory_space<vmem>>, %arg6: memref<2x128xf32, #tpu.memory_space<vmem>>, %arg7: memref<128x384xf32, #tpu.memory_space<vmem>>, %arg8: memref<128x128xf32, #tpu.memory_space<vmem>>) attributes {dimension_semantics = [], scalar_prefetch = 0 : i64, scratch_operands = 0 : i64, tpu.core_type = #tpu.core_type<tc>} {
    %c0 = arith.constant 0 : index
    %c0_0 = arith.constant 0 : index
    %0 = vector.load %arg1[%c0, %c0_0] : memref<128x384xbf16, #tpu.memory_space<vmem>>, vector<128x384xbf16>
    %c0_1 = arith.constant 0 : index
    %c0_2 = arith.constant 0 : index
    %c0_3 = arith.constant 0 : index
    %1 = vector.load %arg2[%c0_1, %c0_2, %c0_3] : memref<4x384x384xbf16, #tpu.memory_space<vmem>>, vector<1x384x384xbf16>
    %2 = vector.shape_cast %1 : vector<1x384x384xbf16> to vector<384x384xbf16>
    %cst = arith.constant dense<0.000000e+00> : vector<128x384xf32>
    %3 = tpu.matmul %0, %2, %cst {dimension_numbers = #tpu.dot_dimension_numbers<[1], [0], [0], [1], [0, 0, 1, 1], [], []>} : vector<128x384xbf16>, vector<384x384xbf16>, vector<128x384xf32> -> vector<128x384xf32>
    %4 = arith.truncf %3 : vector<128x384xf32> to vector<128x384xbf16>
    %c0_4 = arith.constant 0 : index
    %c0_5 = arith.constant 0 : index
    %c0_6 = arith.constant 0 : index
    %5 = vector.load %arg0[%c0_4, %c0_5, %c0_6] : memref<3x128x128xbf16, #tpu.memory_space<vmem>>, vector<1x128x128xbf16>
    %6 = vector.shape_cast %5 : vector<1x128x128xbf16> to vector<128x128xbf16>
    %7 = vector.extract_strided_slice %4 {offsets = [0, 0], sizes = [128, 128], strides = [1, 1]} : vector<128x384xbf16> to vector<128x128xbf16>
    %cst_7 = arith.constant dense<0.000000e+00> : vector<128x128xf32>
    %8 = tpu.matmul %6, %7, %cst_7 {dimension_numbers = #tpu.dot_dimension_numbers<[1], [0], [0], [1], [0, 0, 1, 1], [], []>} : vector<128x128xbf16>, vector<128x128xbf16>, vector<128x128xf32> -> vector<128x128xf32>
    %c1 = arith.constant 1 : index
    %c0_8 = arith.constant 0 : index
    %c0_9 = arith.constant 0 : index
    %9 = vector.load %arg0[%c1, %c0_8, %c0_9] : memref<3x128x128xbf16, #tpu.memory_space<vmem>>, vector<1x128x128xbf16>
    %10 = vector.shape_cast %9 : vector<1x128x128xbf16> to vector<128x128xbf16>
    %11 = vector.extract_strided_slice %4 {offsets = [0, 128], sizes = [128, 128], strides = [1, 1]} : vector<128x384xbf16> to vector<128x128xbf16>
    %cst_10 = arith.constant dense<0.000000e+00> : vector<128x128xf32>
    %12 = tpu.matmul %10, %11, %cst_10 {dimension_numbers = #tpu.dot_dimension_numbers<[1], [0], [0], [1], [0, 0, 1, 1], [], []>} : vector<128x128xbf16>, vector<128x128xbf16>, vector<128x128xf32> -> vector<128x128xf32>
    %c2 = arith.constant 2 : index
    %c0_11 = arith.constant 0 : index
    %c0_12 = arith.constant 0 : index
    %13 = vector.load %arg0[%c2, %c0_11, %c0_12] : memref<3x128x128xbf16, #tpu.memory_space<vmem>>, vector<1x128x128xbf16>
    %14 = vector.shape_cast %13 : vector<1x128x128xbf16> to vector<128x128xbf16>
    %15 = vector.extract_strided_slice %4 {offsets = [0, 256], sizes = [128, 128], strides = [1, 1]} : vector<128x384xbf16> to vector<128x128xbf16>
    %cst_13 = arith.constant dense<0.000000e+00> : vector<128x128xf32>
    %16 = tpu.matmul %14, %15, %cst_13 {dimension_numbers = #tpu.dot_dimension_numbers<[1], [0], [0], [1], [0, 0, 1, 1], [], []>} : vector<128x128xbf16>, vector<128x128xbf16>, vector<128x128xf32> -> vector<128x128xf32>
    %17 = tpu.concatenate %8, %12, %16 in 1 : vector<128x128xf32>, vector<128x128xf32>, vector<128x128xf32> -> vector<128x384xf32>
    %c0_14 = arith.constant 0 : index
    %c0_15 = arith.constant 0 : index
    %18 = vector.load %arg3[%c0_14, %c0_15] : memref<16x384xf32, #tpu.memory_space<vmem>>, vector<1x384xf32>
    %19 = vector.broadcast %18 : vector<1x384xf32> to vector<128x384xf32>
    %20 = arith.addf %17, %19 : vector<128x384xf32>
    %cst_16 = arith.constant 0.000000e+00 : f32
    %21 = vector.broadcast %cst_16 : f32 to vector<128x384xf32>
    %22 = arith.maximumf %20, %21 : vector<128x384xf32>
    %c4 = arith.constant 4 : index
    %c0_17 = arith.constant 0 : index
    %23 = vector.load %arg3[%c4, %c0_17] : memref<16x384xf32, #tpu.memory_space<vmem>>, vector<1x384xf32>
    %c7 = arith.constant 7 : index
    %c0_18 = arith.constant 0 : index
    %24 = vector.load %arg3[%c7, %c0_18] : memref<16x384xf32, #tpu.memory_space<vmem>>, vector<1x384xf32>
    %25 = vector.extract_strided_slice %22 {offsets = [0, 0], sizes = [64, 384], strides = [1, 1]} : vector<128x384xf32> to vector<64x384xf32>
    %cst_19 = arith.constant dense<0.000000e+00> : vector<384xf32>
    %26 = vector.multi_reduction <add>, %25, %cst_19 [0] : vector<64x384xf32> to vector<384xf32>
    %27 = vector.shape_cast %26 : vector<384xf32> to vector<1x384xf32>
    %28 = arith.mulf %25, %25 : vector<64x384xf32>
    %cst_20 = arith.constant dense<0.000000e+00> : vector<384xf32>
    %29 = vector.multi_reduction <add>, %28, %cst_20 [0] : vector<64x384xf32> to vector<384xf32>
    %30 = vector.shape_cast %29 : vector<384xf32> to vector<1x384xf32>
    %cst_21 = arith.constant 1.562500e-02 : f32
    %31 = vector.broadcast %cst_21 : f32 to vector<1x384xf32>
    %32 = arith.mulf %27, %31 : vector<1x384xf32>
    %cst_22 = arith.constant 1.562500e-02 : f32
    %33 = vector.broadcast %cst_22 : f32 to vector<1x384xf32>
    %34 = arith.mulf %30, %33 : vector<1x384xf32>
    %35 = arith.mulf %32, %32 : vector<1x384xf32>
    %36 = arith.subf %34, %35 : vector<1x384xf32>
    %cst_23 = arith.constant 9.99999974E-6 : f32
    %37 = vector.broadcast %cst_23 : f32 to vector<1x384xf32>
    %38 = arith.addf %36, %37 : vector<1x384xf32>
    %39 = math.rsqrt %38 : vector<1x384xf32>
    %40 = arith.mulf %23, %39 : vector<1x384xf32>
    %41 = arith.mulf %32, %40 : vector<1x384xf32>
    %42 = arith.subf %24, %41 : vector<1x384xf32>
    %43 = vector.broadcast %40 : vector<1x384xf32> to vector<128x384xf32>
    %44 = arith.mulf %22, %43 : vector<128x384xf32>
    %45 = vector.broadcast %42 : vector<1x384xf32> to vector<128x384xf32>
    %46 = arith.addf %44, %45 : vector<128x384xf32>
    %47 = arith.truncf %46 : vector<128x384xf32> to vector<128x384xbf16>
    %c1_24 = arith.constant 1 : index
    %c0_25 = arith.constant 0 : index
    %c0_26 = arith.constant 0 : index
    %48 = vector.load %arg2[%c1_24, %c0_25, %c0_26] : memref<4x384x384xbf16, #tpu.memory_space<vmem>>, vector<1x384x384xbf16>
    %49 = vector.shape_cast %48 : vector<1x384x384xbf16> to vector<384x384xbf16>
    %cst_27 = arith.constant dense<0.000000e+00> : vector<128x384xf32>
    %50 = tpu.matmul %47, %49, %cst_27 {dimension_numbers = #tpu.dot_dimension_numbers<[1], [0], [0], [1], [0, 0, 1, 1], [], []>} : vector<128x384xbf16>, vector<384x384xbf16>, vector<128x384xf32> -> vector<128x384xf32>
    %51 = arith.truncf %50 : vector<128x384xf32> to vector<128x384xbf16>
    %c0_28 = arith.constant 0 : index
    %c0_29 = arith.constant 0 : index
    %c0_30 = arith.constant 0 : index
    %52 = vector.load %arg0[%c0_28, %c0_29, %c0_30] : memref<3x128x128xbf16, #tpu.memory_space<vmem>>, vector<1x128x128xbf16>
    %53 = vector.shape_cast %52 : vector<1x128x128xbf16> to vector<128x128xbf16>
    %54 = vector.extract_strided_slice %51 {offsets = [0, 0], sizes = [128, 128], strides = [1, 1]} : vector<128x384xbf16> to vector<128x128xbf16>
    %cst_31 = arith.constant dense<0.000000e+00> : vector<128x128xf32>
    %55 = tpu.matmul %53, %54, %cst_31 {dimension_numbers = #tpu.dot_dimension_numbers<[1], [0], [0], [1], [0, 0, 1, 1], [], []>} : vector<128x128xbf16>, vector<128x128xbf16>, vector<128x128xf32> -> vector<128x128xf32>
    %c1_32 = arith.constant 1 : index
    %c0_33 = arith.constant 0 : index
    %c0_34 = arith.constant 0 : index
    %56 = vector.load %arg0[%c1_32, %c0_33, %c0_34] : memref<3x128x128xbf16, #tpu.memory_space<vmem>>, vector<1x128x128xbf16>
    %57 = vector.shape_cast %56 : vector<1x128x128xbf16> to vector<128x128xbf16>
    %58 = vector.extract_strided_slice %51 {offsets = [0, 128], sizes = [128, 128], strides = [1, 1]} : vector<128x384xbf16> to vector<128x128xbf16>
    %cst_35 = arith.constant dense<0.000000e+00> : vector<128x128xf32>
    %59 = tpu.matmul %57, %58, %cst_35 {dimension_numbers = #tpu.dot_dimension_numbers<[1], [0], [0], [1], [0, 0, 1, 1], [], []>} : vector<128x128xbf16>, vector<128x128xbf16>, vector<128x128xf32> -> vector<128x128xf32>
    %c2_36 = arith.constant 2 : index
    %c0_37 = arith.constant 0 : index
    %c0_38 = arith.constant 0 : index
    %60 = vector.load %arg0[%c2_36, %c0_37, %c0_38] : memref<3x128x128xbf16, #tpu.memory_space<vmem>>, vector<1x128x128xbf16>
    %61 = vector.shape_cast %60 : vector<1x128x128xbf16> to vector<128x128xbf16>
    %62 = vector.extract_strided_slice %51 {offsets = [0, 256], sizes = [128, 128], strides = [1, 1]} : vector<128x384xbf16> to vector<128x128xbf16>
    %cst_39 = arith.constant dense<0.000000e+00> : vector<128x128xf32>
    %63 = tpu.matmul %61, %62, %cst_39 {dimension_numbers = #tpu.dot_dimension_numbers<[1], [0], [0], [1], [0, 0, 1, 1], [], []>} : vector<128x128xbf16>, vector<128x128xbf16>, vector<128x128xf32> -> vector<128x128xf32>
    %64 = tpu.concatenate %55, %59, %63 in 1 : vector<128x128xf32>, vector<128x128xf32>, vector<128x128xf32> -> vector<128x384xf32>
    %c1_40 = arith.constant 1 : index
    %c0_41 = arith.constant 0 : index
    %65 = vector.load %arg3[%c1_40, %c0_41] : memref<16x384xf32, #tpu.memory_space<vmem>>, vector<1x384xf32>
    %66 = vector.broadcast %65 : vector<1x384xf32> to vector<128x384xf32>
    %67 = arith.addf %64, %66 : vector<128x384xf32>
    %cst_42 = arith.constant 0.000000e+00 : f32
    %68 = vector.broadcast %cst_42 : f32 to vector<128x384xf32>
    %69 = arith.maximumf %67, %68 : vector<128x384xf32>
    %c5 = arith.constant 5 : index
    %c0_43 = arith.constant 0 : index
    %70 = vector.load %arg3[%c5, %c0_43] : memref<16x384xf32, #tpu.memory_space<vmem>>, vector<1x384xf32>
    %c8 = arith.constant 8 : index
    %c0_44 = arith.constant 0 : index
    %71 = vector.load %arg3[%c8, %c0_44] : memref<16x384xf32, #tpu.memory_space<vmem>>, vector<1x384xf32>
    %72 = vector.extract_strided_slice %69 {offsets = [0, 0], sizes = [64, 384], strides = [1, 1]} : vector<128x384xf32> to vector<64x384xf32>
    %cst_45 = arith.constant dense<0.000000e+00> : vector<384xf32>
    %73 = vector.multi_reduction <add>, %72, %cst_45 [0] : vector<64x384xf32> to vector<384xf32>
    %74 = vector.shape_cast %73 : vector<384xf32> to vector<1x384xf32>
    %75 = arith.mulf %72, %72 : vector<64x384xf32>
    %cst_46 = arith.constant dense<0.000000e+00> : vector<384xf32>
    %76 = vector.multi_reduction <add>, %75, %cst_46 [0] : vector<64x384xf32> to vector<384xf32>
    %77 = vector.shape_cast %76 : vector<384xf32> to vector<1x384xf32>
    %cst_47 = arith.constant 1.562500e-02 : f32
    %78 = vector.broadcast %cst_47 : f32 to vector<1x384xf32>
    %79 = arith.mulf %74, %78 : vector<1x384xf32>
    %cst_48 = arith.constant 1.562500e-02 : f32
    %80 = vector.broadcast %cst_48 : f32 to vector<1x384xf32>
    %81 = arith.mulf %77, %80 : vector<1x384xf32>
    %82 = arith.mulf %79, %79 : vector<1x384xf32>
    %83 = arith.subf %81, %82 : vector<1x384xf32>
    %cst_49 = arith.constant 9.99999974E-6 : f32
    %84 = vector.broadcast %cst_49 : f32 to vector<1x384xf32>
    %85 = arith.addf %83, %84 : vector<1x384xf32>
    %86 = math.rsqrt %85 : vector<1x384xf32>
    %87 = arith.mulf %70, %86 : vector<1x384xf32>
    %88 = arith.mulf %79, %87 : vector<1x384xf32>
    %89 = arith.subf %71, %88 : vector<1x384xf32>
    %90 = vector.broadcast %87 : vector<1x384xf32> to vector<128x384xf32>
    %91 = arith.mulf %69, %90 : vector<128x384xf32>
    %92 = vector.broadcast %89 : vector<1x384xf32> to vector<128x384xf32>
    %93 = arith.addf %91, %92 : vector<128x384xf32>
    %94 = arith.truncf %93 : vector<128x384xf32> to vector<128x384xbf16>
    %c2_50 = arith.constant 2 : index
    %c0_51 = arith.constant 0 : index
    %c0_52 = arith.constant 0 : index
    %95 = vector.load %arg2[%c2_50, %c0_51, %c0_52] : memref<4x384x384xbf16, #tpu.memory_space<vmem>>, vector<1x384x384xbf16>
    %96 = vector.shape_cast %95 : vector<1x384x384xbf16> to vector<384x384xbf16>
    %cst_53 = arith.constant dense<0.000000e+00> : vector<128x384xf32>
    %97 = tpu.matmul %94, %96, %cst_53 {dimension_numbers = #tpu.dot_dimension_numbers<[1], [0], [0], [1], [0, 0, 1, 1], [], []>} : vector<128x384xbf16>, vector<384x384xbf16>, vector<128x384xf32> -> vector<128x384xf32>
    %98 = arith.truncf %97 : vector<128x384xf32> to vector<128x384xbf16>
    %c0_54 = arith.constant 0 : index
    %c0_55 = arith.constant 0 : index
    %c0_56 = arith.constant 0 : index
    %99 = vector.load %arg0[%c0_54, %c0_55, %c0_56] : memref<3x128x128xbf16, #tpu.memory_space<vmem>>, vector<1x128x128xbf16>
    %100 = vector.shape_cast %99 : vector<1x128x128xbf16> to vector<128x128xbf16>
    %101 = vector.extract_strided_slice %98 {offsets = [0, 0], sizes = [128, 128], strides = [1, 1]} : vector<128x384xbf16> to vector<128x128xbf16>
    %cst_57 = arith.constant dense<0.000000e+00> : vector<128x128xf32>
    %102 = tpu.matmul %100, %101, %cst_57 {dimension_numbers = #tpu.dot_dimension_numbers<[1], [0], [0], [1], [0, 0, 1, 1], [], []>} : vector<128x128xbf16>, vector<128x128xbf16>, vector<128x128xf32> -> vector<128x128xf32>
    %c1_58 = arith.constant 1 : index
    %c0_59 = arith.constant 0 : index
    %c0_60 = arith.constant 0 : index
    %103 = vector.load %arg0[%c1_58, %c0_59, %c0_60] : memref<3x128x128xbf16, #tpu.memory_space<vmem>>, vector<1x128x128xbf16>
    %104 = vector.shape_cast %103 : vector<1x128x128xbf16> to vector<128x128xbf16>
    %105 = vector.extract_strided_slice %98 {offsets = [0, 128], sizes = [128, 128], strides = [1, 1]} : vector<128x384xbf16> to vector<128x128xbf16>
    %cst_61 = arith.constant dense<0.000000e+00> : vector<128x128xf32>
    %106 = tpu.matmul %104, %105, %cst_61 {dimension_numbers = #tpu.dot_dimension_numbers<[1], [0], [0], [1], [0, 0, 1, 1], [], []>} : vector<128x128xbf16>, vector<128x128xbf16>, vector<128x128xf32> -> vector<128x128xf32>
    %c2_62 = arith.constant 2 : index
    %c0_63 = arith.constant 0 : index
    %c0_64 = arith.constant 0 : index
    %107 = vector.load %arg0[%c2_62, %c0_63, %c0_64] : memref<3x128x128xbf16, #tpu.memory_space<vmem>>, vector<1x128x128xbf16>
    %108 = vector.shape_cast %107 : vector<1x128x128xbf16> to vector<128x128xbf16>
    %109 = vector.extract_strided_slice %98 {offsets = [0, 256], sizes = [128, 128], strides = [1, 1]} : vector<128x384xbf16> to vector<128x128xbf16>
    %cst_65 = arith.constant dense<0.000000e+00> : vector<128x128xf32>
    %110 = tpu.matmul %108, %109, %cst_65 {dimension_numbers = #tpu.dot_dimension_numbers<[1], [0], [0], [1], [0, 0, 1, 1], [], []>} : vector<128x128xbf16>, vector<128x128xbf16>, vector<128x128xf32> -> vector<128x128xf32>
    %111 = tpu.concatenate %102, %106, %110 in 1 : vector<128x128xf32>, vector<128x128xf32>, vector<128x128xf32> -> vector<128x384xf32>
    %c2_66 = arith.constant 2 : index
    %c0_67 = arith.constant 0 : index
    %112 = vector.load %arg3[%c2_66, %c0_67] : memref<16x384xf32, #tpu.memory_space<vmem>>, vector<1x384xf32>
    %113 = vector.broadcast %112 : vector<1x384xf32> to vector<128x384xf32>
    %114 = arith.addf %111, %113 : vector<128x384xf32>
    %cst_68 = arith.constant 0.000000e+00 : f32
    %115 = vector.broadcast %cst_68 : f32 to vector<128x384xf32>
    %116 = arith.maximumf %114, %115 : vector<128x384xf32>
    %c6 = arith.constant 6 : index
    %c0_69 = arith.constant 0 : index
    %117 = vector.load %arg3[%c6, %c0_69] : memref<16x384xf32, #tpu.memory_space<vmem>>, vector<1x384xf32>
    %c9 = arith.constant 9 : index
    %c0_70 = arith.constant 0 : index
    %118 = vector.load %arg3[%c9, %c0_70] : memref<16x384xf32, #tpu.memory_space<vmem>>, vector<1x384xf32>
    %119 = vector.extract_strided_slice %116 {offsets = [0, 0], sizes = [64, 384], strides = [1, 1]} : vector<128x384xf32> to vector<64x384xf32>
    %cst_71 = arith.constant dense<0.000000e+00> : vector<384xf32>
    %120 = vector.multi_reduction <add>, %119, %cst_71 [0] : vector<64x384xf32> to vector<384xf32>
    %121 = vector.shape_cast %120 : vector<384xf32> to vector<1x384xf32>
    %122 = arith.mulf %119, %119 : vector<64x384xf32>
    %cst_72 = arith.constant dense<0.000000e+00> : vector<384xf32>
    %123 = vector.multi_reduction <add>, %122, %cst_72 [0] : vector<64x384xf32> to vector<384xf32>
    %124 = vector.shape_cast %123 : vector<384xf32> to vector<1x384xf32>
    %cst_73 = arith.constant 1.562500e-02 : f32
    %125 = vector.broadcast %cst_73 : f32 to vector<1x384xf32>
    %126 = arith.mulf %121, %125 : vector<1x384xf32>
    %cst_74 = arith.constant 1.562500e-02 : f32
    %127 = vector.broadcast %cst_74 : f32 to vector<1x384xf32>
    %128 = arith.mulf %124, %127 : vector<1x384xf32>
    %129 = arith.mulf %126, %126 : vector<1x384xf32>
    %130 = arith.subf %128, %129 : vector<1x384xf32>
    %cst_75 = arith.constant 9.99999974E-6 : f32
    %131 = vector.broadcast %cst_75 : f32 to vector<1x384xf32>
    %132 = arith.addf %130, %131 : vector<1x384xf32>
    %133 = math.rsqrt %132 : vector<1x384xf32>
    %134 = arith.mulf %117, %133 : vector<1x384xf32>
    %135 = arith.mulf %126, %134 : vector<1x384xf32>
    %136 = arith.subf %118, %135 : vector<1x384xf32>
    %137 = vector.broadcast %134 : vector<1x384xf32> to vector<128x384xf32>
    %138 = arith.mulf %116, %137 : vector<128x384xf32>
    %139 = vector.broadcast %136 : vector<1x384xf32> to vector<128x384xf32>
    %140 = arith.addf %138, %139 : vector<128x384xf32>
    %141 = arith.truncf %140 : vector<128x384xf32> to vector<128x384xbf16>
    %c3 = arith.constant 3 : index
    %c0_76 = arith.constant 0 : index
    %c0_77 = arith.constant 0 : index
    %142 = vector.load %arg2[%c3, %c0_76, %c0_77] : memref<4x384x384xbf16, #tpu.memory_space<vmem>>, vector<1x384x384xbf16>
    %143 = vector.shape_cast %142 : vector<1x384x384xbf16> to vector<384x384xbf16>
    %cst_78 = arith.constant dense<0.000000e+00> : vector<128x384xf32>
    %144 = tpu.matmul %141, %143, %cst_78 {dimension_numbers = #tpu.dot_dimension_numbers<[1], [0], [0], [1], [0, 0, 1, 1], [], []>} : vector<128x384xbf16>, vector<384x384xbf16>, vector<128x384xf32> -> vector<128x384xf32>
    %145 = arith.truncf %144 : vector<128x384xf32> to vector<128x384xbf16>
    %c0_79 = arith.constant 0 : index
    %c0_80 = arith.constant 0 : index
    %c0_81 = arith.constant 0 : index
    %146 = vector.load %arg0[%c0_79, %c0_80, %c0_81] : memref<3x128x128xbf16, #tpu.memory_space<vmem>>, vector<1x128x128xbf16>
    %147 = vector.shape_cast %146 : vector<1x128x128xbf16> to vector<128x128xbf16>
    %148 = vector.extract_strided_slice %145 {offsets = [0, 0], sizes = [128, 128], strides = [1, 1]} : vector<128x384xbf16> to vector<128x128xbf16>
    %cst_82 = arith.constant dense<0.000000e+00> : vector<128x128xf32>
    %149 = tpu.matmul %147, %148, %cst_82 {dimension_numbers = #tpu.dot_dimension_numbers<[1], [0], [0], [1], [0, 0, 1, 1], [], []>} : vector<128x128xbf16>, vector<128x128xbf16>, vector<128x128xf32> -> vector<128x128xf32>
    %c1_83 = arith.constant 1 : index
    %c0_84 = arith.constant 0 : index
    %c0_85 = arith.constant 0 : index
    %150 = vector.load %arg0[%c1_83, %c0_84, %c0_85] : memref<3x128x128xbf16, #tpu.memory_space<vmem>>, vector<1x128x128xbf16>
    %151 = vector.shape_cast %150 : vector<1x128x128xbf16> to vector<128x128xbf16>
    %152 = vector.extract_strided_slice %145 {offsets = [0, 128], sizes = [128, 128], strides = [1, 1]} : vector<128x384xbf16> to vector<128x128xbf16>
    %cst_86 = arith.constant dense<0.000000e+00> : vector<128x128xf32>
    %153 = tpu.matmul %151, %152, %cst_86 {dimension_numbers = #tpu.dot_dimension_numbers<[1], [0], [0], [1], [0, 0, 1, 1], [], []>} : vector<128x128xbf16>, vector<128x128xbf16>, vector<128x128xf32> -> vector<128x128xf32>
    %c2_87 = arith.constant 2 : index
    %c0_88 = arith.constant 0 : index
    %c0_89 = arith.constant 0 : index
    %154 = vector.load %arg0[%c2_87, %c0_88, %c0_89] : memref<3x128x128xbf16, #tpu.memory_space<vmem>>, vector<1x128x128xbf16>
    %155 = vector.shape_cast %154 : vector<1x128x128xbf16> to vector<128x128xbf16>
    %156 = vector.extract_strided_slice %145 {offsets = [0, 256], sizes = [128, 128], strides = [1, 1]} : vector<128x384xbf16> to vector<128x128xbf16>
    %cst_90 = arith.constant dense<0.000000e+00> : vector<128x128xf32>
    %157 = tpu.matmul %155, %156, %cst_90 {dimension_numbers = #tpu.dot_dimension_numbers<[1], [0], [0], [1], [0, 0, 1, 1], [], []>} : vector<128x128xbf16>, vector<128x128xbf16>, vector<128x128xf32> -> vector<128x128xf32>
    %158 = tpu.concatenate %149, %153, %157 in 1 : vector<128x128xf32>, vector<128x128xf32>, vector<128x128xf32> -> vector<128x384xf32>
    %c3_91 = arith.constant 3 : index
    %c0_92 = arith.constant 0 : index
    %159 = vector.load %arg3[%c3_91, %c0_92] : memref<16x384xf32, #tpu.memory_space<vmem>>, vector<1x384xf32>
    %160 = vector.broadcast %159 : vector<1x384xf32> to vector<128x384xf32>
    %161 = arith.addf %158, %160 : vector<128x384xf32>
    %cst_93 = arith.constant 0.000000e+00 : f32
    %162 = vector.broadcast %cst_93 : f32 to vector<128x384xf32>
    %163 = arith.maximumf %161, %162 : vector<128x384xf32>
    %c0_94 = arith.constant 0 : index
    %c0_95 = arith.constant 0 : index
    %164 = vector.load %arg7[%c0_94, %c0_95] : memref<128x384xf32, #tpu.memory_space<vmem>>, vector<128x384xf32>
    tpu.vector_store %arg7[%c0_94, %c0_95], %163 {strides = array<i32>} : memref<128x384xf32, #tpu.memory_space<vmem>>, vector<128x384xf32>,
    %165 = arith.truncf %163 : vector<128x384xf32> to vector<128x384xbf16>
    %c0_96 = arith.constant 0 : index
    %c0_97 = arith.constant 0 : index
    %166 = vector.load %arg4[%c0_96, %c0_97] : memref<384x128xbf16, #tpu.memory_space<vmem>>, vector<384x128xbf16>
    %cst_98 = arith.constant dense<0.000000e+00> : vector<128x128xf32>
    %167 = tpu.matmul %165, %166, %cst_98 {dimension_numbers = #tpu.dot_dimension_numbers<[1], [0], [0], [1], [0, 0, 1, 1], [], []>} : vector<128x384xbf16>, vector<384x128xbf16>, vector<128x128xf32> -> vector<128x128xf32>
    %c0_99 = arith.constant 0 : index
    %c0_100 = arith.constant 0 : index
    %168 = vector.load %arg6[%c0_99, %c0_100] : memref<2x128xf32, #tpu.memory_space<vmem>>, vector<1x128xf32>
    %169 = vector.broadcast %168 : vector<1x128xf32> to vector<128x128xf32>
    %170 = arith.addf %167, %169 : vector<128x128xf32>
    %cst_101 = arith.constant 0.000000e+00 : f32
    %171 = vector.broadcast %cst_101 : f32 to vector<128x128xf32>
    %172 = arith.cmpf ogt, %170, %171 : vector<128x128xf32>
    %cst_102 = arith.constant 2.500000e-01 : f32
    %173 = vector.broadcast %cst_102 : f32 to vector<128x128xf32>
    %174 = arith.mulf %173, %170 : vector<128x128xf32>
    %175 = arith.select %172, %170, %174 : vector<128x128xi1>, vector<128x128xf32>
    %176 = arith.truncf %175 : vector<128x128xf32> to vector<128x128xbf16>
    %c0_103 = arith.constant 0 : index
    %c0_104 = arith.constant 0 : index
    %177 = vector.load %arg5[%c0_103, %c0_104] : memref<128x128xbf16, #tpu.memory_space<vmem>>, vector<128x128xbf16>
    %cst_105 = arith.constant dense<0.000000e+00> : vector<128x128xf32>
    %178 = tpu.matmul %176, %177, %cst_105 {dimension_numbers = #tpu.dot_dimension_numbers<[1], [0], [0], [1], [0, 0, 1, 1], [], []>} : vector<128x128xbf16>, vector<128x128xbf16>, vector<128x128xf32> -> vector<128x128xf32>
    %c1_106 = arith.constant 1 : index
    %c0_107 = arith.constant 0 : index
    %179 = vector.load %arg6[%c1_106, %c0_107] : memref<2x128xf32, #tpu.memory_space<vmem>>, vector<1x128xf32>
    %180 = vector.broadcast %179 : vector<1x128xf32> to vector<128x128xf32>
    %181 = arith.addf %178, %180 : vector<128x128xf32>
    %c0_108 = arith.constant 0 : index
    %c0_109 = arith.constant 0 : index
    %182 = vector.load %arg8[%c0_108, %c0_109] : memref<128x128xf32, #tpu.memory_space<vmem>>, vector<128x128xf32>
    tpu.vector_store %arg8[%c0_108, %c0_109], %181 {strides = array<i32>} : memref<128x128xf32, #tpu.memory_space<vmem>>, vector<128x128xf32>,
    return
  }
}

</mosaic_0001>

<llo_original>
// kernel: mogonet_forward.1
$region0: #{mogonet_forward.1}
  #allocation0 [shape = 'u32[]', space=smem, size = 0x4, offset = 0x4, fixed_abs, tag = 'smem constant byte address 0x4 - core index']
  #allocation1 [shape = 'u32[72,128]{1,0:T(1,128)}', space=vmem, size = 0x9000, scoped, tag = 'internal scratch']
  %s0 = inlined_call_operand.hbm [shape: bf16[3,128,128], index: 0, kind: input, shape index: {}]
  %s1 = inlined_call_operand.hbm [shape: bf16[128,384], index: 1, kind: input, shape index: {}]
  %s2 = inlined_call_operand.hbm [shape: bf16[4,384,384], index: 2, kind: input, shape index: {}]
  %s3 = inlined_call_operand.hbm [shape: f32[16,384], index: 3, kind: input, shape index: {}]
  %s4 = inlined_call_operand.hbm [shape: bf16[384,128], index: 4, kind: input, shape index: {}]
  %s5 = inlined_call_operand.hbm [shape: bf16[128,128], index: 5, kind: input, shape index: {}]
  %s6 = inlined_call_operand.hbm [shape: f32[2,128], index: 6, kind: input, shape index: {}]
  %s7 = inlined_call_operand.vmem [shape: f32[128,384], index: 7, kind: output, shape index: {0}]
  %s8 = inlined_call_operand.vmem [shape: f32[128,128], index: 8, kind: output, shape index: {1}]
  %9 = xla_tuple %s7, %s8
  %s10 = sld [smem:[#allocation0]]
  $region74: #{mogonet_forward.1} parent=0
    _
  %s12 = ssub.s32 1, %s10
  %s13 = scalar_select 0, %s12, %s10
  $region1: #{mogonet_forward.1} parent=0
    #allocation2 [shape = 'u8[98304]{0}', space=vmem, size = 0x18000, scoped, tag = 'input window, operand 0, single buffered']
    #allocation3 [shape = 's32[1]{0}', space=sflag, size = 0x4, scoped, tag = 'scoped memory for mogonet_forward.1']
    #allocation4 [shape = 'u8[98304]{0}', space=vmem, size = 0x18000, scoped, tag = 'input window, operand 1, single buffered']
    #allocation5 [shape = 's32[1]{0}', space=sflag, size = 0x4, scoped, tag = 'scoped memory for mogonet_forward.1']
    #allocation6 [shape = 'u8[1179648]{0}', space=vmem, size = 0x120000, scoped, tag = 'input window, operand 2, single buffered']
    #allocation7 [shape = 'u8[24576]{0}', space=vmem, size = 0x6000, scoped, tag = 'input window, operand 3, single buffered']
    #allocation8 [shape = 's32[1]{0}', space=sflag, size = 0x4, scoped, tag = 'scoped memory for mogonet_forward.1']
    #allocation9 [shape = 'u8[98304]{0}', space=vmem, size = 0x18000, scoped, tag = 'input window, operand 4, single buffered']
    #allocation10 [shape = 'u8[32768]{0}', space=vmem, size = 0x8000, scoped, tag = 'input window, operand 5, single buffered']
    #allocation11 [shape = 's32[1]{0}', space=sflag, size = 0x4, scoped, tag = 'scoped memory for mogonet_forward.1']
    #allocation12 [shape = 'u8[1024]{0}', space=vmem, size = 0x400, scoped, tag = 'input window, operand 6, single buffered']
    %14 = vsyncpa [#allocation3], 0
    %15 = vsyncpa [#allocation5], 0
    %16 = vsyncpa [#allocation8], 0
    %17 = vsyncpa [#allocation11], 0
    // Predicated region
    $region2: #{mogonet_forward.1} parent=1 // pred_check
      _
    $region3: #{mogonet_forward.1} parent=1 // pred_check_branch
      %19 = sbr.rel (0) target = $region5
    $region4: #{mogonet_forward.1} parent=1 // pred_region
      %21 = vsyncadd [#allocation3], 0
      %s22 = sshll.u32 %s0, 4
      %s23 = int_to_ptr.hbm [resolvable:$true] %s22
      %s24 = sshll.u32 [#allocation2], 4
      %s25 = int_to_ptr.vmem [resolvable:$true] %s24
      %30 = dma.hbm_to_vmem [thread:$0]  %s23, 3072, %s25, [#allocation3], 64, 64, 4
    $region5: #{mogonet_forward.1} parent=1 // pred_fallthru
      _
    // Predicated region
    $region6: #{mogonet_forward.1} parent=1 // pred_check
      _
    $region7: #{mogonet_forward.1} parent=1 // pred_check_branch
      %32 = sbr.rel (0) target = $region9
    $region8: #{mogonet_forward.1} parent=1 // pred_region
      %34 = vsyncadd [#allocation5], 0
      %s35 = sshll.u32 %s1, 4
      %s36 = int_to_ptr.hbm [resolvable:$true] %s35
      %s37 = sshll.u32 [#allocation4], 4
      %s38 = int_to_ptr.vmem [resolvable:$true] %s37
      %43 = dma.hbm_to_vmem [thread:$0]  %s36, 3072, %s38, [#allocation5], 192, 192, 12
    $region9: #{mogonet_forward.1} parent=1 // pred_fallthru
      _
    // Predicated region
    $region10: #{mogonet_forward.1} parent=1 // pred_check
      _
    $region11: #{mogonet_forward.1} parent=1 // pred_check_branch
      %45 = sbr.rel (0) target = $region13
    $region12: #{mogonet_forward.1} parent=1 // pred_region
      %47 = vsyncadd [#allocation5], 0
      %s48 = sshll.u32 %s2, 4
      %s49 = int_to_ptr.hbm [resolvable:$true] %s48
      %s50 = sshll.u32 [#allocation6], 4
      %s51 = int_to_ptr.vmem [resolvable:$true] %s50
      %56 = dma.hbm_to_vmem [thread:$0]  %s49, 36864, %s51, [#allocation5], 192, 192, 12
    $region13: #{mogonet_forward.1} parent=1 // pred_fallthru
      _
    // Predicated region
    $region14: #{mogonet_forward.1} parent=1 // pred_check
      _
    $region15: #{mogonet_forward.1} parent=1 // pred_check_branch
      %58 = sbr.rel (0) target = $region17
    $region16: #{mogonet_forward.1} parent=1 // pred_region
      %60 = vsyncadd [#allocation8], 0
      %s61 = sshll.u32 %s3, 4
      %s62 = int_to_ptr.hbm [resolvable:$true] %s61
      %s63 = sshll.u32 [#allocation7], 4
      %s64 = int_to_ptr.vmem [resolvable:$true] %s63
      %69 = dma.hbm_to_vmem [thread:$0]  %s62, 768, %s64, [#allocation8], 384, 384, 24
    $region17: #{mogonet_forward.1} parent=1 // pred_fallthru
      _
    // Predicated region
    $region18: #{mogonet_forward.1} parent=1 // pred_check
      _
    $region19: #{mogonet_forward.1} parent=1 // pred_check_branch
      %71 = sbr.rel (0) target = $region21
    $region20: #{mogonet_forward.1} parent=1 // pred_region
      %73 = vsyncadd [#allocation8], 0
      %s74 = sshll.u32 %s4, 4
      %s75 = int_to_ptr.hbm [resolvable:$true] %s74
      %s76 = sshll.u32 [#allocation9], 4
      %s77 = int_to_ptr.vmem [resolvable:$true] %s76
      %82 = dma.hbm_to_vmem [thread:$0]  %s75, 3072, %s77, [#allocation8], 64, 64, 4
    $region21: #{mogonet_forward.1} parent=1 // pred_fallthru
      _
    // Predicated region
    $region22: #{mogonet_forward.1} parent=1 // pred_check
      _
    $region23: #{mogonet_forward.1} parent=1 // pred_check_branch
      %84 = sbr.rel (0) target = $region25
    $region24: #{mogonet_forward.1} parent=1 // pred_region
      %86 = vsyncadd [#allocation11], 0
      %s87 = sshll.u32 %s5, 4
      %s88 = int_to_ptr.hbm [resolvable:$true] %s87
      %s89 = sshll.u32 [#allocation10], 4
      %s90 = int_to_ptr.vmem [resolvable:$true] %s89
      %95 = dma.hbm_to_vmem [thread:$0]  %s88, 1024, %s90, [#allocation11], 64, 64, 4
    $region25: #{mogonet_forward.1} parent=1 // pred_fallthru
      _
    // Predicated region
    $region26: #{mogonet_forward.1} parent=1 // pred_check
      _
    $region27: #{mogonet_forward.1} parent=1 // pred_check_branch
      %97 = sbr.rel (0) target = $region29
    $region28: #{mogonet_forward.1} parent=1 // pred_region
      %99 = vsyncadd [#allocation11], 0
      %s101 = sshll.u32 %s6, 4
      %s102 = int_to_ptr.hbm [resolvable:$true] %s101
      %s103 = sshll.u32 [#allocation12], 4
      %s104 = int_to_ptr.vmem [resolvable:$true] %s103
      %106 = dma.hbm_to_vmem [thread:$0]  %s102, 32, %s104, [#allocation11]
    $region29: #{mogonet_forward.1} parent=1 // pred_fallthru
      _
    // Predicated region
    $region30: #{mogonet_forward.1} parent=1 // pred_check
      _
    $region31: #{mogonet_forward.1} parent=1 // pred_check_branch
      %108 = sbr.rel (0) target = $region33
    $region32: #{mogonet_forward.1} parent=1 // pred_region
      %110 = dma.done [#allocation3], 3072
    $region33: #{mogonet_forward.1} parent=1 // pred_fallthru
      _
    // Predicated region
    $region34: #{mogonet_forward.1} parent=1 // pred_check
      _
    $region35: #{mogonet_forward.1} parent=1 // pred_check_branch
      %112 = sbr.rel (0) target = $region37
    $region36: #{mogonet_forward.1} parent=1 // pred_region
      %114 = dma.done [#allocation5], 3072
    $region37: #{mogonet_forward.1} parent=1 // pred_fallthru
      _
    // Predicated region
    $region38: #{mogonet_forward.1} parent=1 // pred_check
      _
    $region39: #{mogonet_forward.1} parent=1 // pred_check_branch
      %116 = sbr.rel (0) target = $region41
    $region40: #{mogonet_forward.1} parent=1 // pred_region
      %118 = dma.done [#allocation5], 36864
    $region41: #{mogonet_forward.1} parent=1 // pred_fallthru
      _
    // Predicated region
    $region42: #{mogonet_forward.1} parent=1 // pred_check
      _
    $region43: #{mogonet_forward.1} parent=1 // pred_check_branch
      %120 = sbr.rel (0) target = $region45
    $region44: #{mogonet_forward.1} parent=1 // pred_region
      %122 = dma.done [#allocation8], 768
    $region45: #{mogonet_forward.1} parent=1 // pred_fallthru
      _
    // Predicated region
    $region46: #{mogonet_forward.1} parent=1 // pred_check
      _
    $region47: #{mogonet_forward.1} parent=1 // pred_check_branch
      %124 = sbr.rel (0) target = $region49
    $region48: #{mogonet_forward.1} parent=1 // pred_region
      %126 = dma.done [#allocation8], 3072
    $region49: #{mogonet_forward.1} parent=1 // pred_fallthru
      _
    // Predicated region
    $region50: #{mogonet_forward.1} parent=1 // pred_check
      _
    $region51: #{mogonet_forward.1} parent=1 // pred_check_branch
      %128 = sbr.rel (0) target = $region53
    $region52: #{mogonet_forward.1} parent=1 // pred_region
      %130 = dma.done [#allocation11], 1024
    $region53: #{mogonet_forward.1} parent=1 // pred_fallthru
      _
    // Predicated region
    $region54: #{mogonet_forward.1} parent=1 // pred_check
      _
    $region55: #{mogonet_forward.1} parent=1 // pred_check_branch
      %132 = sbr.rel (0) target = $region57
    $region56: #{mogonet_forward.1} parent=1 // pred_region
      %134 = dma.done [#allocation11], 32
    $region57: #{mogonet_forward.1} parent=1 // pred_fallthru
      _
    %v135 = vld [vmem:[#allocation4] sm:$0xff]
    %v136 = vld [vmem:[#allocation4 + $0x8] sm:$0xf]
    %v137 = vld [vmem:[#allocation4 + $0xc] sm:$0xff]
    %v138 = vld [vmem:[#allocation4 + $0x14] sm:$0xf]
    %v139 = vld [vmem:[#allocation4 + $0x18] sm:$0xff]
    %v140 = vld [vmem:[#allocation4 + $0x20] sm:$0xf]
    %v141 = vld [vmem:[#allocation4 + $0x24] sm:$0xff]
    %v142 = vld [vmem:[#allocation4 + $0x2c] sm:$0xf]
    %v143 = vld [vmem:[#allocation4 + $0x30] sm:$0xff]
    %v144 = vld [vmem:[#allocation4 + $0x38] sm:$0xf]
    %v145 = vld [vmem:[#allocation4 + $0x3c] sm:$0xff]
    %v146 = vld [vmem:[#allocation4 + $0x44] sm:$0xf]
    %v147 = vld [vmem:[#allocation4 + $0x48] sm:$0xff]
    %v148 = vld [vmem:[#allocation4 + $0x50] sm:$0xf]
    %v149 = vld [vmem:[#allocation4 + $0x54] sm:$0xff]
    %v150 = vld [vmem:[#allocation4 + $0x5c] sm:$0xf]
    %v151 = vld [vmem:[#allocation4 + $0x60] sm:$0xff]
    %v152 = vld [vmem:[#allocation4 + $0x68] sm:$0xf]
    %v153 = vld [vmem:[#allocation4 + $0x6c] sm:$0xff]
    %v154 = vld [vmem:[#allocation4 + $0x74] sm:$0xf]
    %v155 = vld [vmem:[#allocation4 + $0x78] sm:$0xff]
    %v156 = vld [vmem:[#allocation4 + $0x80] sm:$0xf]
    %v157 = vld [vmem:[#allocation4 + $0x84] sm:$0xff]
    %v158 = vld [vmem:[#allocation4 + $0x8c] sm:$0xf]
    %v159 = vld [vmem:[#allocation4 + $0x90] sm:$0xff]
    %v160 = vld [vmem:[#allocation4 + $0x98] sm:$0xf]
    %v161 = vld [vmem:[#allocation4 + $0x9c] sm:$0xff]
    %v162 = vld [vmem:[#allocation4 + $0xa4] sm:$0xf]
    %v163 = vld [vmem:[#allocation4 + $0xa8] sm:$0xff]
    %v164 = vld [vmem:[#allocation4 + $0xb0] sm:$0xf]
    %v165 = vld [vmem:[#allocation4 + $0xb4] sm:$0xff]
    %v166 = vld [vmem:[#allocation4 + $0xbc] sm:$0xf]
    %v167 = vld [vmem:[#allocation6] sm:$0xff]
    %v168 = vld [vmem:[#allocation6 + $0x8] sm:$0xf]
    %v169 = vld [vmem:[#allocation6 + $0xc] sm:$0xff]
    %v170 = vld [vmem:[#allocation6 + $0x14] sm:$0xf]
    %v171 = vld [vmem:[#allocation6 + $0x18] sm:$0xff]
    %v172 = vld [vmem:[#allocation6 + $0x20] sm:$0xf]
    %v173 = vld [vmem:[#allocation6 + $0x24] sm:$0xff]
    %v174 = vld [vmem:[#allocation6 + $0x2c] sm:$0xf]
    %v175 = vld [vmem:[#allocation6 + $0x30] sm:$0xff]
    %v176 = vld [vmem:[#allocation6 + $0x38] sm:$0xf]
    %v177 = vld [vmem:[#allocation6 + $0x3c] sm:$0xff]
    %v178 = vld [vmem:[#allocation6 + $0x44] sm:$0xf]
    %v179 = vld [vmem:[#allocation6 + $0x48] sm:$0xff]
    %v180 = vld [vmem:[#allocation6 + $0x50] sm:$0xf]
    %v181 = vld [vmem:[#allocation6 + $0x54] sm:$0xff]
    %v182 = vld [vmem:[#allocation6 + $0x5c] sm:$0xf]
    %v183 = vld [vmem:[#allocation6 + $0x60] sm:$0xff]
    %v184 = vld [vmem:[#allocation6 + $0x68] sm:$0xf]
    %v185 = vld [vmem:[#allocation6 + $0x6c] sm:$0xff]
    %v186 = vld [vmem:[#allocation6 + $0x74] sm:$0xf]
    %v187 = vld [vmem:[#allocation6 + $0x78] sm:$0xff]
    %v188 = vld [vmem:[#allocation6 + $0x80] sm:$0xf]
    %v189 = vld [vmem:[#allocation6 + $0x84] sm:$0xff]
    %v190 = vld [vmem:[#allocation6 + $0x8c] sm:$0xf]
    %v191 = vld [vmem:[#allocation6 + $0x90] sm:$0xff]
    %v192 = vld [vmem:[#allocation6 + $0x98] sm:$0xf]
    %v193 = vld [vmem:[#allocation6 + $0x9c] sm:$0xff]
    %v194 = vld [vmem:[#allocation6 + $0xa4] sm:$0xf]
    %v195 = vld [vmem:[#allocation6 + $0xa8] sm:$0xff]
    %v196 = vld [vmem:[#allocation6 + $0xb0] sm:$0xf]
    %v197 = vld [vmem:[#allocation6 + $0xb4] sm:$0xff]
    %v198 = vld [vmem:[#allocation6 + $0xbc] sm:$0xf]
    %v199 = vld [vmem:[#allocation6 + $0xc0] sm:$0xff]
    %v200 = vld [vmem:[#allocation6 + $0xc8] sm:$0xf]
    %v201 = vld [vmem:[#allocation6 + $0xcc] sm:$0xff]
    %v202 = vld [vmem:[#allocation6 + $0xd4] sm:$0xf]
    %v203 = vld [vmem:[#allocation6 + $0xd8] sm:$0xff]
    %v204 = vld [vmem:[#allocation6 + $0xe0] sm:$0xf]
    %v205 = vld [vmem:[#allocation6 + $0xe4] sm:$0xff]
    %v206 = vld [vmem:[#allocation6 + $0xec] sm:$0xf]
    %v207 = vld [vmem:[#allocation6 + $0xf0] sm:$0xff]
    %v208 = vld [vmem:[#allocation6 + $0xf8] sm:$0xf]
    %v209 = vld [vmem:[#allocation6 + $0xfc] sm:$0xff]
    %v210 = vld [vmem:[#allocation6 + $0x104] sm:$0xf]
    %v211 = vld [vmem:[#allocation6 + $0x108] sm:$0xff]
    %v212 = vld [vmem:[#allocation6 + $0x110] sm:$0xf]
    %v213 = vld [vmem:[#allocation6 + $0x114] sm:$0xff]
    %v214 = vld [vmem:[#allocation6 + $0x11c] sm:$0xf]
    %v215 = vld [vmem:[#allocation6 + $0x120] sm:$0xff]
    %v216 = vld [vmem:[#allocation6 + $0x128] sm:$0xf]
    %v217 = vld [vmem:[#allocation6 + $0x12c] sm:$0xff]
    %v218 = vld [vmem:[#allocation6 + $0x134] sm:$0xf]
    %v219 = vld [vmem:[#allocation6 + $0x138] sm:$0xff]
    %v220 = vld [vmem:[#allocation6 + $0x140] sm:$0xf]
    %v221 = vld [vmem:[#allocation6 + $0x144] sm:$0xff]
    %v222 = vld [vmem:[#allocation6 + $0x14c] sm:$0xf]
    %v223 = vld [vmem:[#allocation6 + $0x150] sm:$0xff]
    %v224 = vld [vmem:[#allocation6 + $0x158] sm:$0xf]
    %v225 = vld [vmem:[#allocation6 + $0x15c] sm:$0xff]
    %v226 = vld [vmem:[#allocation6 + $0x164] sm:$0xf]
    %v227 = vld [vmem:[#allocation6 + $0x168] sm:$0xff]
    %v228 = vld [vmem:[#allocation6 + $0x170] sm:$0xf]
    %v229 = vld [vmem:[#allocation6 + $0x174] sm:$0xff]
    %v230 = vld [vmem:[#allocation6 + $0x17c] sm:$0xf]
    %v231 = vld [vmem:[#allocation6 + $0x180] sm:$0xff]
    %v232 = vld [vmem:[#allocation6 + $0x188] sm:$0xf]
    %v233 = vld [vmem:[#allocation6 + $0x18c] sm:$0xff]
    %v234 = vld [vmem:[#allocation6 + $0x194] sm:$0xf]
    %v235 = vld [vmem:[#allocation6 + $0x198] sm:$0xff]
    %v236 = vld [vmem:[#allocation6 + $0x1a0] sm:$0xf]
    %v237 = vld [vmem:[#allocation6 + $0x1a4] sm:$0xff]
    %v238 = vld [vmem:[#allocation6 + $0x1ac] sm:$0xf]
    %v239 = vld [vmem:[#allocation6 + $0x1b0] sm:$0xff]
    %v240 = vld [vmem:[#allocation6 + $0x1b8] sm:$0xf]
    %v241 = vld [vmem:[#allocation6 + $0x1bc] sm:$0xff]
    %v242 = vld [vmem:[#allocation6 + $0x1c4] sm:$0xf]
    %v243 = vld [vmem:[#allocation6 + $0x1c8] sm:$0xff]
    %v244 = vld [vmem:[#allocation6 + $0x1d0] sm:$0xf]
    %v245 = vld [vmem:[#allocation6 + $0x1d4] sm:$0xff]
    %v246 = vld [vmem:[#allocation6 + $0x1dc] sm:$0xf]
    %v247 = vld [vmem:[#allocation6 + $0x1e0] sm:$0xff]
    %v248 = vld [vmem:[#allocation6 + $0x1e8] sm:$0xf]
    %v249 = vld [vmem:[#allocation6 + $0x1ec] sm:$0xff]
    %v250 = vld [vmem:[#allocation6 + $0x1f4] sm:$0xf]
    %v251 = vld [vmem:[#allocation6 + $0x1f8] sm:$0xff]
    %v252 = vld [vmem:[#allocation6 + $0x200] sm:$0xf]
    %v253 = vld [vmem:[#allocation6 + $0x204] sm:$0xff]
    %v254 = vld [vmem:[#allocation6 + $0x20c] sm:$0xf]
    %v255 = vld [vmem:[#allocation6 + $0x210] sm:$0xff]
    %v256 = vld [vmem:[#allocation6 + $0x218] sm:$0xf]
    %v257 = vld [vmem:[#allocation6 + $0x21c] sm:$0xff]
    %v258 = vld [vmem:[#allocation6 + $0x224] sm:$0xf]
    %v259 = vld [vmem:[#allocation6 + $0x228] sm:$0xff]
    %v260 = vld [vmem:[#allocation6 + $0x230] sm:$0xf]
    %v261 = vld [vmem:[#allocation6 + $0x234] sm:$0xff]
    %v262 = vld [vmem:[#allocation6 + $0x23c] sm:$0xf]
    %v295 = vunpack.c.l.b16 %v135
    %v296 = vunpack.c.h.b16 %v135
    %v297 = vunpack.c.l.b16 %v136
    %v298 = vunpack.c.l.b16 %v137
    %v299 = vunpack.c.h.b16 %v137
    %v300 = vunpack.c.l.b16 %v138
    %v301 = vunpack.c.l.b16 %v139
    %v302 = vunpack.c.h.b16 %v139
    %v303 = vunpack.c.l.b16 %v140
    %v304 = vunpack.c.l.b16 %v141
    %v305 = vunpack.c.h.b16 %v141
    %v306 = vunpack.c.l.b16 %v142
    %v307 = vunpack.c.l.b16 %v143
    %v308 = vunpack.c.h.b16 %v143
    %v309 = vunpack.c.l.b16 %v144
    %v310 = vunpack.c.l.b16 %v145
    %v311 = vunpack.c.h.b16 %v145
    %v312 = vunpack.c.l.b16 %v146
    %v313 = vunpack.c.l.b16 %v147
    %v314 = vunpack.c.h.b16 %v147
    %v315 = vunpack.c.l.b16 %v148
    %v316 = vunpack.c.l.b16 %v149
    %v317 = vunpack.c.h.b16 %v149
    %v318 = vunpack.c.l.b16 %v150
    %v319 = vunpack.c.l.b16 %v151
    %v320 = vunpack.c.h.b16 %v151
    %v321 = vunpack.c.l.b16 %v152
    %v322 = vunpack.c.l.b16 %v153
    %v323 = vunpack.c.h.b16 %v153
    %v324 = vunpack.c.l.b16 %v154
    %v325 = vunpack.c.l.b16 %v155
    %v326 = vunpack.c.h.b16 %v155
    %v327 = vunpack.c.l.b16 %v156
    %v328 = vunpack.c.l.b16 %v157
    %v329 = vunpack.c.h.b16 %v157
    %v330 = vunpack.c.l.b16 %v158
    %v331 = vunpack.c.l.b16 %v159
    %v332 = vunpack.c.h.b16 %v159
    %v333 = vunpack.c.l.b16 %v160
    %v334 = vunpack.c.l.b16 %v161
    %v335 = vunpack.c.h.b16 %v161
    %v336 = vunpack.c.l.b16 %v162
    %v337 = vunpack.c.l.b16 %v163
    %v338 = vunpack.c.h.b16 %v163
    %v339 = vunpack.c.l.b16 %v164
    %v340 = vunpack.c.l.b16 %v165
    %v341 = vunpack.c.h.b16 %v165
    %v342 = vunpack.c.l.b16 %v166
    %v343 = vpack.c.b16 %v298, %v295
    %v344 = vpack.c.b16 %v299, %v296
    %v345 = vpack.c.b16 %v300, %v297
    %v346 = vpack.c.b16 %v304, %v301
    %v347 = vpack.c.b16 %v305, %v302
    %v348 = vpack.c.b16 %v306, %v303
    %v349 = vpack.c.b16 %v310, %v307
    %v350 = vpack.c.b16 %v311, %v308
    %v351 = vpack.c.b16 %v312, %v309
    %v352 = vpack.c.b16 %v316, %v313
    %v353 = vpack.c.b16 %v317, %v314
    %v354 = vpack.c.b16 %v318, %v315
    %v355 = vpack.c.b16 %v322, %v319
    %v356 = vpack.c.b16 %v323, %v320
    %v357 = vpack.c.b16 %v324, %v321
    %v358 = vpack.c.b16 %v328, %v325
    %v359 = vpack.c.b16 %v329, %v326
    %v360 = vpack.c.b16 %v330, %v327
    %v361 = vpack.c.b16 %v334, %v331
    %v362 = vpack.c.b16 %v335, %v332
    %v363 = vpack.c.b16 %v336, %v333
    %v364 = vpack.c.b16 %v340, %v337
    %v365 = vpack.c.b16 %v341, %v338
    %v366 = vpack.c.b16 %v342, %v339
    %v487 = vunpack.c.l.b16 %v167
    %v488 = vunpack.c.h.b16 %v167
    %v489 = vunpack.c.l.b16 %v168
    %v490 = vunpack.c.l.b16 %v169
    %v491 = vunpack.c.h.b16 %v169
    %v492 = vunpack.c.l.b16 %v170
    %v493 = vunpack.c.l.b16 %v171
    %v494 = vunpack.c.h.b16 %v171
    %v495 = vunpack.c.l.b16 %v172
    %v496 = vunpack.c.l.b16 %v173
    %v497 = vunpack.c.h.b16 %v173
    %v498 = vunpack.c.l.b16 %v174
    %v499 = vunpack.c.l.b16 %v175
    %v500 = vunpack.c.h.b16 %v175
    %v501 = vunpack.c.l.b16 %v176
    %v502 = vunpack.c.l.b16 %v177
    %v503 = vunpack.c.h.b16 %v177
    %v504 = vunpack.c.l.b16 %v178
    %v505 = vunpack.c.l.b16 %v179
    %v506 = vunpack.c.h.b16 %v179
    %v507 = vunpack.c.l.b16 %v180
    %v508 = vunpack.c.l.b16 %v181
    %v509 = vunpack.c.h.b16 %v181
    %v510 = vunpack.c.l.b16 %v182
    %v511 = vunpack.c.l.b16 %v183
    %v512 = vunpack.c.h.b16 %v183
    %v513 = vunpack.c.l.b16 %v184
    %v514 = vunpack.c.l.b16 %v185
    %v515 = vunpack.c.h.b16 %v185
    %v516 = vunpack.c.l.b16 %v186
    %v517 = vunpack.c.l.b16 %v187
    %v518 = vunpack.c.h.b16 %v187
    %v519 = vunpack.c.l.b16 %v188
    %v520 = vunpack.c.l.b16 %v189
    %v521 = vunpack.c.h.b16 %v189
    %v522 = vunpack.c.l.b16 %v190
    %v523 = vunpack.c.l.b16 %v191
    %v524 = vunpack.c.h.b16 %v191
    %v525 = vunpack.c.l.b16 %v192
    %v526 = vunpack.c.l.b16 %v193
    %v527 = vunpack.c.h.b16 %v193
    %v528 = vunpack.c.l.b16 %v194
    %v529 = vunpack.c.l.b16 %v195
    %v530 = vunpack.c.h.b16 %v195
    %v531 = vunpack.c.l.b16 %v196
    %v532 = vunpack.c.l.b16 %v197
    %v533 = vunpack.c.h.b16 %v197
    %v534 = vunpack.c.l.b16 %v198
    %v535 = vunpack.c.l.b16 %v199
    %v536 = vunpack.c.h.b16 %v199
    %v537 = vunpack.c.l.b16 %v200
    %v538 = vunpack.c.l.b16 %v201
    %v539 = vunpack.c.h.b16 %v201
    %v540 = vunpack.c.l.b16 %v202
    %v541 = vunpack.c.l.b16 %v203
    %v542 = vunpack.c.h.b16 %v203
    %v543 = vunpack.c.l.b16 %v204
    %v544 = vunpack.c.l.b16 %v205
    %v545 = vunpack.c.h.b16 %v205
    %v546 = vunpack.c.l.b16 %v206
    %v547 = vunpack.c.l.b16 %v207
    %v548 = vunpack.c.h.b16 %v207
    %v549 = vunpack.c.l.b16 %v208
    %v550 = vunpack.c.l.b16 %v209
    %v551 = vunpack.c.h.b16 %v209
    %v552 = vunpack.c.l.b16 %v210
    %v553 = vunpack.c.l.b16 %v211
    %v554 = vunpack.c.h.b16 %v211
    %v555 = vunpack.c.l.b16 %v212
    %v556 = vunpack.c.l.b16 %v213
    %v557 = vunpack.c.h.b16 %v213
    %v558 = vunpack.c.l.b16 %v214
    %v559 = vunpack.c.l.b16 %v215
    %v560 = vunpack.c.h.b16 %v215
    %v561 = vunpack.c.l.b16 %v216
    %v562 = vunpack.c.l.b16 %v217
    %v563 = vunpack.c.h.b16 %v217
    %v564 = vunpack.c.l.b16 %v218
    %v565 = vunpack.c.l.b16 %v219
    %v566 = vunpack.c.h.b16 %v219
    %v567 = vunpack.c.l.b16 %v220
    %v568 = vunpack.c.l.b16 %v221
    %v569 = vunpack.c.h.b16 %v221
    %v570 = vunpack.c.l.b16 %v222
    %v571 = vunpack.c.l.b16 %v223
    %v572 = vunpack.c.h.b16 %v223
    %v573 = vunpack.c.l.b16 %v224
    %v574 = vunpack.c.l.b16 %v225
    %v575 = vunpack.c.h.b16 %v225
    %v576 = vunpack.c.l.b16 %v226
    %v577 = vunpack.c.l.b16 %v227
    %v578 = vunpack.c.h.b16 %v227
    %v579 = vunpack.c.l.b16 %v228
    %v580 = vunpack.c.l.b16 %v229
    %v581 = vunpack.c.h.b16 %v229
    %v582 = vunpack.c.l.b16 %v230
    %v583 = vunpack.c.l.b16 %v231
    %v584 = vunpack.c.h.b16 %v231
    %v585 = vunpack.c.l.b16 %v232
    %v586 = vunpack.c.l.b16 %v233
    %v587 = vunpack.c.h.b16 %v233
    %v588 = vunpack.c.l.b16 %v234
    %v589 = vunpack.c.l.b16 %v235
    %v590 = vunpack.c.h.b16 %v235
    %v591 = vunpack.c.l.b16 %v236
    %v592 = vunpack.c.l.b16 %v237
    %v593 = vunpack.c.h.b16 %v237
    %v594 = vunpack.c.l.b16 %v238
    %v595 = vunpack.c.l.b16 %v239
    %v596 = vunpack.c.h.b16 %v239
    %v597 = vunpack.c.l.b16 %v240
    %v598 = vunpack.c.l.b16 %v241
    %v599 = vunpack.c.h.b16 %v241
    %v600 = vunpack.c.l.b16 %v242
    %v601 = vunpack.c.l.b16 %v243
    %v602 = vunpack.c.h.b16 %v243
    %v603 = vunpack.c.l.b16 %v244
    %v604 = vunpack.c.l.b16 %v245
    %v605 = vunpack.c.h.b16 %v245
    %v606 = vunpack.c.l.b16 %v246
    %v607 = vunpack.c.l.b16 %v247
    %v608 = vunpack.c.h.b16 %v247
    %v609 = vunpack.c.l.b16 %v248
    %v610 = vunpack.c.l.b16 %v249
    %v611 = vunpack.c.h.b16 %v249
    %v612 = vunpack.c.l.b16 %v250
    %v613 = vunpack.c.l.b16 %v251
    %v614 = vunpack.c.h.b16 %v251
    %v615 = vunpack.c.l.b16 %v252
    %v616 = vunpack.c.l.b16 %v253
    %v617 = vunpack.c.h.b16 %v253
    %v618 = vunpack.c.l.b16 %v254
    %v619 = vunpack.c.l.b16 %v255
    %v620 = vunpack.c.h.b16 %v255
    %v621 = vunpack.c.l.b16 %v256
    %v622 = vunpack.c.l.b16 %v257
    %v623 = vunpack.c.h.b16 %v257
    %v624 = vunpack.c.l.b16 %v258
    %v625 = vunpack.c.l.b16 %v259
    %v626 = vunpack.c.h.b16 %v259
    %v627 = vunpack.c.l.b16 %v260
    %v628 = vunpack.c.l.b16 %v261
    %v629 = vunpack.c.h.b16 %v261
    %v630 = vunpack.c.l.b16 %v262
    %v631 = vpack.c.b16 %v490, %v487
    %v632 = vpack.c.b16 %v491, %v488
    %v633 = vpack.c.b16 %v492, %v489
    %v634 = vpack.c.b16 %v496, %v493
    %v635 = vpack.c.b16 %v497, %v494
    %v636 = vpack.c.b16 %v498, %v495
    %v637 = vpack.c.b16 %v502, %v499
    %v638 = vpack.c.b16 %v503, %v500
    %v639 = vpack.c.b16 %v504, %v501
    %v640 = vpack.c.b16 %v508, %v505
    %v641 = vpack.c.b16 %v509, %v506
    %v642 = vpack.c.b16 %v510, %v507
    %v643 = vpack.c.b16 %v514, %v511
    %v644 = vpack.c.b16 %v515, %v512
    %v645 = vpack.c.b16 %v516, %v513
    %v646 = vpack.c.b16 %v520, %v517
    %v647 = vpack.c.b16 %v521, %v518
    %v648 = vpack.c.b16 %v522, %v519
    %v649 = vpack.c.b16 %v526, %v523
    %v650 = vpack.c.b16 %v527, %v524
    %v651 = vpack.c.b16 %v528, %v525
    %v652 = vpack.c.b16 %v532, %v529
    %v653 = vpack.c.b16 %v533, %v530
    %v654 = vpack.c.b16 %v534, %v531
    %v655 = vpack.c.b16 %v538, %v535
    %v656 = vpack.c.b16 %v539, %v536
    %v657 = vpack.c.b16 %v540, %v537
    %v658 = vpack.c.b16 %v544, %v541
    %v659 = vpack.c.b16 %v545, %v542
    %v660 = vpack.c.b16 %v546, %v543
    %v661 = vpack.c.b16 %v550, %v547
    %v662 = vpack.c.b16 %v551, %v548
    %v663 = vpack.c.b16 %v552, %v549
    %v664 = vpack.c.b16 %v556, %v553
    %v665 = vpack.c.b16 %v557, %v554
    %v666 = vpack.c.b16 %v558, %v555
    %v667 = vpack.c.b16 %v562, %v559
    %v668 = vpack.c.b16 %v563, %v560
    %v669 = vpack.c.b16 %v564, %v561
    %v670 = vpack.c.b16 %v568, %v565
    %v671 = vpack.c.b16 %v569, %v566
    %v672 = vpack.c.b16 %v570, %v567
    %v673 = vpack.c.b16 %v574, %v571
    %v674 = vpack.c.b16 %v575, %v572
    %v675 = vpack.c.b16 %v576, %v573
    %v676 = vpack.c.b16 %v580, %v577
    %v677 = vpack.c.b16 %v581, %v578
    %v678 = vpack.c.b16 %v582, %v579
    %v679 = vpack.c.b16 %v586, %v583
    %v680 = vpack.c.b16 %v587, %v584
    %v681 = vpack.c.b16 %v588, %v585
    %v682 = vpack.c.b16 %v592, %v589
    %v683 = vpack.c.b16 %v593, %v590
    %v684 = vpack.c.b16 %v594, %v591
    %v685 = vpack.c.b16 %v598, %v595
    %v686 = vpack.c.b16 %v599, %v596
    %v687 = vpack.c.b16 %v600, %v597
    %v688 = vpack.c.b16 %v604, %v601
    %v689 = vpack.c.b16 %v605, %v602
    %v690 = vpack.c.b16 %v606, %v603
    %v691 = vpack.c.b16 %v610, %v607
    %v692 = vpack.c.b16 %v611, %v608
    %v693 = vpack.c.b16 %v612, %v609
    %v694 = vpack.c.b16 %v616, %v613
    %v695 = vpack.c.b16 %v617, %v614
    %v696 = vpack.c.b16 %v618, %v615
    %v697 = vpack.c.b16 %v622, %v619
    %v698 = vpack.c.b16 %v623, %v620
    %v699 = vpack.c.b16 %v624, %v621
    %v700 = vpack.c.b16 %v628, %v625
    %v701 = vpack.c.b16 %v629, %v626
    %v702 = vpack.c.b16 %v630, %v627
    %775 = vmatpush.bf16.msra.mxu0 %v652
    %776 = vmatpush.bf16.msra.mxu0 %v649
    %777 = vmatpush.bf16.msra.mxu0 %v646
    %778 = vmatpush.bf16.msra.mxu0 %v643
    %779 = vmatpush.bf16.msra.mxu0 %v640
    %780 = vmatpush.bf16.msra.mxu0 %v637
    %781 = vmatpush.bf16.msra.mxu0 %v634
    %782 = vmatpush.bf16.msra.mxu0 %v631
    %783 = vmatmul.bf16.gmra.mxu0 %v343
    %v784 = vpop.f32.mrf.mxu0
    %v785 = vadd.f32 0.0, %v784
    %v786 = vpop.f32.mrf.mxu0
    %v787 = vadd.f32 0.0, %v786
    %788 = vmatmul.bf16.gmra.mxu0 %v346
    %v789 = vpop.f32.mrf.mxu0
    %v790 = vadd.f32 0.0, %v789
    %v791 = vpop.f32.mrf.mxu0
    %v792 = vadd.f32 0.0, %v791
    %793 = vmatmul.bf16.gmra.mxu0 %v349
    %v794 = vpop.f32.mrf.mxu0
    %v795 = vadd.f32 0.0, %v794
    %v796 = vpop.f32.mrf.mxu0
    %v797 = vadd.f32 0.0, %v796
    %798 = vmatmul.bf16.gmra.mxu0 %v352
    %v799 = vpop.f32.mrf.mxu0
    %v800 = vadd.f32 0.0, %v799
    %v801 = vpop.f32.mrf.mxu0
    %v802 = vadd.f32 0.0, %v801
    %803 = vmatmul.bf16.gmra.mxu0 %v355
    %v804 = vpop.f32.mrf.mxu0
    %v805 = vadd.f32 0.0, %v804
    %v806 = vpop.f32.mrf.mxu0
    %v807 = vadd.f32 0.0, %v806
    %808 = vmatmul.bf16.gmra.mxu0 %v358
    %v809 = vpop.f32.mrf.mxu0
    %v810 = vadd.f32 0.0, %v809
    %v811 = vpop.f32.mrf.mxu0
    %v812 = vadd.f32 0.0, %v811
    %813 = vmatmul.bf16.gmra.mxu0 %v361
    %v814 = vpop.f32.mrf.mxu0
    %v815 = vadd.f32 0.0, %v814
    %v816 = vpop.f32.mrf.mxu0
    %v817 = vadd.f32 0.0, %v816
    %818 = vmatmul.bf16.gmra.mxu0 %v364
    %v819 = vpop.f32.mrf.mxu0
    %v820 = vadd.f32 0.0, %v819
    %v821 = vpop.f32.mrf.mxu0
    %v822 = vadd.f32 0.0, %v821
    %823 = vdwg.mxu0
    %824 = vmatpush.bf16.msra.mxu0 %v676
    %825 = vmatpush.bf16.msra.mxu0 %v673
    %826 = vmatpush.bf16.msra.mxu0 %v670
    %827 = vmatpush.bf16.msra.mxu0 %v667
    %828 = vmatpush.bf16.msra.mxu0 %v664
    %829 = vmatpush.bf16.msra.mxu0 %v661
    %830 = vmatpush.bf16.msra.mxu0 %v658
    %831 = vmatpush.bf16.msra.mxu0 %v655
    %832 = vmatmul.bf16.gmra.mxu0 %v344
    %v833 = vpop.f32.mrf.mxu0
    %v834 = vadd.f32 %v785, %v833
    %v835 = vpop.f32.mrf.mxu0
    %v836 = vadd.f32 %v787, %v835
    %837 = vmatmul.bf16.gmra.mxu0 %v347
    %v838 = vpop.f32.mrf.mxu0
    %v839 = vadd.f32 %v790, %v838
    %v840 = vpop.f32.mrf.mxu0
    %v841 = vadd.f32 %v792, %v840
    %842 = vmatmul.bf16.gmra.mxu0 %v350
    %v843 = vpop.f32.mrf.mxu0
    %v844 = vadd.f32 %v795, %v843
    %v845 = vpop.f32.mrf.mxu0
    %v846 = vadd.f32 %v797, %v845
    %847 = vmatmul.bf16.gmra.mxu0 %v353
    %v848 = vpop.f32.mrf.mxu0
    %v849 = vadd.f32 %v800, %v848
    %v850 = vpop.f32.mrf.mxu0
    %v851 = vadd.f32 %v802, %v850
    %852 = vmatmul.bf16.gmra.mxu0 %v356
    %v853 = vpop.f32.mrf.mxu0
    %v854 = vadd.f32 %v805, %v853
    %v855 = vpop.f32.mrf.mxu0
    %v856 = vadd.f32 %v807, %v855
    %857 = vmatmul.bf16.gmra.mxu0 %v359
    %v858 = vpop.f32.mrf.mxu0
    %v859 = vadd.f32 %v810, %v858
    %v860 = vpop.f32.mrf.mxu0
    %v861 = vadd.f32 %v812, %v860
    %862 = vmatmul.bf16.gmra.mxu0 %v362
    %v863 = vpop.f32.mrf.mxu0
    %v864 = vadd.f32 %v815, %v863
    %v865 = vpop.f32.mrf.mxu0
    %v866 = vadd.f32 %v817, %v865
    %867 = vmatmul.bf16.gmra.mxu0 %v365
    %v868 = vpop.f32.mrf.mxu0
    %v869 = vadd.f32 %v820, %v868
    %v870 = vpop.f32.mrf.mxu0
    %v871 = vadd.f32 %v822, %v870
    %872 = vdwg.mxu0
    %873 = vmatpush.bf16.msra.mxu0 %v700
    %874 = vmatpush.bf16.msra.mxu0 %v697
    %875 = vmatpush.bf16.msra.mxu0 %v694
    %876 = vmatpush.bf16.msra.mxu0 %v691
    %877 = vmatpush.bf16.msra.mxu0 %v688
    %878 = vmatpush.bf16.msra.mxu0 %v685
    %879 = vmatpush.bf16.msra.mxu0 %v682
    %880 = vmatpush.bf16.msra.mxu0 %v679
    %881 = vmatmul.bf16.gmra.mxu0 %v345
    %v882 = vpop.f32.mrf.mxu0
    %v883 = vadd.f32 %v834, %v882
    %v884 = vpop.f32.mrf.mxu0
    %v885 = vadd.f32 %v836, %v884
    %886 = vmatmul.bf16.gmra.mxu0 %v348
    %v887 = vpop.f32.mrf.mxu0
    %v888 = vadd.f32 %v839, %v887
    %v889 = vpop.f32.mrf.mxu0
    %v890 = vadd.f32 %v841, %v889
    %891 = vmatmul.bf16.gmra.mxu0 %v351
    %v892 = vpop.f32.mrf.mxu0
    %v893 = vadd.f32 %v844, %v892
    %v894 = vpop.f32.mrf.mxu0
    %v895 = vadd.f32 %v846, %v894
    %896 = vmatmul.bf16.gmra.mxu0 %v354
    %v897 = vpop.f32.mrf.mxu0
    %v898 = vadd.f32 %v849, %v897
    %v899 = vpop.f32.mrf.mxu0
    %v900 = vadd.f32 %v851, %v899
    %901 = vmatmul.bf16.gmra.mxu0 %v357
    %v902 = vpop.f32.mrf.mxu0
    %v903 = vadd.f32 %v854, %v902
    %v904 = vpop.f32.mrf.mxu0
    %v905 = vadd.f32 %v856, %v904
    %906 = vmatmul.bf16.gmra.mxu0 %v360
    %v907 = vpop.f32.mrf.mxu0
    %v908 = vadd.f32 %v859, %v907
    %v909 = vpop.f32.mrf.mxu0
    %v910 = vadd.f32 %v861, %v909
    %911 = vmatmul.bf16.gmra.mxu0 %v363
    %v912 = vpop.f32.mrf.mxu0
    %v913 = vadd.f32 %v864, %v912
    %v914 = vpop.f32.mrf.mxu0
    %v915 = vadd.f32 %v866, %v914
    %916 = vmatmul.bf16.gmra.mxu0 %v366
    %v917 = vpop.f32.mrf.mxu0
    %v918 = vadd.f32 %v869, %v917
    %v919 = vpop.f32.mrf.mxu0
    %v920 = vadd.f32 %v871, %v919
    %921 = vdwg.mxu0
    %922 = vmatpush.bf16.msra.mxu0 %v653
    %923 = vmatpush.bf16.msra.mxu0 %v650
    %924 = vmatpush.bf16.msra.mxu0 %v647
    %925 = vmatpush.bf16.msra.mxu0 %v644
    %926 = vmatpush.bf16.msra.mxu0 %v641
    %927 = vmatpush.bf16.msra.mxu0 %v638
    %928 = vmatpush.bf16.msra.mxu0 %v635
    %929 = vmatpush.bf16.msra.mxu0 %v632
    %930 = vmatmul.bf16.gmra.mxu0 %v343
    %v931 = vpop.f32.mrf.mxu0
    %v932 = vadd.f32 0.0, %v931
    %v933 = vpop.f32.mrf.mxu0
    %v934 = vadd.f32 0.0, %v933
    %935 = vmatmul.bf16.gmra.mxu0 %v346
    %v936 = vpop.f32.mrf.mxu0
    %v937 = vadd.f32 0.0, %v936
    %v938 = vpop.f32.mrf.mxu0
    %v939 = vadd.f32 0.0, %v938
    %940 = vmatmul.bf16.gmra.mxu0 %v349
    %v941 = vpop.f32.mrf.mxu0
    %v942 = vadd.f32 0.0, %v941
    %v943 = vpop.f32.mrf.mxu0
    %v944 = vadd.f32 0.0, %v943
    %945 = vmatmul.bf16.gmra.mxu0 %v352
    %v946 = vpop.f32.mrf.mxu0
    %v947 = vadd.f32 0.0, %v946
    %v948 = vpop.f32.mrf.mxu0
    %v949 = vadd.f32 0.0, %v948
    %950 = vmatmul.bf16.gmra.mxu0 %v355
    %v951 = vpop.f32.mrf.mxu0
    %v952 = vadd.f32 0.0, %v951
    %v953 = vpop.f32.mrf.mxu0
    %v954 = vadd.f32 0.0, %v953
    %955 = vmatmul.bf16.gmra.mxu0 %v358
    %v956 = vpop.f32.mrf.mxu0
    %v957 = vadd.f32 0.0, %v956
    %v958 = vpop.f32.mrf.mxu0
    %v959 = vadd.f32 0.0, %v958
    %960 = vmatmul.bf16.gmra.mxu0 %v361
    %v961 = vpop.f32.mrf.mxu0
    %v962 = vadd.f32 0.0, %v961
    %v963 = vpop.f32.mrf.mxu0
    %v964 = vadd.f32 0.0, %v963
    %965 = vmatmul.bf16.gmra.mxu0 %v364
    %v966 = vpop.f32.mrf.mxu0
    %v967 = vadd.f32 0.0, %v966
    %v968 = vpop.f32.mrf.mxu0
    %v969 = vadd.f32 0.0, %v968
    %970 = vdwg.mxu0
    %971 = vmatpush.bf16.msra.mxu0 %v677
    %972 = vmatpush.bf16.msra.mxu0 %v674
    %973 = vmatpush.bf16.msra.mxu0 %v671
    %974 = vmatpush.bf16.msra.mxu0 %v668
    %975 = vmatpush.bf16.msra.mxu0 %v665
    %976 = vmatpush.bf16.msra.mxu0 %v662
    %977 = vmatpush.bf16.msra.mxu0 %v659
    %978 = vmatpush.bf16.msra.mxu0 %v656
    %979 = vmatmul.bf16.gmra.mxu0 %v344
    %v980 = vpop.f32.mrf.mxu0
    %v981 = vadd.f32 %v932, %v980
    %v982 = vpop.f32.mrf.mxu0
    %v983 = vadd.f32 %v934, %v982
    %984 = vmatmul.bf16.gmra.mxu0 %v347
    %v985 = vpop.f32.mrf.mxu0
    %v986 = vadd.f32 %v937, %v985
    %v987 = vpop.f32.mrf.mxu0
    %v988 = vadd.f32 %v939, %v987
    %989 = vmatmul.bf16.gmra.mxu0 %v350
    %v990 = vpop.f32.mrf.mxu0
    %v991 = vadd.f32 %v942, %v990
    %v992 = vpop.f32.mrf.mxu0
    %v993 = vadd.f32 %v944, %v992
    %994 = vmatmul.bf16.gmra.mxu0 %v353
    %v995 = vpop.f32.mrf.mxu0
    %v996 = vadd.f32 %v947, %v995
    %v997 = vpop.f32.mrf.mxu0
    %v998 = vadd.f32 %v949, %v997
    %999 = vmatmul.bf16.gmra.mxu0 %v356
    %v1000 = vpop.f32.mrf.mxu0
    %v1001 = vadd.f32 %v952, %v1000
    %v1002 = vpop.f32.mrf.mxu0
    %v1003 = vadd.f32 %v954, %v1002
    %1004 = vmatmul.bf16.gmra.mxu0 %v359
    %v1005 = vpop.f32.mrf.mxu0
    %v1006 = vadd.f32 %v957, %v1005
    %v1007 = vpop.f32.mrf.mxu0
    %v1008 = vadd.f32 %v959, %v1007
    %1009 = vmatmul.bf16.gmra.mxu0 %v362
    %v1010 = vpop.f32.mrf.mxu0
    %v1011 = vadd.f32 %v962, %v1010
    %v1012 = vpop.f32.mrf.mxu0
    %v1013 = vadd.f32 %v964, %v1012
    %1014 = vmatmul.bf16.gmra.mxu0 %v365
    %v1015 = vpop.f32.mrf.mxu0
    %v1016 = vadd.f32 %v967, %v1015
    %v1017 = vpop.f32.mrf.mxu0
    %v1018 = vadd.f32 %v969, %v1017
    %1019 = vdwg.mxu0
    %1020 = vmatpush.bf16.msra.mxu0 %v701
    %1021 = vmatpush.bf16.msra.mxu0 %v698
    %1022 = vmatpush.bf16.msra.mxu0 %v695
    %1023 = vmatpush.bf16.msra.mxu0 %v692
    %1024 = vmatpush.bf16.msra.mxu0 %v689
    %1025 = vmatpush.bf16.msra.mxu0 %v686
    %1026 = vmatpush.bf16.msra.mxu0 %v683
    %1027 = vmatpush.bf16.msra.mxu0 %v680
    %1028 = vmatmul.bf16.gmra.mxu0 %v345
    %v1029 = vpop.f32.mrf.mxu0
    %v1030 = vadd.f32 %v981, %v1029
    %v1031 = vpop.f32.mrf.mxu0
    %v1032 = vadd.f32 %v983, %v1031
    %1033 = vmatmul.bf16.gmra.mxu0 %v348
    %v1034 = vpop.f32.mrf.mxu0
    %v1035 = vadd.f32 %v986, %v1034
    %v1036 = vpop.f32.mrf.mxu0
    %v1037 = vadd.f32 %v988, %v1036
    %1038 = vmatmul.bf16.gmra.mxu0 %v351
    %v1039 = vpop.f32.mrf.mxu0
    %v1040 = vadd.f32 %v991, %v1039
    %v1041 = vpop.f32.mrf.mxu0
    %v1042 = vadd.f32 %v993, %v1041
    %1043 = vmatmul.bf16.gmra.mxu0 %v354
    %v1044 = vpop.f32.mrf.mxu0
    %v1045 = vadd.f32 %v996, %v1044
    %v1046 = vpop.f32.mrf.mxu0
    %v1047 = vadd.f32 %v998, %v1046
    %1048 = vmatmul.bf16.gmra.mxu0 %v357
    %v1049 = vpop.f32.mrf.mxu0
    %v1050 = vadd.f32 %v1001, %v1049
    %v1051 = vpop.f32.mrf.mxu0
    %v1052 = vadd.f32 %v1003, %v1051
    %1053 = vmatmul.bf16.gmra.mxu0 %v360
    %v1054 = vpop.f32.mrf.mxu0
    %v1055 = vadd.f32 %v1006, %v1054
    %v1056 = vpop.f32.mrf.mxu0
    %v1057 = vadd.f32 %v1008, %v1056
    %1058 = vmatmul.bf16.gmra.mxu0 %v363
    %v1059 = vpop.f32.mrf.mxu0
    %v1060 = vadd.f32 %v1011, %v1059
    %v1061 = vpop.f32.mrf.mxu0
    %v1062 = vadd.f32 %v1013, %v1061
    %1063 = vmatmul.bf16.gmra.mxu0 %v366
    %v1064 = vpop.f32.mrf.mxu0
    %v1065 = vadd.f32 %v1016, %v1064
    %v1066 = vpop.f32.mrf.mxu0
    %v1067 = vadd.f32 %v1018, %v1066
    %1068 = vdwg.mxu0
    %1069 = vmatpush.bf16.msra.mxu0 %v654
    %1070 = vmatpush.bf16.msra.mxu0 %v651
    %1071 = vmatpush.bf16.msra.mxu0 %v648
    %1072 = vmatpush.bf16.msra.mxu0 %v645
    %1073 = vmatpush.bf16.msra.mxu0 %v642
    %1074 = vmatpush.bf16.msra.mxu0 %v639
    %1075 = vmatpush.bf16.msra.mxu0 %v636
    %1076 = vmatpush.bf16.msra.mxu0 %v633
    %1077 = vmatmul.bf16.gmra.mxu0 %v343
    %v1078 = vpop.f32.mrf.mxu0
    %v1079 = vadd.f32 0.0, %v1078
    %v1080 = vpop.f32.mrf.mxu0
    %v1081 = vadd.f32 0.0, %v1080
    %1082 = vmatmul.bf16.gmra.mxu0 %v346
    %v1083 = vpop.f32.mrf.mxu0
    %v1084 = vadd.f32 0.0, %v1083
    %v1085 = vpop.f32.mrf.mxu0
    %v1086 = vadd.f32 0.0, %v1085
    %1087 = vmatmul.bf16.gmra.mxu0 %v349
    %v1088 = vpop.f32.mrf.mxu0
    %v1089 = vadd.f32 0.0, %v1088
    %v1090 = vpop.f32.mrf.mxu0
    %v1091 = vadd.f32 0.0, %v1090
    %1092 = vmatmul.bf16.gmra.mxu0 %v352
    %v1093 = vpop.f32.mrf.mxu0
    %v1094 = vadd.f32 0.0, %v1093
    %v1095 = vpop.f32.mrf.mxu0
    %v1096 = vadd.f32 0.0, %v1095
    %1097 = vmatmul.bf16.gmra.mxu0 %v355
    %v1098 = vpop.f32.mrf.mxu0
    %v1099 = vadd.f32 0.0, %v1098
    %v1100 = vpop.f32.mrf.mxu0
    %v1101 = vadd.f32 0.0, %v1100
    %1102 = vmatmul.bf16.gmra.mxu0 %v358
    %v1103 = vpop.f32.mrf.mxu0
    %v1104 = vadd.f32 0.0, %v1103
    %v1105 = vpop.f32.mrf.mxu0
    %v1106 = vadd.f32 0.0, %v1105
    %1107 = vmatmul.bf16.gmra.mxu0 %v361
    %v1108 = vpop.f32.mrf.mxu0
    %v1109 = vadd.f32 0.0, %v1108
    %v1110 = vpop.f32.mrf.mxu0
    %v1111 = vadd.f32 0.0, %v1110
    %1112 = vmatmul.bf16.gmra.mxu0 %v364
    %v1113 = vpop.f32.mrf.mxu0
    %v1114 = vadd.f32 0.0, %v1113
    %v1115 = vpop.f32.mrf.mxu0
    %v1116 = vadd.f32 0.0, %v1115
    %1117 = vdwg.mxu0
    %1118 = vmatpush.bf16.msra.mxu0 %v678
    %1119 = vmatpush.bf16.msra.mxu0 %v675
    %1120 = vmatpush.bf16.msra.mxu0 %v672
    %1121 = vmatpush.bf16.msra.mxu0 %v669
    %1122 = vmatpush.bf16.msra.mxu0 %v666
    %1123 = vmatpush.bf16.msra.mxu0 %v663
    %1124 = vmatpush.bf16.msra.mxu0 %v660
    %1125 = vmatpush.bf16.msra.mxu0 %v657
    %1126 = vmatmul.bf16.gmra.mxu0 %v344
    %v1127 = vpop.f32.mrf.mxu0
    %v1128 = vadd.f32 %v1079, %v1127
    %v1129 = vpop.f32.mrf.mxu0
    %v1130 = vadd.f32 %v1081, %v1129
    %1131 = vmatmul.bf16.gmra.mxu0 %v347
    %v1132 = vpop.f32.mrf.mxu0
    %v1133 = vadd.f32 %v1084, %v1132
    %v1134 = vpop.f32.mrf.mxu0
    %v1135 = vadd.f32 %v1086, %v1134
    %1136 = vmatmul.bf16.gmra.mxu0 %v350
    %v1137 = vpop.f32.mrf.mxu0
    %v1138 = vadd.f32 %v1089, %v1137
    %v1139 = vpop.f32.mrf.mxu0
    %v1140 = vadd.f32 %v1091, %v1139
    %1141 = vmatmul.bf16.gmra.mxu0 %v353
    %v1142 = vpop.f32.mrf.mxu0
    %v1143 = vadd.f32 %v1094, %v1142
    %v1144 = vpop.f32.mrf.mxu0
    %v1145 = vadd.f32 %v1096, %v1144
    %1146 = vmatmul.bf16.gmra.mxu0 %v356
    %v1147 = vpop.f32.mrf.mxu0
    %v1148 = vadd.f32 %v1099, %v1147
    %v1149 = vpop.f32.mrf.mxu0
    %v1150 = vadd.f32 %v1101, %v1149
    %1151 = vmatmul.bf16.gmra.mxu0 %v359
    %v1152 = vpop.f32.mrf.mxu0
    %v1153 = vadd.f32 %v1104, %v1152
    %v1154 = vpop.f32.mrf.mxu0
    %v1155 = vadd.f32 %v1106, %v1154
    %1156 = vmatmul.bf16.gmra.mxu0 %v362
    %v1157 = vpop.f32.mrf.mxu0
    %v1158 = vadd.f32 %v1109, %v1157
    %v1159 = vpop.f32.mrf.mxu0
    %v1160 = vadd.f32 %v1111, %v1159
    %1161 = vmatmul.bf16.gmra.mxu0 %v365
    %v1162 = vpop.f32.mrf.mxu0
    %v1163 = vadd.f32 %v1114, %v1162
    %v1164 = vpop.f32.mrf.mxu0
    %v1165 = vadd.f32 %v1116, %v1164
    %1166 = vdwg.mxu0
    %1167 = vmatpush.bf16.msra.mxu0 %v702
    %1168 = vmatpush.bf16.msra.mxu0 %v699
    %1169 = vmatpush.bf16.msra.mxu0 %v696
    %1170 = vmatpush.bf16.msra.mxu0 %v693
    %1171 = vmatpush.bf16.msra.mxu0 %v690
    %1172 = vmatpush.bf16.msra.mxu0 %v687
    %1173 = vmatpush.bf16.msra.mxu0 %v684
    %1174 = vmatpush.bf16.msra.mxu0 %v681
    %1175 = vmatmul.bf16.gmra.mxu0 %v345
    %v1176 = vpop.f32.mrf.mxu0
    %v1177 = vadd.f32 %v1128, %v1176
    %v1178 = vpop.f32.mrf.mxu0
    %v1179 = vadd.f32 %v1130, %v1178
    %1180 = vmatmul.bf16.gmra.mxu0 %v348
    %v1181 = vpop.f32.mrf.mxu0
    %v1182 = vadd.f32 %v1133, %v1181
    %v1183 = vpop.f32.mrf.mxu0
    %v1184 = vadd.f32 %v1135, %v1183
    %1185 = vmatmul.bf16.gmra.mxu0 %v351
    %v1186 = vpop.f32.mrf.mxu0
    %v1187 = vadd.f32 %v1138, %v1186
    %v1188 = vpop.f32.mrf.mxu0
    %v1189 = vadd.f32 %v1140, %v1188
    %1190 = vmatmul.bf16.gmra.mxu0 %v354
    %v1191 = vpop.f32.mrf.mxu0
    %v1192 = vadd.f32 %v1143, %v1191
    %v1193 = vpop.f32.mrf.mxu0
    %v1194 = vadd.f32 %v1145, %v1193
    %1195 = vmatmul.bf16.gmra.mxu0 %v357
    %v1196 = vpop.f32.mrf.mxu0
    %v1197 = vadd.f32 %v1148, %v1196
    %v1198 = vpop.f32.mrf.mxu0
    %v1199 = vadd.f32 %v1150, %v1198
    %1200 = vmatmul.bf16.gmra.mxu0 %v360
    %v1201 = vpop.f32.mrf.mxu0
    %v1202 = vadd.f32 %v1153, %v1201
    %v1203 = vpop.f32.mrf.mxu0
    %v1204 = vadd.f32 %v1155, %v1203
    %1205 = vmatmul.bf16.gmra.mxu0 %v363
    %v1206 = vpop.f32.mrf.mxu0
    %v1207 = vadd.f32 %v1158, %v1206
    %v1208 = vpop.f32.mrf.mxu0
    %v1209 = vadd.f32 %v1160, %v1208
    %1210 = vmatmul.bf16.gmra.mxu0 %v366
    %v1211 = vpop.f32.mrf.mxu0
    %v1212 = vadd.f32 %v1163, %v1211
    %v1213 = vpop.f32.mrf.mxu0
    %v1214 = vadd.f32 %v1165, %v1213
    %1215 = vdwg.mxu0
    %v1216 = vpack.c.bf16 %v1030, %v883
    %v1217 = vpack.c.bf16 %v1177, %v1177
    %v1218 = vpack.c.bf16 %v1032, %v885
    %v1219 = vpack.c.bf16 %v1179, %v1179
    %v1220 = vpack.c.bf16 %v1035, %v888
    %v1221 = vpack.c.bf16 %v1182, %v1182
    %v1222 = vpack.c.bf16 %v1037, %v890
    %v1223 = vpack.c.bf16 %v1184, %v1184
    %v1224 = vpack.c.bf16 %v1040, %v893
    %v1225 = vpack.c.bf16 %v1187, %v1187
    %v1226 = vpack.c.bf16 %v1042, %v895
    %v1227 = vpack.c.bf16 %v1189, %v1189
    %v1228 = vpack.c.bf16 %v1045, %v898
    %v1229 = vpack.c.bf16 %v1192, %v1192
    %v1230 = vpack.c.bf16 %v1047, %v900
    %v1231 = vpack.c.bf16 %v1194, %v1194
    %v1232 = vpack.c.bf16 %v1050, %v903
    %v1233 = vpack.c.bf16 %v1197, %v1197
    %v1234 = vpack.c.bf16 %v1052, %v905
    %v1235 = vpack.c.bf16 %v1199, %v1199
    %v1236 = vpack.c.bf16 %v1055, %v908
    %v1237 = vpack.c.bf16 %v1202, %v1202
    %v1238 = vpack.c.bf16 %v1057, %v910
    %v1239 = vpack.c.bf16 %v1204, %v1204
    %v1240 = vpack.c.bf16 %v1060, %v913
    %v1241 = vpack.c.bf16 %v1207, %v1207
    %v1242 = vpack.c.bf16 %v1062, %v915
    %v1243 = vpack.c.bf16 %v1209, %v1209
    %v1244 = vpack.c.bf16 %v1065, %v918
    %v1245 = vpack.c.bf16 %v1212, %v1212
    %v1246 = vpack.c.bf16 %v1067, %v920
    %v1247 = vpack.c.bf16 %v1214, %v1214
    %v1248 = vld [vmem:[#allocation2] sm:$0xf]
    %v1249 = vld [vmem:[#allocation2 + $0x4] sm:$0xf]
    %v1250 = vld [vmem:[#allocation2 + $0x8] sm:$0xf]
    %v1251 = vld [vmem:[#allocation2 + $0xc] sm:$0xf]
    %v1252 = vld [vmem:[#allocation2 + $0x10] sm:$0xf]
    %v1253 = vld [vmem:[#allocation2 + $0x14] sm:$0xf]
    %v1254 = vld [vmem:[#allocation2 + $0x18] sm:$0xf]
    %v1255 = vld [vmem:[#allocation2 + $0x1c] sm:$0xf]
    %v1256 = vld [vmem:[#allocation2 + $0x20] sm:$0xf]
    %v1257 = vld [vmem:[#allocation2 + $0x24] sm:$0xf]
    %v1258 = vld [vmem:[#allocation2 + $0x28] sm:$0xf]
    %v1259 = vld [vmem:[#allocation2 + $0x2c] sm:$0xf]
    %v1260 = vld [vmem:[#allocation2 + $0x30] sm:$0xf]
    %v1261 = vld [vmem:[#allocation2 + $0x34] sm:$0xf]
    %v1262 = vld [vmem:[#allocation2 + $0x38] sm:$0xf]
    %v1263 = vld [vmem:[#allocation2 + $0x3c] sm:$0xf]
    %v1280 = vunpack.c.l.b16 %v1248
    %v1281 = vunpack.c.l.b16 %v1249
    %v1282 = vunpack.c.l.b16 %v1250
    %v1283 = vunpack.c.l.b16 %v1251
    %v1284 = vunpack.c.l.b16 %v1252
    %v1285 = vunpack.c.l.b16 %v1253
    %v1286 = vunpack.c.l.b16 %v1254
    %v1287 = vunpack.c.l.b16 %v1255
    %v1288 = vunpack.c.l.b16 %v1256
    %v1289 = vunpack.c.l.b16 %v1257
    %v1290 = vunpack.c.l.b16 %v1258
    %v1291 = vunpack.c.l.b16 %v1259
    %v1292 = vunpack.c.l.b16 %v1260
    %v1293 = vunpack.c.l.b16 %v1261
    %v1294 = vunpack.c.l.b16 %v1262
    %v1295 = vunpack.c.l.b16 %v1263
    %v1296 = vpack.c.b16 %v1281, %v1280
    %v1297 = vpack.c.b16 %v1283, %v1282
    %v1298 = vpack.c.b16 %v1285, %v1284
    %v1299 = vpack.c.b16 %v1287, %v1286
    %v1300 = vpack.c.b16 %v1289, %v1288
    %v1301 = vpack.c.b16 %v1291, %v1290
    %v1302 = vpack.c.b16 %v1293, %v1292
    %v1303 = vpack.c.b16 %v1295, %v1294
    %v1328 = vunpack.c.l.b16 %v1216
    %v1329 = vunpack.c.l.b16 %v1218
    %v1330 = vunpack.c.l.b16 %v1220
    %v1331 = vunpack.c.l.b16 %v1222
    %v1332 = vunpack.c.l.b16 %v1224
    %v1333 = vunpack.c.l.b16 %v1226
    %v1334 = vunpack.c.l.b16 %v1228
    %v1335 = vunpack.c.l.b16 %v1230
    %v1336 = vunpack.c.l.b16 %v1232
    %v1337 = vunpack.c.l.b16 %v1234
    %v1338 = vunpack.c.l.b16 %v1236
    %v1339 = vunpack.c.l.b16 %v1238
    %v1340 = vunpack.c.l.b16 %v1240
    %v1341 = vunpack.c.l.b16 %v1242
    %v1342 = vunpack.c.l.b16 %v1244
    %v1343 = vunpack.c.l.b16 %v1246
    %v1344 = vpack.c.b16 %v1329, %v1328
    %v1345 = vpack.c.b16 %v1331, %v1330
    %v1346 = vpack.c.b16 %v1333, %v1332
    %v1347 = vpack.c.b16 %v1335, %v1334
    %v1348 = vpack.c.b16 %v1337, %v1336
    %v1349 = vpack.c.b16 %v1339, %v1338
    %v1350 = vpack.c.b16 %v1341, %v1340
    %v1351 = vpack.c.b16 %v1343, %v1342
    %1360 = vmatpush.bf16.msra.mxu0 %v1351
    %1361 = vmatpush.bf16.msra.mxu0 %v1350
    %1362 = vmatpush.bf16.msra.mxu0 %v1349
    %1363 = vmatpush.bf16.msra.mxu0 %v1348
    %1364 = vmatpush.bf16.msra.mxu0 %v1347
    %1365 = vmatpush.bf16.msra.mxu0 %v1346
    %1366 = vmatpush.bf16.msra.mxu0 %v1345
    %1367 = vmatpush.bf16.msra.mxu0 %v1344
    %1368 = vmatmul.bf16.gmra.mxu0 %v1296
    %v1369 = vpop.f32.mrf.mxu0
    %v1370 = vadd.f32 0.0, %v1369
    %v1371 = vpop.f32.mrf.mxu0
    %v1372 = vadd.f32 0.0, %v1371
    %1373 = vmatmul.bf16.gmra.mxu0 %v1297
    %v1374 = vpop.f32.mrf.mxu0
    %v1375 = vadd.f32 0.0, %v1374
    %v1376 = vpop.f32.mrf.mxu0
    %v1377 = vadd.f32 0.0, %v1376
    %1378 = vmatmul.bf16.gmra.mxu0 %v1298
    %v1379 = vpop.f32.mrf.mxu0
    %v1380 = vadd.f32 0.0, %v1379
    %v1381 = vpop.f32.mrf.mxu0
    %v1382 = vadd.f32 0.0, %v1381
    %1383 = vmatmul.bf16.gmra.mxu0 %v1299
    %v1384 = vpop.f32.mrf.mxu0
    %v1385 = vadd.f32 0.0, %v1384
    %v1386 = vpop.f32.mrf.mxu0
    %v1387 = vadd.f32 0.0, %v1386
    %1388 = vmatmul.bf16.gmra.mxu0 %v1300
    %v1389 = vpop.f32.mrf.mxu0
    %v1390 = vadd.f32 0.0, %v1389
    %v1391 = vpop.f32.mrf.mxu0
    %v1392 = vadd.f32 0.0, %v1391
    %1393 = vmatmul.bf16.gmra.mxu0 %v1301
    %v1394 = vpop.f32.mrf.mxu0
    %v1395 = vadd.f32 0.0, %v1394
    %v1396 = vpop.f32.mrf.mxu0
    %v1397 = vadd.f32 0.0, %v1396
    %1398 = vmatmul.bf16.gmra.mxu0 %v1302
    %v1399 = vpop.f32.mrf.mxu0
    %v1400 = vadd.f32 0.0, %v1399
    %v1401 = vpop.f32.mrf.mxu0
    %v1402 = vadd.f32 0.0, %v1401
    %1403 = vmatmul.bf16.gmra.mxu0 %v1303
    %v1404 = vpop.f32.mrf.mxu0
    %v1405 = vadd.f32 0.0, %v1404
    %v1406 = vpop.f32.mrf.mxu0
    %v1407 = vadd.f32 0.0, %v1406
    %1408 = vdwg.mxu0
    %s1409 = scalar_lea.vmem [#allocation2], 64
    %v1410 = vld [vmem:[%s1409] sm:$0xf]
    %v1411 = vld [vmem:[%s1409 + $0x4] sm:$0xf]
    %v1412 = vld [vmem:[%s1409 + $0x8] sm:$0xf]
    %v1413 = vld [vmem:[%s1409 + $0xc] sm:$0xf]
    %v1414 = vld [vmem:[%s1409 + $0x10] sm:$0xf]
    %v1415 = vld [vmem:[%s1409 + $0x14] sm:$0xf]
    %v1416 = vld [vmem:[%s1409 + $0x18] sm:$0xf]
    %v1417 = vld [vmem:[%s1409 + $0x1c] sm:$0xf]
    %v1418 = vld [vmem:[%s1409 + $0x20] sm:$0xf]
    %v1419 = vld [vmem:[%s1409 + $0x24] sm:$0xf]
    %v1420 = vld [vmem:[%s1409 + $0x28] sm:$0xf]
    %v1421 = vld [vmem:[%s1409 + $0x2c] sm:$0xf]
    %v1422 = vld [vmem:[%s1409 + $0x30] sm:$0xf]
    %v1423 = vld [vmem:[%s1409 + $0x34] sm:$0xf]
    %v1424 = vld [vmem:[%s1409 + $0x38] sm:$0xf]
    %v1425 = vld [vmem:[%s1409 + $0x3c] sm:$0xf]
    %v1442 = vunpack.c.l.b16 %v1410
    %v1443 = vunpack.c.l.b16 %v1411
    %v1444 = vunpack.c.l.b16 %v1412
    %v1445 = vunpack.c.l.b16 %v1413
    %v1446 = vunpack.c.l.b16 %v1414
    %v1447 = vunpack.c.l.b16 %v1415
    %v1448 = vunpack.c.l.b16 %v1416
    %v1449 = vunpack.c.l.b16 %v1417
    %v1450 = vunpack.c.l.b16 %v1418
    %v1451 = vunpack.c.l.b16 %v1419
    %v1452 = vunpack.c.l.b16 %v1420
    %v1453 = vunpack.c.l.b16 %v1421
    %v1454 = vunpack.c.l.b16 %v1422
    %v1455 = vunpack.c.l.b16 %v1423
    %v1456 = vunpack.c.l.b16 %v1424
    %v1457 = vunpack.c.l.b16 %v1425
    %v1458 = vpack.c.b16 %v1443, %v1442
    %v1459 = vpack.c.b16 %v1445, %v1444
    %v1460 = vpack.c.b16 %v1447, %v1446
    %v1461 = vpack.c.b16 %v1449, %v1448
    %v1462 = vpack.c.b16 %v1451, %v1450
    %v1463 = vpack.c.b16 %v1453, %v1452
    %v1464 = vpack.c.b16 %v1455, %v1454
    %v1465 = vpack.c.b16 %v1457, %v1456
    %v1474 = vunpack.c.h.b16 %v1216
    %v1475 = vunpack.c.h.b16 %v1218
    %v1476 = vunpack.c.h.b16 %v1220
    %v1477 = vunpack.c.h.b16 %v1222
    %v1478 = vunpack.c.h.b16 %v1224
    %v1479 = vunpack.c.h.b16 %v1226
    %v1480 = vunpack.c.h.b16 %v1228
    %v1481 = vunpack.c.h.b16 %v1230
    %v1482 = vunpack.c.h.b16 %v1232
    %v1483 = vunpack.c.h.b16 %v1234
    %v1484 = vunpack.c.h.b16 %v1236
    %v1485 = vunpack.c.h.b16 %v1238
    %v1486 = vunpack.c.h.b16 %v1240
    %v1487 = vunpack.c.h.b16 %v1242
    %v1488 = vunpack.c.h.b16 %v1244
    %v1489 = vunpack.c.h.b16 %v1246
    %v1490 = vpack.c.b16 %v1475, %v1474
    %v1491 = vpack.c.b16 %v1477, %v1476
    %v1492 = vpack.c.b16 %v1479, %v1478
    %v1493 = vpack.c.b16 %v1481, %v1480
    %v1494 = vpack.c.b16 %v1483, %v1482
    %v1495 = vpack.c.b16 %v1485, %v1484
    %v1496 = vpack.c.b16 %v1487, %v1486
    %v1497 = vpack.c.b16 %v1489, %v1488
    %1506 = vmatpush.bf16.msra.mxu0 %v1497
    %1507 = vmatpush.bf16.msra.mxu0 %v1496
    %1508 = vmatpush.bf16.msra.mxu0 %v1495
    %1509 = vmatpush.bf16.msra.mxu0 %v1494
    %1510 = vmatpush.bf16.msra.mxu0 %v1493
    %1511 = vmatpush.bf16.msra.mxu0 %v1492
    %1512 = vmatpush.bf16.msra.mxu0 %v1491
    %1513 = vmatpush.bf16.msra.mxu0 %v1490
    %1514 = vmatmul.bf16.gmra.mxu0 %v1458
    %v1515 = vpop.f32.mrf.mxu0
    %v1516 = vadd.f32 0.0, %v1515
    %v1517 = vpop.f32.mrf.mxu0
    %v1518 = vadd.f32 0.0, %v1517
    %1519 = vmatmul.bf16.gmra.mxu0 %v1459
    %v1520 = vpop.f32.mrf.mxu0
    %v1521 = vadd.f32 0.0, %v1520
    %v1522 = vpop.f32.mrf.mxu0
    %v1523 = vadd.f32 0.0, %v1522
    %1524 = vmatmul.bf16.gmra.mxu0 %v1460
    %v1525 = vpop.f32.mrf.mxu0
    %v1526 = vadd.f32 0.0, %v1525
    %v1527 = vpop.f32.mrf.mxu0
    %v1528 = vadd.f32 0.0, %v1527
    %1529 = vmatmul.bf16.gmra.mxu0 %v1461
    %v1530 = vpop.f32.mrf.mxu0
    %v1531 = vadd.f32 0.0, %v1530
    %v1532 = vpop.f32.mrf.mxu0
    %v1533 = vadd.f32 0.0, %v1532
    %1534 = vmatmul.bf16.gmra.mxu0 %v1462
    %v1535 = vpop.f32.mrf.mxu0
    %v1536 = vadd.f32 0.0, %v1535
    %v1537 = vpop.f32.mrf.mxu0
    %v1538 = vadd.f32 0.0, %v1537
    %1539 = vmatmul.bf16.gmra.mxu0 %v1463
    %v1540 = vpop.f32.mrf.mxu0
    %v1541 = vadd.f32 0.0, %v1540
    %v1542 = vpop.f32.mrf.mxu0
    %v1543 = vadd.f32 0.0, %v1542
    %1544 = vmatmul.bf16.gmra.mxu0 %v1464
    %v1545 = vpop.f32.mrf.mxu0
    %v1546 = vadd.f32 0.0, %v1545
    %v1547 = vpop.f32.mrf.mxu0
    %v1548 = vadd.f32 0.0, %v1547
    %1549 = vmatmul.bf16.gmra.mxu0 %v1465
    %v1550 = vpop.f32.mrf.mxu0
    %v1551 = vadd.f32 0.0, %v1550
    %v1552 = vpop.f32.mrf.mxu0
    %v1553 = vadd.f32 0.0, %v1552
    %1554 = vdwg.mxu0
    %s1555 = scalar_lea.vmem [#allocation2], 128
    %v1556 = vld [vmem:[%s1555] sm:$0xf]
    %v1557 = vld [vmem:[%s1555 + $0x4] sm:$0xf]
    %v1558 = vld [vmem:[%s1555 + $0x8] sm:$0xf]
    %v1559 = vld [vmem:[%s1555 + $0xc] sm:$0xf]
    %v1560 = vld [vmem:[%s1555 + $0x10] sm:$0xf]
    %v1561 = vld [vmem:[%s1555 + $0x14] sm:$0xf]
    %v1562 = vld [vmem:[%s1555 + $0x18] sm:$0xf]
    %v1563 = vld [vmem:[%s1555 + $0x1c] sm:$0xf]
    %v1564 = vld [vmem:[%s1555 + $0x20] sm:$0xf]
    %v1565 = vld [vmem:[%s1555 + $0x24] sm:$0xf]
    %v1566 = vld [vmem:[%s1555 + $0x28] sm:$0xf]
    %v1567 = vld [vmem:[%s1555 + $0x2c] sm:$0xf]
    %v1568 = vld [vmem:[%s1555 + $0x30] sm:$0xf]
    %v1569 = vld [vmem:[%s1555 + $0x34] sm:$0xf]
    %v1570 = vld [vmem:[%s1555 + $0x38] sm:$0xf]
    %v1571 = vld [vmem:[%s1555 + $0x3c] sm:$0xf]
    %v1588 = vunpack.c.l.b16 %v1556
    %v1589 = vunpack.c.l.b16 %v1557
    %v1590 = vunpack.c.l.b16 %v1558
    %v1591 = vunpack.c.l.b16 %v1559
    %v1592 = vunpack.c.l.b16 %v1560
    %v1593 = vunpack.c.l.b16 %v1561
    %v1594 = vunpack.c.l.b16 %v1562
    %v1595 = vunpack.c.l.b16 %v1563
    %v1596 = vunpack.c.l.b16 %v1564
    %v1597 = vunpack.c.l.b16 %v1565
    %v1598 = vunpack.c.l.b16 %v1566
    %v1599 = vunpack.c.l.b16 %v1567
    %v1600 = vunpack.c.l.b16 %v1568
    %v1601 = vunpack.c.l.b16 %v1569
    %v1602 = vunpack.c.l.b16 %v1570
    %v1603 = vunpack.c.l.b16 %v1571
    %v1604 = vpack.c.b16 %v1589, %v1588
    %v1605 = vpack.c.b16 %v1591, %v1590
    %v1606 = vpack.c.b16 %v1593, %v1592
    %v1607 = vpack.c.b16 %v1595, %v1594
    %v1608 = vpack.c.b16 %v1597, %v1596
    %v1609 = vpack.c.b16 %v1599, %v1598
    %v1610 = vpack.c.b16 %v1601, %v1600
    %v1611 = vpack.c.b16 %v1603, %v1602
    %v1636 = vunpack.c.l.b16 %v1217
    %v1637 = vunpack.c.l.b16 %v1219
    %v1638 = vunpack.c.l.b16 %v1221
    %v1639 = vunpack.c.l.b16 %v1223
    %v1640 = vunpack.c.l.b16 %v1225
    %v1641 = vunpack.c.l.b16 %v1227
    %v1642 = vunpack.c.l.b16 %v1229
    %v1643 = vunpack.c.l.b16 %v1231
    %v1644 = vunpack.c.l.b16 %v1233
    %v1645 = vunpack.c.l.b16 %v1235
    %v1646 = vunpack.c.l.b16 %v1237
    %v1647 = vunpack.c.l.b16 %v1239
    %v1648 = vunpack.c.l.b16 %v1241
    %v1649 = vunpack.c.l.b16 %v1243
    %v1650 = vunpack.c.l.b16 %v1245
    %v1651 = vunpack.c.l.b16 %v1247
    %v1652 = vpack.c.b16 %v1637, %v1636
    %v1653 = vpack.c.b16 %v1639, %v1638
    %v1654 = vpack.c.b16 %v1641, %v1640
    %v1655 = vpack.c.b16 %v1643, %v1642
    %v1656 = vpack.c.b16 %v1645, %v1644
    %v1657 = vpack.c.b16 %v1647, %v1646
    %v1658 = vpack.c.b16 %v1649, %v1648
    %v1659 = vpack.c.b16 %v1651, %v1650
    %1668 = vmatpush.bf16.msra.mxu0 %v1659
    %1669 = vmatpush.bf16.msra.mxu0 %v1658
    %1670 = vmatpush.bf16.msra.mxu0 %v1657
    %1671 = vmatpush.bf16.msra.mxu0 %v1656
    %1672 = vmatpush.bf16.msra.mxu0 %v1655
    %1673 = vmatpush.bf16.msra.mxu0 %v1654
    %1674 = vmatpush.bf16.msra.mxu0 %v1653
    %1675 = vmatpush.bf16.msra.mxu0 %v1652
    %1676 = vmatmul.bf16.gmra.mxu0 %v1604
    %v1677 = vpop.f32.mrf.mxu0
    %v1678 = vadd.f32 0.0, %v1677
    %v1679 = vpop.f32.mrf.mxu0
    %v1680 = vadd.f32 0.0, %v1679
    %1681 = vmatmul.bf16.gmra.mxu0 %v1605
    %v1682 = vpop.f32.mrf.mxu0
    %v1683 = vadd.f32 0.0, %v1682
    %v1684 = vpop.f32.mrf.mxu0
    %v1685 = vadd.f32 0.0, %v1684
    %1686 = vmatmul.bf16.gmra.mxu0 %v1606
    %v1687 = vpop.f32.mrf.mxu0
    %v1688 = vadd.f32 0.0, %v1687
    %v1689 = vpop.f32.mrf.mxu0
    %v1690 = vadd.f32 0.0, %v1689
    %1691 = vmatmul.bf16.gmra.mxu0 %v1607
    %v1692 = vpop.f32.mrf.mxu0
    %v1693 = vadd.f32 0.0, %v1692
    %v1694 = vpop.f32.mrf.mxu0
    %v1695 = vadd.f32 0.0, %v1694
    %1696 = vmatmul.bf16.gmra.mxu0 %v1608
    %v1697 = vpop.f32.mrf.mxu0
    %v1698 = vadd.f32 0.0, %v1697
    %v1699 = vpop.f32.mrf.mxu0
    %v1700 = vadd.f32 0.0, %v1699
    %1701 = vmatmul.bf16.gmra.mxu0 %v1609
    %v1702 = vpop.f32.mrf.mxu0
    %v1703 = vadd.f32 0.0, %v1702
    %v1704 = vpop.f32.mrf.mxu0
    %v1705 = vadd.f32 0.0, %v1704
    %1706 = vmatmul.bf16.gmra.mxu0 %v1610
    %v1707 = vpop.f32.mrf.mxu0
    %v1708 = vadd.f32 0.0, %v1707
    %v1709 = vpop.f32.mrf.mxu0
    %v1710 = vadd.f32 0.0, %v1709
    %1711 = vmatmul.bf16.gmra.mxu0 %v1611
    %v1712 = vpop.f32.mrf.mxu0
    %v1713 = vadd.f32 0.0, %v1712
    %v1714 = vpop.f32.mrf.mxu0
    %v1715 = vadd.f32 0.0, %v1714
    %1716 = vdwg.mxu0
    %v1717 = vld [vmem:[#allocation7] ss:$8 sm:$0x7]
    %v1719 = vperm.slane %v1717, 0
    %v1720 = vperm.slane %v1717, 1
    %v1721 = vperm.slane %v1717, 2
    %v1725 = vadd.f32 %v1370, %v1719
    %v1726 = vadd.f32 %v1516, %v1720
    %v1727 = vadd.f32 %v1678, %v1721
    %v1728 = vadd.f32 %v1372, %v1719
    %v1729 = vadd.f32 %v1518, %v1720
    %v1730 = vadd.f32 %v1680, %v1721
    %v1731 = vadd.f32 %v1375, %v1719
    %v1732 = vadd.f32 %v1521, %v1720
    %v1733 = vadd.f32 %v1683, %v1721
    %v1734 = vadd.f32 %v1377, %v1719
    %v1735 = vadd.f32 %v1523, %v1720
    %v1736 = vadd.f32 %v1685, %v1721
    %v1737 = vadd.f32 %v1380, %v1719
    %v1738 = vadd.f32 %v1526, %v1720
    %v1739 = vadd.f32 %v1688, %v1721
    %v1740 = vadd.f32 %v1382, %v1719
    %v1741 = vadd.f32 %v1528, %v1720
    %v1742 = vadd.f32 %v1690, %v1721
    %v1743 = vadd.f32 %v1385, %v1719
    %v1744 = vadd.f32 %v1531, %v1720
    %v1745 = vadd.f32 %v1693, %v1721
    %v1746 = vadd.f32 %v1387, %v1719
    %v1747 = vadd.f32 %v1533, %v1720
    %v1748 = vadd.f32 %v1695, %v1721
    %v1749 = vadd.f32 %v1390, %v1719
    %v1750 = vadd.f32 %v1536, %v1720
    %v1751 = vadd.f32 %v1698, %v1721
    %v1752 = vadd.f32 %v1392, %v1719
    %v1753 = vadd.f32 %v1538, %v1720
    %v1754 = vadd.f32 %v1700, %v1721
    %v1755 = vadd.f32 %v1395, %v1719
    %v1756 = vadd.f32 %v1541, %v1720
    %v1757 = vadd.f32 %v1703, %v1721
    %v1758 = vadd.f32 %v1397, %v1719
    %v1759 = vadd.f32 %v1543, %v1720
    %v1760 = vadd.f32 %v1705, %v1721
    %v1761 = vadd.f32 %v1400, %v1719
    %v1762 = vadd.f32 %v1546, %v1720
    %v1763 = vadd.f32 %v1708, %v1721
    %v1764 = vadd.f32 %v1402, %v1719
    %v1765 = vadd.f32 %v1548, %v1720
    %v1766 = vadd.f32 %v1710, %v1721
    %v1767 = vadd.f32 %v1405, %v1719
    %v1768 = vadd.f32 %v1551, %v1720
    %v1769 = vadd.f32 %v1713, %v1721
    %v1770 = vadd.f32 %v1407, %v1719
    %v1771 = vadd.f32 %v1553, %v1720
    %v1772 = vadd.f32 %v1715, %v1721
    %v1773 = vmax.f32 %v1725, 0.0
    %v1774 = vmax.f32 %v1726, 0.0
    %v1775 = vmax.f32 %v1727, 0.0
    %v1776 = vmax.f32 %v1728, 0.0
    %v1777 = vmax.f32 %v1729, 0.0
    %v1778 = vmax.f32 %v1730, 0.0
    %v1779 = vmax.f32 %v1731, 0.0
    %v1780 = vmax.f32 %v1732, 0.0
    %v1781 = vmax.f32 %v1733, 0.0
    %v1782 = vmax.f32 %v1734, 0.0
    %v1783 = vmax.f32 %v1735, 0.0
    %v1784 = vmax.f32 %v1736, 0.0
    %v1785 = vmax.f32 %v1737, 0.0
    %v1786 = vmax.f32 %v1738, 0.0
    %v1787 = vmax.f32 %v1739, 0.0
    %v1788 = vmax.f32 %v1740, 0.0
    %v1789 = vmax.f32 %v1741, 0.0
    %v1790 = vmax.f32 %v1742, 0.0
    %v1791 = vmax.f32 %v1743, 0.0
    %v1792 = vmax.f32 %v1744, 0.0
    %v1793 = vmax.f32 %v1745, 0.0
    %v1794 = vmax.f32 %v1746, 0.0
    %v1795 = vmax.f32 %v1747, 0.0
    %v1796 = vmax.f32 %v1748, 0.0
    %v1797 = vmax.f32 %v1749, 0.0
    %v1798 = vmax.f32 %v1750, 0.0
    %v1799 = vmax.f32 %v1751, 0.0
    %v1800 = vmax.f32 %v1752, 0.0
    %v1801 = vmax.f32 %v1753, 0.0
    %v1802 = vmax.f32 %v1754, 0.0
    %v1803 = vmax.f32 %v1755, 0.0
    %v1804 = vmax.f32 %v1756, 0.0
    %v1805 = vmax.f32 %v1757, 0.0
    %v1806 = vmax.f32 %v1758, 0.0
    %v1807 = vmax.f32 %v1759, 0.0
    %v1808 = vmax.f32 %v1760, 0.0
    %v1809 = vmax.f32 %v1761, 0.0
    %v1810 = vmax.f32 %v1762, 0.0
    %v1811 = vmax.f32 %v1763, 0.0
    %v1812 = vmax.f32 %v1764, 0.0
    %v1813 = vmax.f32 %v1765, 0.0
    %v1814 = vmax.f32 %v1766, 0.0
    %v1815 = vmax.f32 %v1767, 0.0
    %v1816 = vmax.f32 %v1768, 0.0
    %v1817 = vmax.f32 %v1769, 0.0
    %v1818 = vmax.f32 %v1770, 0.0
    %v1819 = vmax.f32 %v1771, 0.0
    %v1820 = vmax.f32 %v1772, 0.0
    %s1821 = scalar_lea.vmem [#allocation7], 4
    %v1822 = vld [vmem:[%s1821] ss:$8 sm:$0x7]
    %s1823 = scalar_lea.vmem [#allocation7], 7
    %v1824 = vld [vmem:[%s1823] ss:$8 sm:$0x7]
    %v1825 = vadd.f32 %v1773, %v1776
    %v1826 = vadd.f32 %v1825, %v1779
    %v1827 = vadd.f32 %v1826, %v1782
    %v1828 = vadd.f32 %v1827, %v1785
    %v1829 = vadd.f32 %v1828, %v1788
    %v1830 = vadd.f32 %v1829, %v1791
    %v1831 = vadd.f32 %v1830, %v1794
    %v1832 = vrot.slane %v1831, 4
    %v1833 = vadd.f32 %v1831, %v1832
    %v1834 = vrot.slane %v1833, 2
    %v1835 = vadd.f32 %v1833, %v1834
    %v1836 = vrot.slane %v1835, 1
    %v1837 = vadd.f32 %v1835, %v1836
    %v1838 = vadd.f32 %v1774, %v1777
    %v1839 = vadd.f32 %v1838, %v1780
    %v1840 = vadd.f32 %v1839, %v1783
    %v1841 = vadd.f32 %v1840, %v1786
    %v1842 = vadd.f32 %v1841, %v1789
    %v1843 = vadd.f32 %v1842, %v1792
    %v1844 = vadd.f32 %v1843, %v1795
    %v1845 = vrot.slane %v1844, 4
    %v1846 = vadd.f32 %v1844, %v1845
    %v1847 = vrot.slane %v1846, 2
    %v1848 = vadd.f32 %v1846, %v1847
    %v1849 = vrot.slane %v1848, 1
    %v1850 = vadd.f32 %v1848, %v1849
    %v1851 = vadd.f32 %v1775, %v1778
    %v1852 = vadd.f32 %v1851, %v1781
    %v1853 = vadd.f32 %v1852, %v1784
    %v1854 = vadd.f32 %v1853, %v1787
    %v1855 = vadd.f32 %v1854, %v1790
    %v1856 = vadd.f32 %v1855, %v1793
    %v1857 = vadd.f32 %v1856, %v1796
    %v1858 = vrot.slane %v1857, 4
    %v1859 = vadd.f32 %v1857, %v1858
    %v1860 = vrot.slane %v1859, 2
    %v1861 = vadd.f32 %v1859, %v1860
    %v1862 = vrot.slane %v1861, 1
    %v1863 = vadd.f32 %v1861, %v1862
    %v1864 = vmul.f32 %v1773, %v1773
    %v1865 = vmul.f32 %v1774, %v1774
    %v1866 = vmul.f32 %v1775, %v1775
    %v1867 = vmul.f32 %v1776, %v1776
    %v1868 = vmul.f32 %v1777, %v1777
    %v1869 = vmul.f32 %v1778, %v1778
    %v1870 = vmul.f32 %v1779, %v1779
    %v1871 = vmul.f32 %v1780, %v1780
    %v1872 = vmul.f32 %v1781, %v1781
    %v1873 = vmul.f32 %v1782, %v1782
    %v1874 = vmul.f32 %v1783, %v1783
    %v1875 = vmul.f32 %v1784, %v1784
    %v1876 = vmul.f32 %v1785, %v1785
    %v1877 = vmul.f32 %v1786, %v1786
    %v1878 = vmul.f32 %v1787, %v1787
    %v1879 = vmul.f32 %v1788, %v1788
    %v1880 = vmul.f32 %v1789, %v1789
    %v1881 = vmul.f32 %v1790, %v1790
    %v1882 = vmul.f32 %v1791, %v1791
    %v1883 = vmul.f32 %v1792, %v1792
    %v1884 = vmul.f32 %v1793, %v1793
    %v1885 = vmul.f32 %v1794, %v1794
    %v1886 = vmul.f32 %v1795, %v1795
    %v1887 = vmul.f32 %v1796, %v1796
    %v1888 = vadd.f32 %v1864, %v1867
    %v1889 = vadd.f32 %v1888, %v1870
    %v1890 = vadd.f32 %v1889, %v1873
    %v1891 = vadd.f32 %v1890, %v1876
    %v1892 = vadd.f32 %v1891, %v1879
    %v1893 = vadd.f32 %v1892, %v1882
    %v1894 = vadd.f32 %v1893, %v1885
    %v1895 = vrot.slane %v1894, 4
    %v1896 = vadd.f32 %v1894, %v1895
    %v1897 = vrot.slane %v1896, 2
    %v1898 = vadd.f32 %v1896, %v1897
    %v1899 = vrot.slane %v1898, 1
    %v1900 = vadd.f32 %v1898, %v1899
    %v1901 = vadd.f32 %v1865, %v1868
    %v1902 = vadd.f32 %v1901, %v1871
    %v1903 = vadd.f32 %v1902, %v1874
    %v1904 = vadd.f32 %v1903, %v1877
    %v1905 = vadd.f32 %v1904, %v1880
    %v1906 = vadd.f32 %v1905, %v1883
    %v1907 = vadd.f32 %v1906, %v1886
    %v1908 = vrot.slane %v1907, 4
    %v1909 = vadd.f32 %v1907, %v1908
    %v1910 = vrot.slane %v1909, 2
    %v1911 = vadd.f32 %v1909, %v1910
    %v1912 = vrot.slane %v1911, 1
    %v1913 = vadd.f32 %v1911, %v1912
    %v1914 = vadd.f32 %v1866, %v1869
    %v1915 = vadd.f32 %v1914, %v1872
    %v1916 = vadd.f32 %v1915, %v1875
    %v1917 = vadd.f32 %v1916, %v1878
    %v1918 = vadd.f32 %v1917, %v1881
    %v1919 = vadd.f32 %v1918, %v1884
    %v1920 = vadd.f32 %v1919, %v1887
    %v1921 = vrot.slane %v1920, 4
    %v1922 = vadd.f32 %v1920, %v1921
    %v1923 = vrot.slane %v1922, 2
    %v1924 = vadd.f32 %v1922, %v1923
    %v1925 = vrot.slane %v1924, 1
    %v1926 = vadd.f32 %v1924, %v1925
    %v1927 = vmul.f32 %v1837, 0.015625
    %v1928 = vmul.f32 %v1850, 0.015625
    %v1929 = vmul.f32 %v1863, 0.015625
    %v1930 = vmul.f32 %v1900, 0.015625
    %v1931 = vmul.f32 %v1913, 0.015625
    %v1932 = vmul.f32 %v1926, 0.015625
    %v1933 = vmul.f32 %v1927, %v1927
    %v1934 = vmul.f32 %v1928, %v1928
    %v1935 = vmul.f32 %v1929, %v1929
    %v1936 = vsub.f32 %v1930, %v1933
    %v1937 = vsub.f32 %v1931, %v1934
    %v1938 = vsub.f32 %v1932, %v1935
    %v1939 = vadd.f32 %v1936, 1e-05
    %v1940 = vadd.f32 %v1937, 1e-05
    %v1941 = vadd.f32 %v1938, 1e-05
    %v1942 = vrsqrt.pop %v1939
    %v1943 = vmul.f32 %v1942, %v1939
    %v1944 = vmul.f32 %v1943, %v1942
    %v1945 = vmul.f32 0.5, %v1944
    %v1946 = vsub.f32 1.5, %v1945
    %v1947 = vmul.f32 %v1942, %v1946
    %vm1948 = vweird.f32 %v1939
    %vm1949 = vweird.f32 %v1942
    %vm1950 = vmor %vm1948, %vm1949
    %v1951 = vsel %vm1950, %v1942, %v1947
    %v1952 = vrsqrt.pop %v1940
    %v1953 = vmul.f32 %v1952, %v1940
    %v1954 = vmul.f32 %v1953, %v1952
    %v1955 = vmul.f32 0.5, %v1954
    %v1956 = vsub.f32 1.5, %v1955
    %v1957 = vmul.f32 %v1952, %v1956
    %vm1958 = vweird.f32 %v1940
    %vm1959 = vweird.f32 %v1952
    %vm1960 = vmor %vm1958, %vm1959
    %v1961 = vsel %vm1960, %v1952, %v1957
    %v1962 = vrsqrt.pop %v1941
    %v1963 = vmul.f32 %v1962, %v1941
    %v1964 = vmul.f32 %v1963, %v1962
    %v1965 = vmul.f32 0.5, %v1964
    %v1966 = vsub.f32 1.5, %v1965
    %v1967 = vmul.f32 %v1962, %v1966
    %vm1968 = vweird.f32 %v1941
    %vm1969 = vweird.f32 %v1962
    %vm1970 = vmor %vm1968, %vm1969
    %v1971 = vsel %vm1970, %v1962, %v1967
    %v1975 = vrot.slane %v1961, 7
    %v1976 = vrot.slane %v1971, 6
    %vm1977 = vcmask 1040384
    %v1978 = vsel %vm1977, %v1951, %v1975
    %vm1979 = vcmask 1041408
    %v1980 = vsel %vm1979, %v1978, %v1976
    %v1982 = vmul.f32 %v1822, %v1980
    %v1984 = vperm.slane %v1982, 0
    %v1985 = vperm.slane %v1982, 1
    %v1986 = vperm.slane %v1982, 2
    %v1990 = vmul.f32 %v1927, %v1984
    %v1991 = vmul.f32 %v1928, %v1985
    %v1992 = vmul.f32 %v1929, %v1986
    %v1996 = vrot.slane %v1991, 7
    %v1997 = vrot.slane %v1992, 6
    %v1998 = vsel %vm1977, %v1990, %v1996
    %v1999 = vsel %vm1979, %v1998, %v1997
    %v2001 = vsub.f32 %v1824, %v1999
    %v2002 = vmul.f32 %v1773, %v1984
    %v2003 = vmul.f32 %v1774, %v1985
    %v2004 = vmul.f32 %v1775, %v1986
    %v2005 = vmul.f32 %v1776, %v1984
    %v2006 = vmul.f32 %v1777, %v1985
    %v2007 = vmul.f32 %v1778, %v1986
    %v2008 = vmul.f32 %v1779, %v1984
    %v2009 = vmul.f32 %v1780, %v1985
    %v2010 = vmul.f32 %v1781, %v1986
    %v2011 = vmul.f32 %v1782, %v1984
    %v2012 = vmul.f32 %v1783, %v1985
    %v2013 = vmul.f32 %v1784, %v1986
    %v2014 = vmul.f32 %v1785, %v1984
    %v2015 = vmul.f32 %v1786, %v1985
    %v2016 = vmul.f32 %v1787, %v1986
    %v2017 = vmul.f32 %v1788, %v1984
    %v2018 = vmul.f32 %v1789, %v1985
    %v2019 = vmul.f32 %v1790, %v1986
    %v2020 = vmul.f32 %v1791, %v1984
    %v2021 = vmul.f32 %v1792, %v1985
    %v2022 = vmul.f32 %v1793, %v1986
    %v2023 = vmul.f32 %v1794, %v1984
    %v2024 = vmul.f32 %v1795, %v1985
    %v2025 = vmul.f32 %v1796, %v1986
    %v2026 = vmul.f32 %v1797, %v1984
    %v2027 = vmul.f32 %v1798, %v1985
    %v2028 = vmul.f32 %v1799, %v1986
    %v2029 = vmul.f32 %v1800, %v1984
    %v2030 = vmul.f32 %v1801, %v1985
    %v2031 = vmul.f32 %v1802, %v1986
    %v2032 = vmul.f32 %v1803, %v1984
    %v2033 = vmul.f32 %v1804, %v1985
    %v2034 = vmul.f32 %v1805, %v1986
    %v2035 = vmul.f32 %v1806, %v1984
    %v2036 = vmul.f32 %v1807, %v1985
    %v2037 = vmul.f32 %v1808, %v1986
    %v2038 = vmul.f32 %v1809, %v1984
    %v2039 = vmul.f32 %v1810, %v1985
    %v2040 = vmul.f32 %v1811, %v1986
    %v2041 = vmul.f32 %v1812, %v1984
    %v2042 = vmul.f32 %v1813, %v1985
    %v2043 = vmul.f32 %v1814, %v1986
    %v2044 = vmul.f32 %v1815, %v1984
    %v2045 = vmul.f32 %v1816, %v1985
    %v2046 = vmul.f32 %v1817, %v1986
    %v2047 = vmul.f32 %v1818, %v1984
    %v2048 = vmul.f32 %v1819, %v1985
    %v2049 = vmul.f32 %v1820, %v1986
    %v2051 = vperm.slane %v2001, 0
    %v2052 = vperm.slane %v2001, 1
    %v2053 = vperm.slane %v2001, 2
    %v2057 = vadd.f32 %v2002, %v2051
    %v2058 = vadd.f32 %v2003, %v2052
    %v2059 = vadd.f32 %v2004, %v2053
    %v2060 = vadd.f32 %v2005, %v2051
    %v2061 = vadd.f32 %v2006, %v2052
    %v2062 = vadd.f32 %v2007, %v2053
    %v2063 = vadd.f32 %v2008, %v2051
    %v2064 = vadd.f32 %v2009, %v2052
    %v2065 = vadd.f32 %v2010, %v2053
    %v2066 = vadd.f32 %v2011, %v2051
    %v2067 = vadd.f32 %v2012, %v2052
    %v2068 = vadd.f32 %v2013, %v2053
    %v2069 = vadd.f32 %v2014, %v2051
    %v2070 = vadd.f32 %v2015, %v2052
    %v2071 = vadd.f32 %v2016, %v2053
    %v2072 = vadd.f32 %v2017, %v2051
    %v2073 = vadd.f32 %v2018, %v2052
    %v2074 = vadd.f32 %v2019, %v2053
    %v2075 = vadd.f32 %v2020, %v2051
    %v2076 = vadd.f32 %v2021, %v2052
    %v2077 = vadd.f32 %v2022, %v2053
    %v2078 = vadd.f32 %v2023, %v2051
    %v2079 = vadd.f32 %v2024, %v2052
    %v2080 = vadd.f32 %v2025, %v2053
    %v2081 = vadd.f32 %v2026, %v2051
    %v2082 = vadd.f32 %v2027, %v2052
    %v2083 = vadd.f32 %v2028, %v2053
    %v2084 = vadd.f32 %v2029, %v2051
    %v2085 = vadd.f32 %v2030, %v2052
    %v2086 = vadd.f32 %v2031, %v2053
    %v2087 = vadd.f32 %v2032, %v2051
    %v2088 = vadd.f32 %v2033, %v2052
    %v2089 = vadd.f32 %v2034, %v2053
    %v2090 = vadd.f32 %v2035, %v2051
    %v2091 = vadd.f32 %v2036, %v2052
    %v2092 = vadd.f32 %v2037, %v2053
    %v2093 = vadd.f32 %v2038, %v2051
    %v2094 = vadd.f32 %v2039, %v2052
    %v2095 = vadd.f32 %v2040, %v2053
    %v2096 = vadd.f32 %v2041, %v2051
    %v2097 = vadd.f32 %v2042, %v2052
    %v2098 = vadd.f32 %v2043, %v2053
    %v2099 = vadd.f32 %v2044, %v2051
    %v2100 = vadd.f32 %v2045, %v2052
    %v2101 = vadd.f32 %v2046, %v2053
    %v2102 = vadd.f32 %v2047, %v2051
    %v2103 = vadd.f32 %v2048, %v2052
    %v2104 = vadd.f32 %v2049, %v2053
    %v2105 = vpack.c.bf16 %v2060, %v2057
    %v2106 = vpack.c.bf16 %v2061, %v2058
    %v2107 = vpack.c.bf16 %v2062, %v2059
    %v2108 = vpack.c.bf16 %v2066, %v2063
    %v2109 = vpack.c.bf16 %v2067, %v2064
    %v2110 = vpack.c.bf16 %v2068, %v2065
    %v2111 = vpack.c.bf16 %v2072, %v2069
    %v2112 = vpack.c.bf16 %v2073, %v2070
    %v2113 = vpack.c.bf16 %v2074, %v2071
    %v2114 = vpack.c.bf16 %v2078, %v2075
    %v2115 = vpack.c.bf16 %v2079, %v2076
    %v2116 = vpack.c.bf16 %v2080, %v2077
    %v2117 = vpack.c.bf16 %v2084, %v2081
    %v2118 = vpack.c.bf16 %v2085, %v2082
    %v2119 = vpack.c.bf16 %v2086, %v2083
    %v2120 = vpack.c.bf16 %v2090, %v2087
    %v2121 = vpack.c.bf16 %v2091, %v2088
    %v2122 = vpack.c.bf16 %v2092, %v2089
    %v2123 = vpack.c.bf16 %v2096, %v2093
    %v2124 = vpack.c.bf16 %v2097, %v2094
    %v2125 = vpack.c.bf16 %v2098, %v2095
    %v2126 = vpack.c.bf16 %v2102, %v2099
    %v2127 = vpack.c.bf16 %v2103, %v2100
    %v2128 = vpack.c.bf16 %v2104, %v2101
    %s2129 = scalar_lea.vmem [#allocation6], 576
    %v2130 = vld [vmem:[%s2129] sm:$0xff]
    %v2131 = vld [vmem:[%s2129 + $0x8] sm:$0xf]
    %v2132 = vld [vmem:[%s2129 + $0xc] sm:$0xff]
    %v2133 = vld [vmem:[%s2129 + $0x14] sm:$0xf]
    %v2134 = vld [vmem:[%s2129 + $0x18] sm:$0xff]
    %v2135 = vld [vmem:[%s2129 + $0x20] sm:$0xf]
    %v2136 = vld [vmem:[%s2129 + $0x24] sm:$0xff]
    %v2137 = vld [vmem:[%s2129 + $0x2c] sm:$0xf]
    %v2138 = vld [vmem:[%s2129 + $0x30] sm:$0xff]
    %v2139 = vld [vmem:[%s2129 + $0x38] sm:$0xf]
    %v2140 = vld [vmem:[%s2129 + $0x3c] sm:$0xff]
    %v2141 = vld [vmem:[%s2129 + $0x44] sm:$0xf]
    %v2142 = vld [vmem:[%s2129 + $0x48] sm:$0xff]
    %v2143 = vld [vmem:[%s2129 + $0x50] sm:$0xf]
    %v2144 = vld [vmem:[%s2129 + $0x54] sm:$0xff]
    %v2145 = vld [vmem:[%s2129 + $0x5c] sm:$0xf]
    %v2146 = vld [vmem:[%s2129 + $0x60] sm:$0xff]
    %v2147 = vld [vmem:[%s2129 + $0x68] sm:$0xf]
    %v2148 = vld [vmem:[%s2129 + $0x6c] sm:$0xff]
    %v2149 = vld [vmem:[%s2129 + $0x74] sm:$0xf]
    %v2150 = vld [vmem:[%s2129 + $0x78] sm:$0xff]
    %v2151 = vld [vmem:[%s2129 + $0x80] sm:$0xf]
    %v2152 = vld [vmem:[%s2129 + $0x84] sm:$0xff]
    %v2153 = vld [vmem:[%s2129 + $0x8c] sm:$0xf]
    %v2154 = vld [vmem:[%s2129 + $0x90] sm:$0xff]
    %v2155 = vld [vmem:[%s2129 + $0x98] sm:$0xf]
    %v2156 = vld [vmem:[%s2129 + $0x9c] sm:$0xff]
    %v2157 = vld [vmem:[%s2129 + $0xa4] sm:$0xf]
    %v2158 = vld [vmem:[%s2129 + $0xa8] sm:$0xff]
    %v2159 = vld [vmem:[%s2129 + $0xb0] sm:$0xf]
    %v2160 = vld [vmem:[%s2129 + $0xb4] sm:$0xff]
    %v2161 = vld [vmem:[%s2129 + $0xbc] sm:$0xf]
    %v2162 = vld [vmem:[%s2129 + $0xc0] sm:$0xff]
    %v2163 = vld [vmem:[%s2129 + $0xc8] sm:$0xf]
    %v2164 = vld [vmem:[%s2129 + $0xcc] sm:$0xff]
    %v2165 = vld [vmem:[%s2129 + $0xd4] sm:$0xf]
    %v2166 = vld [vmem:[%s2129 + $0xd8] sm:$0xff]
    %v2167 = vld [vmem:[%s2129 + $0xe0] sm:$0xf]
    %v2168 = vld [vmem:[%s2129 + $0xe4] sm:$0xff]
    %v2169 = vld [vmem:[%s2129 + $0xec] sm:$0xf]
    %v2170 = vld [vmem:[%s2129 + $0xf0] sm:$0xff]
    %v2171 = vld [vmem:[%s2129 + $0xf8] sm:$0xf]
    %v2172 = vld [vmem:[%s2129 + $0xfc] sm:$0xff]
    %v2173 = vld [vmem:[%s2129 + $0x104] sm:$0xf]
    %v2174 = vld [vmem:[%s2129 + $0x108] sm:$0xff]
    %v2175 = vld [vmem:[%s2129 + $0x110] sm:$0xf]
    %v2176 = vld [vmem:[%s2129 + $0x114] sm:$0xff]
    %v2177 = vld [vmem:[%s2129 + $0x11c] sm:$0xf]
    %v2178 = vld [vmem:[%s2129 + $0x120] sm:$0xff]
    %v2179 = vld [vmem:[%s2129 + $0x128] sm:$0xf]
    %v2180 = vld [vmem:[%s2129 + $0x12c] sm:$0xff]
    %v2181 = vld [vmem:[%s2129 + $0x134] sm:$0xf]
    %v2182 = vld [vmem:[%s2129 + $0x138] sm:$0xff]
    %v2183 = vld [vmem:[%s2129 + $0x140] sm:$0xf]
    %v2184 = vld [vmem:[%s2129 + $0x144] sm:$0xff]
    %v2185 = vld [vmem:[%s2129 + $0x14c] sm:$0xf]
    %v2186 = vld [vmem:[%s2129 + $0x150] sm:$0xff]
    %v2187 = vld [vmem:[%s2129 + $0x158] sm:$0xf]
    %v2188 = vld [vmem:[%s2129 + $0x15c] sm:$0xff]
    %v2189 = vld [vmem:[%s2129 + $0x164] sm:$0xf]
    %v2190 = vld [vmem:[%s2129 + $0x168] sm:$0xff]
    %v2191 = vld [vmem:[%s2129 + $0x170] sm:$0xf]
    %v2192 = vld [vmem:[%s2129 + $0x174] sm:$0xff]
    %v2193 = vld [vmem:[%s2129 + $0x17c] sm:$0xf]
    %v2194 = vld [vmem:[%s2129 + $0x180] sm:$0xff]
    %v2195 = vld [vmem:[%s2129 + $0x188] sm:$0xf]
    %v2196 = vld [vmem:[%s2129 + $0x18c] sm:$0xff]
    %v2197 = vld [vmem:[%s2129 + $0x194] sm:$0xf]
    %v2198 = vld [vmem:[%s2129 + $0x198] sm:$0xff]
    %v2199 = vld [vmem:[%s2129 + $0x1a0] sm:$0xf]
    %v2200 = vld [vmem:[%s2129 + $0x1a4] sm:$0xff]
    %v2201 = vld [vmem:[%s2129 + $0x1ac] sm:$0xf]
    %v2202 = vld [vmem:[%s2129 + $0x1b0] sm:$0xff]
    %v2203 = vld [vmem:[%s2129 + $0x1b8] sm:$0xf]
    %v2204 = vld [vmem:[%s2129 + $0x1bc] sm:$0xff]
    %v2205 = vld [vmem:[%s2129 + $0x1c4] sm:$0xf]
    %v2206 = vld [vmem:[%s2129 + $0x1c8] sm:$0xff]
    %v2207 = vld [vmem:[%s2129 + $0x1d0] sm:$0xf]
    %v2208 = vld [vmem:[%s2129 + $0x1d4] sm:$0xff]
    %v2209 = vld [vmem:[%s2129 + $0x1dc] sm:$0xf]
    %v2210 = vld [vmem:[%s2129 + $0x1e0] sm:$0xff]
    %v2211 = vld [vmem:[%s2129 + $0x1e8] sm:$0xf]
    %v2212 = vld [vmem:[%s2129 + $0x1ec] sm:$0xff]
    %v2213 = vld [vmem:[%s2129 + $0x1f4] sm:$0xf]
    %v2214 = vld [vmem:[%s2129 + $0x1f8] sm:$0xff]
    %v2215 = vld [vmem:[%s2129 + $0x200] sm:$0xf]
    %v2216 = vld [vmem:[%s2129 + $0x204] sm:$0xff]
    %v2217 = vld [vmem:[%s2129 + $0x20c] sm:$0xf]
    %v2218 = vld [vmem:[%s2129 + $0x210] sm:$0xff]
    %v2219 = vld [vmem:[%s2129 + $0x218] sm:$0xf]
    %v2220 = vld [vmem:[%s2129 + $0x21c] sm:$0xff]
    %v2221 = vld [vmem:[%s2129 + $0x224] sm:$0xf]
    %v2222 = vld [vmem:[%s2129 + $0x228] sm:$0xff]
    %v2223 = vld [vmem:[%s2129 + $0x230] sm:$0xf]
    %v2224 = vld [vmem:[%s2129 + $0x234] sm:$0xff]
    %v2225 = vld [vmem:[%s2129 + $0x23c] sm:$0xf]
    %v2322 = vunpack.c.l.b16 %v2130
    %v2323 = vunpack.c.h.b16 %v2130
    %v2324 = vunpack.c.l.b16 %v2131
    %v2325 = vunpack.c.l.b16 %v2132
    %v2326 = vunpack.c.h.b16 %v2132
    %v2327 = vunpack.c.l.b16 %v2133
    %v2328 = vunpack.c.l.b16 %v2134
    %v2329 = vunpack.c.h.b16 %v2134
    %v2330 = vunpack.c.l.b16 %v2135
    %v2331 = vunpack.c.l.b16 %v2136
    %v2332 = vunpack.c.h.b16 %v2136
    %v2333 = vunpack.c.l.b16 %v2137
    %v2334 = vunpack.c.l.b16 %v2138
    %v2335 = vunpack.c.h.b16 %v2138
    %v2336 = vunpack.c.l.b16 %v2139
    %v2337 = vunpack.c.l.b16 %v2140
    %v2338 = vunpack.c.h.b16 %v2140
    %v2339 = vunpack.c.l.b16 %v2141
    %v2340 = vunpack.c.l.b16 %v2142
    %v2341 = vunpack.c.h.b16 %v2142
    %v2342 = vunpack.c.l.b16 %v2143
    %v2343 = vunpack.c.l.b16 %v2144
    %v2344 = vunpack.c.h.b16 %v2144
    %v2345 = vunpack.c.l.b16 %v2145
    %v2346 = vunpack.c.l.b16 %v2146
    %v2347 = vunpack.c.h.b16 %v2146
    %v2348 = vunpack.c.l.b16 %v2147
    %v2349 = vunpack.c.l.b16 %v2148
    %v2350 = vunpack.c.h.b16 %v2148
    %v2351 = vunpack.c.l.b16 %v2149
    %v2352 = vunpack.c.l.b16 %v2150
    %v2353 = vunpack.c.h.b16 %v2150
    %v2354 = vunpack.c.l.b16 %v2151
    %v2355 = vunpack.c.l.b16 %v2152
    %v2356 = vunpack.c.h.b16 %v2152
    %v2357 = vunpack.c.l.b16 %v2153
    %v2358 = vunpack.c.l.b16 %v2154
    %v2359 = vunpack.c.h.b16 %v2154
    %v2360 = vunpack.c.l.b16 %v2155
    %v2361 = vunpack.c.l.b16 %v2156
    %v2362 = vunpack.c.h.b16 %v2156
    %v2363 = vunpack.c.l.b16 %v2157
    %v2364 = vunpack.c.l.b16 %v2158
    %v2365 = vunpack.c.h.b16 %v2158
    %v2366 = vunpack.c.l.b16 %v2159
    %v2367 = vunpack.c.l.b16 %v2160
    %v2368 = vunpack.c.h.b16 %v2160
    %v2369 = vunpack.c.l.b16 %v2161
    %v2370 = vunpack.c.l.b16 %v2162
    %v2371 = vunpack.c.h.b16 %v2162
    %v2372 = vunpack.c.l.b16 %v2163
    %v2373 = vunpack.c.l.b16 %v2164
    %v2374 = vunpack.c.h.b16 %v2164
    %v2375 = vunpack.c.l.b16 %v2165
    %v2376 = vunpack.c.l.b16 %v2166
    %v2377 = vunpack.c.h.b16 %v2166
    %v2378 = vunpack.c.l.b16 %v2167
    %v2379 = vunpack.c.l.b16 %v2168
    %v2380 = vunpack.c.h.b16 %v2168
    %v2381 = vunpack.c.l.b16 %v2169
    %v2382 = vunpack.c.l.b16 %v2170
    %v2383 = vunpack.c.h.b16 %v2170
    %v2384 = vunpack.c.l.b16 %v2171
    %v2385 = vunpack.c.l.b16 %v2172
    %v2386 = vunpack.c.h.b16 %v2172
    %v2387 = vunpack.c.l.b16 %v2173
    %v2388 = vunpack.c.l.b16 %v2174
    %v2389 = vunpack.c.h.b16 %v2174
    %v2390 = vunpack.c.l.b16 %v2175
    %v2391 = vunpack.c.l.b16 %v2176
    %v2392 = vunpack.c.h.b16 %v2176
    %v2393 = vunpack.c.l.b16 %v2177
    %v2394 = vunpack.c.l.b16 %v2178
    %v2395 = vunpack.c.h.b16 %v2178
    %v2396 = vunpack.c.l.b16 %v2179
    %v2397 = vunpack.c.l.b16 %v2180
    %v2398 = vunpack.c.h.b16 %v2180
    %v2399 = vunpack.c.l.b16 %v2181
    %v2400 = vunpack.c.l.b16 %v2182
    %v2401 = vunpack.c.h.b16 %v2182
    %v2402 = vunpack.c.l.b16 %v2183
    %v2403 = vunpack.c.l.b16 %v2184
    %v2404 = vunpack.c.h.b16 %v2184
    %v2405 = vunpack.c.l.b16 %v2185
    %v2406 = vunpack.c.l.b16 %v2186
    %v2407 = vunpack.c.h.b16 %v2186
    %v2408 = vunpack.c.l.b16 %v2187
    %v2409 = vunpack.c.l.b16 %v2188
    %v2410 = vunpack.c.h.b16 %v2188
    %v2411 = vunpack.c.l.b16 %v2189
    %v2412 = vunpack.c.l.b16 %v2190
    %v2413 = vunpack.c.h.b16 %v2190
    %v2414 = vunpack.c.l.b16 %v2191
    %v2415 = vunpack.c.l.b16 %v2192
    %v2416 = vunpack.c.h.b16 %v2192
    %v2417 = vunpack.c.l.b16 %v2193
    %v2418 = vunpack.c.l.b16 %v2194
    %v2419 = vunpack.c.h.b16 %v2194
    %v2420 = vunpack.c.l.b16 %v2195
    %v2421 = vunpack.c.l.b16 %v2196
    %v2422 = vunpack.c.h.b16 %v2196
    %v2423 = vunpack.c.l.b16 %v2197
    %v2424 = vunpack.c.l.b16 %v2198
    %v2425 = vunpack.c.h.b16 %v2198
    %v2426 = vunpack.c.l.b16 %v2199
    %v2427 = vunpack.c.l.b16 %v2200
    %v2428 = vunpack.c.h.b16 %v2200
    %v2429 = vunpack.c.l.b16 %v2201
    %v2430 = vunpack.c.l.b16 %v2202
    %v2431 = vunpack.c.h.b16 %v2202
    %v2432 = vunpack.c.l.b16 %v2203
    %v2433 = vunpack.c.l.b16 %v2204
    %v2434 = vunpack.c.h.b16 %v2204
    %v2435 = vunpack.c.l.b16 %v2205
    %v2436 = vunpack.c.l.b16 %v2206
    %v2437 = vunpack.c.h.b16 %v2206
    %v2438 = vunpack.c.l.b16 %v2207
    %v2439 = vunpack.c.l.b16 %v2208
    %v2440 = vunpack.c.h.b16 %v2208
    %v2441 = vunpack.c.l.b16 %v2209
    %v2442 = vunpack.c.l.b16 %v2210
    %v2443 = vunpack.c.h.b16 %v2210
    %v2444 = vunpack.c.l.b16 %v2211
    %v2445 = vunpack.c.l.b16 %v2212
    %v2446 = vunpack.c.h.b16 %v2212
    %v2447 = vunpack.c.l.b16 %v2213
    %v2448 = vunpack.c.l.b16 %v2214
    %v2449 = vunpack.c.h.b16 %v2214
    %v2450 = vunpack.c.l.b16 %v2215
    %v2451 = vunpack.c.l.b16 %v2216
    %v2452 = vunpack.c.h.b16 %v2216
    %v2453 = vunpack.c.l.b16 %v2217
    %v2454 = vunpack.c.l.b16 %v2218
    %v2455 = vunpack.c.h.b16 %v2218
    %v2456 = vunpack.c.l.b16 %v2219
    %v2457 = vunpack.c.l.b16 %v2220
    %v2458 = vunpack.c.h.b16 %v2220
    %v2459 = vunpack.c.l.b16 %v2221
    %v2460 = vunpack.c.l.b16 %v2222
    %v2461 = vunpack.c.h.b16 %v2222
    %v2462 = vunpack.c.l.b16 %v2223
    %v2463 = vunpack.c.l.b16 %v2224
    %v2464 = vunpack.c.h.b16 %v2224
    %v2465 = vunpack.c.l.b16 %v2225
    %v2466 = vpack.c.b16 %v2325, %v2322
    %v2467 = vpack.c.b16 %v2326, %v2323
    %v2468 = vpack.c.b16 %v2327, %v2324
    %v2469 = vpack.c.b16 %v2331, %v2328
    %v2470 = vpack.c.b16 %v2332, %v2329
    %v2471 = vpack.c.b16 %v2333, %v2330
    %v2472 = vpack.c.b16 %v2337, %v2334
    %v2473 = vpack.c.b16 %v2338, %v2335
    %v2474 = vpack.c.b16 %v2339, %v2336
    %v2475 = vpack.c.b16 %v2343, %v2340
    %v2476 = vpack.c.b16 %v2344, %v2341
    %v2477 = vpack.c.b16 %v2345, %v2342
    %v2478 = vpack.c.b16 %v2349, %v2346
    %v2479 = vpack.c.b16 %v2350, %v2347
    %v2480 = vpack.c.b16 %v2351, %v2348
    %v2481 = vpack.c.b16 %v2355, %v2352
    %v2482 = vpack.c.b16 %v2356, %v2353
    %v2483 = vpack.c.b16 %v2357, %v2354
    %v2484 = vpack.c.b16 %v2361, %v2358
    %v2485 = vpack.c.b16 %v2362, %v2359
    %v2486 = vpack.c.b16 %v2363, %v2360
    %v2487 = vpack.c.b16 %v2367, %v2364
    %v2488 = vpack.c.b16 %v2368, %v2365
    %v2489 = vpack.c.b16 %v2369, %v2366
    %v2490 = vpack.c.b16 %v2373, %v2370
    %v2491 = vpack.c.b16 %v2374, %v2371
    %v2492 = vpack.c.b16 %v2375, %v2372
    %v2493 = vpack.c.b16 %v2379, %v2376
    %v2494 = vpack.c.b16 %v2380, %v2377
    %v2495 = vpack.c.b16 %v2381, %v2378
    %v2496 = vpack.c.b16 %v2385, %v2382
    %v2497 = vpack.c.b16 %v2386, %v2383
    %v2498 = vpack.c.b16 %v2387, %v2384
    %v2499 = vpack.c.b16 %v2391, %v2388
    %v2500 = vpack.c.b16 %v2392, %v2389
    %v2501 = vpack.c.b16 %v2393, %v2390
    %v2502 = vpack.c.b16 %v2397, %v2394
    %v2503 = vpack.c.b16 %v2398, %v2395
    %v2504 = vpack.c.b16 %v2399, %v2396
    %v2505 = vpack.c.b16 %v2403, %v2400
    %v2506 = vpack.c.b16 %v2404, %v2401
    %v2507 = vpack.c.b16 %v2405, %v2402
    %v2508 = vpack.c.b16 %v2409, %v2406
    %v2509 = vpack.c.b16 %v2410, %v2407
    %v2510 = vpack.c.b16 %v2411, %v2408
    %v2511 = vpack.c.b16 %v2415, %v2412
    %v2512 = vpack.c.b16 %v2416, %v2413
    %v2513 = vpack.c.b16 %v2417, %v2414
    %v2514 = vpack.c.b16 %v2421, %v2418
    %v2515 = vpack.c.b16 %v2422, %v2419
    %v2516 = vpack.c.b16 %v2423, %v2420
    %v2517 = vpack.c.b16 %v2427, %v2424
    %v2518 = vpack.c.b16 %v2428, %v2425
    %v2519 = vpack.c.b16 %v2429, %v2426
    %v2520 = vpack.c.b16 %v2433, %v2430
    %v2521 = vpack.c.b16 %v2434, %v2431
    %v2522 = vpack.c.b16 %v2435, %v2432
    %v2523 = vpack.c.b16 %v2439, %v2436
    %v2524 = vpack.c.b16 %v2440, %v2437
    %v2525 = vpack.c.b16 %v2441, %v2438
    %v2526 = vpack.c.b16 %v2445, %v2442
    %v2527 = vpack.c.b16 %v2446, %v2443
    %v2528 = vpack.c.b16 %v2447, %v2444
    %v2529 = vpack.c.b16 %v2451, %v2448
    %v2530 = vpack.c.b16 %v2452, %v2449
    %v2531 = vpack.c.b16 %v2453, %v2450
    %v2532 = vpack.c.b16 %v2457, %v2454
    %v2533 = vpack.c.b16 %v2458, %v2455
    %v2534 = vpack.c.b16 %v2459, %v2456
    %v2535 = vpack.c.b16 %v2463, %v2460
    %v2536 = vpack.c.b16 %v2464, %v2461
    %v2537 = vpack.c.b16 %v2465, %v2462
    %2610 = vmatpush.bf16.msra.mxu0 %v2487
    %2611 = vmatpush.bf16.msra.mxu0 %v2484
    %2612 = vmatpush.bf16.msra.mxu0 %v2481
    %2613 = vmatpush.bf16.msra.mxu0 %v2478
    %2614 = vmatpush.bf16.msra.mxu0 %v2475
    %2615 = vmatpush.bf16.msra.mxu0 %v2472
    %2616 = vmatpush.bf16.msra.mxu0 %v2469
    %2617 = vmatpush.bf16.msra.mxu0 %v2466
    %2618 = vmatmul.bf16.gmra.mxu0 %v2105
    %v2619 = vpop.f32.mrf.mxu0
    %v2620 = vadd.f32 0.0, %v2619
    %v2621 = vpop.f32.mrf.mxu0
    %v2622 = vadd.f32 0.0, %v2621
    %2623 = vmatmul.bf16.gmra.mxu0 %v2108
    %v2624 = vpop.f32.mrf.mxu0
    %v2625 = vadd.f32 0.0, %v2624
    %v2626 = vpop.f32.mrf.mxu0
    %v2627 = vadd.f32 0.0, %v2626
    %2628 = vmatmul.bf16.gmra.mxu0 %v2111
    %v2629 = vpop.f32.mrf.mxu0
    %v2630 = vadd.f32 0.0, %v2629
    %v2631 = vpop.f32.mrf.mxu0
    %v2632 = vadd.f32 0.0, %v2631
    %2633 = vmatmul.bf16.gmra.mxu0 %v2114
    %v2634 = vpop.f32.mrf.mxu0
    %v2635 = vadd.f32 0.0, %v2634
    %v2636 = vpop.f32.mrf.mxu0
    %v2637 = vadd.f32 0.0, %v2636
    %2638 = vmatmul.bf16.gmra.mxu0 %v2117
    %v2639 = vpop.f32.mrf.mxu0
    %v2640 = vadd.f32 0.0, %v2639
    %v2641 = vpop.f32.mrf.mxu0
    %v2642 = vadd.f32 0.0, %v2641
    %2643 = vmatmul.bf16.gmra.mxu0 %v2120
    %v2644 = vpop.f32.mrf.mxu0
    %v2645 = vadd.f32 0.0, %v2644
    %v2646 = vpop.f32.mrf.mxu0
    %v2647 = vadd.f32 0.0, %v2646
    %2648 = vmatmul.bf16.gmra.mxu0 %v2123
    %v2649 = vpop.f32.mrf.mxu0
    %v2650 = vadd.f32 0.0, %v2649
    %v2651 = vpop.f32.mrf.mxu0
    %v2652 = vadd.f32 0.0, %v2651
    %2653 = vmatmul.bf16.gmra.mxu0 %v2126
    %v2654 = vpop.f32.mrf.mxu0
    %v2655 = vadd.f32 0.0, %v2654
    %v2656 = vpop.f32.mrf.mxu0
    %v2657 = vadd.f32 0.0, %v2656
    %2658 = vdwg.mxu0
    %2659 = vmatpush.bf16.msra.mxu0 %v2511
    %2660 = vmatpush.bf16.msra.mxu0 %v2508
    %2661 = vmatpush.bf16.msra.mxu0 %v2505
    %2662 = vmatpush.bf16.msra.mxu0 %v2502
    %2663 = vmatpush.bf16.msra.mxu0 %v2499
    %2664 = vmatpush.bf16.msra.mxu0 %v2496
    %2665 = vmatpush.bf16.msra.mxu0 %v2493
    %2666 = vmatpush.bf16.msra.mxu0 %v2490
    %2667 = vmatmul.bf16.gmra.mxu0 %v2106
    %v2668 = vpop.f32.mrf.mxu0
    %v2669 = vadd.f32 %v2620, %v2668
    %v2670 = vpop.f32.mrf.mxu0
    %v2671 = vadd.f32 %v2622, %v2670
    %2672 = vmatmul.bf16.gmra.mxu0 %v2109
    %v2673 = vpop.f32.mrf.mxu0
    %v2674 = vadd.f32 %v2625, %v2673
    %v2675 = vpop.f32.mrf.mxu0
    %v2676 = vadd.f32 %v2627, %v2675
    %2677 = vmatmul.bf16.gmra.mxu0 %v2112
    %v2678 = vpop.f32.mrf.mxu0
    %v2679 = vadd.f32 %v2630, %v2678
    %v2680 = vpop.f32.mrf.mxu0
    %v2681 = vadd.f32 %v2632, %v2680
    %2682 = vmatmul.bf16.gmra.mxu0 %v2115
    %v2683 = vpop.f32.mrf.mxu0
    %v2684 = vadd.f32 %v2635, %v2683
    %v2685 = vpop.f32.mrf.mxu0
    %v2686 = vadd.f32 %v2637, %v2685
    %2687 = vmatmul.bf16.gmra.mxu0 %v2118
    %v2688 = vpop.f32.mrf.mxu0
    %v2689 = vadd.f32 %v2640, %v2688
    %v2690 = vpop.f32.mrf.mxu0
    %v2691 = vadd.f32 %v2642, %v2690
    %2692 = vmatmul.bf16.gmra.mxu0 %v2121
    %v2693 = vpop.f32.mrf.mxu0
    %v2694 = vadd.f32 %v2645, %v2693
    %v2695 = vpop.f32.mrf.mxu0
    %v2696 = vadd.f32 %v2647, %v2695
    %2697 = vmatmul.bf16.gmra.mxu0 %v2124
    %v2698 = vpop.f32.mrf.mxu0
    %v2699 = vadd.f32 %v2650, %v2698
    %v2700 = vpop.f32.mrf.mxu0
    %v2701 = vadd.f32 %v2652, %v2700
    %2702 = vmatmul.bf16.gmra.mxu0 %v2127
    %v2703 = vpop.f32.mrf.mxu0
    %v2704 = vadd.f32 %v2655, %v2703
    %v2705 = vpop.f32.mrf.mxu0
    %v2706 = vadd.f32 %v2657, %v2705
    %2707 = vdwg.mxu0
    %2708 = vmatpush.bf16.msra.mxu0 %v2535
    %2709 = vmatpush.bf16.msra.mxu0 %v2532
    %2710 = vmatpush.bf16.msra.mxu0 %v2529
    %2711 = vmatpush.bf16.msra.mxu0 %v2526
    %2712 = vmatpush.bf16.msra.mxu0 %v2523
    %2713 = vmatpush.bf16.msra.mxu0 %v2520
    %2714 = vmatpush.bf16.msra.mxu0 %v2517
    %2715 = vmatpush.bf16.msra.mxu0 %v2514
    %2716 = vmatmul.bf16.gmra.mxu0 %v2107
    %v2717 = vpop.f32.mrf.mxu0
    %v2718 = vadd.f32 %v2669, %v2717
    %v2719 = vpop.f32.mrf.mxu0
    %v2720 = vadd.f32 %v2671, %v2719
    %2721 = vmatmul.bf16.gmra.mxu0 %v2110
    %v2722 = vpop.f32.mrf.mxu0
    %v2723 = vadd.f32 %v2674, %v2722
    %v2724 = vpop.f32.mrf.mxu0
    %v2725 = vadd.f32 %v2676, %v2724
    %2726 = vmatmul.bf16.gmra.mxu0 %v2113
    %v2727 = vpop.f32.mrf.mxu0
    %v2728 = vadd.f32 %v2679, %v2727
    %v2729 = vpop.f32.mrf.mxu0
    %v2730 = vadd.f32 %v2681, %v2729
    %2731 = vmatmul.bf16.gmra.mxu0 %v2116
    %v2732 = vpop.f32.mrf.mxu0
    %v2733 = vadd.f32 %v2684, %v2732
    %v2734 = vpop.f32.mrf.mxu0
    %v2735 = vadd.f32 %v2686, %v2734
    %2736 = vmatmul.bf16.gmra.mxu0 %v2119
    %v2737 = vpop.f32.mrf.mxu0
    %v2738 = vadd.f32 %v2689, %v2737
    %v2739 = vpop.f32.mrf.mxu0
    %v2740 = vadd.f32 %v2691, %v2739
    %2741 = vmatmul.bf16.gmra.mxu0 %v2122
    %v2742 = vpop.f32.mrf.mxu0
    %v2743 = vadd.f32 %v2694, %v2742
    %v2744 = vpop.f32.mrf.mxu0
    %v2745 = vadd.f32 %v2696, %v2744
    %2746 = vmatmul.bf16.gmra.mxu0 %v2125
    %v2747 = vpop.f32.mrf.mxu0
    %v2748 = vadd.f32 %v2699, %v2747
    %v2749 = vpop.f32.mrf.mxu0
    %v2750 = vadd.f32 %v2701, %v2749
    %2751 = vmatmul.bf16.gmra.mxu0 %v2128
    %v2752 = vpop.f32.mrf.mxu0
    %v2753 = vadd.f32 %v2704, %v2752
    %v2754 = vpop.f32.mrf.mxu0
    %v2755 = vadd.f32 %v2706, %v2754
    %2756 = vdwg.mxu0
    %2757 = vmatpush.bf16.msra.mxu0 %v2488
    %2758 = vmatpush.bf16.msra.mxu0 %v2485
    %2759 = vmatpush.bf16.msra.mxu0 %v2482
    %2760 = vmatpush.bf16.msra.mxu0 %v2479
    %2761 = vmatpush.bf16.msra.mxu0 %v2476
    %2762 = vmatpush.bf16.msra.mxu0 %v2473
    %2763 = vmatpush.bf16.msra.mxu0 %v2470
    %2764 = vmatpush.bf16.msra.mxu0 %v2467
    %2765 = vmatmul.bf16.gmra.mxu0 %v2105
    %v2766 = vpop.f32.mrf.mxu0
    %v2767 = vadd.f32 0.0, %v2766
    %v2768 = vpop.f32.mrf.mxu0
    %v2769 = vadd.f32 0.0, %v2768
    %2770 = vmatmul.bf16.gmra.mxu0 %v2108
    %v2771 = vpop.f32.mrf.mxu0
    %v2772 = vadd.f32 0.0, %v2771
    %v2773 = vpop.f32.mrf.mxu0
    %v2774 = vadd.f32 0.0, %v2773
    %2775 = vmatmul.bf16.gmra.mxu0 %v2111
    %v2776 = vpop.f32.mrf.mxu0
    %v2777 = vadd.f32 0.0, %v2776
    %v2778 = vpop.f32.mrf.mxu0
    %v2779 = vadd.f32 0.0, %v2778
    %2780 = vmatmul.bf16.gmra.mxu0 %v2114
    %v2781 = vpop.f32.mrf.mxu0
    %v2782 = vadd.f32 0.0, %v2781
    %v2783 = vpop.f32.mrf.mxu0
    %v2784 = vadd.f32 0.0, %v2783
    %2785 = vmatmul.bf16.gmra.mxu0 %v2117
    %v2786 = vpop.f32.mrf.mxu0
    %v2787 = vadd.f32 0.0, %v2786
    %v2788 = vpop.f32.mrf.mxu0
    %v2789 = vadd.f32 0.0, %v2788
    %2790 = vmatmul.bf16.gmra.mxu0 %v2120
    %v2791 = vpop.f32.mrf.mxu0
    %v2792 = vadd.f32 0.0, %v2791
    %v2793 = vpop.f32.mrf.mxu0
    %v2794 = vadd.f32 0.0, %v2793
    %2795 = vmatmul.bf16.gmra.mxu0 %v2123
    %v2796 = vpop.f32.mrf.mxu0
    %v2797 = vadd.f32 0.0, %v2796
    %v2798 = vpop.f32.mrf.mxu0
    %v2799 = vadd.f32 0.0, %v2798
    %2800 = vmatmul.bf16.gmra.mxu0 %v2126
    %v2801 = vpop.f32.mrf.mxu0
    %v2802 = vadd.f32 0.0, %v2801
    %v2803 = vpop.f32.mrf.mxu0
    %v2804 = vadd.f32 0.0, %v2803
    %2805 = vdwg.mxu0
    %2806 = vmatpush.bf16.msra.mxu0 %v2512
    %2807 = vmatpush.bf16.msra.mxu0 %v2509
    %2808 = vmatpush.bf16.msra.mxu0 %v2506
    %2809 = vmatpush.bf16.msra.mxu0 %v2503
    %2810 = vmatpush.bf16.msra.mxu0 %v2500
    %2811 = vmatpush.bf16.msra.mxu0 %v2497
    %2812 = vmatpush.bf16.msra.mxu0 %v2494
    %2813 = vmatpush.bf16.msra.mxu0 %v2491
    %2814 = vmatmul.bf16.gmra.mxu0 %v2106
    %v2815 = vpop.f32.mrf.mxu0
    %v2816 = vadd.f32 %v2767, %v2815
    %v2817 = vpop.f32.mrf.mxu0
    %v2818 = vadd.f32 %v2769, %v2817
    %2819 = vmatmul.bf16.gmra.mxu0 %v2109
    %v2820 = vpop.f32.mrf.mxu0
    %v2821 = vadd.f32 %v2772, %v2820
    %v2822 = vpop.f32.mrf.mxu0
    %v2823 = vadd.f32 %v2774, %v2822
    %2824 = vmatmul.bf16.gmra.mxu0 %v2112
    %v2825 = vpop.f32.mrf.mxu0
    %v2826 = vadd.f32 %v2777, %v2825
    %v2827 = vpop.f32.mrf.mxu0
    %v2828 = vadd.f32 %v2779, %v2827
    %2829 = vmatmul.bf16.gmra.mxu0 %v2115
    %v2830 = vpop.f32.mrf.mxu0
    %v2831 = vadd.f32 %v2782, %v2830
    %v2832 = vpop.f32.mrf.mxu0
    %v2833 = vadd.f32 %v2784, %v2832
    %2834 = vmatmul.bf16.gmra.mxu0 %v2118
    %v2835 = vpop.f32.mrf.mxu0
    %v2836 = vadd.f32 %v2787, %v2835
    %v2837 = vpop.f32.mrf.mxu0
    %v2838 = vadd.f32 %v2789, %v2837
    %2839 = vmatmul.bf16.gmra.mxu0 %v2121
    %v2840 = vpop.f32.mrf.mxu0
    %v2841 = vadd.f32 %v2792, %v2840
    %v2842 = vpop.f32.mrf.mxu0
    %v2843 = vadd.f32 %v2794, %v2842
    %2844 = vmatmul.bf16.gmra.mxu0 %v2124
    %v2845 = vpop.f32.mrf.mxu0
    %v2846 = vadd.f32 %v2797, %v2845
    %v2847 = vpop.f32.mrf.mxu0
    %v2848 = vadd.f32 %v2799, %v2847
    %2849 = vmatmul.bf16.gmra.mxu0 %v2127
    %v2850 = vpop.f32.mrf.mxu0
    %v2851 = vadd.f32 %v2802, %v2850
    %v2852 = vpop.f32.mrf.mxu0
    %v2853 = vadd.f32 %v2804, %v2852
    %2854 = vdwg.mxu0
    %2855 = vmatpush.bf16.msra.mxu0 %v2536
    %2856 = vmatpush.bf16.msra.mxu0 %v2533
    %2857 = vmatpush.bf16.msra.mxu0 %v2530
    %2858 = vmatpush.bf16.msra.mxu0 %v2527
    %2859 = vmatpush.bf16.msra.mxu0 %v2524
    %2860 = vmatpush.bf16.msra.mxu0 %v2521
    %2861 = vmatpush.bf16.msra.mxu0 %v2518
    %2862 = vmatpush.bf16.msra.mxu0 %v2515
    %2863 = vmatmul.bf16.gmra.mxu0 %v2107
    %v2864 = vpop.f32.mrf.mxu0
    %v2865 = vadd.f32 %v2816, %v2864
    %v2866 = vpop.f32.mrf.mxu0
    %v2867 = vadd.f32 %v2818, %v2866
    %2868 = vmatmul.bf16.gmra.mxu0 %v2110
    %v2869 = vpop.f32.mrf.mxu0
    %v2870 = vadd.f32 %v2821, %v2869
    %v2871 = vpop.f32.mrf.mxu0
    %v2872 = vadd.f32 %v2823, %v2871
    %2873 = vmatmul.bf16.gmra.mxu0 %v2113
    %v2874 = vpop.f32.mrf.mxu0
    %v2875 = vadd.f32 %v2826, %v2874
    %v2876 = vpop.f32.mrf.mxu0
    %v2877 = vadd.f32 %v2828, %v2876
    %2878 = vmatmul.bf16.gmra.mxu0 %v2116
    %v2879 = vpop.f32.mrf.mxu0
    %v2880 = vadd.f32 %v2831, %v2879
    %v2881 = vpop.f32.mrf.mxu0
    %v2882 = vadd.f32 %v2833, %v2881
    %2883 = vmatmul.bf16.gmra.mxu0 %v2119
    %v2884 = vpop.f32.mrf.mxu0
    %v2885 = vadd.f32 %v2836, %v2884
    %v2886 = vpop.f32.mrf.mxu0
    %v2887 = vadd.f32 %v2838, %v2886
    %2888 = vmatmul.bf16.gmra.mxu0 %v2122
    %v2889 = vpop.f32.mrf.mxu0
    %v2890 = vadd.f32 %v2841, %v2889
    %v2891 = vpop.f32.mrf.mxu0
    %v2892 = vadd.f32 %v2843, %v2891
    %2893 = vmatmul.bf16.gmra.mxu0 %v2125
    %v2894 = vpop.f32.mrf.mxu0
    %v2895 = vadd.f32 %v2846, %v2894
    %v2896 = vpop.f32.mrf.mxu0
    %v2897 = vadd.f32 %v2848, %v2896
    %2898 = vmatmul.bf16.gmra.mxu0 %v2128
    %v2899 = vpop.f32.mrf.mxu0
    %v2900 = vadd.f32 %v2851, %v2899
    %v2901 = vpop.f32.mrf.mxu0
    %v2902 = vadd.f32 %v2853, %v2901
    %2903 = vdwg.mxu0
    %2904 = vmatpush.bf16.msra.mxu0 %v2489
    %2905 = vmatpush.bf16.msra.mxu0 %v2486
    %2906 = vmatpush.bf16.msra.mxu0 %v2483
    %2907 = vmatpush.bf16.msra.mxu0 %v2480
    %2908 = vmatpush.bf16.msra.mxu0 %v2477
    %2909 = vmatpush.bf16.msra.mxu0 %v2474
    %2910 = vmatpush.bf16.msra.mxu0 %v2471
    %2911 = vmatpush.bf16.msra.mxu0 %v2468
    %2912 = vmatmul.bf16.gmra.mxu0 %v2105
    %v2913 = vpop.f32.mrf.mxu0
    %v2914 = vadd.f32 0.0, %v2913
    %v2915 = vpop.f32.mrf.mxu0
    %v2916 = vadd.f32 0.0, %v2915
    %2917 = vmatmul.bf16.gmra.mxu0 %v2108
    %v2918 = vpop.f32.mrf.mxu0
    %v2919 = vadd.f32 0.0, %v2918
    %v2920 = vpop.f32.mrf.mxu0
    %v2921 = vadd.f32 0.0, %v2920
    %2922 = vmatmul.bf16.gmra.mxu0 %v2111
    %v2923 = vpop.f32.mrf.mxu0
    %v2924 = vadd.f32 0.0, %v2923
    %v2925 = vpop.f32.mrf.mxu0
    %v2926 = vadd.f32 0.0, %v2925
    %2927 = vmatmul.bf16.gmra.mxu0 %v2114
    %v2928 = vpop.f32.mrf.mxu0
    %v2929 = vadd.f32 0.0, %v2928
    %v2930 = vpop.f32.mrf.mxu0
    %v2931 = vadd.f32 0.0, %v2930
    %2932 = vmatmul.bf16.gmra.mxu0 %v2117
    %v2933 = vpop.f32.mrf.mxu0
    %v2934 = vadd.f32 0.0, %v2933
    %v2935 = vpop.f32.mrf.mxu0
    %v2936 = vadd.f32 0.0, %v2935
    %2937 = vmatmul.bf16.gmra.mxu0 %v2120
    %v2938 = vpop.f32.mrf.mxu0
    %v2939 = vadd.f32 0.0, %v2938
    %v2940 = vpop.f32.mrf.mxu0
    %v2941 = vadd.f32 0.0, %v2940
    %2942 = vmatmul.bf16.gmra.mxu0 %v2123
    %v2943 = vpop.f32.mrf.mxu0
    %v2944 = vadd.f32 0.0, %v2943
    %v2945 = vpop.f32.mrf.mxu0
    %v2946 = vadd.f32 0.0, %v2945
    %2947 = vmatmul.bf16.gmra.mxu0 %v2126
    %v2948 = vpop.f32.mrf.mxu0
    %v2949 = vadd.f32 0.0, %v2948
    %v2950 = vpop.f32.mrf.mxu0
    %v2951 = vadd.f32 0.0, %v2950
    %2952 = vdwg.mxu0
    %2953 = vmatpush.bf16.msra.mxu0 %v2513
    %2954 = vmatpush.bf16.msra.mxu0 %v2510
    %2955 = vmatpush.bf16.msra.mxu0 %v2507
    %2956 = vmatpush.bf16.msra.mxu0 %v2504
    %2957 = vmatpush.bf16.msra.mxu0 %v2501
    %2958 = vmatpush.bf16.msra.mxu0 %v2498
    %2959 = vmatpush.bf16.msra.mxu0 %v2495
    %2960 = vmatpush.bf16.msra.mxu0 %v2492
    %2961 = vmatmul.bf16.gmra.mxu0 %v2106
    %v2962 = vpop.f32.mrf.mxu0
    %v2963 = vadd.f32 %v2914, %v2962
    %v2964 = vpop.f32.mrf.mxu0
    %v2965 = vadd.f32 %v2916, %v2964
    %2966 = vmatmul.bf16.gmra.mxu0 %v2109
    %v2967 = vpop.f32.mrf.mxu0
    %v2968 = vadd.f32 %v2919, %v2967
    %v2969 = vpop.f32.mrf.mxu0
    %v2970 = vadd.f32 %v2921, %v2969
    %2971 = vmatmul.bf16.gmra.mxu0 %v2112
    %v2972 = vpop.f32.mrf.mxu0
    %v2973 = vadd.f32 %v2924, %v2972
    %v2974 = vpop.f32.mrf.mxu0
    %v2975 = vadd.f32 %v2926, %v2974
    %2976 = vmatmul.bf16.gmra.mxu0 %v2115
    %v2977 = vpop.f32.mrf.mxu0
    %v2978 = vadd.f32 %v2929, %v2977
    %v2979 = vpop.f32.mrf.mxu0
    %v2980 = vadd.f32 %v2931, %v2979
    %2981 = vmatmul.bf16.gmra.mxu0 %v2118
    %v2982 = vpop.f32.mrf.mxu0
    %v2983 = vadd.f32 %v2934, %v2982
    %v2984 = vpop.f32.mrf.mxu0
    %v2985 = vadd.f32 %v2936, %v2984
    %2986 = vmatmul.bf16.gmra.mxu0 %v2121
    %v2987 = vpop.f32.mrf.mxu0
    %v2988 = vadd.f32 %v2939, %v2987
    %v2989 = vpop.f32.mrf.mxu0
    %v2990 = vadd.f32 %v2941, %v2989
    %2991 = vmatmul.bf16.gmra.mxu0 %v2124
    %v2992 = vpop.f32.mrf.mxu0
    %v2993 = vadd.f32 %v2944, %v2992
    %v2994 = vpop.f32.mrf.mxu0
    %v2995 = vadd.f32 %v2946, %v2994
    %2996 = vmatmul.bf16.gmra.mxu0 %v2127
    %v2997 = vpop.f32.mrf.mxu0
    %v2998 = vadd.f32 %v2949, %v2997
    %v2999 = vpop.f32.mrf.mxu0
    %v3000 = vadd.f32 %v2951, %v2999
    %3001 = vdwg.mxu0
    %3002 = vmatpush.bf16.msra.mxu0 %v2537
    %3003 = vmatpush.bf16.msra.mxu0 %v2534
    %3004 = vmatpush.bf16.msra.mxu0 %v2531
    %3005 = vmatpush.bf16.msra.mxu0 %v2528
    %3006 = vmatpush.bf16.msra.mxu0 %v2525
    %3007 = vmatpush.bf16.msra.mxu0 %v2522
    %3008 = vmatpush.bf16.msra.mxu0 %v2519
    %3009 = vmatpush.bf16.msra.mxu0 %v2516
    %3010 = vmatmul.bf16.gmra.mxu0 %v2107
    %v3011 = vpop.f32.mrf.mxu0
    %v3012 = vadd.f32 %v2963, %v3011
    %v3013 = vpop.f32.mrf.mxu0
    %v3014 = vadd.f32 %v2965, %v3013
    %3015 = vmatmul.bf16.gmra.mxu0 %v2110
    %v3016 = vpop.f32.mrf.mxu0
    %v3017 = vadd.f32 %v2968, %v3016
    %v3018 = vpop.f32.mrf.mxu0
    %v3019 = vadd.f32 %v2970, %v3018
    %3020 = vmatmul.bf16.gmra.mxu0 %v2113
    %v3021 = vpop.f32.mrf.mxu0
    %v3022 = vadd.f32 %v2973, %v3021
    %v3023 = vpop.f32.mrf.mxu0
    %v3024 = vadd.f32 %v2975, %v3023
    %3025 = vmatmul.bf16.gmra.mxu0 %v2116
    %v3026 = vpop.f32.mrf.mxu0
    %v3027 = vadd.f32 %v2978, %v3026
    %v3028 = vpop.f32.mrf.mxu0
    %v3029 = vadd.f32 %v2980, %v3028
    %3030 = vmatmul.bf16.gmra.mxu0 %v2119
    %v3031 = vpop.f32.mrf.mxu0
    %v3032 = vadd.f32 %v2983, %v3031
    %v3033 = vpop.f32.mrf.mxu0
    %v3034 = vadd.f32 %v2985, %v3033
    %3035 = vmatmul.bf16.gmra.mxu0 %v2122
    %v3036 = vpop.f32.mrf.mxu0
    %v3037 = vadd.f32 %v2988, %v3036
    %v3038 = vpop.f32.mrf.mxu0
    %v3039 = vadd.f32 %v2990, %v3038
    %3040 = vmatmul.bf16.gmra.mxu0 %v2125
    %v3041 = vpop.f32.mrf.mxu0
    %v3042 = vadd.f32 %v2993, %v3041
    %v3043 = vpop.f32.mrf.mxu0
    %v3044 = vadd.f32 %v2995, %v3043
    %3045 = vmatmul.bf16.gmra.mxu0 %v2128
    %v3046 = vpop.f32.mrf.mxu0
    %v3047 = vadd.f32 %v2998, %v3046
    %v3048 = vpop.f32.mrf.mxu0
    %v3049 = vadd.f32 %v3000, %v3048
    %3050 = vdwg.mxu0
    %v3051 = vpack.c.bf16 %v2865, %v2718
    %v3052 = vpack.c.bf16 %v3012, %v3012
    %v3053 = vpack.c.bf16 %v2867, %v2720
    %v3054 = vpack.c.bf16 %v3014, %v3014
    %v3055 = vpack.c.bf16 %v2870, %v2723
    %v3056 = vpack.c.bf16 %v3017, %v3017
    %v3057 = vpack.c.bf16 %v2872, %v2725
    %v3058 = vpack.c.bf16 %v3019, %v3019
    %v3059 = vpack.c.bf16 %v2875, %v2728
    %v3060 = vpack.c.bf16 %v3022, %v3022
    %v3061 = vpack.c.bf16 %v2877, %v2730
    %v3062 = vpack.c.bf16 %v3024, %v3024
    %v3063 = vpack.c.bf16 %v2880, %v2733
    %v3064 = vpack.c.bf16 %v3027, %v3027
    %v3065 = vpack.c.bf16 %v2882, %v2735
    %v3066 = vpack.c.bf16 %v3029, %v3029
    %v3067 = vpack.c.bf16 %v2885, %v2738
    %v3068 = vpack.c.bf16 %v3032, %v3032
    %v3069 = vpack.c.bf16 %v2887, %v2740
    %v3070 = vpack.c.bf16 %v3034, %v3034
    %v3071 = vpack.c.bf16 %v2890, %v2743
    %v3072 = vpack.c.bf16 %v3037, %v3037
    %v3073 = vpack.c.bf16 %v2892, %v2745
    %v3074 = vpack.c.bf16 %v3039, %v3039
    %v3075 = vpack.c.bf16 %v2895, %v2748
    %v3076 = vpack.c.bf16 %v3042, %v3042
    %v3077 = vpack.c.bf16 %v2897, %v2750
    %v3078 = vpack.c.bf16 %v3044, %v3044
    %v3079 = vpack.c.bf16 %v2900, %v2753
    %v3080 = vpack.c.bf16 %v3047, %v3047
    %v3081 = vpack.c.bf16 %v2902, %v2755
    %v3082 = vpack.c.bf16 %v3049, %v3049
    %v3099 = vunpack.c.l.b16 %v3051
    %v3100 = vunpack.c.l.b16 %v3053
    %v3101 = vunpack.c.l.b16 %v3055
    %v3102 = vunpack.c.l.b16 %v3057
    %v3103 = vunpack.c.l.b16 %v3059
    %v3104 = vunpack.c.l.b16 %v3061
    %v3105 = vunpack.c.l.b16 %v3063
    %v3106 = vunpack.c.l.b16 %v3065
    %v3107 = vunpack.c.l.b16 %v3067
    %v3108 = vunpack.c.l.b16 %v3069
    %v3109 = vunpack.c.l.b16 %v3071
    %v3110 = vunpack.c.l.b16 %v3073
    %v3111 = vunpack.c.l.b16 %v3075
    %v3112 = vunpack.c.l.b16 %v3077
    %v3113 = vunpack.c.l.b16 %v3079
    %v3114 = vunpack.c.l.b16 %v3081
    %v3115 = vpack.c.b16 %v3100, %v3099
    %v3116 = vpack.c.b16 %v3102, %v3101
    %v3117 = vpack.c.b16 %v3104, %v3103
    %v3118 = vpack.c.b16 %v3106, %v3105
    %v3119 = vpack.c.b16 %v3108, %v3107
    %v3120 = vpack.c.b16 %v3110, %v3109
    %v3121 = vpack.c.b16 %v3112, %v3111
    %v3122 = vpack.c.b16 %v3114, %v3113
    %3131 = vmatpush.bf16.msra.mxu0 %v3122
    %3132 = vmatpush.bf16.msra.mxu0 %v3121
    %3133 = vmatpush.bf16.msra.mxu0 %v3120
    %3134 = vmatpush.bf16.msra.mxu0 %v3119
    %3135 = vmatpush.bf16.msra.mxu0 %v3118
    %3136 = vmatpush.bf16.msra.mxu0 %v3117
    %3137 = vmatpush.bf16.msra.mxu0 %v3116
    %3138 = vmatpush.bf16.msra.mxu0 %v3115
    %3139 = vmatmul.bf16.gmra.mxu0 %v1296
    %v3140 = vpop.f32.mrf.mxu0
    %v3141 = vadd.f32 0.0, %v3140
    %v3142 = vpop.f32.mrf.mxu0
    %v3143 = vadd.f32 0.0, %v3142
    %3144 = vmatmul.bf16.gmra.mxu0 %v1297
    %v3145 = vpop.f32.mrf.mxu0
    %v3146 = vadd.f32 0.0, %v3145
    %v3147 = vpop.f32.mrf.mxu0
    %v3148 = vadd.f32 0.0, %v3147
    %3149 = vmatmul.bf16.gmra.mxu0 %v1298
    %v3150 = vpop.f32.mrf.mxu0
    %v3151 = vadd.f32 0.0, %v3150
    %v3152 = vpop.f32.mrf.mxu0
    %v3153 = vadd.f32 0.0, %v3152
    %3154 = vmatmul.bf16.gmra.mxu0 %v1299
    %v3155 = vpop.f32.mrf.mxu0
    %v3156 = vadd.f32 0.0, %v3155
    %v3157 = vpop.f32.mrf.mxu0
    %v3158 = vadd.f32 0.0, %v3157
    %3159 = vmatmul.bf16.gmra.mxu0 %v1300
    %v3160 = vpop.f32.mrf.mxu0
    %v3161 = vadd.f32 0.0, %v3160
    %v3162 = vpop.f32.mrf.mxu0
    %v3163 = vadd.f32 0.0, %v3162
    %3164 = vmatmul.bf16.gmra.mxu0 %v1301
    %v3165 = vpop.f32.mrf.mxu0
    %v3166 = vadd.f32 0.0, %v3165
    %v3167 = vpop.f32.mrf.mxu0
    %v3168 = vadd.f32 0.0, %v3167
    %3169 = vmatmul.bf16.gmra.mxu0 %v1302
    %v3170 = vpop.f32.mrf.mxu0
    %v3171 = vadd.f32 0.0, %v3170
    %v3172 = vpop.f32.mrf.mxu0
    %v3173 = vadd.f32 0.0, %v3172
    %3174 = vmatmul.bf16.gmra.mxu0 %v1303
    %v3175 = vpop.f32.mrf.mxu0
    %v3176 = vadd.f32 0.0, %v3175
    %v3177 = vpop.f32.mrf.mxu0
    %v3178 = vadd.f32 0.0, %v3177
    %3179 = vdwg.mxu0
    %v3180 = vunpack.c.h.b16 %v3051
    %v3181 = vunpack.c.h.b16 %v3053
    %v3182 = vunpack.c.h.b16 %v3055
    %v3183 = vunpack.c.h.b16 %v3057
    %v3184 = vunpack.c.h.b16 %v3059
    %v3185 = vunpack.c.h.b16 %v3061
    %v3186 = vunpack.c.h.b16 %v3063
    %v3187 = vunpack.c.h.b16 %v3065
    %v3188 = vunpack.c.h.b16 %v3067
    %v3189 = vunpack.c.h.b16 %v3069
    %v3190 = vunpack.c.h.b16 %v3071
    %v3191 = vunpack.c.h.b16 %v3073
    %v3192 = vunpack.c.h.b16 %v3075
    %v3193 = vunpack.c.h.b16 %v3077
    %v3194 = vunpack.c.h.b16 %v3079
    %v3195 = vunpack.c.h.b16 %v3081
    %v3196 = vpack.c.b16 %v3181, %v3180
    %v3197 = vpack.c.b16 %v3183, %v3182
    %v3198 = vpack.c.b16 %v3185, %v3184
    %v3199 = vpack.c.b16 %v3187, %v3186
    %v3200 = vpack.c.b16 %v3189, %v3188
    %v3201 = vpack.c.b16 %v3191, %v3190
    %v3202 = vpack.c.b16 %v3193, %v3192
    %v3203 = vpack.c.b16 %v3195, %v3194
    %3212 = vmatpush.bf16.msra.mxu0 %v3203
    %3213 = vmatpush.bf16.msra.mxu0 %v3202
    %3214 = vmatpush.bf16.msra.mxu0 %v3201
    %3215 = vmatpush.bf16.msra.mxu0 %v3200
    %3216 = vmatpush.bf16.msra.mxu0 %v3199
    %3217 = vmatpush.bf16.msra.mxu0 %v3198
    %3218 = vmatpush.bf16.msra.mxu0 %v3197
    %3219 = vmatpush.bf16.msra.mxu0 %v3196
    %3220 = vmatmul.bf16.gmra.mxu0 %v1458
    %v3221 = vpop.f32.mrf.mxu0
    %v3222 = vadd.f32 0.0, %v3221
    %v3223 = vpop.f32.mrf.mxu0
    %v3224 = vadd.f32 0.0, %v3223
    %3225 = vmatmul.bf16.gmra.mxu0 %v1459
    %v3226 = vpop.f32.mrf.mxu0
    %v3227 = vadd.f32 0.0, %v3226
    %v3228 = vpop.f32.mrf.mxu0
    %v3229 = vadd.f32 0.0, %v3228
    %3230 = vmatmul.bf16.gmra.mxu0 %v1460
    %v3231 = vpop.f32.mrf.mxu0
    %v3232 = vadd.f32 0.0, %v3231
    %v3233 = vpop.f32.mrf.mxu0
    %v3234 = vadd.f32 0.0, %v3233
    %3235 = vmatmul.bf16.gmra.mxu0 %v1461
    %v3236 = vpop.f32.mrf.mxu0
    %v3237 = vadd.f32 0.0, %v3236
    %v3238 = vpop.f32.mrf.mxu0
    %v3239 = vadd.f32 0.0, %v3238
    %3240 = vmatmul.bf16.gmra.mxu0 %v1462
    %v3241 = vpop.f32.mrf.mxu0
    %v3242 = vadd.f32 0.0, %v3241
    %v3243 = vpop.f32.mrf.mxu0
    %v3244 = vadd.f32 0.0, %v3243
    %3245 = vmatmul.bf16.gmra.mxu0 %v1463
    %v3246 = vpop.f32.mrf.mxu0
    %v3247 = vadd.f32 0.0, %v3246
    %v3248 = vpop.f32.mrf.mxu0
    %v3249 = vadd.f32 0.0, %v3248
    %3250 = vmatmul.bf16.gmra.mxu0 %v1464
    %v3251 = vpop.f32.mrf.mxu0
    %v3252 = vadd.f32 0.0, %v3251
    %v3253 = vpop.f32.mrf.mxu0
    %v3254 = vadd.f32 0.0, %v3253
    %3255 = vmatmul.bf16.gmra.mxu0 %v1465
    %v3256 = vpop.f32.mrf.mxu0
    %v3257 = vadd.f32 0.0, %v3256
    %v3258 = vpop.f32.mrf.mxu0
    %v3259 = vadd.f32 0.0, %v3258
    %3260 = vdwg.mxu0
    %v3277 = vunpack.c.l.b16 %v3052
    %v3278 = vunpack.c.l.b16 %v3054
    %v3279 = vunpack.c.l.b16 %v3056
    %v3280 = vunpack.c.l.b16 %v3058
    %v3281 = vunpack.c.l.b16 %v3060
    %v3282 = vunpack.c.l.b16 %v3062
    %v3283 = vunpack.c.l.b16 %v3064
    %v3284 = vunpack.c.l.b16 %v3066
    %v3285 = vunpack.c.l.b16 %v3068
    %v3286 = vunpack.c.l.b16 %v3070
    %v3287 = vunpack.c.l.b16 %v3072
    %v3288 = vunpack.c.l.b16 %v3074
    %v3289 = vunpack.c.l.b16 %v3076
    %v3290 = vunpack.c.l.b16 %v3078
    %v3291 = vunpack.c.l.b16 %v3080
    %v3292 = vunpack.c.l.b16 %v3082
    %v3293 = vpack.c.b16 %v3278, %v3277
    %v3294 = vpack.c.b16 %v3280, %v3279
    %v3295 = vpack.c.b16 %v3282, %v3281
    %v3296 = vpack.c.b16 %v3284, %v3283
    %v3297 = vpack.c.b16 %v3286, %v3285
    %v3298 = vpack.c.b16 %v3288, %v3287
    %v3299 = vpack.c.b16 %v3290, %v3289
    %v3300 = vpack.c.b16 %v3292, %v3291
    %3309 = vmatpush.bf16.msra.mxu0 %v3300
    %3310 = vmatpush.bf16.msra.mxu0 %v3299
    %3311 = vmatpush.bf16.msra.mxu0 %v3298
    %3312 = vmatpush.bf16.msra.mxu0 %v3297
    %3313 = vmatpush.bf16.msra.mxu0 %v3296
    %3314 = vmatpush.bf16.msra.mxu0 %v3295
    %3315 = vmatpush.bf16.msra.mxu0 %v3294
    %3316 = vmatpush.bf16.msra.mxu0 %v3293
    %3317 = vmatmul.bf16.gmra.mxu0 %v1604
    %v3318 = vpop.f32.mrf.mxu0
    %v3319 = vadd.f32 0.0, %v3318
    %v3320 = vpop.f32.mrf.mxu0
    %v3321 = vadd.f32 0.0, %v3320
    %3322 = vmatmul.bf16.gmra.mxu0 %v1605
    %v3323 = vpop.f32.mrf.mxu0
    %v3324 = vadd.f32 0.0, %v3323
    %v3325 = vpop.f32.mrf.mxu0
    %v3326 = vadd.f32 0.0, %v3325
    %3327 = vmatmul.bf16.gmra.mxu0 %v1606
    %v3328 = vpop.f32.mrf.mxu0
    %v3329 = vadd.f32 0.0, %v3328
    %v3330 = vpop.f32.mrf.mxu0
    %v3331 = vadd.f32 0.0, %v3330
    %3332 = vmatmul.bf16.gmra.mxu0 %v1607
    %v3333 = vpop.f32.mrf.mxu0
    %v3334 = vadd.f32 0.0, %v3333
    %v3335 = vpop.f32.mrf.mxu0
    %v3336 = vadd.f32 0.0, %v3335
    %3337 = vmatmul.bf16.gmra.mxu0 %v1608
    %v3338 = vpop.f32.mrf.mxu0
    %v3339 = vadd.f32 0.0, %v3338
    %v3340 = vpop.f32.mrf.mxu0
    %v3341 = vadd.f32 0.0, %v3340
    %3342 = vmatmul.bf16.gmra.mxu0 %v1609
    %v3343 = vpop.f32.mrf.mxu0
    %v3344 = vadd.f32 0.0, %v3343
    %v3345 = vpop.f32.mrf.mxu0
    %v3346 = vadd.f32 0.0, %v3345
    %3347 = vmatmul.bf16.gmra.mxu0 %v1610
    %v3348 = vpop.f32.mrf.mxu0
    %v3349 = vadd.f32 0.0, %v3348
    %v3350 = vpop.f32.mrf.mxu0
    %v3351 = vadd.f32 0.0, %v3350
    %3352 = vmatmul.bf16.gmra.mxu0 %v1611
    %v3353 = vpop.f32.mrf.mxu0
    %v3354 = vadd.f32 0.0, %v3353
    %v3355 = vpop.f32.mrf.mxu0
    %v3356 = vadd.f32 0.0, %v3355
    %3357 = vdwg.mxu0
    %s3358 = scalar_lea.vmem [#allocation7], 1
    %v3359 = vld [vmem:[%s3358] ss:$8 sm:$0x7]
    %v3361 = vperm.slane %v3359, 0
    %v3362 = vperm.slane %v3359, 1
    %v3363 = vperm.slane %v3359, 2
    %v3367 = vadd.f32 %v3141, %v3361
    %v3368 = vadd.f32 %v3222, %v3362
    %v3369 = vadd.f32 %v3319, %v3363
    %v3370 = vadd.f32 %v3143, %v3361
    %v3371 = vadd.f32 %v3224, %v3362
    %v3372 = vadd.f32 %v3321, %v3363
    %v3373 = vadd.f32 %v3146, %v3361
    %v3374 = vadd.f32 %v3227, %v3362
    %v3375 = vadd.f32 %v3324, %v3363
    %v3376 = vadd.f32 %v3148, %v3361
    %v3377 = vadd.f32 %v3229, %v3362
    %v3378 = vadd.f32 %v3326, %v3363
    %v3379 = vadd.f32 %v3151, %v3361
    %v3380 = vadd.f32 %v3232, %v3362
    %v3381 = vadd.f32 %v3329, %v3363
    %v3382 = vadd.f32 %v3153, %v3361
    %v3383 = vadd.f32 %v3234, %v3362
    %v3384 = vadd.f32 %v3331, %v3363
    %v3385 = vadd.f32 %v3156, %v3361
    %v3386 = vadd.f32 %v3237, %v3362
    %v3387 = vadd.f32 %v3334, %v3363
    %v3388 = vadd.f32 %v3158, %v3361
    %v3389 = vadd.f32 %v3239, %v3362
    %v3390 = vadd.f32 %v3336, %v3363
    %v3391 = vadd.f32 %v3161, %v3361
    %v3392 = vadd.f32 %v3242, %v3362
    %v3393 = vadd.f32 %v3339, %v3363
    %v3394 = vadd.f32 %v3163, %v3361
    %v3395 = vadd.f32 %v3244, %v3362
    %v3396 = vadd.f32 %v3341, %v3363
    %v3397 = vadd.f32 %v3166, %v3361
    %v3398 = vadd.f32 %v3247, %v3362
    %v3399 = vadd.f32 %v3344, %v3363
    %v3400 = vadd.f32 %v3168, %v3361
    %v3401 = vadd.f32 %v3249, %v3362
    %v3402 = vadd.f32 %v3346, %v3363
    %v3403 = vadd.f32 %v3171, %v3361
    %v3404 = vadd.f32 %v3252, %v3362
    %v3405 = vadd.f32 %v3349, %v3363
    %v3406 = vadd.f32 %v3173, %v3361
    %v3407 = vadd.f32 %v3254, %v3362
    %v3408 = vadd.f32 %v3351, %v3363
    %v3409 = vadd.f32 %v3176, %v3361
    %v3410 = vadd.f32 %v3257, %v3362
    %v3411 = vadd.f32 %v3354, %v3363
    %v3412 = vadd.f32 %v3178, %v3361
    %v3413 = vadd.f32 %v3259, %v3362
    %v3414 = vadd.f32 %v3356, %v3363
    %v3415 = vmax.f32 %v3367, 0.0
    %v3416 = vmax.f32 %v3368, 0.0
    %v3417 = vmax.f32 %v3369, 0.0
    %v3418 = vmax.f32 %v3370, 0.0
    %v3419 = vmax.f32 %v3371, 0.0
    %v3420 = vmax.f32 %v3372, 0.0
    %v3421 = vmax.f32 %v3373, 0.0
    %v3422 = vmax.f32 %v3374, 0.0
    %v3423 = vmax.f32 %v3375, 0.0
    %v3424 = vmax.f32 %v3376, 0.0
    %v3425 = vmax.f32 %v3377, 0.0
    %v3426 = vmax.f32 %v3378, 0.0
    %v3427 = vmax.f32 %v3379, 0.0
    %v3428 = vmax.f32 %v3380, 0.0
    %v3429 = vmax.f32 %v3381, 0.0
    %v3430 = vmax.f32 %v3382, 0.0
    %v3431 = vmax.f32 %v3383, 0.0
    %v3432 = vmax.f32 %v3384, 0.0
    %v3433 = vmax.f32 %v3385, 0.0
    %v3434 = vmax.f32 %v3386, 0.0
    %v3435 = vmax.f32 %v3387, 0.0
    %v3436 = vmax.f32 %v3388, 0.0
    %v3437 = vmax.f32 %v3389, 0.0
    %v3438 = vmax.f32 %v3390, 0.0
    %v3439 = vmax.f32 %v3391, 0.0
    %v3440 = vmax.f32 %v3392, 0.0
    %v3441 = vmax.f32 %v3393, 0.0
    %v3442 = vmax.f32 %v3394, 0.0
    %v3443 = vmax.f32 %v3395, 0.0
    %v3444 = vmax.f32 %v3396, 0.0
    %v3445 = vmax.f32 %v3397, 0.0
    %v3446 = vmax.f32 %v3398, 0.0
    %v3447 = vmax.f32 %v3399, 0.0
    %v3448 = vmax.f32 %v3400, 0.0
    %v3449 = vmax.f32 %v3401, 0.0
    %v3450 = vmax.f32 %v3402, 0.0
    %v3451 = vmax.f32 %v3403, 0.0
    %v3452 = vmax.f32 %v3404, 0.0
    %v3453 = vmax.f32 %v3405, 0.0
    %v3454 = vmax.f32 %v3406, 0.0
    %v3455 = vmax.f32 %v3407, 0.0
    %v3456 = vmax.f32 %v3408, 0.0
    %v3457 = vmax.f32 %v3409, 0.0
    %v3458 = vmax.f32 %v3410, 0.0
    %v3459 = vmax.f32 %v3411, 0.0
    %v3460 = vmax.f32 %v3412, 0.0
    %v3461 = vmax.f32 %v3413, 0.0
    %v3462 = vmax.f32 %v3414, 0.0
    %s3463 = scalar_lea.vmem [#allocation7], 5
    %v3464 = vld [vmem:[%s3463] ss:$8 sm:$0x7]
    %s3465 = scalar_lea.vmem [#allocation7], 24
    %v3466 = vld [vmem:[%s3465] ss:$8 sm:$0x7]
    %v3467 = vadd.f32 %v3415, %v3418
    %v3468 = vadd.f32 %v3467, %v3421
    %v3469 = vadd.f32 %v3468, %v3424
    %v3470 = vadd.f32 %v3469, %v3427
    %v3471 = vadd.f32 %v3470, %v3430
    %v3472 = vadd.f32 %v3471, %v3433
    %v3473 = vadd.f32 %v3472, %v3436
    %v3474 = vrot.slane %v3473, 4
    %v3475 = vadd.f32 %v3473, %v3474
    %v3476 = vrot.slane %v3475, 2
    %v3477 = vadd.f32 %v3475, %v3476
    %v3478 = vrot.slane %v3477, 1
    %v3479 = vadd.f32 %v3477, %v3478
    %v3480 = vadd.f32 %v3416, %v3419
    %v3481 = vadd.f32 %v3480, %v3422
    %v3482 = vadd.f32 %v3481, %v3425
    %v3483 = vadd.f32 %v3482, %v3428
    %v3484 = vadd.f32 %v3483, %v3431
    %v3485 = vadd.f32 %v3484, %v3434
    %v3486 = vadd.f32 %v3485, %v3437
    %v3487 = vrot.slane %v3486, 4
    %v3488 = vadd.f32 %v3486, %v3487
    %v3489 = vrot.slane %v3488, 2
    %v3490 = vadd.f32 %v3488, %v3489
    %v3491 = vrot.slane %v3490, 1
    %v3492 = vadd.f32 %v3490, %v3491
    %v3493 = vadd.f32 %v3417, %v3420
    %v3494 = vadd.f32 %v3493, %v3423
    %v3495 = vadd.f32 %v3494, %v3426
    %v3496 = vadd.f32 %v3495, %v3429
    %v3497 = vadd.f32 %v3496, %v3432
    %v3498 = vadd.f32 %v3497, %v3435
    %v3499 = vadd.f32 %v3498, %v3438
    %v3500 = vrot.slane %v3499, 4
    %v3501 = vadd.f32 %v3499, %v3500
    %v3502 = vrot.slane %v3501, 2
    %v3503 = vadd.f32 %v3501, %v3502
    %v3504 = vrot.slane %v3503, 1
    %v3505 = vadd.f32 %v3503, %v3504
    %v3506 = vmul.f32 %v3415, %v3415
    %v3507 = vmul.f32 %v3416, %v3416
    %v3508 = vmul.f32 %v3417, %v3417
    %v3509 = vmul.f32 %v3418, %v3418
    %v3510 = vmul.f32 %v3419, %v3419
    %v3511 = vmul.f32 %v3420, %v3420
    %v3512 = vmul.f32 %v3421, %v3421
    %v3513 = vmul.f32 %v3422, %v3422
    %v3514 = vmul.f32 %v3423, %v3423
    %v3515 = vmul.f32 %v3424, %v3424
    %v3516 = vmul.f32 %v3425, %v3425
    %v3517 = vmul.f32 %v3426, %v3426
    %v3518 = vmul.f32 %v3427, %v3427
    %v3519 = vmul.f32 %v3428, %v3428
    %v3520 = vmul.f32 %v3429, %v3429
    %v3521 = vmul.f32 %v3430, %v3430
    %v3522 = vmul.f32 %v3431, %v3431
    %v3523 = vmul.f32 %v3432, %v3432
    %v3524 = vmul.f32 %v3433, %v3433
    %v3525 = vmul.f32 %v3434, %v3434
    %v3526 = vmul.f32 %v3435, %v3435
    %v3527 = vmul.f32 %v3436, %v3436
    %v3528 = vmul.f32 %v3437, %v3437
    %v3529 = vmul.f32 %v3438, %v3438
    %v3530 = vadd.f32 %v3506, %v3509
    %v3531 = vadd.f32 %v3530, %v3512
    %v3532 = vadd.f32 %v3531, %v3515
    %v3533 = vadd.f32 %v3532, %v3518
    %v3534 = vadd.f32 %v3533, %v3521
    %v3535 = vadd.f32 %v3534, %v3524
    %v3536 = vadd.f32 %v3535, %v3527
    %v3537 = vrot.slane %v3536, 4
    %v3538 = vadd.f32 %v3536, %v3537
    %v3539 = vrot.slane %v3538, 2
    %v3540 = vadd.f32 %v3538, %v3539
    %v3541 = vrot.slane %v3540, 1
    %v3542 = vadd.f32 %v3540, %v3541
    %v3543 = vadd.f32 %v3507, %v3510
    %v3544 = vadd.f32 %v3543, %v3513
    %v3545 = vadd.f32 %v3544, %v3516
    %v3546 = vadd.f32 %v3545, %v3519
    %v3547 = vadd.f32 %v3546, %v3522
    %v3548 = vadd.f32 %v3547, %v3525
    %v3549 = vadd.f32 %v3548, %v3528
    %v3550 = vrot.slane %v3549, 4
    %v3551 = vadd.f32 %v3549, %v3550
    %v3552 = vrot.slane %v3551, 2
    %v3553 = vadd.f32 %v3551, %v3552
    %v3554 = vrot.slane %v3553, 1
    %v3555 = vadd.f32 %v3553, %v3554
    %v3556 = vadd.f32 %v3508, %v3511
    %v3557 = vadd.f32 %v3556, %v3514
    %v3558 = vadd.f32 %v3557, %v3517
    %v3559 = vadd.f32 %v3558, %v3520
    %v3560 = vadd.f32 %v3559, %v3523
    %v3561 = vadd.f32 %v3560, %v3526
    %v3562 = vadd.f32 %v3561, %v3529
    %v3563 = vrot.slane %v3562, 4
    %v3564 = vadd.f32 %v3562, %v3563
    %v3565 = vrot.slane %v3564, 2
    %v3566 = vadd.f32 %v3564, %v3565
    %v3567 = vrot.slane %v3566, 1
    %v3568 = vadd.f32 %v3566, %v3567
    %v3569 = vmul.f32 %v3479, 0.015625
    %v3570 = vmul.f32 %v3492, 0.015625
    %v3571 = vmul.f32 %v3505, 0.015625
    %v3572 = vmul.f32 %v3542, 0.015625
    %v3573 = vmul.f32 %v3555, 0.015625
    %v3574 = vmul.f32 %v3568, 0.015625
    %v3575 = vmul.f32 %v3569, %v3569
    %v3576 = vmul.f32 %v3570, %v3570
    %v3577 = vmul.f32 %v3571, %v3571
    %v3578 = vsub.f32 %v3572, %v3575
    %v3579 = vsub.f32 %v3573, %v3576
    %v3580 = vsub.f32 %v3574, %v3577
    %v3581 = vadd.f32 %v3578, 1e-05
    %v3582 = vadd.f32 %v3579, 1e-05
    %v3583 = vadd.f32 %v3580, 1e-05
    %v3584 = vrsqrt.pop %v3581
    %v3585 = vmul.f32 %v3584, %v3581
    %v3586 = vmul.f32 %v3585, %v3584
    %v3587 = vmul.f32 0.5, %v3586
    %v3588 = vsub.f32 1.5, %v3587
    %v3589 = vmul.f32 %v3584, %v3588
    %vm3590 = vweird.f32 %v3581
    %vm3591 = vweird.f32 %v3584
    %vm3592 = vmor %vm3590, %vm3591
    %v3593 = vsel %vm3592, %v3584, %v3589
    %v3594 = vrsqrt.pop %v3582
    %v3595 = vmul.f32 %v3594, %v3582
    %v3596 = vmul.f32 %v3595, %v3594
    %v3597 = vmul.f32 0.5, %v3596
    %v3598 = vsub.f32 1.5, %v3597
    %v3599 = vmul.f32 %v3594, %v3598
    %vm3600 = vweird.f32 %v3582
    %vm3601 = vweird.f32 %v3594
    %vm3602 = vmor %vm3600, %vm3601
    %v3603 = vsel %vm3602, %v3594, %v3599
    %v3604 = vrsqrt.pop %v3583
    %v3605 = vmul.f32 %v3604, %v3583
    %v3606 = vmul.f32 %v3605, %v3604
    %v3607 = vmul.f32 0.5, %v3606
    %v3608 = vsub.f32 1.5, %v3607
    %v3609 = vmul.f32 %v3604, %v3608
    %vm3610 = vweird.f32 %v3583
    %vm3611 = vweird.f32 %v3604
    %vm3612 = vmor %vm3610, %vm3611
    %v3613 = vsel %vm3612, %v3604, %v3609
    %v3617 = vrot.slane %v3603, 7
    %v3618 = vrot.slane %v3613, 6
    %v3619 = vsel %vm1977, %v3593, %v3617
    %v3620 = vsel %vm1979, %v3619, %v3618
    %v3622 = vmul.f32 %v3464, %v3620
    %v3624 = vperm.slane %v3622, 0
    %v3625 = vperm.slane %v3622, 1
    %v3626 = vperm.slane %v3622, 2
    %v3630 = vmul.f32 %v3569, %v3624
    %v3631 = vmul.f32 %v3570, %v3625
    %v3632 = vmul.f32 %v3571, %v3626
    %v3636 = vrot.slane %v3631, 7
    %v3637 = vrot.slane %v3632, 6
    %v3638 = vsel %vm1977, %v3630, %v3636
    %v3639 = vsel %vm1979, %v3638, %v3637
    %v3641 = vsub.f32 %v3466, %v3639
    %v3642 = vmul.f32 %v3415, %v3624
    %v3643 = vmul.f32 %v3416, %v3625
    %v3644 = vmul.f32 %v3417, %v3626
    %v3645 = vmul.f32 %v3418, %v3624
    %v3646 = vmul.f32 %v3419, %v3625
    %v3647 = vmul.f32 %v3420, %v3626
    %v3648 = vmul.f32 %v3421, %v3624
    %v3649 = vmul.f32 %v3422, %v3625
    %v3650 = vmul.f32 %v3423, %v3626
    %v3651 = vmul.f32 %v3424, %v3624
    %v3652 = vmul.f32 %v3425, %v3625
    %v3653 = vmul.f32 %v3426, %v3626
    %v3654 = vmul.f32 %v3427, %v3624
    %v3655 = vmul.f32 %v3428, %v3625
    %v3656 = vmul.f32 %v3429, %v3626
    %v3657 = vmul.f32 %v3430, %v3624
    %v3658 = vmul.f32 %v3431, %v3625
    %v3659 = vmul.f32 %v3432, %v3626
    %v3660 = vmul.f32 %v3433, %v3624
    %v3661 = vmul.f32 %v3434, %v3625
    %v3662 = vmul.f32 %v3435, %v3626
    %v3663 = vmul.f32 %v3436, %v3624
    %v3664 = vmul.f32 %v3437, %v3625
    %v3665 = vmul.f32 %v3438, %v3626
    %v3666 = vmul.f32 %v3439, %v3624
    %v3667 = vmul.f32 %v3440, %v3625
    %v3668 = vmul.f32 %v3441, %v3626
    %v3669 = vmul.f32 %v3442, %v3624
    %v3670 = vmul.f32 %v3443, %v3625
    %v3671 = vmul.f32 %v3444, %v3626
    %v3672 = vmul.f32 %v3445, %v3624
    %v3673 = vmul.f32 %v3446, %v3625
    %v3674 = vmul.f32 %v3447, %v3626
    %v3675 = vmul.f32 %v3448, %v3624
    %v3676 = vmul.f32 %v3449, %v3625
    %v3677 = vmul.f32 %v3450, %v3626
    %v3678 = vmul.f32 %v3451, %v3624
    %v3679 = vmul.f32 %v3452, %v3625
    %v3680 = vmul.f32 %v3453, %v3626
    %v3681 = vmul.f32 %v3454, %v3624
    %v3682 = vmul.f32 %v3455, %v3625
    %v3683 = vmul.f32 %v3456, %v3626
    %v3684 = vmul.f32 %v3457, %v3624
    %v3685 = vmul.f32 %v3458, %v3625
    %v3686 = vmul.f32 %v3459, %v3626
    %v3687 = vmul.f32 %v3460, %v3624
    %v3688 = vmul.f32 %v3461, %v3625
    %v3689 = vmul.f32 %v3462, %v3626
    %v3691 = vperm.slane %v3641, 0
    %v3692 = vperm.slane %v3641, 1
    %v3693 = vperm.slane %v3641, 2
    %v3697 = vadd.f32 %v3642, %v3691
    %v3698 = vadd.f32 %v3643, %v3692
    %v3699 = vadd.f32 %v3644, %v3693
    %v3700 = vadd.f32 %v3645, %v3691
    %v3701 = vadd.f32 %v3646, %v3692
    %v3702 = vadd.f32 %v3647, %v3693
    %v3703 = vadd.f32 %v3648, %v3691
    %v3704 = vadd.f32 %v3649, %v3692
    %v3705 = vadd.f32 %v3650, %v3693
    %v3706 = vadd.f32 %v3651, %v3691
    %v3707 = vadd.f32 %v3652, %v3692
    %v3708 = vadd.f32 %v3653, %v3693
    %v3709 = vadd.f32 %v3654, %v3691
    %v3710 = vadd.f32 %v3655, %v3692
    %v3711 = vadd.f32 %v3656, %v3693
    %v3712 = vadd.f32 %v3657, %v3691
    %v3713 = vadd.f32 %v3658, %v3692
    %v3714 = vadd.f32 %v3659, %v3693
    %v3715 = vadd.f32 %v3660, %v3691
    %v3716 = vadd.f32 %v3661, %v3692
    %v3717 = vadd.f32 %v3662, %v3693
    %v3718 = vadd.f32 %v3663, %v3691
    %v3719 = vadd.f32 %v3664, %v3692
    %v3720 = vadd.f32 %v3665, %v3693
    %v3721 = vadd.f32 %v3666, %v3691
    %v3722 = vadd.f32 %v3667, %v3692
    %v3723 = vadd.f32 %v3668, %v3693
    %v3724 = vadd.f32 %v3669, %v3691
    %v3725 = vadd.f32 %v3670, %v3692
    %v3726 = vadd.f32 %v3671, %v3693
    %v3727 = vadd.f32 %v3672, %v3691
    %v3728 = vadd.f32 %v3673, %v3692
    %v3729 = vadd.f32 %v3674, %v3693
    %v3730 = vadd.f32 %v3675, %v3691
    %v3731 = vadd.f32 %v3676, %v3692
    %v3732 = vadd.f32 %v3677, %v3693
    %v3733 = vadd.f32 %v3678, %v3691
    %v3734 = vadd.f32 %v3679, %v3692
    %v3735 = vadd.f32 %v3680, %v3693
    %v3736 = vadd.f32 %v3681, %v3691
    %v3737 = vadd.f32 %v3682, %v3692
    %v3738 = vadd.f32 %v3683, %v3693
    %v3739 = vadd.f32 %v3684, %v3691
    %v3740 = vadd.f32 %v3685, %v3692
    %v3741 = vadd.f32 %v3686, %v3693
    %v3742 = vadd.f32 %v3687, %v3691
    %v3743 = vadd.f32 %v3688, %v3692
    %v3744 = vadd.f32 %v3689, %v3693
    %v3745 = vpack.c.bf16 %v3700, %v3697
    %v3746 = vpack.c.bf16 %v3701, %v3698
    %v3747 = vpack.c.bf16 %v3702, %v3699
    %v3748 = vpack.c.bf16 %v3706, %v3703
    %v3749 = vpack.c.bf16 %v3707, %v3704
    %v3750 = vpack.c.bf16 %v3708, %v3705
    %v3751 = vpack.c.bf16 %v3712, %v3709
    %v3752 = vpack.c.bf16 %v3713, %v3710
    %v3753 = vpack.c.bf16 %v3714, %v3711
    %v3754 = vpack.c.bf16 %v3718, %v3715
    %v3755 = vpack.c.bf16 %v3719, %v3716
    %v3756 = vpack.c.bf16 %v3720, %v3717
    %v3757 = vpack.c.bf16 %v3724, %v3721
    %v3758 = vpack.c.bf16 %v3725, %v3722
    %v3759 = vpack.c.bf16 %v3726, %v3723
    %v3760 = vpack.c.bf16 %v3730, %v3727
    %v3761 = vpack.c.bf16 %v3731, %v3728
    %v3762 = vpack.c.bf16 %v3732, %v3729
    %v3763 = vpack.c.bf16 %v3736, %v3733
    %v3764 = vpack.c.bf16 %v3737, %v3734
    %v3765 = vpack.c.bf16 %v3738, %v3735
    %v3766 = vpack.c.bf16 %v3742, %v3739
    %v3767 = vpack.c.bf16 %v3743, %v3740
    %v3768 = vpack.c.bf16 %v3744, %v3741
    %s3769 = scalar_lea.vmem [#allocation6], 1152
    %v3770 = vld [vmem:[%s3769] sm:$0xff]
    %v3771 = vld [vmem:[%s3769 + $0x8] sm:$0xf]
    %v3772 = vld [vmem:[%s3769 + $0xc] sm:$0xff]
    %v3773 = vld [vmem:[%s3769 + $0x14] sm:$0xf]
    %v3774 = vld [vmem:[%s3769 + $0x18] sm:$0xff]
    %v3775 = vld [vmem:[%s3769 + $0x20] sm:$0xf]
    %v3776 = vld [vmem:[%s3769 + $0x24] sm:$0xff]
    %v3777 = vld [vmem:[%s3769 + $0x2c] sm:$0xf]
    %v3778 = vld [vmem:[%s3769 + $0x30] sm:$0xff]
    %v3779 = vld [vmem:[%s3769 + $0x38] sm:$0xf]
    %v3780 = vld [vmem:[%s3769 + $0x3c] sm:$0xff]
    %v3781 = vld [vmem:[%s3769 + $0x44] sm:$0xf]
    %v3782 = vld [vmem:[%s3769 + $0x48] sm:$0xff]
    %v3783 = vld [vmem:[%s3769 + $0x50] sm:$0xf]
    %v3784 = vld [vmem:[%s3769 + $0x54] sm:$0xff]
    %v3785 = vld [vmem:[%s3769 + $0x5c] sm:$0xf]
    %v3786 = vld [vmem:[%s3769 + $0x60] sm:$0xff]
    %v3787 = vld [vmem:[%s3769 + $0x68] sm:$0xf]
    %v3788 = vld [vmem:[%s3769 + $0x6c] sm:$0xff]
    %v3789 = vld [vmem:[%s3769 + $0x74] sm:$0xf]
    %v3790 = vld [vmem:[%s3769 + $0x78] sm:$0xff]
    %v3791 = vld [vmem:[%s3769 + $0x80] sm:$0xf]
    %v3792 = vld [vmem:[%s3769 + $0x84] sm:$0xff]
    %v3793 = vld [vmem:[%s3769 + $0x8c] sm:$0xf]
    %v3794 = vld [vmem:[%s3769 + $0x90] sm:$0xff]
    %v3795 = vld [vmem:[%s3769 + $0x98] sm:$0xf]
    %v3796 = vld [vmem:[%s3769 + $0x9c] sm:$0xff]
    %v3797 = vld [vmem:[%s3769 + $0xa4] sm:$0xf]
    %v3798 = vld [vmem:[%s3769 + $0xa8] sm:$0xff]
    %v3799 = vld [vmem:[%s3769 + $0xb0] sm:$0xf]
    %v3800 = vld [vmem:[%s3769 + $0xb4] sm:$0xff]
    %v3801 = vld [vmem:[%s3769 + $0xbc] sm:$0xf]
    %v3802 = vld [vmem:[%s3769 + $0xc0] sm:$0xff]
    %v3803 = vld [vmem:[%s3769 + $0xc8] sm:$0xf]
    %v3804 = vld [vmem:[%s3769 + $0xcc] sm:$0xff]
    %v3805 = vld [vmem:[%s3769 + $0xd4] sm:$0xf]
    %v3806 = vld [vmem:[%s3769 + $0xd8] sm:$0xff]
    %v3807 = vld [vmem:[%s3769 + $0xe0] sm:$0xf]
    %v3808 = vld [vmem:[%s3769 + $0xe4] sm:$0xff]
    %v3809 = vld [vmem:[%s3769 + $0xec] sm:$0xf]
    %v3810 = vld [vmem:[%s3769 + $0xf0] sm:$0xff]
    %v3811 = vld [vmem:[%s3769 + $0xf8] sm:$0xf]
    %v3812 = vld [vmem:[%s3769 + $0xfc] sm:$0xff]
    %v3813 = vld [vmem:[%s3769 + $0x104] sm:$0xf]
    %v3814 = vld [vmem:[%s3769 + $0x108] sm:$0xff]
    %v3815 = vld [vmem:[%s3769 + $0x110] sm:$0xf]
    %v3816 = vld [vmem:[%s3769 + $0x114] sm:$0xff]
    %v3817 = vld [vmem:[%s3769 + $0x11c] sm:$0xf]
    %v3818 = vld [vmem:[%s3769 + $0x120] sm:$0xff]
    %v3819 = vld [vmem:[%s3769 + $0x128] sm:$0xf]
    %v3820 = vld [vmem:[%s3769 + $0x12c] sm:$0xff]
    %v3821 = vld [vmem:[%s3769 + $0x134] sm:$0xf]
    %v3822 = vld [vmem:[%s3769 + $0x138] sm:$0xff]
    %v3823 = vld [vmem:[%s3769 + $0x140] sm:$0xf]
    %v3824 = vld [vmem:[%s3769 + $0x144] sm:$0xff]
    %v3825 = vld [vmem:[%s3769 + $0x14c] sm:$0xf]
    %v3826 = vld [vmem:[%s3769 + $0x150] sm:$0xff]
    %v3827 = vld [vmem:[%s3769 + $0x158] sm:$0xf]
    %v3828 = vld [vmem:[%s3769 + $0x15c] sm:$0xff]
    %v3829 = vld [vmem:[%s3769 + $0x164] sm:$0xf]
    %v3830 = vld [vmem:[%s3769 + $0x168] sm:$0xff]
    %v3831 = vld [vmem:[%s3769 + $0x170] sm:$0xf]
    %v3832 = vld [vmem:[%s3769 + $0x174] sm:$0xff]
    %v3833 = vld [vmem:[%s3769 + $0x17c] sm:$0xf]
    %v3834 = vld [vmem:[%s3769 + $0x180] sm:$0xff]
    %v3835 = vld [vmem:[%s3769 + $0x188] sm:$0xf]
    %v3836 = vld [vmem:[%s3769 + $0x18c] sm:$0xff]
    %v3837 = vld [vmem:[%s3769 + $0x194] sm:$0xf]
    %v3838 = vld [vmem:[%s3769 + $0x198] sm:$0xff]
    %v3839 = vld [vmem:[%s3769 + $0x1a0] sm:$0xf]
    %v3840 = vld [vmem:[%s3769 + $0x1a4] sm:$0xff]
    %v3841 = vld [vmem:[%s3769 + $0x1ac] sm:$0xf]
    %v3842 = vld [vmem:[%s3769 + $0x1b0] sm:$0xff]
    %v3843 = vld [vmem:[%s3769 + $0x1b8] sm:$0xf]
    %v3844 = vld [vmem:[%s3769 + $0x1bc] sm:$0xff]
    %v3845 = vld [vmem:[%s3769 + $0x1c4] sm:$0xf]
    %v3846 = vld [vmem:[%s3769 + $0x1c8] sm:$0xff]
    %v3847 = vld [vmem:[%s3769 + $0x1d0] sm:$0xf]
    %v3848 = vld [vmem:[%s3769 + $0x1d4] sm:$0xff]
    %v3849 = vld [vmem:[%s3769 + $0x1dc] sm:$0xf]
    %v3850 = vld [vmem:[%s3769 + $0x1e0] sm:$0xff]
    %v3851 = vld [vmem:[%s3769 + $0x1e8] sm:$0xf]
    %v3852 = vld [vmem:[%s3769 + $0x1ec] sm:$0xff]
    %v3853 = vld [vmem:[%s3769 + $0x1f4] sm:$0xf]
    %v3854 = vld [vmem:[%s3769 + $0x1f8] sm:$0xff]
    %v3855 = vld [vmem:[%s3769 + $0x200] sm:$0xf]
    %v3856 = vld [vmem:[%s3769 + $0x204] sm:$0xff]
    %v3857 = vld [vmem:[%s3769 + $0x20c] sm:$0xf]
    %v3858 = vld [vmem:[%s3769 + $0x210] sm:$0xff]
    %v3859 = vld [vmem:[%s3769 + $0x218] sm:$0xf]
    %v3860 = vld [vmem:[%s3769 + $0x21c] sm:$0xff]
    %v3861 = vld [vmem:[%s3769 + $0x224] sm:$0xf]
    %v3862 = vld [vmem:[%s3769 + $0x228] sm:$0xff]
    %v3863 = vld [vmem:[%s3769 + $0x230] sm:$0xf]
    %v3864 = vld [vmem:[%s3769 + $0x234] sm:$0xff]
    %v3865 = vld [vmem:[%s3769 + $0x23c] sm:$0xf]
    %v3962 = vunpack.c.l.b16 %v3770
    %v3963 = vunpack.c.h.b16 %v3770
    %v3964 = vunpack.c.l.b16 %v3771
    %v3965 = vunpack.c.l.b16 %v3772
    %v3966 = vunpack.c.h.b16 %v3772
    %v3967 = vunpack.c.l.b16 %v3773
    %v3968 = vunpack.c.l.b16 %v3774
    %v3969 = vunpack.c.h.b16 %v3774
    %v3970 = vunpack.c.l.b16 %v3775
    %v3971 = vunpack.c.l.b16 %v3776
    %v3972 = vunpack.c.h.b16 %v3776
    %v3973 = vunpack.c.l.b16 %v3777
    %v3974 = vunpack.c.l.b16 %v3778
    %v3975 = vunpack.c.h.b16 %v3778
    %v3976 = vunpack.c.l.b16 %v3779
    %v3977 = vunpack.c.l.b16 %v3780
    %v3978 = vunpack.c.h.b16 %v3780
    %v3979 = vunpack.c.l.b16 %v3781
    %v3980 = vunpack.c.l.b16 %v3782
    %v3981 = vunpack.c.h.b16 %v3782
    %v3982 = vunpack.c.l.b16 %v3783
    %v3983 = vunpack.c.l.b16 %v3784
    %v3984 = vunpack.c.h.b16 %v3784
    %v3985 = vunpack.c.l.b16 %v3785
    %v3986 = vunpack.c.l.b16 %v3786
    %v3987 = vunpack.c.h.b16 %v3786
    %v3988 = vunpack.c.l.b16 %v3787
    %v3989 = vunpack.c.l.b16 %v3788
    %v3990 = vunpack.c.h.b16 %v3788
    %v3991 = vunpack.c.l.b16 %v3789
    %v3992 = vunpack.c.l.b16 %v3790
    %v3993 = vunpack.c.h.b16 %v3790
    %v3994 = vunpack.c.l.b16 %v3791
    %v3995 = vunpack.c.l.b16 %v3792
    %v3996 = vunpack.c.h.b16 %v3792
    %v3997 = vunpack.c.l.b16 %v3793
    %v3998 = vunpack.c.l.b16 %v3794
    %v3999 = vunpack.c.h.b16 %v3794
    %v4000 = vunpack.c.l.b16 %v3795
    %v4001 = vunpack.c.l.b16 %v3796
    %v4002 = vunpack.c.h.b16 %v3796
    %v4003 = vunpack.c.l.b16 %v3797
    %v4004 = vunpack.c.l.b16 %v3798
    %v4005 = vunpack.c.h.b16 %v3798
    %v4006 = vunpack.c.l.b16 %v3799
    %v4007 = vunpack.c.l.b16 %v3800
    %v4008 = vunpack.c.h.b16 %v3800
    %v4009 = vunpack.c.l.b16 %v3801
    %v4010 = vunpack.c.l.b16 %v3802
    %v4011 = vunpack.c.h.b16 %v3802
    %v4012 = vunpack.c.l.b16 %v3803
    %v4013 = vunpack.c.l.b16 %v3804
    %v4014 = vunpack.c.h.b16 %v3804
    %v4015 = vunpack.c.l.b16 %v3805
    %v4016 = vunpack.c.l.b16 %v3806
    %v4017 = vunpack.c.h.b16 %v3806
    %v4018 = vunpack.c.l.b16 %v3807
    %v4019 = vunpack.c.l.b16 %v3808
    %v4020 = vunpack.c.h.b16 %v3808
    %v4021 = vunpack.c.l.b16 %v3809
    %v4022 = vunpack.c.l.b16 %v3810
    %v4023 = vunpack.c.h.b16 %v3810
    %v4024 = vunpack.c.l.b16 %v3811
    %v4025 = vunpack.c.l.b16 %v3812
    %v4026 = vunpack.c.h.b16 %v3812
    %v4027 = vunpack.c.l.b16 %v3813
    %v4028 = vunpack.c.l.b16 %v3814
    %v4029 = vunpack.c.h.b16 %v3814
    %v4030 = vunpack.c.l.b16 %v3815
    %v4031 = vunpack.c.l.b16 %v3816
    %v4032 = vunpack.c.h.b16 %v3816
    %v4033 = vunpack.c.l.b16 %v3817
    %v4034 = vunpack.c.l.b16 %v3818
    %v4035 = vunpack.c.h.b16 %v3818
    %v4036 = vunpack.c.l.b16 %v3819
    %v4037 = vunpack.c.l.b16 %v3820
    %v4038 = vunpack.c.h.b16 %v3820
    %v4039 = vunpack.c.l.b16 %v3821
    %v4040 = vunpack.c.l.b16 %v3822
    %v4041 = vunpack.c.h.b16 %v3822
    %v4042 = vunpack.c.l.b16 %v3823
    %v4043 = vunpack.c.l.b16 %v3824
    %v4044 = vunpack.c.h.b16 %v3824
    %v4045 = vunpack.c.l.b16 %v3825
    %v4046 = vunpack.c.l.b16 %v3826
    %v4047 = vunpack.c.h.b16 %v3826
    %v4048 = vunpack.c.l.b16 %v3827
    %v4049 = vunpack.c.l.b16 %v3828
    %v4050 = vunpack.c.h.b16 %v3828
    %v4051 = vunpack.c.l.b16 %v3829
    %v4052 = vunpack.c.l.b16 %v3830
    %v4053 = vunpack.c.h.b16 %v3830
    %v4054 = vunpack.c.l.b16 %v3831
    %v4055 = vunpack.c.l.b16 %v3832
    %v4056 = vunpack.c.h.b16 %v3832
    %v4057 = vunpack.c.l.b16 %v3833
    %v4058 = vunpack.c.l.b16 %v3834
    %v4059 = vunpack.c.h.b16 %v3834
    %v4060 = vunpack.c.l.b16 %v3835
    %v4061 = vunpack.c.l.b16 %v3836
    %v4062 = vunpack.c.h.b16 %v3836
    %v4063 = vunpack.c.l.b16 %v3837
    %v4064 = vunpack.c.l.b16 %v3838
    %v4065 = vunpack.c.h.b16 %v3838
    %v4066 = vunpack.c.l.b16 %v3839
    %v4067 = vunpack.c.l.b16 %v3840
    %v4068 = vunpack.c.h.b16 %v3840
    %v4069 = vunpack.c.l.b16 %v3841
    %v4070 = vunpack.c.l.b16 %v3842
    %v4071 = vunpack.c.h.b16 %v3842
    %v4072 = vunpack.c.l.b16 %v3843
    %v4073 = vunpack.c.l.b16 %v3844
    %v4074 = vunpack.c.h.b16 %v3844
    %v4075 = vunpack.c.l.b16 %v3845
    %v4076 = vunpack.c.l.b16 %v3846
    %v4077 = vunpack.c.h.b16 %v3846
    %v4078 = vunpack.c.l.b16 %v3847
    %v4079 = vunpack.c.l.b16 %v3848
    %v4080 = vunpack.c.h.b16 %v3848
    %v4081 = vunpack.c.l.b16 %v3849
    %v4082 = vunpack.c.l.b16 %v3850
    %v4083 = vunpack.c.h.b16 %v3850
    %v4084 = vunpack.c.l.b16 %v3851
    %v4085 = vunpack.c.l.b16 %v3852
    %v4086 = vunpack.c.h.b16 %v3852
    %v4087 = vunpack.c.l.b16 %v3853
    %v4088 = vunpack.c.l.b16 %v3854
    %v4089 = vunpack.c.h.b16 %v3854
    %v4090 = vunpack.c.l.b16 %v3855
    %v4091 = vunpack.c.l.b16 %v3856
    %v4092 = vunpack.c.h.b16 %v3856
    %v4093 = vunpack.c.l.b16 %v3857
    %v4094 = vunpack.c.l.b16 %v3858
    %v4095 = vunpack.c.h.b16 %v3858
    %v4096 = vunpack.c.l.b16 %v3859
    %v4097 = vunpack.c.l.b16 %v3860
    %v4098 = vunpack.c.h.b16 %v3860
    %v4099 = vunpack.c.l.b16 %v3861
    %v4100 = vunpack.c.l.b16 %v3862
    %v4101 = vunpack.c.h.b16 %v3862
    %v4102 = vunpack.c.l.b16 %v3863
    %v4103 = vunpack.c.l.b16 %v3864
    %v4104 = vunpack.c.h.b16 %v3864
    %v4105 = vunpack.c.l.b16 %v3865
    %v4106 = vpack.c.b16 %v3965, %v3962
    %v4107 = vpack.c.b16 %v3966, %v3963
    %v4108 = vpack.c.b16 %v3967, %v3964
    %v4109 = vpack.c.b16 %v3971, %v3968
    %v4110 = vpack.c.b16 %v3972, %v3969
    %v4111 = vpack.c.b16 %v3973, %v3970
    %v4112 = vpack.c.b16 %v3977, %v3974
    %v4113 = vpack.c.b16 %v3978, %v3975
    %v4114 = vpack.c.b16 %v3979, %v3976
    %v4115 = vpack.c.b16 %v3983, %v3980
    %v4116 = vpack.c.b16 %v3984, %v3981
    %v4117 = vpack.c.b16 %v3985, %v3982
    %v4118 = vpack.c.b16 %v3989, %v3986
    %v4119 = vpack.c.b16 %v3990, %v3987
    %v4120 = vpack.c.b16 %v3991, %v3988
    %v4121 = vpack.c.b16 %v3995, %v3992
    %v4122 = vpack.c.b16 %v3996, %v3993
    %v4123 = vpack.c.b16 %v3997, %v3994
    %v4124 = vpack.c.b16 %v4001, %v3998
    %v4125 = vpack.c.b16 %v4002, %v3999
    %v4126 = vpack.c.b16 %v4003, %v4000
    %v4127 = vpack.c.b16 %v4007, %v4004
    %v4128 = vpack.c.b16 %v4008, %v4005
    %v4129 = vpack.c.b16 %v4009, %v4006
    %v4130 = vpack.c.b16 %v4013, %v4010
    %v4131 = vpack.c.b16 %v4014, %v4011
    %v4132 = vpack.c.b16 %v4015, %v4012
    %v4133 = vpack.c.b16 %v4019, %v4016
    %v4134 = vpack.c.b16 %v4020, %v4017
    %v4135 = vpack.c.b16 %v4021, %v4018
    %v4136 = vpack.c.b16 %v4025, %v4022
    %v4137 = vpack.c.b16 %v4026, %v4023
    %v4138 = vpack.c.b16 %v4027, %v4024
    %v4139 = vpack.c.b16 %v4031, %v4028
    %v4140 = vpack.c.b16 %v4032, %v4029
    %v4141 = vpack.c.b16 %v4033, %v4030
    %v4142 = vpack.c.b16 %v4037, %v4034
    %v4143 = vpack.c.b16 %v4038, %v4035
    %v4144 = vpack.c.b16 %v4039, %v4036
    %v4145 = vpack.c.b16 %v4043, %v4040
    %v4146 = vpack.c.b16 %v4044, %v4041
    %v4147 = vpack.c.b16 %v4045, %v4042
    %v4148 = vpack.c.b16 %v4049, %v4046
    %v4149 = vpack.c.b16 %v4050, %v4047
    %v4150 = vpack.c.b16 %v4051, %v4048
    %v4151 = vpack.c.b16 %v4055, %v4052
    %v4152 = vpack.c.b16 %v4056, %v4053
    %v4153 = vpack.c.b16 %v4057, %v4054
    %v4154 = vpack.c.b16 %v4061, %v4058
    %v4155 = vpack.c.b16 %v4062, %v4059
    %v4156 = vpack.c.b16 %v4063, %v4060
    %v4157 = vpack.c.b16 %v4067, %v4064
    %v4158 = vpack.c.b16 %v4068, %v4065
    %v4159 = vpack.c.b16 %v4069, %v4066
    %v4160 = vpack.c.b16 %v4073, %v4070
    %v4161 = vpack.c.b16 %v4074, %v4071
    %v4162 = vpack.c.b16 %v4075, %v4072
    %v4163 = vpack.c.b16 %v4079, %v4076
    %v4164 = vpack.c.b16 %v4080, %v4077
    %v4165 = vpack.c.b16 %v4081, %v4078
    %v4166 = vpack.c.b16 %v4085, %v4082
    %v4167 = vpack.c.b16 %v4086, %v4083
    %v4168 = vpack.c.b16 %v4087, %v4084
    %v4169 = vpack.c.b16 %v4091, %v4088
    %v4170 = vpack.c.b16 %v4092, %v4089
    %v4171 = vpack.c.b16 %v4093, %v4090
    %v4172 = vpack.c.b16 %v4097, %v4094
    %v4173 = vpack.c.b16 %v4098, %v4095
    %v4174 = vpack.c.b16 %v4099, %v4096
    %v4175 = vpack.c.b16 %v4103, %v4100
    %v4176 = vpack.c.b16 %v4104, %v4101
    %v4177 = vpack.c.b16 %v4105, %v4102
    %4250 = vmatpush.bf16.msra.mxu0 %v4127
    %4251 = vmatpush.bf16.msra.mxu0 %v4124
    %4252 = vmatpush.bf16.msra.mxu0 %v4121
    %4253 = vmatpush.bf16.msra.mxu0 %v4118
    %4254 = vmatpush.bf16.msra.mxu0 %v4115
    %4255 = vmatpush.bf16.msra.mxu0 %v4112
    %4256 = vmatpush.bf16.msra.mxu0 %v4109
    %4257 = vmatpush.bf16.msra.mxu0 %v4106
    %4258 = vmatmul.bf16.gmra.mxu0 %v3745
    %v4259 = vpop.f32.mrf.mxu0
    %v4260 = vadd.f32 0.0, %v4259
    %v4261 = vpop.f32.mrf.mxu0
    %v4262 = vadd.f32 0.0, %v4261
    %4263 = vmatmul.bf16.gmra.mxu0 %v3748
    %v4264 = vpop.f32.mrf.mxu0
    %v4265 = vadd.f32 0.0, %v4264
    %v4266 = vpop.f32.mrf.mxu0
    %v4267 = vadd.f32 0.0, %v4266
    %4268 = vmatmul.bf16.gmra.mxu0 %v3751
    %v4269 = vpop.f32.mrf.mxu0
    %v4270 = vadd.f32 0.0, %v4269
    %v4271 = vpop.f32.mrf.mxu0
    %v4272 = vadd.f32 0.0, %v4271
    %4273 = vmatmul.bf16.gmra.mxu0 %v3754
    %v4274 = vpop.f32.mrf.mxu0
    %v4275 = vadd.f32 0.0, %v4274
    %v4276 = vpop.f32.mrf.mxu0
    %v4277 = vadd.f32 0.0, %v4276
    %4278 = vmatmul.bf16.gmra.mxu0 %v3757
    %v4279 = vpop.f32.mrf.mxu0
    %v4280 = vadd.f32 0.0, %v4279
    %v4281 = vpop.f32.mrf.mxu0
    %v4282 = vadd.f32 0.0, %v4281
    %4283 = vmatmul.bf16.gmra.mxu0 %v3760
    %v4284 = vpop.f32.mrf.mxu0
    %v4285 = vadd.f32 0.0, %v4284
    %v4286 = vpop.f32.mrf.mxu0
    %v4287 = vadd.f32 0.0, %v4286
    %4288 = vmatmul.bf16.gmra.mxu0 %v3763
    %v4289 = vpop.f32.mrf.mxu0
    %v4290 = vadd.f32 0.0, %v4289
    %v4291 = vpop.f32.mrf.mxu0
    %v4292 = vadd.f32 0.0, %v4291
    %4293 = vmatmul.bf16.gmra.mxu0 %v3766
    %v4294 = vpop.f32.mrf.mxu0
    %v4295 = vadd.f32 0.0, %v4294
    %v4296 = vpop.f32.mrf.mxu0
    %v4297 = vadd.f32 0.0, %v4296
    %4298 = vdwg.mxu0
    %4299 = vmatpush.bf16.msra.mxu0 %v4151
    %4300 = vmatpush.bf16.msra.mxu0 %v4148
    %4301 = vmatpush.bf16.msra.mxu0 %v4145
    %4302 = vmatpush.bf16.msra.mxu0 %v4142
    %4303 = vmatpush.bf16.msra.mxu0 %v4139
    %4304 = vmatpush.bf16.msra.mxu0 %v4136
    %4305 = vmatpush.bf16.msra.mxu0 %v4133
    %4306 = vmatpush.bf16.msra.mxu0 %v4130
    %4307 = vmatmul.bf16.gmra.mxu0 %v3746
    %v4308 = vpop.f32.mrf.mxu0
    %v4309 = vadd.f32 %v4260, %v4308
    %v4310 = vpop.f32.mrf.mxu0
    %v4311 = vadd.f32 %v4262, %v4310
    %4312 = vmatmul.bf16.gmra.mxu0 %v3749
    %v4313 = vpop.f32.mrf.mxu0
    %v4314 = vadd.f32 %v4265, %v4313
    %v4315 = vpop.f32.mrf.mxu0
    %v4316 = vadd.f32 %v4267, %v4315
    %4317 = vmatmul.bf16.gmra.mxu0 %v3752
    %v4318 = vpop.f32.mrf.mxu0
    %v4319 = vadd.f32 %v4270, %v4318
    %v4320 = vpop.f32.mrf.mxu0
    %v4321 = vadd.f32 %v4272, %v4320
    %4322 = vmatmul.bf16.gmra.mxu0 %v3755
    %v4323 = vpop.f32.mrf.mxu0
    %v4324 = vadd.f32 %v4275, %v4323
    %v4325 = vpop.f32.mrf.mxu0
    %v4326 = vadd.f32 %v4277, %v4325
    %4327 = vmatmul.bf16.gmra.mxu0 %v3758
    %v4328 = vpop.f32.mrf.mxu0
    %v4329 = vadd.f32 %v4280, %v4328
    %v4330 = vpop.f32.mrf.mxu0
    %v4331 = vadd.f32 %v4282, %v4330
    %4332 = vmatmul.bf16.gmra.mxu0 %v3761
    %v4333 = vpop.f32.mrf.mxu0
    %v4334 = vadd.f32 %v4285, %v4333
    %v4335 = vpop.f32.mrf.mxu0
    %v4336 = vadd.f32 %v4287, %v4335
    %4337 = vmatmul.bf16.gmra.mxu0 %v3764
    %v4338 = vpop.f32.mrf.mxu0
    %v4339 = vadd.f32 %v4290, %v4338
    %v4340 = vpop.f32.mrf.mxu0
    %v4341 = vadd.f32 %v4292, %v4340
    %4342 = vmatmul.bf16.gmra.mxu0 %v3767
    %v4343 = vpop.f32.mrf.mxu0
    %v4344 = vadd.f32 %v4295, %v4343
    %v4345 = vpop.f32.mrf.mxu0
    %v4346 = vadd.f32 %v4297, %v4345
    %4347 = vdwg.mxu0
    %4348 = vmatpush.bf16.msra.mxu0 %v4175
    %4349 = vmatpush.bf16.msra.mxu0 %v4172
    %4350 = vmatpush.bf16.msra.mxu0 %v4169
    %4351 = vmatpush.bf16.msra.mxu0 %v4166
    %4352 = vmatpush.bf16.msra.mxu0 %v4163
    %4353 = vmatpush.bf16.msra.mxu0 %v4160
    %4354 = vmatpush.bf16.msra.mxu0 %v4157
    %4355 = vmatpush.bf16.msra.mxu0 %v4154
    %4356 = vmatmul.bf16.gmra.mxu0 %v3747
    %v4357 = vpop.f32.mrf.mxu0
    %v4358 = vadd.f32 %v4309, %v4357
    %v4359 = vpop.f32.mrf.mxu0
    %v4360 = vadd.f32 %v4311, %v4359
    %4361 = vmatmul.bf16.gmra.mxu0 %v3750
    %v4362 = vpop.f32.mrf.mxu0
    %v4363 = vadd.f32 %v4314, %v4362
    %v4364 = vpop.f32.mrf.mxu0
    %v4365 = vadd.f32 %v4316, %v4364
    %4366 = vmatmul.bf16.gmra.mxu0 %v3753
    %v4367 = vpop.f32.mrf.mxu0
    %v4368 = vadd.f32 %v4319, %v4367
    %v4369 = vpop.f32.mrf.mxu0
    %v4370 = vadd.f32 %v4321, %v4369
    %4371 = vmatmul.bf16.gmra.mxu0 %v3756
    %v4372 = vpop.f32.mrf.mxu0
    %v4373 = vadd.f32 %v4324, %v4372
    %v4374 = vpop.f32.mrf.mxu0
    %v4375 = vadd.f32 %v4326, %v4374
    %4376 = vmatmul.bf16.gmra.mxu0 %v3759
    %v4377 = vpop.f32.mrf.mxu0
    %v4378 = vadd.f32 %v4329, %v4377
    %v4379 = vpop.f32.mrf.mxu0
    %v4380 = vadd.f32 %v4331, %v4379
    %4381 = vmatmul.bf16.gmra.mxu0 %v3762
    %v4382 = vpop.f32.mrf.mxu0
    %v4383 = vadd.f32 %v4334, %v4382
    %v4384 = vpop.f32.mrf.mxu0
    %v4385 = vadd.f32 %v4336, %v4384
    %4386 = vmatmul.bf16.gmra.mxu0 %v3765
    %v4387 = vpop.f32.mrf.mxu0
    %v4388 = vadd.f32 %v4339, %v4387
    %v4389 = vpop.f32.mrf.mxu0
    %v4390 = vadd.f32 %v4341, %v4389
    %4391 = vmatmul.bf16.gmra.mxu0 %v3768
    %v4392 = vpop.f32.mrf.mxu0
    %v4393 = vadd.f32 %v4344, %v4392
    %v4394 = vpop.f32.mrf.mxu0
    %v4395 = vadd.f32 %v4346, %v4394
    %4396 = vdwg.mxu0
    %4397 = vmatpush.bf16.msra.mxu0 %v4128
    %4398 = vmatpush.bf16.msra.mxu0 %v4125
    %4399 = vmatpush.bf16.msra.mxu0 %v4122
    %4400 = vmatpush.bf16.msra.mxu0 %v4119
    %4401 = vmatpush.bf16.msra.mxu0 %v4116
    %4402 = vmatpush.bf16.msra.mxu0 %v4113
    %4403 = vmatpush.bf16.msra.mxu0 %v4110
    %4404 = vmatpush.bf16.msra.mxu0 %v4107
    %4405 = vmatmul.bf16.gmra.mxu0 %v3745
    %v4406 = vpop.f32.mrf.mxu0
    %v4407 = vadd.f32 0.0, %v4406
    %v4408 = vpop.f32.mrf.mxu0
    %v4409 = vadd.f32 0.0, %v4408
    %4410 = vmatmul.bf16.gmra.mxu0 %v3748
    %v4411 = vpop.f32.mrf.mxu0
    %v4412 = vadd.f32 0.0, %v4411
    %v4413 = vpop.f32.mrf.mxu0
    %v4414 = vadd.f32 0.0, %v4413
    %4415 = vmatmul.bf16.gmra.mxu0 %v3751
    %v4416 = vpop.f32.mrf.mxu0
    %v4417 = vadd.f32 0.0, %v4416
    %v4418 = vpop.f32.mrf.mxu0
    %v4419 = vadd.f32 0.0, %v4418
    %4420 = vmatmul.bf16.gmra.mxu0 %v3754
    %v4421 = vpop.f32.mrf.mxu0
    %v4422 = vadd.f32 0.0, %v4421
    %v4423 = vpop.f32.mrf.mxu0
    %v4424 = vadd.f32 0.0, %v4423
    %4425 = vmatmul.bf16.gmra.mxu0 %v3757
    %v4426 = vpop.f32.mrf.mxu0
    %v4427 = vadd.f32 0.0, %v4426
    %v4428 = vpop.f32.mrf.mxu0
    %v4429 = vadd.f32 0.0, %v4428
    %4430 = vmatmul.bf16.gmra.mxu0 %v3760
    %v4431 = vpop.f32.mrf.mxu0
    %v4432 = vadd.f32 0.0, %v4431
    %v4433 = vpop.f32.mrf.mxu0
    %v4434 = vadd.f32 0.0, %v4433
    %4435 = vmatmul.bf16.gmra.mxu0 %v3763
    %v4436 = vpop.f32.mrf.mxu0
    %v4437 = vadd.f32 0.0, %v4436
    %v4438 = vpop.f32.mrf.mxu0
    %v4439 = vadd.f32 0.0, %v4438
    %4440 = vmatmul.bf16.gmra.mxu0 %v3766
    %v4441 = vpop.f32.mrf.mxu0
    %v4442 = vadd.f32 0.0, %v4441
    %v4443 = vpop.f32.mrf.mxu0
    %v4444 = vadd.f32 0.0, %v4443
    %4445 = vdwg.mxu0
    %4446 = vmatpush.bf16.msra.mxu0 %v4152
    %4447 = vmatpush.bf16.msra.mxu0 %v4149
    %4448 = vmatpush.bf16.msra.mxu0 %v4146
    %4449 = vmatpush.bf16.msra.mxu0 %v4143
    %4450 = vmatpush.bf16.msra.mxu0 %v4140
    %4451 = vmatpush.bf16.msra.mxu0 %v4137
    %4452 = vmatpush.bf16.msra.mxu0 %v4134
    %4453 = vmatpush.bf16.msra.mxu0 %v4131
    %4454 = vmatmul.bf16.gmra.mxu0 %v3746
    %v4455 = vpop.f32.mrf.mxu0
    %v4456 = vadd.f32 %v4407, %v4455
    %v4457 = vpop.f32.mrf.mxu0
    %v4458 = vadd.f32 %v4409, %v4457
    %4459 = vmatmul.bf16.gmra.mxu0 %v3749
    %v4460 = vpop.f32.mrf.mxu0
    %v4461 = vadd.f32 %v4412, %v4460
    %v4462 = vpop.f32.mrf.mxu0
    %v4463 = vadd.f32 %v4414, %v4462
    %4464 = vmatmul.bf16.gmra.mxu0 %v3752
    %v4465 = vpop.f32.mrf.mxu0
    %v4466 = vadd.f32 %v4417, %v4465
    %v4467 = vpop.f32.mrf.mxu0
    %v4468 = vadd.f32 %v4419, %v4467
    %4469 = vmatmul.bf16.gmra.mxu0 %v3755
    %v4470 = vpop.f32.mrf.mxu0
    %v4471 = vadd.f32 %v4422, %v4470
    %v4472 = vpop.f32.mrf.mxu0
    %v4473 = vadd.f32 %v4424, %v4472
    %4474 = vmatmul.bf16.gmra.mxu0 %v3758
    %v4475 = vpop.f32.mrf.mxu0
    %v4476 = vadd.f32 %v4427, %v4475
    %v4477 = vpop.f32.mrf.mxu0
    %v4478 = vadd.f32 %v4429, %v4477
    %4479 = vmatmul.bf16.gmra.mxu0 %v3761
    %v4480 = vpop.f32.mrf.mxu0
    %v4481 = vadd.f32 %v4432, %v4480
    %v4482 = vpop.f32.mrf.mxu0
    %v4483 = vadd.f32 %v4434, %v4482
    %4484 = vmatmul.bf16.gmra.mxu0 %v3764
    %v4485 = vpop.f32.mrf.mxu0
    %v4486 = vadd.f32 %v4437, %v4485
    %v4487 = vpop.f32.mrf.mxu0
    %v4488 = vadd.f32 %v4439, %v4487
    %4489 = vmatmul.bf16.gmra.mxu0 %v3767
    %v4490 = vpop.f32.mrf.mxu0
    %v4491 = vadd.f32 %v4442, %v4490
    %v4492 = vpop.f32.mrf.mxu0
    %v4493 = vadd.f32 %v4444, %v4492
    %4494 = vdwg.mxu0
    %4495 = vmatpush.bf16.msra.mxu0 %v4176
    %4496 = vmatpush.bf16.msra.mxu0 %v4173
    %4497 = vmatpush.bf16.msra.mxu0 %v4170
    %4498 = vmatpush.bf16.msra.mxu0 %v4167
    %4499 = vmatpush.bf16.msra.mxu0 %v4164
    %4500 = vmatpush.bf16.msra.mxu0 %v4161
    %4501 = vmatpush.bf16.msra.mxu0 %v4158
    %4502 = vmatpush.bf16.msra.mxu0 %v4155
    %4503 = vmatmul.bf16.gmra.mxu0 %v3747
    %v4504 = vpop.f32.mrf.mxu0
    %v4505 = vadd.f32 %v4456, %v4504
    %v4506 = vpop.f32.mrf.mxu0
    %v4507 = vadd.f32 %v4458, %v4506
    %4508 = vmatmul.bf16.gmra.mxu0 %v3750
    %v4509 = vpop.f32.mrf.mxu0
    %v4510 = vadd.f32 %v4461, %v4509
    %v4511 = vpop.f32.mrf.mxu0
    %v4512 = vadd.f32 %v4463, %v4511
    %4513 = vmatmul.bf16.gmra.mxu0 %v3753
    %v4514 = vpop.f32.mrf.mxu0
    %v4515 = vadd.f32 %v4466, %v4514
    %v4516 = vpop.f32.mrf.mxu0
    %v4517 = vadd.f32 %v4468, %v4516
    %4518 = vmatmul.bf16.gmra.mxu0 %v3756
    %v4519 = vpop.f32.mrf.mxu0
    %v4520 = vadd.f32 %v4471, %v4519
    %v4521 = vpop.f32.mrf.mxu0
    %v4522 = vadd.f32 %v4473, %v4521
    %4523 = vmatmul.bf16.gmra.mxu0 %v3759
    %v4524 = vpop.f32.mrf.mxu0
    %v4525 = vadd.f32 %v4476, %v4524
    %v4526 = vpop.f32.mrf.mxu0
    %v4527 = vadd.f32 %v4478, %v4526
    %4528 = vmatmul.bf16.gmra.mxu0 %v3762
    %v4529 = vpop.f32.mrf.mxu0
    %v4530 = vadd.f32 %v4481, %v4529
    %v4531 = vpop.f32.mrf.mxu0
    %v4532 = vadd.f32 %v4483, %v4531
    %4533 = vmatmul.bf16.gmra.mxu0 %v3765
    %v4534 = vpop.f32.mrf.mxu0
    %v4535 = vadd.f32 %v4486, %v4534
    %v4536 = vpop.f32.mrf.mxu0
    %v4537 = vadd.f32 %v4488, %v4536
    %4538 = vmatmul.bf16.gmra.mxu0 %v3768
    %v4539 = vpop.f32.mrf.mxu0
    %v4540 = vadd.f32 %v4491, %v4539
    %v4541 = vpop.f32.mrf.mxu0
    %v4542 = vadd.f32 %v4493, %v4541
    %4543 = vdwg.mxu0
    %4544 = vmatpush.bf16.msra.mxu0 %v4129
    %4545 = vmatpush.bf16.msra.mxu0 %v4126
    %4546 = vmatpush.bf16.msra.mxu0 %v4123
    %4547 = vmatpush.bf16.msra.mxu0 %v4120
    %4548 = vmatpush.bf16.msra.mxu0 %v4117
    %4549 = vmatpush.bf16.msra.mxu0 %v4114
    %4550 = vmatpush.bf16.msra.mxu0 %v4111
    %4551 = vmatpush.bf16.msra.mxu0 %v4108
    %4552 = vmatmul.bf16.gmra.mxu0 %v3745
    %v4553 = vpop.f32.mrf.mxu0
    %v4554 = vadd.f32 0.0, %v4553
    %v4555 = vpop.f32.mrf.mxu0
    %v4556 = vadd.f32 0.0, %v4555
    %4557 = vmatmul.bf16.gmra.mxu0 %v3748
    %v4558 = vpop.f32.mrf.mxu0
    %v4559 = vadd.f32 0.0, %v4558
    %v4560 = vpop.f32.mrf.mxu0
    %v4561 = vadd.f32 0.0, %v4560
    %4562 = vmatmul.bf16.gmra.mxu0 %v3751
    %v4563 = vpop.f32.mrf.mxu0
    %v4564 = vadd.f32 0.0, %v4563
    %v4565 = vpop.f32.mrf.mxu0
    %v4566 = vadd.f32 0.0, %v4565
    %4567 = vmatmul.bf16.gmra.mxu0 %v3754
    %v4568 = vpop.f32.mrf.mxu0
    %v4569 = vadd.f32 0.0, %v4568
    %v4570 = vpop.f32.mrf.mxu0
    %v4571 = vadd.f32 0.0, %v4570
    %4572 = vmatmul.bf16.gmra.mxu0 %v3757
    %v4573 = vpop.f32.mrf.mxu0
    %v4574 = vadd.f32 0.0, %v4573
    %v4575 = vpop.f32.mrf.mxu0
    %v4576 = vadd.f32 0.0, %v4575
    %4577 = vmatmul.bf16.gmra.mxu0 %v3760
    %v4578 = vpop.f32.mrf.mxu0
    %v4579 = vadd.f32 0.0, %v4578
    %v4580 = vpop.f32.mrf.mxu0
    %v4581 = vadd.f32 0.0, %v4580
    %4582 = vmatmul.bf16.gmra.mxu0 %v3763
    %v4583 = vpop.f32.mrf.mxu0
    %v4584 = vadd.f32 0.0, %v4583
    %v4585 = vpop.f32.mrf.mxu0
    %v4586 = vadd.f32 0.0, %v4585
    %4587 = vmatmul.bf16.gmra.mxu0 %v3766
    %v4588 = vpop.f32.mrf.mxu0
    %v4589 = vadd.f32 0.0, %v4588
    %v4590 = vpop.f32.mrf.mxu0
    %v4591 = vadd.f32 0.0, %v4590
    %4592 = vdwg.mxu0
    %4593 = vmatpush.bf16.msra.mxu0 %v4153
    %4594 = vmatpush.bf16.msra.mxu0 %v4150
    %4595 = vmatpush.bf16.msra.mxu0 %v4147
    %4596 = vmatpush.bf16.msra.mxu0 %v4144
    %4597 = vmatpush.bf16.msra.mxu0 %v4141
    %4598 = vmatpush.bf16.msra.mxu0 %v4138
    %4599 = vmatpush.bf16.msra.mxu0 %v4135
    %4600 = vmatpush.bf16.msra.mxu0 %v4132
    %4601 = vmatmul.bf16.gmra.mxu0 %v3746
    %v4602 = vpop.f32.mrf.mxu0
    %v4603 = vadd.f32 %v4554, %v4602
    %v4604 = vpop.f32.mrf.mxu0
    %v4605 = vadd.f32 %v4556, %v4604
    %4606 = vmatmul.bf16.gmra.mxu0 %v3749
    %v4607 = vpop.f32.mrf.mxu0
    %v4608 = vadd.f32 %v4559, %v4607
    %v4609 = vpop.f32.mrf.mxu0
    %v4610 = vadd.f32 %v4561, %v4609
    %4611 = vmatmul.bf16.gmra.mxu0 %v3752
    %v4612 = vpop.f32.mrf.mxu0
    %v4613 = vadd.f32 %v4564, %v4612
    %v4614 = vpop.f32.mrf.mxu0
    %v4615 = vadd.f32 %v4566, %v4614
    %4616 = vmatmul.bf16.gmra.mxu0 %v3755
    %v4617 = vpop.f32.mrf.mxu0
    %v4618 = vadd.f32 %v4569, %v4617
    %v4619 = vpop.f32.mrf.mxu0
    %v4620 = vadd.f32 %v4571, %v4619
    %4621 = vmatmul.bf16.gmra.mxu0 %v3758
    %v4622 = vpop.f32.mrf.mxu0
    %v4623 = vadd.f32 %v4574, %v4622
    %v4624 = vpop.f32.mrf.mxu0
    %v4625 = vadd.f32 %v4576, %v4624
    %4626 = vmatmul.bf16.gmra.mxu0 %v3761
    %v4627 = vpop.f32.mrf.mxu0
    %v4628 = vadd.f32 %v4579, %v4627
    %v4629 = vpop.f32.mrf.mxu0
    %v4630 = vadd.f32 %v4581, %v4629
    %4631 = vmatmul.bf16.gmra.mxu0 %v3764
    %v4632 = vpop.f32.mrf.mxu0
    %v4633 = vadd.f32 %v4584, %v4632
    %v4634 = vpop.f32.mrf.mxu0
    %v4635 = vadd.f32 %v4586, %v4634
    %4636 = vmatmul.bf16.gmra.mxu0 %v3767
    %v4637 = vpop.f32.mrf.mxu0
    %v4638 = vadd.f32 %v4589, %v4637
    %v4639 = vpop.f32.mrf.mxu0
    %v4640 = vadd.f32 %v4591, %v4639
    %4641 = vdwg.mxu0
    %4642 = vmatpush.bf16.msra.mxu0 %v4177
    %4643 = vmatpush.bf16.msra.mxu0 %v4174
    %4644 = vmatpush.bf16.msra.mxu0 %v4171
    %4645 = vmatpush.bf16.msra.mxu0 %v4168
    %4646 = vmatpush.bf16.msra.mxu0 %v4165
    %4647 = vmatpush.bf16.msra.mxu0 %v4162
    %4648 = vmatpush.bf16.msra.mxu0 %v4159
    %4649 = vmatpush.bf16.msra.mxu0 %v4156
    %4650 = vmatmul.bf16.gmra.mxu0 %v3747
    %v4651 = vpop.f32.mrf.mxu0
    %v4652 = vadd.f32 %v4603, %v4651
    %v4653 = vpop.f32.mrf.mxu0
    %v4654 = vadd.f32 %v4605, %v4653
    %4655 = vmatmul.bf16.gmra.mxu0 %v3750
    %v4656 = vpop.f32.mrf.mxu0
    %v4657 = vadd.f32 %v4608, %v4656
    %v4658 = vpop.f32.mrf.mxu0
    %v4659 = vadd.f32 %v4610, %v4658
    %4660 = vmatmul.bf16.gmra.mxu0 %v3753
    %v4661 = vpop.f32.mrf.mxu0
    %v4662 = vadd.f32 %v4613, %v4661
    %v4663 = vpop.f32.mrf.mxu0
    %v4664 = vadd.f32 %v4615, %v4663
    %4665 = vmatmul.bf16.gmra.mxu0 %v3756
    %v4666 = vpop.f32.mrf.mxu0
    %v4667 = vadd.f32 %v4618, %v4666
    %v4668 = vpop.f32.mrf.mxu0
    %v4669 = vadd.f32 %v4620, %v4668
    %4670 = vmatmul.bf16.gmra.mxu0 %v3759
    %v4671 = vpop.f32.mrf.mxu0
    %v4672 = vadd.f32 %v4623, %v4671
    %v4673 = vpop.f32.mrf.mxu0
    %v4674 = vadd.f32 %v4625, %v4673
    %4675 = vmatmul.bf16.gmra.mxu0 %v3762
    %v4676 = vpop.f32.mrf.mxu0
    %v4677 = vadd.f32 %v4628, %v4676
    %v4678 = vpop.f32.mrf.mxu0
    %v4679 = vadd.f32 %v4630, %v4678
    %4680 = vmatmul.bf16.gmra.mxu0 %v3765
    %v4681 = vpop.f32.mrf.mxu0
    %v4682 = vadd.f32 %v4633, %v4681
    %v4683 = vpop.f32.mrf.mxu0
    %v4684 = vadd.f32 %v4635, %v4683
    %4685 = vmatmul.bf16.gmra.mxu0 %v3768
    %v4686 = vpop.f32.mrf.mxu0
    %v4687 = vadd.f32 %v4638, %v4686
    %v4688 = vpop.f32.mrf.mxu0
    %v4689 = vadd.f32 %v4640, %v4688
    %4690 = vdwg.mxu0
    %v4691 = vpack.c.bf16 %v4505, %v4358
    %v4692 = vpack.c.bf16 %v4652, %v4652
    %v4693 = vpack.c.bf16 %v4507, %v4360
    %v4694 = vpack.c.bf16 %v4654, %v4654
    %v4695 = vpack.c.bf16 %v4510, %v4363
    %v4696 = vpack.c.bf16 %v4657, %v4657
    %v4697 = vpack.c.bf16 %v4512, %v4365
    %v4698 = vpack.c.bf16 %v4659, %v4659
    %v4699 = vpack.c.bf16 %v4515, %v4368
    %v4700 = vpack.c.bf16 %v4662, %v4662
    %v4701 = vpack.c.bf16 %v4517, %v4370
    %v4702 = vpack.c.bf16 %v4664, %v4664
    %v4703 = vpack.c.bf16 %v4520, %v4373
    %v4704 = vpack.c.bf16 %v4667, %v4667
    %v4705 = vpack.c.bf16 %v4522, %v4375
    %v4706 = vpack.c.bf16 %v4669, %v4669
    %v4707 = vpack.c.bf16 %v4525, %v4378
    %v4708 = vpack.c.bf16 %v4672, %v4672
    %v4709 = vpack.c.bf16 %v4527, %v4380
    %v4710 = vpack.c.bf16 %v4674, %v4674
    %v4711 = vpack.c.bf16 %v4530, %v4383
    %v4712 = vpack.c.bf16 %v4677, %v4677
    %v4713 = vpack.c.bf16 %v4532, %v4385
    %v4714 = vpack.c.bf16 %v4679, %v4679
    %v4715 = vpack.c.bf16 %v4535, %v4388
    %v4716 = vpack.c.bf16 %v4682, %v4682
    %v4717 = vpack.c.bf16 %v4537, %v4390
    %v4718 = vpack.c.bf16 %v4684, %v4684
    %v4719 = vpack.c.bf16 %v4540, %v4393
    %v4720 = vpack.c.bf16 %v4687, %v4687
    %v4721 = vpack.c.bf16 %v4542, %v4395
    %v4722 = vpack.c.bf16 %v4689, %v4689
    %v4739 = vunpack.c.l.b16 %v4691
    %v4740 = vunpack.c.l.b16 %v4693
    %v4741 = vunpack.c.l.b16 %v4695
    %v4742 = vunpack.c.l.b16 %v4697
    %v4743 = vunpack.c.l.b16 %v4699
    %v4744 = vunpack.c.l.b16 %v4701
    %v4745 = vunpack.c.l.b16 %v4703
    %v4746 = vunpack.c.l.b16 %v4705
    %v4747 = vunpack.c.l.b16 %v4707
    %v4748 = vunpack.c.l.b16 %v4709
    %v4749 = vunpack.c.l.b16 %v4711
    %v4750 = vunpack.c.l.b16 %v4713
    %v4751 = vunpack.c.l.b16 %v4715
    %v4752 = vunpack.c.l.b16 %v4717
    %v4753 = vunpack.c.l.b16 %v4719
    %v4754 = vunpack.c.l.b16 %v4721
    %v4755 = vpack.c.b16 %v4740, %v4739
    %v4756 = vpack.c.b16 %v4742, %v4741
    %v4757 = vpack.c.b16 %v4744, %v4743
    %v4758 = vpack.c.b16 %v4746, %v4745
    %v4759 = vpack.c.b16 %v4748, %v4747
    %v4760 = vpack.c.b16 %v4750, %v4749
    %v4761 = vpack.c.b16 %v4752, %v4751
    %v4762 = vpack.c.b16 %v4754, %v4753
    %4771 = vmatpush.bf16.msra.mxu0 %v4762
    %4772 = vmatpush.bf16.msra.mxu0 %v4761
    %4773 = vmatpush.bf16.msra.mxu0 %v4760
    %4774 = vmatpush.bf16.msra.mxu0 %v4759
    %4775 = vmatpush.bf16.msra.mxu0 %v4758
    %4776 = vmatpush.bf16.msra.mxu0 %v4757
    %4777 = vmatpush.bf16.msra.mxu0 %v4756
    %4778 = vmatpush.bf16.msra.mxu0 %v4755
    %4779 = vmatmul.bf16.gmra.mxu0 %v1296
    %v4780 = vpop.f32.mrf.mxu0
    %v4781 = vadd.f32 0.0, %v4780
    %v4782 = vpop.f32.mrf.mxu0
    %v4783 = vadd.f32 0.0, %v4782
    %4784 = vmatmul.bf16.gmra.mxu0 %v1297
    %v4785 = vpop.f32.mrf.mxu0
    %v4786 = vadd.f32 0.0, %v4785
    %v4787 = vpop.f32.mrf.mxu0
    %v4788 = vadd.f32 0.0, %v4787
    %4789 = vmatmul.bf16.gmra.mxu0 %v1298
    %v4790 = vpop.f32.mrf.mxu0
    %v4791 = vadd.f32 0.0, %v4790
    %v4792 = vpop.f32.mrf.mxu0
    %v4793 = vadd.f32 0.0, %v4792
    %4794 = vmatmul.bf16.gmra.mxu0 %v1299
    %v4795 = vpop.f32.mrf.mxu0
    %v4796 = vadd.f32 0.0, %v4795
    %v4797 = vpop.f32.mrf.mxu0
    %v4798 = vadd.f32 0.0, %v4797
    %4799 = vmatmul.bf16.gmra.mxu0 %v1300
    %v4800 = vpop.f32.mrf.mxu0
    %v4801 = vadd.f32 0.0, %v4800
    %v4802 = vpop.f32.mrf.mxu0
    %v4803 = vadd.f32 0.0, %v4802
    %4804 = vmatmul.bf16.gmra.mxu0 %v1301
    %v4805 = vpop.f32.mrf.mxu0
    %v4806 = vadd.f32 0.0, %v4805
    %v4807 = vpop.f32.mrf.mxu0
    %v4808 = vadd.f32 0.0, %v4807
    %4809 = vmatmul.bf16.gmra.mxu0 %v1302
    %v4810 = vpop.f32.mrf.mxu0
    %v4811 = vadd.f32 0.0, %v4810
    %v4812 = vpop.f32.mrf.mxu0
    %v4813 = vadd.f32 0.0, %v4812
    %4814 = vmatmul.bf16.gmra.mxu0 %v1303
    %v4815 = vpop.f32.mrf.mxu0
    %v4816 = vadd.f32 0.0, %v4815
    %v4817 = vpop.f32.mrf.mxu0
    %v4818 = vadd.f32 0.0, %v4817
    %4819 = vdwg.mxu0
    %v4820 = vunpack.c.h.b16 %v4691
    %v4821 = vunpack.c.h.b16 %v4693
    %v4822 = vunpack.c.h.b16 %v4695
    %v4823 = vunpack.c.h.b16 %v4697
    %v4824 = vunpack.c.h.b16 %v4699
    %v4825 = vunpack.c.h.b16 %v4701
    %v4826 = vunpack.c.h.b16 %v4703
    %v4827 = vunpack.c.h.b16 %v4705
    %v4828 = vunpack.c.h.b16 %v4707
    %v4829 = vunpack.c.h.b16 %v4709
    %v4830 = vunpack.c.h.b16 %v4711
    %v4831 = vunpack.c.h.b16 %v4713
    %v4832 = vunpack.c.h.b16 %v4715
    %v4833 = vunpack.c.h.b16 %v4717
    %v4834 = vunpack.c.h.b16 %v4719
    %v4835 = vunpack.c.h.b16 %v4721
    %v4836 = vpack.c.b16 %v4821, %v4820
    %v4837 = vpack.c.b16 %v4823, %v4822
    %v4838 = vpack.c.b16 %v4825, %v4824
    %v4839 = vpack.c.b16 %v4827, %v4826
    %v4840 = vpack.c.b16 %v4829, %v4828
    %v4841 = vpack.c.b16 %v4831, %v4830
    %v4842 = vpack.c.b16 %v4833, %v4832
    %v4843 = vpack.c.b16 %v4835, %v4834
    %4852 = vmatpush.bf16.msra.mxu0 %v4843
    %4853 = vmatpush.bf16.msra.mxu0 %v4842
    %4854 = vmatpush.bf16.msra.mxu0 %v4841
    %4855 = vmatpush.bf16.msra.mxu0 %v4840
    %4856 = vmatpush.bf16.msra.mxu0 %v4839
    %4857 = vmatpush.bf16.msra.mxu0 %v4838
    %4858 = vmatpush.bf16.msra.mxu0 %v4837
    %4859 = vmatpush.bf16.msra.mxu0 %v4836
    %4860 = vmatmul.bf16.gmra.mxu0 %v1458
    %v4861 = vpop.f32.mrf.mxu0
    %v4862 = vadd.f32 0.0, %v4861
    %v4863 = vpop.f32.mrf.mxu0
    %v4864 = vadd.f32 0.0, %v4863
    %4865 = vmatmul.bf16.gmra.mxu0 %v1459
    %v4866 = vpop.f32.mrf.mxu0
    %v4867 = vadd.f32 0.0, %v4866
    %v4868 = vpop.f32.mrf.mxu0
    %v4869 = vadd.f32 0.0, %v4868
    %4870 = vmatmul.bf16.gmra.mxu0 %v1460
    %v4871 = vpop.f32.mrf.mxu0
    %v4872 = vadd.f32 0.0, %v4871
    %v4873 = vpop.f32.mrf.mxu0
    %v4874 = vadd.f32 0.0, %v4873
    %4875 = vmatmul.bf16.gmra.mxu0 %v1461
    %v4876 = vpop.f32.mrf.mxu0
    %v4877 = vadd.f32 0.0, %v4876
    %v4878 = vpop.f32.mrf.mxu0
    %v4879 = vadd.f32 0.0, %v4878
    %4880 = vmatmul.bf16.gmra.mxu0 %v1462
    %v4881 = vpop.f32.mrf.mxu0
    %v4882 = vadd.f32 0.0, %v4881
    %v4883 = vpop.f32.mrf.mxu0
    %v4884 = vadd.f32 0.0, %v4883
    %4885 = vmatmul.bf16.gmra.mxu0 %v1463
    %v4886 = vpop.f32.mrf.mxu0
    %v4887 = vadd.f32 0.0, %v4886
    %v4888 = vpop.f32.mrf.mxu0
    %v4889 = vadd.f32 0.0, %v4888
    %4890 = vmatmul.bf16.gmra.mxu0 %v1464
    %v4891 = vpop.f32.mrf.mxu0
    %v4892 = vadd.f32 0.0, %v4891
    %v4893 = vpop.f32.mrf.mxu0
    %v4894 = vadd.f32 0.0, %v4893
    %4895 = vmatmul.bf16.gmra.mxu0 %v1465
    %v4896 = vpop.f32.mrf.mxu0
    %v4897 = vadd.f32 0.0, %v4896
    %v4898 = vpop.f32.mrf.mxu0
    %v4899 = vadd.f32 0.0, %v4898
    %4900 = vdwg.mxu0
    %v4917 = vunpack.c.l.b16 %v4692
    %v4918 = vunpack.c.l.b16 %v4694
    %v4919 = vunpack.c.l.b16 %v4696
    %v4920 = vunpack.c.l.b16 %v4698
    %v4921 = vunpack.c.l.b16 %v4700
    %v4922 = vunpack.c.l.b16 %v4702
    %v4923 = vunpack.c.l.b16 %v4704
    %v4924 = vunpack.c.l.b16 %v4706
    %v4925 = vunpack.c.l.b16 %v4708
    %v4926 = vunpack.c.l.b16 %v4710
    %v4927 = vunpack.c.l.b16 %v4712
    %v4928 = vunpack.c.l.b16 %v4714
    %v4929 = vunpack.c.l.b16 %v4716
    %v4930 = vunpack.c.l.b16 %v4718
    %v4931 = vunpack.c.l.b16 %v4720
    %v4932 = vunpack.c.l.b16 %v4722
    %v4933 = vpack.c.b16 %v4918, %v4917
    %v4934 = vpack.c.b16 %v4920, %v4919
    %v4935 = vpack.c.b16 %v4922, %v4921
    %v4936 = vpack.c.b16 %v4924, %v4923
    %v4937 = vpack.c.b16 %v4926, %v4925
    %v4938 = vpack.c.b16 %v4928, %v4927
    %v4939 = vpack.c.b16 %v4930, %v4929
    %v4940 = vpack.c.b16 %v4932, %v4931
    %4949 = vmatpush.bf16.msra.mxu0 %v4940
    %4950 = vmatpush.bf16.msra.mxu0 %v4939
    %4951 = vmatpush.bf16.msra.mxu0 %v4938
    %4952 = vmatpush.bf16.msra.mxu0 %v4937
    %4953 = vmatpush.bf16.msra.mxu0 %v4936
    %4954 = vmatpush.bf16.msra.mxu0 %v4935
    %4955 = vmatpush.bf16.msra.mxu0 %v4934
    %4956 = vmatpush.bf16.msra.mxu0 %v4933
    %4957 = vmatmul.bf16.gmra.mxu0 %v1604
    %v4958 = vpop.f32.mrf.mxu0
    %v4959 = vadd.f32 0.0, %v4958
    %v4960 = vpop.f32.mrf.mxu0
    %v4961 = vadd.f32 0.0, %v4960
    %4962 = vmatmul.bf16.gmra.mxu0 %v1605
    %v4963 = vpop.f32.mrf.mxu0
    %v4964 = vadd.f32 0.0, %v4963
    %v4965 = vpop.f32.mrf.mxu0
    %v4966 = vadd.f32 0.0, %v4965
    %4967 = vmatmul.bf16.gmra.mxu0 %v1606
    %v4968 = vpop.f32.mrf.mxu0
    %v4969 = vadd.f32 0.0, %v4968
    %v4970 = vpop.f32.mrf.mxu0
    %v4971 = vadd.f32 0.0, %v4970
    %4972 = vmatmul.bf16.gmra.mxu0 %v1607
    %v4973 = vpop.f32.mrf.mxu0
    %v4974 = vadd.f32 0.0, %v4973
    %v4975 = vpop.f32.mrf.mxu0
    %v4976 = vadd.f32 0.0, %v4975
    %4977 = vmatmul.bf16.gmra.mxu0 %v1608
    %v4978 = vpop.f32.mrf.mxu0
    %v4979 = vadd.f32 0.0, %v4978
    %v4980 = vpop.f32.mrf.mxu0
    %v4981 = vadd.f32 0.0, %v4980
    %4982 = vmatmul.bf16.gmra.mxu0 %v1609
    %v4983 = vpop.f32.mrf.mxu0
    %v4984 = vadd.f32 0.0, %v4983
    %v4985 = vpop.f32.mrf.mxu0
    %v4986 = vadd.f32 0.0, %v4985
    %4987 = vmatmul.bf16.gmra.mxu0 %v1610
    %v4988 = vpop.f32.mrf.mxu0
    %v4989 = vadd.f32 0.0, %v4988
    %v4990 = vpop.f32.mrf.mxu0
    %v4991 = vadd.f32 0.0, %v4990
    %4992 = vmatmul.bf16.gmra.mxu0 %v1611
    %v4993 = vpop.f32.mrf.mxu0
    %v4994 = vadd.f32 0.0, %v4993
    %v4995 = vpop.f32.mrf.mxu0
    %v4996 = vadd.f32 0.0, %v4995
    %4997 = vdwg.mxu0
    %s4998 = scalar_lea.vmem [#allocation7], 2
    %v4999 = vld [vmem:[%s4998] ss:$8 sm:$0x7]
    %v5001 = vperm.slane %v4999, 0
    %v5002 = vperm.slane %v4999, 1
    %v5003 = vperm.slane %v4999, 2
    %v5007 = vadd.f32 %v4781, %v5001
    %v5008 = vadd.f32 %v4862, %v5002
    %v5009 = vadd.f32 %v4959, %v5003
    %v5010 = vadd.f32 %v4783, %v5001
    %v5011 = vadd.f32 %v4864, %v5002
    %v5012 = vadd.f32 %v4961, %v5003
    %v5013 = vadd.f32 %v4786, %v5001
    %v5014 = vadd.f32 %v4867, %v5002
    %v5015 = vadd.f32 %v4964, %v5003
    %v5016 = vadd.f32 %v4788, %v5001
    %v5017 = vadd.f32 %v4869, %v5002
    %v5018 = vadd.f32 %v4966, %v5003
    %v5019 = vadd.f32 %v4791, %v5001
    %v5020 = vadd.f32 %v4872, %v5002
    %v5021 = vadd.f32 %v4969, %v5003
    %v5022 = vadd.f32 %v4793, %v5001
    %v5023 = vadd.f32 %v4874, %v5002
    %v5024 = vadd.f32 %v4971, %v5003
    %v5025 = vadd.f32 %v4796, %v5001
    %v5026 = vadd.f32 %v4877, %v5002
    %v5027 = vadd.f32 %v4974, %v5003
    %v5028 = vadd.f32 %v4798, %v5001
    %v5029 = vadd.f32 %v4879, %v5002
    %v5030 = vadd.f32 %v4976, %v5003
    %v5031 = vadd.f32 %v4801, %v5001
    %v5032 = vadd.f32 %v4882, %v5002
    %v5033 = vadd.f32 %v4979, %v5003
    %v5034 = vadd.f32 %v4803, %v5001
    %v5035 = vadd.f32 %v4884, %v5002
    %v5036 = vadd.f32 %v4981, %v5003
    %v5037 = vadd.f32 %v4806, %v5001
    %v5038 = vadd.f32 %v4887, %v5002
    %v5039 = vadd.f32 %v4984, %v5003
    %v5040 = vadd.f32 %v4808, %v5001
    %v5041 = vadd.f32 %v4889, %v5002
    %v5042 = vadd.f32 %v4986, %v5003
    %v5043 = vadd.f32 %v4811, %v5001
    %v5044 = vadd.f32 %v4892, %v5002
    %v5045 = vadd.f32 %v4989, %v5003
    %v5046 = vadd.f32 %v4813, %v5001
    %v5047 = vadd.f32 %v4894, %v5002
    %v5048 = vadd.f32 %v4991, %v5003
    %v5049 = vadd.f32 %v4816, %v5001
    %v5050 = vadd.f32 %v4897, %v5002
    %v5051 = vadd.f32 %v4994, %v5003
    %v5052 = vadd.f32 %v4818, %v5001
    %v5053 = vadd.f32 %v4899, %v5002
    %v5054 = vadd.f32 %v4996, %v5003
    %v5055 = vmax.f32 %v5007, 0.0
    %v5056 = vmax.f32 %v5008, 0.0
    %v5057 = vmax.f32 %v5009, 0.0
    %v5058 = vmax.f32 %v5010, 0.0
    %v5059 = vmax.f32 %v5011, 0.0
    %v5060 = vmax.f32 %v5012, 0.0
    %v5061 = vmax.f32 %v5013, 0.0
    %v5062 = vmax.f32 %v5014, 0.0
    %v5063 = vmax.f32 %v5015, 0.0
    %v5064 = vmax.f32 %v5016, 0.0
    %v5065 = vmax.f32 %v5017, 0.0
    %v5066 = vmax.f32 %v5018, 0.0
    %v5067 = vmax.f32 %v5019, 0.0
    %v5068 = vmax.f32 %v5020, 0.0
    %v5069 = vmax.f32 %v5021, 0.0
    %v5070 = vmax.f32 %v5022, 0.0
    %v5071 = vmax.f32 %v5023, 0.0
    %v5072 = vmax.f32 %v5024, 0.0
    %v5073 = vmax.f32 %v5025, 0.0
    %v5074 = vmax.f32 %v5026, 0.0
    %v5075 = vmax.f32 %v5027, 0.0
    %v5076 = vmax.f32 %v5028, 0.0
    %v5077 = vmax.f32 %v5029, 0.0
    %v5078 = vmax.f32 %v5030, 0.0
    %v5079 = vmax.f32 %v5031, 0.0
    %v5080 = vmax.f32 %v5032, 0.0
    %v5081 = vmax.f32 %v5033, 0.0
    %v5082 = vmax.f32 %v5034, 0.0
    %v5083 = vmax.f32 %v5035, 0.0
    %v5084 = vmax.f32 %v5036, 0.0
    %v5085 = vmax.f32 %v5037, 0.0
    %v5086 = vmax.f32 %v5038, 0.0
    %v5087 = vmax.f32 %v5039, 0.0
    %v5088 = vmax.f32 %v5040, 0.0
    %v5089 = vmax.f32 %v5041, 0.0
    %v5090 = vmax.f32 %v5042, 0.0
    %v5091 = vmax.f32 %v5043, 0.0
    %v5092 = vmax.f32 %v5044, 0.0
    %v5093 = vmax.f32 %v5045, 0.0
    %v5094 = vmax.f32 %v5046, 0.0
    %v5095 = vmax.f32 %v5047, 0.0
    %v5096 = vmax.f32 %v5048, 0.0
    %v5097 = vmax.f32 %v5049, 0.0
    %v5098 = vmax.f32 %v5050, 0.0
    %v5099 = vmax.f32 %v5051, 0.0
    %v5100 = vmax.f32 %v5052, 0.0
    %v5101 = vmax.f32 %v5053, 0.0
    %v5102 = vmax.f32 %v5054, 0.0
    %s5103 = scalar_lea.vmem [#allocation7], 6
    %v5104 = vld [vmem:[%s5103] ss:$8 sm:$0x7]
    %s5105 = scalar_lea.vmem [#allocation7], 25
    %v5106 = vld [vmem:[%s5105] ss:$8 sm:$0x7]
    %v5107 = vadd.f32 %v5055, %v5058
    %v5108 = vadd.f32 %v5107, %v5061
    %v5109 = vadd.f32 %v5108, %v5064
    %v5110 = vadd.f32 %v5109, %v5067
    %v5111 = vadd.f32 %v5110, %v5070
    %v5112 = vadd.f32 %v5111, %v5073
    %v5113 = vadd.f32 %v5112, %v5076
    %v5114 = vrot.slane %v5113, 4
    %v5115 = vadd.f32 %v5113, %v5114
    %v5116 = vrot.slane %v5115, 2
    %v5117 = vadd.f32 %v5115, %v5116
    %v5118 = vrot.slane %v5117, 1
    %v5119 = vadd.f32 %v5117, %v5118
    %v5120 = vadd.f32 %v5056, %v5059
    %v5121 = vadd.f32 %v5120, %v5062
    %v5122 = vadd.f32 %v5121, %v5065
    %v5123 = vadd.f32 %v5122, %v5068
    %v5124 = vadd.f32 %v5123, %v5071
    %v5125 = vadd.f32 %v5124, %v5074
    %v5126 = vadd.f32 %v5125, %v5077
    %v5127 = vrot.slane %v5126, 4
    %v5128 = vadd.f32 %v5126, %v5127
    %v5129 = vrot.slane %v5128, 2
    %v5130 = vadd.f32 %v5128, %v5129
    %v5131 = vrot.slane %v5130, 1
    %v5132 = vadd.f32 %v5130, %v5131
    %v5133 = vadd.f32 %v5057, %v5060
    %v5134 = vadd.f32 %v5133, %v5063
    %v5135 = vadd.f32 %v5134, %v5066
    %v5136 = vadd.f32 %v5135, %v5069
    %v5137 = vadd.f32 %v5136, %v5072
    %v5138 = vadd.f32 %v5137, %v5075
    %v5139 = vadd.f32 %v5138, %v5078
    %v5140 = vrot.slane %v5139, 4
    %v5141 = vadd.f32 %v5139, %v5140
    %v5142 = vrot.slane %v5141, 2
    %v5143 = vadd.f32 %v5141, %v5142
    %v5144 = vrot.slane %v5143, 1
    %v5145 = vadd.f32 %v5143, %v5144
    %v5146 = vmul.f32 %v5055, %v5055
    %v5147 = vmul.f32 %v5056, %v5056
    %v5148 = vmul.f32 %v5057, %v5057
    %v5149 = vmul.f32 %v5058, %v5058
    %v5150 = vmul.f32 %v5059, %v5059
    %v5151 = vmul.f32 %v5060, %v5060
    %v5152 = vmul.f32 %v5061, %v5061
    %v5153 = vmul.f32 %v5062, %v5062
    %v5154 = vmul.f32 %v5063, %v5063
    %v5155 = vmul.f32 %v5064, %v5064
    %v5156 = vmul.f32 %v5065, %v5065
    %v5157 = vmul.f32 %v5066, %v5066
    %v5158 = vmul.f32 %v5067, %v5067
    %v5159 = vmul.f32 %v5068, %v5068
    %v5160 = vmul.f32 %v5069, %v5069
    %v5161 = vmul.f32 %v5070, %v5070
    %v5162 = vmul.f32 %v5071, %v5071
    %v5163 = vmul.f32 %v5072, %v5072
    %v5164 = vmul.f32 %v5073, %v5073
    %v5165 = vmul.f32 %v5074, %v5074
    %v5166 = vmul.f32 %v5075, %v5075
    %v5167 = vmul.f32 %v5076, %v5076
    %v5168 = vmul.f32 %v5077, %v5077
    %v5169 = vmul.f32 %v5078, %v5078
    %v5170 = vadd.f32 %v5146, %v5149
    %v5171 = vadd.f32 %v5170, %v5152
    %v5172 = vadd.f32 %v5171, %v5155
    %v5173 = vadd.f32 %v5172, %v5158
    %v5174 = vadd.f32 %v5173, %v5161
    %v5175 = vadd.f32 %v5174, %v5164
    %v5176 = vadd.f32 %v5175, %v5167
    %v5177 = vrot.slane %v5176, 4
    %v5178 = vadd.f32 %v5176, %v5177
    %v5179 = vrot.slane %v5178, 2
    %v5180 = vadd.f32 %v5178, %v5179
    %v5181 = vrot.slane %v5180, 1
    %v5182 = vadd.f32 %v5180, %v5181
    %v5183 = vadd.f32 %v5147, %v5150
    %v5184 = vadd.f32 %v5183, %v5153
    %v5185 = vadd.f32 %v5184, %v5156
    %v5186 = vadd.f32 %v5185, %v5159
    %v5187 = vadd.f32 %v5186, %v5162
    %v5188 = vadd.f32 %v5187, %v5165
    %v5189 = vadd.f32 %v5188, %v5168
    %v5190 = vrot.slane %v5189, 4
    %v5191 = vadd.f32 %v5189, %v5190
    %v5192 = vrot.slane %v5191, 2
    %v5193 = vadd.f32 %v5191, %v5192
    %v5194 = vrot.slane %v5193, 1
    %v5195 = vadd.f32 %v5193, %v5194
    %v5196 = vadd.f32 %v5148, %v5151
    %v5197 = vadd.f32 %v5196, %v5154
    %v5198 = vadd.f32 %v5197, %v5157
    %v5199 = vadd.f32 %v5198, %v5160
    %v5200 = vadd.f32 %v5199, %v5163
    %v5201 = vadd.f32 %v5200, %v5166
    %v5202 = vadd.f32 %v5201, %v5169
    %v5203 = vrot.slane %v5202, 4
    %v5204 = vadd.f32 %v5202, %v5203
    %v5205 = vrot.slane %v5204, 2
    %v5206 = vadd.f32 %v5204, %v5205
    %v5207 = vrot.slane %v5206, 1
    %v5208 = vadd.f32 %v5206, %v5207
    %v5209 = vmul.f32 %v5119, 0.015625
    %v5210 = vmul.f32 %v5132, 0.015625
    %v5211 = vmul.f32 %v5145, 0.015625
    %v5212 = vmul.f32 %v5182, 0.015625
    %v5213 = vmul.f32 %v5195, 0.015625
    %v5214 = vmul.f32 %v5208, 0.015625
    %v5215 = vmul.f32 %v5209, %v5209
    %v5216 = vmul.f32 %v5210, %v5210
    %v5217 = vmul.f32 %v5211, %v5211
    %v5218 = vsub.f32 %v5212, %v5215
    %v5219 = vsub.f32 %v5213, %v5216
    %v5220 = vsub.f32 %v5214, %v5217
    %v5221 = vadd.f32 %v5218, 1e-05
    %v5222 = vadd.f32 %v5219, 1e-05
    %v5223 = vadd.f32 %v5220, 1e-05
    %v5224 = vrsqrt.pop %v5221
    %v5225 = vmul.f32 %v5224, %v5221
    %v5226 = vmul.f32 %v5225, %v5224
    %v5227 = vmul.f32 0.5, %v5226
    %v5228 = vsub.f32 1.5, %v5227
    %v5229 = vmul.f32 %v5224, %v5228
    %vm5230 = vweird.f32 %v5221
    %vm5231 = vweird.f32 %v5224
    %vm5232 = vmor %vm5230, %vm5231
    %v5233 = vsel %vm5232, %v5224, %v5229
    %v5234 = vrsqrt.pop %v5222
    %v5235 = vmul.f32 %v5234, %v5222
    %v5236 = vmul.f32 %v5235, %v5234
    %v5237 = vmul.f32 0.5, %v5236
    %v5238 = vsub.f32 1.5, %v5237
    %v5239 = vmul.f32 %v5234, %v5238
    %vm5240 = vweird.f32 %v5222
    %vm5241 = vweird.f32 %v5234
    %vm5242 = vmor %vm5240, %vm5241
    %v5243 = vsel %vm5242, %v5234, %v5239
    %v5244 = vrsqrt.pop %v5223
    %v5245 = vmul.f32 %v5244, %v5223
    %v5246 = vmul.f32 %v5245, %v5244
    %v5247 = vmul.f32 0.5, %v5246
    %v5248 = vsub.f32 1.5, %v5247
    %v5249 = vmul.f32 %v5244, %v5248
    %vm5250 = vweird.f32 %v5223
    %vm5251 = vweird.f32 %v5244
    %vm5252 = vmor %vm5250, %vm5251
    %v5253 = vsel %vm5252, %v5244, %v5249
    %v5257 = vrot.slane %v5243, 7
    %v5258 = vrot.slane %v5253, 6
    %v5259 = vsel %vm1977, %v5233, %v5257
    %v5260 = vsel %vm1979, %v5259, %v5258
    %v5262 = vmul.f32 %v5104, %v5260
    %v5264 = vperm.slane %v5262, 0
    %v5265 = vperm.slane %v5262, 1
    %v5266 = vperm.slane %v5262, 2
    %v5270 = vmul.f32 %v5209, %v5264
    %v5271 = vmul.f32 %v5210, %v5265
    %v5272 = vmul.f32 %v5211, %v5266
    %v5276 = vrot.slane %v5271, 7
    %v5277 = vrot.slane %v5272, 6
    %v5278 = vsel %vm1977, %v5270, %v5276
    %v5279 = vsel %vm1979, %v5278, %v5277
    %v5281 = vsub.f32 %v5106, %v5279
    %v5282 = vmul.f32 %v5055, %v5264
    %v5283 = vmul.f32 %v5056, %v5265
    %v5284 = vmul.f32 %v5057, %v5266
    %v5285 = vmul.f32 %v5058, %v5264
    %v5286 = vmul.f32 %v5059, %v5265
    %v5287 = vmul.f32 %v5060, %v5266
    %v5288 = vmul.f32 %v5061, %v5264
    %v5289 = vmul.f32 %v5062, %v5265
    %v5290 = vmul.f32 %v5063, %v5266
    %v5291 = vmul.f32 %v5064, %v5264
    %v5292 = vmul.f32 %v5065, %v5265
    %v5293 = vmul.f32 %v5066, %v5266
    %v5294 = vmul.f32 %v5067, %v5264
    %v5295 = vmul.f32 %v5068, %v5265
    %v5296 = vmul.f32 %v5069, %v5266
    %v5297 = vmul.f32 %v5070, %v5264
    %v5298 = vmul.f32 %v5071, %v5265
    %v5299 = vmul.f32 %v5072, %v5266
    %v5300 = vmul.f32 %v5073, %v5264
    %v5301 = vmul.f32 %v5074, %v5265
    %v5302 = vmul.f32 %v5075, %v5266
    %v5303 = vmul.f32 %v5076, %v5264
    %v5304 = vmul.f32 %v5077, %v5265
    %v5305 = vmul.f32 %v5078, %v5266
    %v5306 = vmul.f32 %v5079, %v5264
    %v5307 = vmul.f32 %v5080, %v5265
    %v5308 = vmul.f32 %v5081, %v5266
    %v5309 = vmul.f32 %v5082, %v5264
    %v5310 = vmul.f32 %v5083, %v5265
    %v5311 = vmul.f32 %v5084, %v5266
    %v5312 = vmul.f32 %v5085, %v5264
    %v5313 = vmul.f32 %v5086, %v5265
    %v5314 = vmul.f32 %v5087, %v5266
    %v5315 = vmul.f32 %v5088, %v5264
    %v5316 = vmul.f32 %v5089, %v5265
    %v5317 = vmul.f32 %v5090, %v5266
    %v5318 = vmul.f32 %v5091, %v5264
    %v5319 = vmul.f32 %v5092, %v5265
    %v5320 = vmul.f32 %v5093, %v5266
    %v5321 = vmul.f32 %v5094, %v5264
    %v5322 = vmul.f32 %v5095, %v5265
    %v5323 = vmul.f32 %v5096, %v5266
    %v5324 = vmul.f32 %v5097, %v5264
    %v5325 = vmul.f32 %v5098, %v5265
    %v5326 = vmul.f32 %v5099, %v5266
    %v5327 = vmul.f32 %v5100, %v5264
    %v5328 = vmul.f32 %v5101, %v5265
    %v5329 = vmul.f32 %v5102, %v5266
    %v5331 = vperm.slane %v5281, 0
    %v5332 = vperm.slane %v5281, 1
    %v5333 = vperm.slane %v5281, 2
    %v5337 = vadd.f32 %v5282, %v5331
    %v5338 = vadd.f32 %v5283, %v5332
    %v5339 = vadd.f32 %v5284, %v5333
    %v5340 = vadd.f32 %v5285, %v5331
    %v5341 = vadd.f32 %v5286, %v5332
    %v5342 = vadd.f32 %v5287, %v5333
    %v5343 = vadd.f32 %v5288, %v5331
    %v5344 = vadd.f32 %v5289, %v5332
    %v5345 = vadd.f32 %v5290, %v5333
    %v5346 = vadd.f32 %v5291, %v5331
    %v5347 = vadd.f32 %v5292, %v5332
    %v5348 = vadd.f32 %v5293, %v5333
    %v5349 = vadd.f32 %v5294, %v5331
    %v5350 = vadd.f32 %v5295, %v5332
    %v5351 = vadd.f32 %v5296, %v5333
    %v5352 = vadd.f32 %v5297, %v5331
    %v5353 = vadd.f32 %v5298, %v5332
    %v5354 = vadd.f32 %v5299, %v5333
    %v5355 = vadd.f32 %v5300, %v5331
    %v5356 = vadd.f32 %v5301, %v5332
    %v5357 = vadd.f32 %v5302, %v5333
    %v5358 = vadd.f32 %v5303, %v5331
    %v5359 = vadd.f32 %v5304, %v5332
    %v5360 = vadd.f32 %v5305, %v5333
    %v5361 = vadd.f32 %v5306, %v5331
    %v5362 = vadd.f32 %v5307, %v5332
    %v5363 = vadd.f32 %v5308, %v5333
    %v5364 = vadd.f32 %v5309, %v5331
    %v5365 = vadd.f32 %v5310, %v5332
    %v5366 = vadd.f32 %v5311, %v5333
    %v5367 = vadd.f32 %v5312, %v5331
    %v5368 = vadd.f32 %v5313, %v5332
    %v5369 = vadd.f32 %v5314, %v5333
    %v5370 = vadd.f32 %v5315, %v5331
    %v5371 = vadd.f32 %v5316, %v5332
    %v5372 = vadd.f32 %v5317, %v5333
    %v5373 = vadd.f32 %v5318, %v5331
    %v5374 = vadd.f32 %v5319, %v5332
    %v5375 = vadd.f32 %v5320, %v5333
    %v5376 = vadd.f32 %v5321, %v5331
    %v5377 = vadd.f32 %v5322, %v5332
    %v5378 = vadd.f32 %v5323, %v5333
    %v5379 = vadd.f32 %v5324, %v5331
    %v5380 = vadd.f32 %v5325, %v5332
    %v5381 = vadd.f32 %v5326, %v5333
    %v5382 = vadd.f32 %v5327, %v5331
    %v5383 = vadd.f32 %v5328, %v5332
    %v5384 = vadd.f32 %v5329, %v5333
    %v5385 = vpack.c.bf16 %v5340, %v5337
    %v5386 = vpack.c.bf16 %v5341, %v5338
    %v5387 = vpack.c.bf16 %v5342, %v5339
    %v5388 = vpack.c.bf16 %v5346, %v5343
    %v5389 = vpack.c.bf16 %v5347, %v5344
    %v5390 = vpack.c.bf16 %v5348, %v5345
    %v5391 = vpack.c.bf16 %v5352, %v5349
    %v5392 = vpack.c.bf16 %v5353, %v5350
    %v5393 = vpack.c.bf16 %v5354, %v5351
    %v5394 = vpack.c.bf16 %v5358, %v5355
    %v5395 = vpack.c.bf16 %v5359, %v5356
    %v5396 = vpack.c.bf16 %v5360, %v5357
    %v5397 = vpack.c.bf16 %v5364, %v5361
    %v5398 = vpack.c.bf16 %v5365, %v5362
    %v5399 = vpack.c.bf16 %v5366, %v5363
    %v5400 = vpack.c.bf16 %v5370, %v5367
    %v5401 = vpack.c.bf16 %v5371, %v5368
    %v5402 = vpack.c.bf16 %v5372, %v5369
    %v5403 = vpack.c.bf16 %v5376, %v5373
    %v5404 = vpack.c.bf16 %v5377, %v5374
    %v5405 = vpack.c.bf16 %v5378, %v5375
    %v5406 = vpack.c.bf16 %v5382, %v5379
    %v5407 = vpack.c.bf16 %v5383, %v5380
    %v5408 = vpack.c.bf16 %v5384, %v5381
    %s5409 = scalar_lea.vmem [#allocation6], 1728
    %v5410 = vld [vmem:[%s5409] sm:$0xff]
    %v5411 = vld [vmem:[%s5409 + $0x8] sm:$0xf]
    %v5412 = vld [vmem:[%s5409 + $0xc] sm:$0xff]
    %v5413 = vld [vmem:[%s5409 + $0x14] sm:$0xf]
    %v5414 = vld [vmem:[%s5409 + $0x18] sm:$0xff]
    %v5415 = vld [vmem:[%s5409 + $0x20] sm:$0xf]
    %v5416 = vld [vmem:[%s5409 + $0x24] sm:$0xff]
    %v5417 = vld [vmem:[%s5409 + $0x2c] sm:$0xf]
    %v5418 = vld [vmem:[%s5409 + $0x30] sm:$0xff]
    %v5419 = vld [vmem:[%s5409 + $0x38] sm:$0xf]
    %v5420 = vld [vmem:[%s5409 + $0x3c] sm:$0xff]
    %v5421 = vld [vmem:[%s5409 + $0x44] sm:$0xf]
    %v5422 = vld [vmem:[%s5409 + $0x48] sm:$0xff]
    %v5423 = vld [vmem:[%s5409 + $0x50] sm:$0xf]
    %v5424 = vld [vmem:[%s5409 + $0x54] sm:$0xff]
    %v5425 = vld [vmem:[%s5409 + $0x5c] sm:$0xf]
    %v5426 = vld [vmem:[%s5409 + $0x60] sm:$0xff]
    %v5427 = vld [vmem:[%s5409 + $0x68] sm:$0xf]
    %v5428 = vld [vmem:[%s5409 + $0x6c] sm:$0xff]
    %v5429 = vld [vmem:[%s5409 + $0x74] sm:$0xf]
    %v5430 = vld [vmem:[%s5409 + $0x78] sm:$0xff]
    %v5431 = vld [vmem:[%s5409 + $0x80] sm:$0xf]
    %v5432 = vld [vmem:[%s5409 + $0x84] sm:$0xff]
    %v5433 = vld [vmem:[%s5409 + $0x8c] sm:$0xf]
    %v5434 = vld [vmem:[%s5409 + $0x90] sm:$0xff]
    %v5435 = vld [vmem:[%s5409 + $0x98] sm:$0xf]
    %v5436 = vld [vmem:[%s5409 + $0x9c] sm:$0xff]
    %v5437 = vld [vmem:[%s5409 + $0xa4] sm:$0xf]
    %v5438 = vld [vmem:[%s5409 + $0xa8] sm:$0xff]
    %v5439 = vld [vmem:[%s5409 + $0xb0] sm:$0xf]
    %v5440 = vld [vmem:[%s5409 + $0xb4] sm:$0xff]
    %v5441 = vld [vmem:[%s5409 + $0xbc] sm:$0xf]
    %v5442 = vld [vmem:[%s5409 + $0xc0] sm:$0xff]
    %v5443 = vld [vmem:[%s5409 + $0xc8] sm:$0xf]
    %v5444 = vld [vmem:[%s5409 + $0xcc] sm:$0xff]
    %v5445 = vld [vmem:[%s5409 + $0xd4] sm:$0xf]
    %v5446 = vld [vmem:[%s5409 + $0xd8] sm:$0xff]
    %v5447 = vld [vmem:[%s5409 + $0xe0] sm:$0xf]
    %v5448 = vld [vmem:[%s5409 + $0xe4] sm:$0xff]
    %v5449 = vld [vmem:[%s5409 + $0xec] sm:$0xf]
    %v5450 = vld [vmem:[%s5409 + $0xf0] sm:$0xff]
    %v5451 = vld [vmem:[%s5409 + $0xf8] sm:$0xf]
    %v5452 = vld [vmem:[%s5409 + $0xfc] sm:$0xff]
    %v5453 = vld [vmem:[%s5409 + $0x104] sm:$0xf]
    %v5454 = vld [vmem:[%s5409 + $0x108] sm:$0xff]
    %v5455 = vld [vmem:[%s5409 + $0x110] sm:$0xf]
    %v5456 = vld [vmem:[%s5409 + $0x114] sm:$0xff]
    %v5457 = vld [vmem:[%s5409 + $0x11c] sm:$0xf]
    %v5458 = vld [vmem:[%s5409 + $0x120] sm:$0xff]
    %v5459 = vld [vmem:[%s5409 + $0x128] sm:$0xf]
    %v5460 = vld [vmem:[%s5409 + $0x12c] sm:$0xff]
    %v5461 = vld [vmem:[%s5409 + $0x134] sm:$0xf]
    %v5462 = vld [vmem:[%s5409 + $0x138] sm:$0xff]
    %v5463 = vld [vmem:[%s5409 + $0x140] sm:$0xf]
    %v5464 = vld [vmem:[%s5409 + $0x144] sm:$0xff]
    %v5465 = vld [vmem:[%s5409 + $0x14c] sm:$0xf]
    %v5466 = vld [vmem:[%s5409 + $0x150] sm:$0xff]
    %v5467 = vld [vmem:[%s5409 + $0x158] sm:$0xf]
    %v5468 = vld [vmem:[%s5409 + $0x15c] sm:$0xff]
    %v5469 = vld [vmem:[%s5409 + $0x164] sm:$0xf]
    %v5470 = vld [vmem:[%s5409 + $0x168] sm:$0xff]
    %v5471 = vld [vmem:[%s5409 + $0x170] sm:$0xf]
    %v5472 = vld [vmem:[%s5409 + $0x174] sm:$0xff]
    %v5473 = vld [vmem:[%s5409 + $0x17c] sm:$0xf]
    %v5474 = vld [vmem:[%s5409 + $0x180] sm:$0xff]
    %v5475 = vld [vmem:[%s5409 + $0x188] sm:$0xf]
    %v5476 = vld [vmem:[%s5409 + $0x18c] sm:$0xff]
    %v5477 = vld [vmem:[%s5409 + $0x194] sm:$0xf]
    %v5478 = vld [vmem:[%s5409 + $0x198] sm:$0xff]
    %v5479 = vld [vmem:[%s5409 + $0x1a0] sm:$0xf]
    %v5480 = vld [vmem:[%s5409 + $0x1a4] sm:$0xff]
    %v5481 = vld [vmem:[%s5409 + $0x1ac] sm:$0xf]
    %v5482 = vld [vmem:[%s5409 + $0x1b0] sm:$0xff]
    %v5483 = vld [vmem:[%s5409 + $0x1b8] sm:$0xf]
    %v5484 = vld [vmem:[%s5409 + $0x1bc] sm:$0xff]
    %v5485 = vld [vmem:[%s5409 + $0x1c4] sm:$0xf]
    %v5486 = vld [vmem:[%s5409 + $0x1c8] sm:$0xff]
    %v5487 = vld [vmem:[%s5409 + $0x1d0] sm:$0xf]
    %v5488 = vld [vmem:[%s5409 + $0x1d4] sm:$0xff]
    %v5489 = vld [vmem:[%s5409 + $0x1dc] sm:$0xf]
    %v5490 = vld [vmem:[%s5409 + $0x1e0] sm:$0xff]
    %v5491 = vld [vmem:[%s5409 + $0x1e8] sm:$0xf]
    %v5492 = vld [vmem:[%s5409 + $0x1ec] sm:$0xff]
    %v5493 = vld [vmem:[%s5409 + $0x1f4] sm:$0xf]
    %v5494 = vld [vmem:[%s5409 + $0x1f8] sm:$0xff]
    %v5495 = vld [vmem:[%s5409 + $0x200] sm:$0xf]
    %v5496 = vld [vmem:[%s5409 + $0x204] sm:$0xff]
    %v5497 = vld [vmem:[%s5409 + $0x20c] sm:$0xf]
    %v5498 = vld [vmem:[%s5409 + $0x210] sm:$0xff]
    %v5499 = vld [vmem:[%s5409 + $0x218] sm:$0xf]
    %v5500 = vld [vmem:[%s5409 + $0x21c] sm:$0xff]
    %v5501 = vld [vmem:[%s5409 + $0x224] sm:$0xf]
    %v5502 = vld [vmem:[%s5409 + $0x228] sm:$0xff]
    %v5503 = vld [vmem:[%s5409 + $0x230] sm:$0xf]
    %v5504 = vld [vmem:[%s5409 + $0x234] sm:$0xff]
    %v5505 = vld [vmem:[%s5409 + $0x23c] sm:$0xf]
    %v5602 = vunpack.c.l.b16 %v5410
    %v5603 = vunpack.c.h.b16 %v5410
    %v5604 = vunpack.c.l.b16 %v5411
    %v5605 = vunpack.c.l.b16 %v5412
    %v5606 = vunpack.c.h.b16 %v5412
    %v5607 = vunpack.c.l.b16 %v5413
    %v5608 = vunpack.c.l.b16 %v5414
    %v5609 = vunpack.c.h.b16 %v5414
    %v5610 = vunpack.c.l.b16 %v5415
    %v5611 = vunpack.c.l.b16 %v5416
    %v5612 = vunpack.c.h.b16 %v5416
    %v5613 = vunpack.c.l.b16 %v5417
    %v5614 = vunpack.c.l.b16 %v5418
    %v5615 = vunpack.c.h.b16 %v5418
    %v5616 = vunpack.c.l.b16 %v5419
    %v5617 = vunpack.c.l.b16 %v5420
    %v5618 = vunpack.c.h.b16 %v5420
    %v5619 = vunpack.c.l.b16 %v5421
    %v5620 = vunpack.c.l.b16 %v5422
    %v5621 = vunpack.c.h.b16 %v5422
    %v5622 = vunpack.c.l.b16 %v5423
    %v5623 = vunpack.c.l.b16 %v5424
    %v5624 = vunpack.c.h.b16 %v5424
    %v5625 = vunpack.c.l.b16 %v5425
    %v5626 = vunpack.c.l.b16 %v5426
    %v5627 = vunpack.c.h.b16 %v5426
    %v5628 = vunpack.c.l.b16 %v5427
    %v5629 = vunpack.c.l.b16 %v5428
    %v5630 = vunpack.c.h.b16 %v5428
    %v5631 = vunpack.c.l.b16 %v5429
    %v5632 = vunpack.c.l.b16 %v5430
    %v5633 = vunpack.c.h.b16 %v5430
    %v5634 = vunpack.c.l.b16 %v5431
    %v5635 = vunpack.c.l.b16 %v5432
    %v5636 = vunpack.c.h.b16 %v5432
    %v5637 = vunpack.c.l.b16 %v5433
    %v5638 = vunpack.c.l.b16 %v5434
    %v5639 = vunpack.c.h.b16 %v5434
    %v5640 = vunpack.c.l.b16 %v5435
    %v5641 = vunpack.c.l.b16 %v5436
    %v5642 = vunpack.c.h.b16 %v5436
    %v5643 = vunpack.c.l.b16 %v5437
    %v5644 = vunpack.c.l.b16 %v5438
    %v5645 = vunpack.c.h.b16 %v5438
    %v5646 = vunpack.c.l.b16 %v5439
    %v5647 = vunpack.c.l.b16 %v5440
    %v5648 = vunpack.c.h.b16 %v5440
    %v5649 = vunpack.c.l.b16 %v5441
    %v5650 = vunpack.c.l.b16 %v5442
    %v5651 = vunpack.c.h.b16 %v5442
    %v5652 = vunpack.c.l.b16 %v5443
    %v5653 = vunpack.c.l.b16 %v5444
    %v5654 = vunpack.c.h.b16 %v5444
    %v5655 = vunpack.c.l.b16 %v5445
    %v5656 = vunpack.c.l.b16 %v5446
    %v5657 = vunpack.c.h.b16 %v5446
    %v5658 = vunpack.c.l.b16 %v5447
    %v5659 = vunpack.c.l.b16 %v5448
    %v5660 = vunpack.c.h.b16 %v5448
    %v5661 = vunpack.c.l.b16 %v5449
    %v5662 = vunpack.c.l.b16 %v5450
    %v5663 = vunpack.c.h.b16 %v5450
    %v5664 = vunpack.c.l.b16 %v5451
    %v5665 = vunpack.c.l.b16 %v5452
    %v5666 = vunpack.c.h.b16 %v5452
    %v5667 = vunpack.c.l.b16 %v5453
    %v5668 = vunpack.c.l.b16 %v5454
    %v5669 = vunpack.c.h.b16 %v5454
    %v5670 = vunpack.c.l.b16 %v5455
    %v5671 = vunpack.c.l.b16 %v5456
    %v5672 = vunpack.c.h.b16 %v5456
    %v5673 = vunpack.c.l.b16 %v5457
    %v5674 = vunpack.c.l.b16 %v5458
    %v5675 = vunpack.c.h.b16 %v5458
    %v5676 = vunpack.c.l.b16 %v5459
    %v5677 = vunpack.c.l.b16 %v5460
    %v5678 = vunpack.c.h.b16 %v5460
    %v5679 = vunpack.c.l.b16 %v5461
    %v5680 = vunpack.c.l.b16 %v5462
    %v5681 = vunpack.c.h.b16 %v5462
    %v5682 = vunpack.c.l.b16 %v5463
    %v5683 = vunpack.c.l.b16 %v5464
    %v5684 = vunpack.c.h.b16 %v5464
    %v5685 = vunpack.c.l.b16 %v5465
    %v5686 = vunpack.c.l.b16 %v5466
    %v5687 = vunpack.c.h.b16 %v5466
    %v5688 = vunpack.c.l.b16 %v5467
    %v5689 = vunpack.c.l.b16 %v5468
    %v5690 = vunpack.c.h.b16 %v5468
    %v5691 = vunpack.c.l.b16 %v5469
    %v5692 = vunpack.c.l.b16 %v5470
    %v5693 = vunpack.c.h.b16 %v5470
    %v5694 = vunpack.c.l.b16 %v5471
    %v5695 = vunpack.c.l.b16 %v5472
    %v5696 = vunpack.c.h.b16 %v5472
    %v5697 = vunpack.c.l.b16 %v5473
    %v5698 = vunpack.c.l.b16 %v5474
    %v5699 = vunpack.c.h.b16 %v5474
    %v5700 = vunpack.c.l.b16 %v5475
    %v5701 = vunpack.c.l.b16 %v5476
    %v5702 = vunpack.c.h.b16 %v5476
    %v5703 = vunpack.c.l.b16 %v5477
    %v5704 = vunpack.c.l.b16 %v5478
    %v5705 = vunpack.c.h.b16 %v5478
    %v5706 = vunpack.c.l.b16 %v5479
    %v5707 = vunpack.c.l.b16 %v5480
    %v5708 = vunpack.c.h.b16 %v5480
    %v5709 = vunpack.c.l.b16 %v5481
    %v5710 = vunpack.c.l.b16 %v5482
    %v5711 = vunpack.c.h.b16 %v5482
    %v5712 = vunpack.c.l.b16 %v5483
    %v5713 = vunpack.c.l.b16 %v5484
    %v5714 = vunpack.c.h.b16 %v5484
    %v5715 = vunpack.c.l.b16 %v5485
    %v5716 = vunpack.c.l.b16 %v5486
    %v5717 = vunpack.c.h.b16 %v5486
    %v5718 = vunpack.c.l.b16 %v5487
    %v5719 = vunpack.c.l.b16 %v5488
    %v5720 = vunpack.c.h.b16 %v5488
    %v5721 = vunpack.c.l.b16 %v5489
    %v5722 = vunpack.c.l.b16 %v5490
    %v5723 = vunpack.c.h.b16 %v5490
    %v5724 = vunpack.c.l.b16 %v5491
    %v5725 = vunpack.c.l.b16 %v5492
    %v5726 = vunpack.c.h.b16 %v5492
    %v5727 = vunpack.c.l.b16 %v5493
    %v5728 = vunpack.c.l.b16 %v5494
    %v5729 = vunpack.c.h.b16 %v5494
    %v5730 = vunpack.c.l.b16 %v5495
    %v5731 = vunpack.c.l.b16 %v5496
    %v5732 = vunpack.c.h.b16 %v5496
    %v5733 = vunpack.c.l.b16 %v5497
    %v5734 = vunpack.c.l.b16 %v5498
    %v5735 = vunpack.c.h.b16 %v5498
    %v5736 = vunpack.c.l.b16 %v5499
    %v5737 = vunpack.c.l.b16 %v5500
    %v5738 = vunpack.c.h.b16 %v5500
    %v5739 = vunpack.c.l.b16 %v5501
    %v5740 = vunpack.c.l.b16 %v5502
    %v5741 = vunpack.c.h.b16 %v5502
    %v5742 = vunpack.c.l.b16 %v5503
    %v5743 = vunpack.c.l.b16 %v5504
    %v5744 = vunpack.c.h.b16 %v5504
    %v5745 = vunpack.c.l.b16 %v5505
    %v5746 = vpack.c.b16 %v5605, %v5602
    %v5747 = vpack.c.b16 %v5606, %v5603
    %v5748 = vpack.c.b16 %v5607, %v5604
    %v5749 = vpack.c.b16 %v5611, %v5608
    %v5750 = vpack.c.b16 %v5612, %v5609
    %v5751 = vpack.c.b16 %v5613, %v5610
    %v5752 = vpack.c.b16 %v5617, %v5614
    %v5753 = vpack.c.b16 %v5618, %v5615
    %v5754 = vpack.c.b16 %v5619, %v5616
    %v5755 = vpack.c.b16 %v5623, %v5620
    %v5756 = vpack.c.b16 %v5624, %v5621
    %v5757 = vpack.c.b16 %v5625, %v5622
    %v5758 = vpack.c.b16 %v5629, %v5626
    %v5759 = vpack.c.b16 %v5630, %v5627
    %v5760 = vpack.c.b16 %v5631, %v5628
    %v5761 = vpack.c.b16 %v5635, %v5632
    %v5762 = vpack.c.b16 %v5636, %v5633
    %v5763 = vpack.c.b16 %v5637, %v5634
    %v5764 = vpack.c.b16 %v5641, %v5638
    %v5765 = vpack.c.b16 %v5642, %v5639
    %v5766 = vpack.c.b16 %v5643, %v5640
    %v5767 = vpack.c.b16 %v5647, %v5644
    %v5768 = vpack.c.b16 %v5648, %v5645
    %v5769 = vpack.c.b16 %v5649, %v5646
    %v5770 = vpack.c.b16 %v5653, %v5650
    %v5771 = vpack.c.b16 %v5654, %v5651
    %v5772 = vpack.c.b16 %v5655, %v5652
    %v5773 = vpack.c.b16 %v5659, %v5656
    %v5774 = vpack.c.b16 %v5660, %v5657
    %v5775 = vpack.c.b16 %v5661, %v5658
    %v5776 = vpack.c.b16 %v5665, %v5662
    %v5777 = vpack.c.b16 %v5666, %v5663
    %v5778 = vpack.c.b16 %v5667, %v5664
    %v5779 = vpack.c.b16 %v5671, %v5668
    %v5780 = vpack.c.b16 %v5672, %v5669
    %v5781 = vpack.c.b16 %v5673, %v5670
    %v5782 = vpack.c.b16 %v5677, %v5674
    %v5783 = vpack.c.b16 %v5678, %v5675
    %v5784 = vpack.c.b16 %v5679, %v5676
    %v5785 = vpack.c.b16 %v5683, %v5680
    %v5786 = vpack.c.b16 %v5684, %v5681
    %v5787 = vpack.c.b16 %v5685, %v5682
    %v5788 = vpack.c.b16 %v5689, %v5686
    %v5789 = vpack.c.b16 %v5690, %v5687
    %v5790 = vpack.c.b16 %v5691, %v5688
    %v5791 = vpack.c.b16 %v5695, %v5692
    %v5792 = vpack.c.b16 %v5696, %v5693
    %v5793 = vpack.c.b16 %v5697, %v5694
    %v5794 = vpack.c.b16 %v5701, %v5698
    %v5795 = vpack.c.b16 %v5702, %v5699
    %v5796 = vpack.c.b16 %v5703, %v5700
    %v5797 = vpack.c.b16 %v5707, %v5704
    %v5798 = vpack.c.b16 %v5708, %v5705
    %v5799 = vpack.c.b16 %v5709, %v5706
    %v5800 = vpack.c.b16 %v5713, %v5710
    %v5801 = vpack.c.b16 %v5714, %v5711
    %v5802 = vpack.c.b16 %v5715, %v5712
    %v5803 = vpack.c.b16 %v5719, %v5716
    %v5804 = vpack.c.b16 %v5720, %v5717
    %v5805 = vpack.c.b16 %v5721, %v5718
    %v5806 = vpack.c.b16 %v5725, %v5722
    %v5807 = vpack.c.b16 %v5726, %v5723
    %v5808 = vpack.c.b16 %v5727, %v5724
    %v5809 = vpack.c.b16 %v5731, %v5728
    %v5810 = vpack.c.b16 %v5732, %v5729
    %v5811 = vpack.c.b16 %v5733, %v5730
    %v5812 = vpack.c.b16 %v5737, %v5734
    %v5813 = vpack.c.b16 %v5738, %v5735
    %v5814 = vpack.c.b16 %v5739, %v5736
    %v5815 = vpack.c.b16 %v5743, %v5740
    %v5816 = vpack.c.b16 %v5744, %v5741
    %v5817 = vpack.c.b16 %v5745, %v5742
    %5890 = vmatpush.bf16.msra.mxu0 %v5767
    %5891 = vmatpush.bf16.msra.mxu0 %v5764
    %5892 = vmatpush.bf16.msra.mxu0 %v5761
    %5893 = vmatpush.bf16.msra.mxu0 %v5758
    %5894 = vmatpush.bf16.msra.mxu0 %v5755
    %5895 = vmatpush.bf16.msra.mxu0 %v5752
    %5896 = vmatpush.bf16.msra.mxu0 %v5749
    %5897 = vmatpush.bf16.msra.mxu0 %v5746
    %5898 = vmatmul.bf16.gmra.mxu0 %v5385
    %v5899 = vpop.f32.mrf.mxu0
    %v5900 = vadd.f32 0.0, %v5899
    %v5901 = vpop.f32.mrf.mxu0
    %v5902 = vadd.f32 0.0, %v5901
    %5903 = vmatmul.bf16.gmra.mxu0 %v5388
    %v5904 = vpop.f32.mrf.mxu0
    %v5905 = vadd.f32 0.0, %v5904
    %v5906 = vpop.f32.mrf.mxu0
    %v5907 = vadd.f32 0.0, %v5906
    %5908 = vmatmul.bf16.gmra.mxu0 %v5391
    %v5909 = vpop.f32.mrf.mxu0
    %v5910 = vadd.f32 0.0, %v5909
    %v5911 = vpop.f32.mrf.mxu0
    %v5912 = vadd.f32 0.0, %v5911
    %5913 = vmatmul.bf16.gmra.mxu0 %v5394
    %v5914 = vpop.f32.mrf.mxu0
    %v5915 = vadd.f32 0.0, %v5914
    %v5916 = vpop.f32.mrf.mxu0
    %v5917 = vadd.f32 0.0, %v5916
    %5918 = vmatmul.bf16.gmra.mxu0 %v5397
    %v5919 = vpop.f32.mrf.mxu0
    %v5920 = vadd.f32 0.0, %v5919
    %v5921 = vpop.f32.mrf.mxu0
    %v5922 = vadd.f32 0.0, %v5921
    %5923 = vmatmul.bf16.gmra.mxu0 %v5400
    %v5924 = vpop.f32.mrf.mxu0
    %v5925 = vadd.f32 0.0, %v5924
    %v5926 = vpop.f32.mrf.mxu0
    %v5927 = vadd.f32 0.0, %v5926
    %5928 = vmatmul.bf16.gmra.mxu0 %v5403
    %v5929 = vpop.f32.mrf.mxu0
    %v5930 = vadd.f32 0.0, %v5929
    %v5931 = vpop.f32.mrf.mxu0
    %v5932 = vadd.f32 0.0, %v5931
    %5933 = vmatmul.bf16.gmra.mxu0 %v5406
    %v5934 = vpop.f32.mrf.mxu0
    %v5935 = vadd.f32 0.0, %v5934
    %v5936 = vpop.f32.mrf.mxu0
    %v5937 = vadd.f32 0.0, %v5936
    %5938 = vdwg.mxu0
    %5939 = vmatpush.bf16.msra.mxu0 %v5791
    %5940 = vmatpush.bf16.msra.mxu0 %v5788
    %5941 = vmatpush.bf16.msra.mxu0 %v5785
    %5942 = vmatpush.bf16.msra.mxu0 %v5782
    %5943 = vmatpush.bf16.msra.mxu0 %v5779
    %5944 = vmatpush.bf16.msra.mxu0 %v5776
    %5945 = vmatpush.bf16.msra.mxu0 %v5773
    %5946 = vmatpush.bf16.msra.mxu0 %v5770
    %5947 = vmatmul.bf16.gmra.mxu0 %v5386
    %v5948 = vpop.f32.mrf.mxu0
    %v5949 = vadd.f32 %v5900, %v5948
    %v5950 = vpop.f32.mrf.mxu0
    %v5951 = vadd.f32 %v5902, %v5950
    %5952 = vmatmul.bf16.gmra.mxu0 %v5389
    %v5953 = vpop.f32.mrf.mxu0
    %v5954 = vadd.f32 %v5905, %v5953
    %v5955 = vpop.f32.mrf.mxu0
    %v5956 = vadd.f32 %v5907, %v5955
    %5957 = vmatmul.bf16.gmra.mxu0 %v5392
    %v5958 = vpop.f32.mrf.mxu0
    %v5959 = vadd.f32 %v5910, %v5958
    %v5960 = vpop.f32.mrf.mxu0
    %v5961 = vadd.f32 %v5912, %v5960
    %5962 = vmatmul.bf16.gmra.mxu0 %v5395
    %v5963 = vpop.f32.mrf.mxu0
    %v5964 = vadd.f32 %v5915, %v5963
    %v5965 = vpop.f32.mrf.mxu0
    %v5966 = vadd.f32 %v5917, %v5965
    %5967 = vmatmul.bf16.gmra.mxu0 %v5398
    %v5968 = vpop.f32.mrf.mxu0
    %v5969 = vadd.f32 %v5920, %v5968
    %v5970 = vpop.f32.mrf.mxu0
    %v5971 = vadd.f32 %v5922, %v5970
    %5972 = vmatmul.bf16.gmra.mxu0 %v5401
    %v5973 = vpop.f32.mrf.mxu0
    %v5974 = vadd.f32 %v5925, %v5973
    %v5975 = vpop.f32.mrf.mxu0
    %v5976 = vadd.f32 %v5927, %v5975
    %5977 = vmatmul.bf16.gmra.mxu0 %v5404
    %v5978 = vpop.f32.mrf.mxu0
    %v5979 = vadd.f32 %v5930, %v5978
    %v5980 = vpop.f32.mrf.mxu0
    %v5981 = vadd.f32 %v5932, %v5980
    %5982 = vmatmul.bf16.gmra.mxu0 %v5407
    %v5983 = vpop.f32.mrf.mxu0
    %v5984 = vadd.f32 %v5935, %v5983
    %v5985 = vpop.f32.mrf.mxu0
    %v5986 = vadd.f32 %v5937, %v5985
    %5987 = vdwg.mxu0
    %5988 = vmatpush.bf16.msra.mxu0 %v5815
    %5989 = vmatpush.bf16.msra.mxu0 %v5812
    %5990 = vmatpush.bf16.msra.mxu0 %v5809
    %5991 = vmatpush.bf16.msra.mxu0 %v5806
    %5992 = vmatpush.bf16.msra.mxu0 %v5803
    %5993 = vmatpush.bf16.msra.mxu0 %v5800
    %5994 = vmatpush.bf16.msra.mxu0 %v5797
    %5995 = vmatpush.bf16.msra.mxu0 %v5794
    %5996 = vmatmul.bf16.gmra.mxu0 %v5387
    %v5997 = vpop.f32.mrf.mxu0
    %v5998 = vadd.f32 %v5949, %v5997
    %v5999 = vpop.f32.mrf.mxu0
    %v6000 = vadd.f32 %v5951, %v5999
    %6001 = vmatmul.bf16.gmra.mxu0 %v5390
    %v6002 = vpop.f32.mrf.mxu0
    %v6003 = vadd.f32 %v5954, %v6002
    %v6004 = vpop.f32.mrf.mxu0
    %v6005 = vadd.f32 %v5956, %v6004
    %6006 = vmatmul.bf16.gmra.mxu0 %v5393
    %v6007 = vpop.f32.mrf.mxu0
    %v6008 = vadd.f32 %v5959, %v6007
    %v6009 = vpop.f32.mrf.mxu0
    %v6010 = vadd.f32 %v5961, %v6009
    %6011 = vmatmul.bf16.gmra.mxu0 %v5396
    %v6012 = vpop.f32.mrf.mxu0
    %v6013 = vadd.f32 %v5964, %v6012
    %v6014 = vpop.f32.mrf.mxu0
    %v6015 = vadd.f32 %v5966, %v6014
    %6016 = vmatmul.bf16.gmra.mxu0 %v5399
    %v6017 = vpop.f32.mrf.mxu0
    %v6018 = vadd.f32 %v5969, %v6017
    %v6019 = vpop.f32.mrf.mxu0
    %v6020 = vadd.f32 %v5971, %v6019
    %6021 = vmatmul.bf16.gmra.mxu0 %v5402
    %v6022 = vpop.f32.mrf.mxu0
    %v6023 = vadd.f32 %v5974, %v6022
    %v6024 = vpop.f32.mrf.mxu0
    %v6025 = vadd.f32 %v5976, %v6024
    %6026 = vmatmul.bf16.gmra.mxu0 %v5405
    %v6027 = vpop.f32.mrf.mxu0
    %v6028 = vadd.f32 %v5979, %v6027
    %v6029 = vpop.f32.mrf.mxu0
    %v6030 = vadd.f32 %v5981, %v6029
    %6031 = vmatmul.bf16.gmra.mxu0 %v5408
    %v6032 = vpop.f32.mrf.mxu0
    %v6033 = vadd.f32 %v5984, %v6032
    %v6034 = vpop.f32.mrf.mxu0
    %v6035 = vadd.f32 %v5986, %v6034
    %6036 = vdwg.mxu0
    %6037 = vmatpush.bf16.msra.mxu0 %v5768
    %6038 = vmatpush.bf16.msra.mxu0 %v5765
    %6039 = vmatpush.bf16.msra.mxu0 %v5762
    %6040 = vmatpush.bf16.msra.mxu0 %v5759
    %6041 = vmatpush.bf16.msra.mxu0 %v5756
    %6042 = vmatpush.bf16.msra.mxu0 %v5753
    %6043 = vmatpush.bf16.msra.mxu0 %v5750
    %6044 = vmatpush.bf16.msra.mxu0 %v5747
    %6045 = vmatmul.bf16.gmra.mxu0 %v5385
    %v6046 = vpop.f32.mrf.mxu0
    %v6047 = vadd.f32 0.0, %v6046
    %v6048 = vpop.f32.mrf.mxu0
    %v6049 = vadd.f32 0.0, %v6048
    %6050 = vmatmul.bf16.gmra.mxu0 %v5388
    %v6051 = vpop.f32.mrf.mxu0
    %v6052 = vadd.f32 0.0, %v6051
    %v6053 = vpop.f32.mrf.mxu0
    %v6054 = vadd.f32 0.0, %v6053
    %6055 = vmatmul.bf16.gmra.mxu0 %v5391
    %v6056 = vpop.f32.mrf.mxu0
    %v6057 = vadd.f32 0.0, %v6056
    %v6058 = vpop.f32.mrf.mxu0
    %v6059 = vadd.f32 0.0, %v6058
    %6060 = vmatmul.bf16.gmra.mxu0 %v5394
    %v6061 = vpop.f32.mrf.mxu0
    %v6062 = vadd.f32 0.0, %v6061
    %v6063 = vpop.f32.mrf.mxu0
    %v6064 = vadd.f32 0.0, %v6063
    %6065 = vmatmul.bf16.gmra.mxu0 %v5397
    %v6066 = vpop.f32.mrf.mxu0
    %v6067 = vadd.f32 0.0, %v6066
    %v6068 = vpop.f32.mrf.mxu0
    %v6069 = vadd.f32 0.0, %v6068
    %6070 = vmatmul.bf16.gmra.mxu0 %v5400
    %v6071 = vpop.f32.mrf.mxu0
    %v6072 = vadd.f32 0.0, %v6071
    %v6073 = vpop.f32.mrf.mxu0
    %v6074 = vadd.f32 0.0, %v6073
    %6075 = vmatmul.bf16.gmra.mxu0 %v5403
    %v6076 = vpop.f32.mrf.mxu0
    %v6077 = vadd.f32 0.0, %v6076
    %v6078 = vpop.f32.mrf.mxu0
    %v6079 = vadd.f32 0.0, %v6078
    %6080 = vmatmul.bf16.gmra.mxu0 %v5406
    %v6081 = vpop.f32.mrf.mxu0
    %v6082 = vadd.f32 0.0, %v6081
    %v6083 = vpop.f32.mrf.mxu0
    %v6084 = vadd.f32 0.0, %v6083
    %6085 = vdwg.mxu0
    %6086 = vmatpush.bf16.msra.mxu0 %v5792
    %6087 = vmatpush.bf16.msra.mxu0 %v5789
    %6088 = vmatpush.bf16.msra.mxu0 %v5786
    %6089 = vmatpush.bf16.msra.mxu0 %v5783
    %6090 = vmatpush.bf16.msra.mxu0 %v5780
    %6091 = vmatpush.bf16.msra.mxu0 %v5777
    %6092 = vmatpush.bf16.msra.mxu0 %v5774
    %6093 = vmatpush.bf16.msra.mxu0 %v5771
    %6094 = vmatmul.bf16.gmra.mxu0 %v5386
    %v6095 = vpop.f32.mrf.mxu0
    %v6096 = vadd.f32 %v6047, %v6095
    %v6097 = vpop.f32.mrf.mxu0
    %v6098 = vadd.f32 %v6049, %v6097
    %6099 = vmatmul.bf16.gmra.mxu0 %v5389
    %v6100 = vpop.f32.mrf.mxu0
    %v6101 = vadd.f32 %v6052, %v6100
    %v6102 = vpop.f32.mrf.mxu0
    %v6103 = vadd.f32 %v6054, %v6102
    %6104 = vmatmul.bf16.gmra.mxu0 %v5392
    %v6105 = vpop.f32.mrf.mxu0
    %v6106 = vadd.f32 %v6057, %v6105
    %v6107 = vpop.f32.mrf.mxu0
    %v6108 = vadd.f32 %v6059, %v6107
    %6109 = vmatmul.bf16.gmra.mxu0 %v5395
    %v6110 = vpop.f32.mrf.mxu0
    %v6111 = vadd.f32 %v6062, %v6110
    %v6112 = vpop.f32.mrf.mxu0
    %v6113 = vadd.f32 %v6064, %v6112
    %6114 = vmatmul.bf16.gmra.mxu0 %v5398
    %v6115 = vpop.f32.mrf.mxu0
    %v6116 = vadd.f32 %v6067, %v6115
    %v6117 = vpop.f32.mrf.mxu0
    %v6118 = vadd.f32 %v6069, %v6117
    %6119 = vmatmul.bf16.gmra.mxu0 %v5401
    %v6120 = vpop.f32.mrf.mxu0
    %v6121 = vadd.f32 %v6072, %v6120
    %v6122 = vpop.f32.mrf.mxu0
    %v6123 = vadd.f32 %v6074, %v6122
    %6124 = vmatmul.bf16.gmra.mxu0 %v5404
    %v6125 = vpop.f32.mrf.mxu0
    %v6126 = vadd.f32 %v6077, %v6125
    %v6127 = vpop.f32.mrf.mxu0
    %v6128 = vadd.f32 %v6079, %v6127
    %6129 = vmatmul.bf16.gmra.mxu0 %v5407
    %v6130 = vpop.f32.mrf.mxu0
    %v6131 = vadd.f32 %v6082, %v6130
    %v6132 = vpop.f32.mrf.mxu0
    %v6133 = vadd.f32 %v6084, %v6132
    %6134 = vdwg.mxu0
    %6135 = vmatpush.bf16.msra.mxu0 %v5816
    %6136 = vmatpush.bf16.msra.mxu0 %v5813
    %6137 = vmatpush.bf16.msra.mxu0 %v5810
    %6138 = vmatpush.bf16.msra.mxu0 %v5807
    %6139 = vmatpush.bf16.msra.mxu0 %v5804
    %6140 = vmatpush.bf16.msra.mxu0 %v5801
    %6141 = vmatpush.bf16.msra.mxu0 %v5798
    %6142 = vmatpush.bf16.msra.mxu0 %v5795
    %6143 = vmatmul.bf16.gmra.mxu0 %v5387
    %v6144 = vpop.f32.mrf.mxu0
    %v6145 = vadd.f32 %v6096, %v6144
    %v6146 = vpop.f32.mrf.mxu0
    %v6147 = vadd.f32 %v6098, %v6146
    %6148 = vmatmul.bf16.gmra.mxu0 %v5390
    %v6149 = vpop.f32.mrf.mxu0
    %v6150 = vadd.f32 %v6101, %v6149
    %v6151 = vpop.f32.mrf.mxu0
    %v6152 = vadd.f32 %v6103, %v6151
    %6153 = vmatmul.bf16.gmra.mxu0 %v5393
    %v6154 = vpop.f32.mrf.mxu0
    %v6155 = vadd.f32 %v6106, %v6154
    %v6156 = vpop.f32.mrf.mxu0
    %v6157 = vadd.f32 %v6108, %v6156
    %6158 = vmatmul.bf16.gmra.mxu0 %v5396
    %v6159 = vpop.f32.mrf.mxu0
    %v6160 = vadd.f32 %v6111, %v6159
    %v6161 = vpop.f32.mrf.mxu0
    %v6162 = vadd.f32 %v6113, %v6161
    %6163 = vmatmul.bf16.gmra.mxu0 %v5399
    %v6164 = vpop.f32.mrf.mxu0
    %v6165 = vadd.f32 %v6116, %v6164
    %v6166 = vpop.f32.mrf.mxu0
    %v6167 = vadd.f32 %v6118, %v6166
    %6168 = vmatmul.bf16.gmra.mxu0 %v5402
    %v6169 = vpop.f32.mrf.mxu0
    %v6170 = vadd.f32 %v6121, %v6169
    %v6171 = vpop.f32.mrf.mxu0
    %v6172 = vadd.f32 %v6123, %v6171
    %6173 = vmatmul.bf16.gmra.mxu0 %v5405
    %v6174 = vpop.f32.mrf.mxu0
    %v6175 = vadd.f32 %v6126, %v6174
    %v6176 = vpop.f32.mrf.mxu0
    %v6177 = vadd.f32 %v6128, %v6176
    %6178 = vmatmul.bf16.gmra.mxu0 %v5408
    %v6179 = vpop.f32.mrf.mxu0
    %v6180 = vadd.f32 %v6131, %v6179
    %v6181 = vpop.f32.mrf.mxu0
    %v6182 = vadd.f32 %v6133, %v6181
    %6183 = vdwg.mxu0
    %6184 = vmatpush.bf16.msra.mxu0 %v5769
    %6185 = vmatpush.bf16.msra.mxu0 %v5766
    %6186 = vmatpush.bf16.msra.mxu0 %v5763
    %6187 = vmatpush.bf16.msra.mxu0 %v5760
    %6188 = vmatpush.bf16.msra.mxu0 %v5757
    %6189 = vmatpush.bf16.msra.mxu0 %v5754
    %6190 = vmatpush.bf16.msra.mxu0 %v5751
    %6191 = vmatpush.bf16.msra.mxu0 %v5748
    %6192 = vmatmul.bf16.gmra.mxu0 %v5385
    %v6193 = vpop.f32.mrf.mxu0
    %v6194 = vadd.f32 0.0, %v6193
    %v6195 = vpop.f32.mrf.mxu0
    %v6196 = vadd.f32 0.0, %v6195
    %6197 = vmatmul.bf16.gmra.mxu0 %v5388
    %v6198 = vpop.f32.mrf.mxu0
    %v6199 = vadd.f32 0.0, %v6198
    %v6200 = vpop.f32.mrf.mxu0
    %v6201 = vadd.f32 0.0, %v6200
    %6202 = vmatmul.bf16.gmra.mxu0 %v5391
    %v6203 = vpop.f32.mrf.mxu0
    %v6204 = vadd.f32 0.0, %v6203
    %v6205 = vpop.f32.mrf.mxu0
    %v6206 = vadd.f32 0.0, %v6205
    %6207 = vmatmul.bf16.gmra.mxu0 %v5394
    %v6208 = vpop.f32.mrf.mxu0
    %v6209 = vadd.f32 0.0, %v6208
    %v6210 = vpop.f32.mrf.mxu0
    %v6211 = vadd.f32 0.0, %v6210
    %6212 = vmatmul.bf16.gmra.mxu0 %v5397
    %v6213 = vpop.f32.mrf.mxu0
    %v6214 = vadd.f32 0.0, %v6213
    %v6215 = vpop.f32.mrf.mxu0
    %v6216 = vadd.f32 0.0, %v6215
    %6217 = vmatmul.bf16.gmra.mxu0 %v5400
    %v6218 = vpop.f32.mrf.mxu0
    %v6219 = vadd.f32 0.0, %v6218
    %v6220 = vpop.f32.mrf.mxu0
    %v6221 = vadd.f32 0.0, %v6220
    %6222 = vmatmul.bf16.gmra.mxu0 %v5403
    %v6223 = vpop.f32.mrf.mxu0
    %v6224 = vadd.f32 0.0, %v6223
    %v6225 = vpop.f32.mrf.mxu0
    %v6226 = vadd.f32 0.0, %v6225
    %6227 = vmatmul.bf16.gmra.mxu0 %v5406
    %v6228 = vpop.f32.mrf.mxu0
    %v6229 = vadd.f32 0.0, %v6228
    %v6230 = vpop.f32.mrf.mxu0
    %v6231 = vadd.f32 0.0, %v6230
    %6232 = vdwg.mxu0
    %6233 = vmatpush.bf16.msra.mxu0 %v5793
    %6234 = vmatpush.bf16.msra.mxu0 %v5790
    %6235 = vmatpush.bf16.msra.mxu0 %v5787
    %6236 = vmatpush.bf16.msra.mxu0 %v5784
    %6237 = vmatpush.bf16.msra.mxu0 %v5781
    %6238 = vmatpush.bf16.msra.mxu0 %v5778
    %6239 = vmatpush.bf16.msra.mxu0 %v5775
    %6240 = vmatpush.bf16.msra.mxu0 %v5772
    %6241 = vmatmul.bf16.gmra.mxu0 %v5386
    %v6242 = vpop.f32.mrf.mxu0
    %v6243 = vadd.f32 %v6194, %v6242
    %v6244 = vpop.f32.mrf.mxu0
    %v6245 = vadd.f32 %v6196, %v6244
    %6246 = vmatmul.bf16.gmra.mxu0 %v5389
    %v6247 = vpop.f32.mrf.mxu0
    %v6248 = vadd.f32 %v6199, %v6247
    %v6249 = vpop.f32.mrf.mxu0
    %v6250 = vadd.f32 %v6201, %v6249
    %6251 = vmatmul.bf16.gmra.mxu0 %v5392
    %v6252 = vpop.f32.mrf.mxu0
    %v6253 = vadd.f32 %v6204, %v6252
    %v6254 = vpop.f32.mrf.mxu0
    %v6255 = vadd.f32 %v6206, %v6254
    %6256 = vmatmul.bf16.gmra.mxu0 %v5395
    %v6257 = vpop.f32.mrf.mxu0
    %v6258 = vadd.f32 %v6209, %v6257
    %v6259 = vpop.f32.mrf.mxu0
    %v6260 = vadd.f32 %v6211, %v6259
    %6261 = vmatmul.bf16.gmra.mxu0 %v5398
    %v6262 = vpop.f32.mrf.mxu0
    %v6263 = vadd.f32 %v6214, %v6262
    %v6264 = vpop.f32.mrf.mxu0
    %v6265 = vadd.f32 %v6216, %v6264
    %6266 = vmatmul.bf16.gmra.mxu0 %v5401
    %v6267 = vpop.f32.mrf.mxu0
    %v6268 = vadd.f32 %v6219, %v6267
    %v6269 = vpop.f32.mrf.mxu0
    %v6270 = vadd.f32 %v6221, %v6269
    %6271 = vmatmul.bf16.gmra.mxu0 %v5404
    %v6272 = vpop.f32.mrf.mxu0
    %v6273 = vadd.f32 %v6224, %v6272
    %v6274 = vpop.f32.mrf.mxu0
    %v6275 = vadd.f32 %v6226, %v6274
    %6276 = vmatmul.bf16.gmra.mxu0 %v5407
    %v6277 = vpop.f32.mrf.mxu0
    %v6278 = vadd.f32 %v6229, %v6277
    %v6279 = vpop.f32.mrf.mxu0
    %v6280 = vadd.f32 %v6231, %v6279
    %6281 = vdwg.mxu0
    %6282 = vmatpush.bf16.msra.mxu0 %v5817
    %6283 = vmatpush.bf16.msra.mxu0 %v5814
    %6284 = vmatpush.bf16.msra.mxu0 %v5811
    %6285 = vmatpush.bf16.msra.mxu0 %v5808
    %6286 = vmatpush.bf16.msra.mxu0 %v5805
    %6287 = vmatpush.bf16.msra.mxu0 %v5802
    %6288 = vmatpush.bf16.msra.mxu0 %v5799
    %6289 = vmatpush.bf16.msra.mxu0 %v5796
    %6290 = vmatmul.bf16.gmra.mxu0 %v5387
    %v6291 = vpop.f32.mrf.mxu0
    %v6292 = vadd.f32 %v6243, %v6291
    %v6293 = vpop.f32.mrf.mxu0
    %v6294 = vadd.f32 %v6245, %v6293
    %6295 = vmatmul.bf16.gmra.mxu0 %v5390
    %v6296 = vpop.f32.mrf.mxu0
    %v6297 = vadd.f32 %v6248, %v6296
    %v6298 = vpop.f32.mrf.mxu0
    %v6299 = vadd.f32 %v6250, %v6298
    %6300 = vmatmul.bf16.gmra.mxu0 %v5393
    %v6301 = vpop.f32.mrf.mxu0
    %v6302 = vadd.f32 %v6253, %v6301
    %v6303 = vpop.f32.mrf.mxu0
    %v6304 = vadd.f32 %v6255, %v6303
    %6305 = vmatmul.bf16.gmra.mxu0 %v5396
    %v6306 = vpop.f32.mrf.mxu0
    %v6307 = vadd.f32 %v6258, %v6306
    %v6308 = vpop.f32.mrf.mxu0
    %v6309 = vadd.f32 %v6260, %v6308
    %6310 = vmatmul.bf16.gmra.mxu0 %v5399
    %v6311 = vpop.f32.mrf.mxu0
    %v6312 = vadd.f32 %v6263, %v6311
    %v6313 = vpop.f32.mrf.mxu0
    %v6314 = vadd.f32 %v6265, %v6313
    %6315 = vmatmul.bf16.gmra.mxu0 %v5402
    %v6316 = vpop.f32.mrf.mxu0
    %v6317 = vadd.f32 %v6268, %v6316
    %v6318 = vpop.f32.mrf.mxu0
    %v6319 = vadd.f32 %v6270, %v6318
    %6320 = vmatmul.bf16.gmra.mxu0 %v5405
    %v6321 = vpop.f32.mrf.mxu0
    %v6322 = vadd.f32 %v6273, %v6321
    %v6323 = vpop.f32.mrf.mxu0
    %v6324 = vadd.f32 %v6275, %v6323
    %6325 = vmatmul.bf16.gmra.mxu0 %v5408
    %v6326 = vpop.f32.mrf.mxu0
    %v6327 = vadd.f32 %v6278, %v6326
    %v6328 = vpop.f32.mrf.mxu0
    %v6329 = vadd.f32 %v6280, %v6328
    %6330 = vdwg.mxu0
    %v6331 = vpack.c.bf16 %v6145, %v5998
    %v6332 = vpack.c.bf16 %v6292, %v6292
    %v6333 = vpack.c.bf16 %v6147, %v6000
    %v6334 = vpack.c.bf16 %v6294, %v6294
    %v6335 = vpack.c.bf16 %v6150, %v6003
    %v6336 = vpack.c.bf16 %v6297, %v6297
    %v6337 = vpack.c.bf16 %v6152, %v6005
    %v6338 = vpack.c.bf16 %v6299, %v6299
    %v6339 = vpack.c.bf16 %v6155, %v6008
    %v6340 = vpack.c.bf16 %v6302, %v6302
    %v6341 = vpack.c.bf16 %v6157, %v6010
    %v6342 = vpack.c.bf16 %v6304, %v6304
    %v6343 = vpack.c.bf16 %v6160, %v6013
    %v6344 = vpack.c.bf16 %v6307, %v6307
    %v6345 = vpack.c.bf16 %v6162, %v6015
    %v6346 = vpack.c.bf16 %v6309, %v6309
    %v6347 = vpack.c.bf16 %v6165, %v6018
    %v6348 = vpack.c.bf16 %v6312, %v6312
    %v6349 = vpack.c.bf16 %v6167, %v6020
    %v6350 = vpack.c.bf16 %v6314, %v6314
    %v6351 = vpack.c.bf16 %v6170, %v6023
    %v6352 = vpack.c.bf16 %v6317, %v6317
    %v6353 = vpack.c.bf16 %v6172, %v6025
    %v6354 = vpack.c.bf16 %v6319, %v6319
    %v6355 = vpack.c.bf16 %v6175, %v6028
    %v6356 = vpack.c.bf16 %v6322, %v6322
    %v6357 = vpack.c.bf16 %v6177, %v6030
    %v6358 = vpack.c.bf16 %v6324, %v6324
    %v6359 = vpack.c.bf16 %v6180, %v6033
    %v6360 = vpack.c.bf16 %v6327, %v6327
    %v6361 = vpack.c.bf16 %v6182, %v6035
    %v6362 = vpack.c.bf16 %v6329, %v6329
    %v6379 = vunpack.c.l.b16 %v6331
    %v6380 = vunpack.c.l.b16 %v6333
    %v6381 = vunpack.c.l.b16 %v6335
    %v6382 = vunpack.c.l.b16 %v6337
    %v6383 = vunpack.c.l.b16 %v6339
    %v6384 = vunpack.c.l.b16 %v6341
    %v6385 = vunpack.c.l.b16 %v6343
    %v6386 = vunpack.c.l.b16 %v6345
    %v6387 = vunpack.c.l.b16 %v6347
    %v6388 = vunpack.c.l.b16 %v6349
    %v6389 = vunpack.c.l.b16 %v6351
    %v6390 = vunpack.c.l.b16 %v6353
    %v6391 = vunpack.c.l.b16 %v6355
    %v6392 = vunpack.c.l.b16 %v6357
    %v6393 = vunpack.c.l.b16 %v6359
    %v6394 = vunpack.c.l.b16 %v6361
    %v6395 = vpack.c.b16 %v6380, %v6379
    %v6396 = vpack.c.b16 %v6382, %v6381
    %v6397 = vpack.c.b16 %v6384, %v6383
    %v6398 = vpack.c.b16 %v6386, %v6385
    %v6399 = vpack.c.b16 %v6388, %v6387
    %v6400 = vpack.c.b16 %v6390, %v6389
    %v6401 = vpack.c.b16 %v6392, %v6391
    %v6402 = vpack.c.b16 %v6394, %v6393
    %6411 = vmatpush.bf16.msra.mxu0 %v6402
    %6412 = vmatpush.bf16.msra.mxu0 %v6401
    %6413 = vmatpush.bf16.msra.mxu0 %v6400
    %6414 = vmatpush.bf16.msra.mxu0 %v6399
    %6415 = vmatpush.bf16.msra.mxu0 %v6398
    %6416 = vmatpush.bf16.msra.mxu0 %v6397
    %6417 = vmatpush.bf16.msra.mxu0 %v6396
    %6418 = vmatpush.bf16.msra.mxu0 %v6395
    %6419 = vmatmul.bf16.gmra.mxu0 %v1296
    %v6420 = vpop.f32.mrf.mxu0
    %v6421 = vadd.f32 0.0, %v6420
    %v6422 = vpop.f32.mrf.mxu0
    %v6423 = vadd.f32 0.0, %v6422
    %6424 = vmatmul.bf16.gmra.mxu0 %v1297
    %v6425 = vpop.f32.mrf.mxu0
    %v6426 = vadd.f32 0.0, %v6425
    %v6427 = vpop.f32.mrf.mxu0
    %v6428 = vadd.f32 0.0, %v6427
    %6429 = vmatmul.bf16.gmra.mxu0 %v1298
    %v6430 = vpop.f32.mrf.mxu0
    %v6431 = vadd.f32 0.0, %v6430
    %v6432 = vpop.f32.mrf.mxu0
    %v6433 = vadd.f32 0.0, %v6432
    %6434 = vmatmul.bf16.gmra.mxu0 %v1299
    %v6435 = vpop.f32.mrf.mxu0
    %v6436 = vadd.f32 0.0, %v6435
    %v6437 = vpop.f32.mrf.mxu0
    %v6438 = vadd.f32 0.0, %v6437
    %6439 = vmatmul.bf16.gmra.mxu0 %v1300
    %v6440 = vpop.f32.mrf.mxu0
    %v6441 = vadd.f32 0.0, %v6440
    %v6442 = vpop.f32.mrf.mxu0
    %v6443 = vadd.f32 0.0, %v6442
    %6444 = vmatmul.bf16.gmra.mxu0 %v1301
    %v6445 = vpop.f32.mrf.mxu0
    %v6446 = vadd.f32 0.0, %v6445
    %v6447 = vpop.f32.mrf.mxu0
    %v6448 = vadd.f32 0.0, %v6447
    %6449 = vmatmul.bf16.gmra.mxu0 %v1302
    %v6450 = vpop.f32.mrf.mxu0
    %v6451 = vadd.f32 0.0, %v6450
    %v6452 = vpop.f32.mrf.mxu0
    %v6453 = vadd.f32 0.0, %v6452
    %6454 = vmatmul.bf16.gmra.mxu0 %v1303
    %v6455 = vpop.f32.mrf.mxu0
    %v6456 = vadd.f32 0.0, %v6455
    %v6457 = vpop.f32.mrf.mxu0
    %v6458 = vadd.f32 0.0, %v6457
    %6459 = vdwg.mxu0
    %v6460 = vunpack.c.h.b16 %v6331
    %v6461 = vunpack.c.h.b16 %v6333
    %v6462 = vunpack.c.h.b16 %v6335
    %v6463 = vunpack.c.h.b16 %v6337
    %v6464 = vunpack.c.h.b16 %v6339
    %v6465 = vunpack.c.h.b16 %v6341
    %v6466 = vunpack.c.h.b16 %v6343
    %v6467 = vunpack.c.h.b16 %v6345
    %v6468 = vunpack.c.h.b16 %v6347
    %v6469 = vunpack.c.h.b16 %v6349
    %v6470 = vunpack.c.h.b16 %v6351
    %v6471 = vunpack.c.h.b16 %v6353
    %v6472 = vunpack.c.h.b16 %v6355
    %v6473 = vunpack.c.h.b16 %v6357
    %v6474 = vunpack.c.h.b16 %v6359
    %v6475 = vunpack.c.h.b16 %v6361
    %v6476 = vpack.c.b16 %v6461, %v6460
    %v6477 = vpack.c.b16 %v6463, %v6462
    %v6478 = vpack.c.b16 %v6465, %v6464
    %v6479 = vpack.c.b16 %v6467, %v6466
    %v6480 = vpack.c.b16 %v6469, %v6468
    %v6481 = vpack.c.b16 %v6471, %v6470
    %v6482 = vpack.c.b16 %v6473, %v6472
    %v6483 = vpack.c.b16 %v6475, %v6474
    %6492 = vmatpush.bf16.msra.mxu0 %v6483
    %6493 = vmatpush.bf16.msra.mxu0 %v6482
    %6494 = vmatpush.bf16.msra.mxu0 %v6481
    %6495 = vmatpush.bf16.msra.mxu0 %v6480
    %6496 = vmatpush.bf16.msra.mxu0 %v6479
    %6497 = vmatpush.bf16.msra.mxu0 %v6478
    %6498 = vmatpush.bf16.msra.mxu0 %v6477
    %6499 = vmatpush.bf16.msra.mxu0 %v6476
    %6500 = vmatmul.bf16.gmra.mxu0 %v1458
    %v6501 = vpop.f32.mrf.mxu0
    %v6502 = vadd.f32 0.0, %v6501
    %v6503 = vpop.f32.mrf.mxu0
    %v6504 = vadd.f32 0.0, %v6503
    %6505 = vmatmul.bf16.gmra.mxu0 %v1459
    %v6506 = vpop.f32.mrf.mxu0
    %v6507 = vadd.f32 0.0, %v6506
    %v6508 = vpop.f32.mrf.mxu0
    %v6509 = vadd.f32 0.0, %v6508
    %6510 = vmatmul.bf16.gmra.mxu0 %v1460
    %v6511 = vpop.f32.mrf.mxu0
    %v6512 = vadd.f32 0.0, %v6511
    %v6513 = vpop.f32.mrf.mxu0
    %v6514 = vadd.f32 0.0, %v6513
    %6515 = vmatmul.bf16.gmra.mxu0 %v1461
    %v6516 = vpop.f32.mrf.mxu0
    %v6517 = vadd.f32 0.0, %v6516
    %v6518 = vpop.f32.mrf.mxu0
    %v6519 = vadd.f32 0.0, %v6518
    %6520 = vmatmul.bf16.gmra.mxu0 %v1462
    %v6521 = vpop.f32.mrf.mxu0
    %v6522 = vadd.f32 0.0, %v6521
    %v6523 = vpop.f32.mrf.mxu0
    %v6524 = vadd.f32 0.0, %v6523
    %6525 = vmatmul.bf16.gmra.mxu0 %v1463
    %v6526 = vpop.f32.mrf.mxu0
    %v6527 = vadd.f32 0.0, %v6526
    %v6528 = vpop.f32.mrf.mxu0
    %v6529 = vadd.f32 0.0, %v6528
    %6530 = vmatmul.bf16.gmra.mxu0 %v1464
    %v6531 = vpop.f32.mrf.mxu0
    %v6532 = vadd.f32 0.0, %v6531
    %v6533 = vpop.f32.mrf.mxu0
    %v6534 = vadd.f32 0.0, %v6533
    %6535 = vmatmul.bf16.gmra.mxu0 %v1465
    %v6536 = vpop.f32.mrf.mxu0
    %v6537 = vadd.f32 0.0, %v6536
    %v6538 = vpop.f32.mrf.mxu0
    %v6539 = vadd.f32 0.0, %v6538
    %6540 = vdwg.mxu0
    %v6557 = vunpack.c.l.b16 %v6332
    %v6558 = vunpack.c.l.b16 %v6334
    %v6559 = vunpack.c.l.b16 %v6336
    %v6560 = vunpack.c.l.b16 %v6338
    %v6561 = vunpack.c.l.b16 %v6340
    %v6562 = vunpack.c.l.b16 %v6342
    %v6563 = vunpack.c.l.b16 %v6344
    %v6564 = vunpack.c.l.b16 %v6346
    %v6565 = vunpack.c.l.b16 %v6348
    %v6566 = vunpack.c.l.b16 %v6350
    %v6567 = vunpack.c.l.b16 %v6352
    %v6568 = vunpack.c.l.b16 %v6354
    %v6569 = vunpack.c.l.b16 %v6356
    %v6570 = vunpack.c.l.b16 %v6358
    %v6571 = vunpack.c.l.b16 %v6360
    %v6572 = vunpack.c.l.b16 %v6362
    %v6573 = vpack.c.b16 %v6558, %v6557
    %v6574 = vpack.c.b16 %v6560, %v6559
    %v6575 = vpack.c.b16 %v6562, %v6561
    %v6576 = vpack.c.b16 %v6564, %v6563
    %v6577 = vpack.c.b16 %v6566, %v6565
    %v6578 = vpack.c.b16 %v6568, %v6567
    %v6579 = vpack.c.b16 %v6570, %v6569
    %v6580 = vpack.c.b16 %v6572, %v6571
    %6589 = vmatpush.bf16.msra.mxu0 %v6580
    %6590 = vmatpush.bf16.msra.mxu0 %v6579
    %6591 = vmatpush.bf16.msra.mxu0 %v6578
    %6592 = vmatpush.bf16.msra.mxu0 %v6577
    %6593 = vmatpush.bf16.msra.mxu0 %v6576
    %6594 = vmatpush.bf16.msra.mxu0 %v6575
    %6595 = vmatpush.bf16.msra.mxu0 %v6574
    %6596 = vmatpush.bf16.msra.mxu0 %v6573
    %6597 = vmatmul.bf16.gmra.mxu0 %v1604
    %v6598 = vpop.f32.mrf.mxu0
    %v6599 = vadd.f32 0.0, %v6598
    %v6600 = vpop.f32.mrf.mxu0
    %v6601 = vadd.f32 0.0, %v6600
    %6602 = vmatmul.bf16.gmra.mxu0 %v1605
    %v6603 = vpop.f32.mrf.mxu0
    %v6604 = vadd.f32 0.0, %v6603
    %v6605 = vpop.f32.mrf.mxu0
    %v6606 = vadd.f32 0.0, %v6605
    %6607 = vmatmul.bf16.gmra.mxu0 %v1606
    %v6608 = vpop.f32.mrf.mxu0
    %v6609 = vadd.f32 0.0, %v6608
    %v6610 = vpop.f32.mrf.mxu0
    %v6611 = vadd.f32 0.0, %v6610
    %6612 = vmatmul.bf16.gmra.mxu0 %v1607
    %v6613 = vpop.f32.mrf.mxu0
    %v6614 = vadd.f32 0.0, %v6613
    %v6615 = vpop.f32.mrf.mxu0
    %v6616 = vadd.f32 0.0, %v6615
    %6617 = vmatmul.bf16.gmra.mxu0 %v1608
    %v6618 = vpop.f32.mrf.mxu0
    %v6619 = vadd.f32 0.0, %v6618
    %v6620 = vpop.f32.mrf.mxu0
    %v6621 = vadd.f32 0.0, %v6620
    %6622 = vmatmul.bf16.gmra.mxu0 %v1609
    %v6623 = vpop.f32.mrf.mxu0
    %v6624 = vadd.f32 0.0, %v6623
    %v6625 = vpop.f32.mrf.mxu0
    %v6626 = vadd.f32 0.0, %v6625
    %6627 = vmatmul.bf16.gmra.mxu0 %v1610
    %v6628 = vpop.f32.mrf.mxu0
    %v6629 = vadd.f32 0.0, %v6628
    %v6630 = vpop.f32.mrf.mxu0
    %v6631 = vadd.f32 0.0, %v6630
    %6632 = vmatmul.bf16.gmra.mxu0 %v1611
    %v6633 = vpop.f32.mrf.mxu0
    %v6634 = vadd.f32 0.0, %v6633
    %v6635 = vpop.f32.mrf.mxu0
    %v6636 = vadd.f32 0.0, %v6635
    %6637 = vdwg.mxu0
    %s6638 = scalar_lea.vmem [#allocation7], 3
    %v6639 = vld [vmem:[%s6638] ss:$8 sm:$0x7]
    %v6641 = vperm.slane %v6639, 0
    %v6642 = vperm.slane %v6639, 1
    %v6643 = vperm.slane %v6639, 2
    %v6647 = vadd.f32 %v6421, %v6641
    %v6648 = vadd.f32 %v6502, %v6642
    %v6649 = vadd.f32 %v6599, %v6643
    %v6650 = vadd.f32 %v6423, %v6641
    %v6651 = vadd.f32 %v6504, %v6642
    %v6652 = vadd.f32 %v6601, %v6643
    %v6653 = vadd.f32 %v6426, %v6641
    %v6654 = vadd.f32 %v6507, %v6642
    %v6655 = vadd.f32 %v6604, %v6643
    %v6656 = vadd.f32 %v6428, %v6641
    %v6657 = vadd.f32 %v6509, %v6642
    %v6658 = vadd.f32 %v6606, %v6643
    %v6659 = vadd.f32 %v6431, %v6641
    %v6660 = vadd.f32 %v6512, %v6642
    %v6661 = vadd.f32 %v6609, %v6643
    %v6662 = vadd.f32 %v6433, %v6641
    %v6663 = vadd.f32 %v6514, %v6642
    %v6664 = vadd.f32 %v6611, %v6643
    %v6665 = vadd.f32 %v6436, %v6641
    %v6666 = vadd.f32 %v6517, %v6642
    %v6667 = vadd.f32 %v6614, %v6643
    %v6668 = vadd.f32 %v6438, %v6641
    %v6669 = vadd.f32 %v6519, %v6642
    %v6670 = vadd.f32 %v6616, %v6643
    %v6671 = vadd.f32 %v6441, %v6641
    %v6672 = vadd.f32 %v6522, %v6642
    %v6673 = vadd.f32 %v6619, %v6643
    %v6674 = vadd.f32 %v6443, %v6641
    %v6675 = vadd.f32 %v6524, %v6642
    %v6676 = vadd.f32 %v6621, %v6643
    %v6677 = vadd.f32 %v6446, %v6641
    %v6678 = vadd.f32 %v6527, %v6642
    %v6679 = vadd.f32 %v6624, %v6643
    %v6680 = vadd.f32 %v6448, %v6641
    %v6681 = vadd.f32 %v6529, %v6642
    %v6682 = vadd.f32 %v6626, %v6643
    %v6683 = vadd.f32 %v6451, %v6641
    %v6684 = vadd.f32 %v6532, %v6642
    %v6685 = vadd.f32 %v6629, %v6643
    %v6686 = vadd.f32 %v6453, %v6641
    %v6687 = vadd.f32 %v6534, %v6642
    %v6688 = vadd.f32 %v6631, %v6643
    %v6689 = vadd.f32 %v6456, %v6641
    %v6690 = vadd.f32 %v6537, %v6642
    %v6691 = vadd.f32 %v6634, %v6643
    %v6692 = vadd.f32 %v6458, %v6641
    %v6693 = vadd.f32 %v6539, %v6642
    %v6694 = vadd.f32 %v6636, %v6643
    %v6695 = vmax.f32 %v6647, 0.0
    %v6696 = vmax.f32 %v6648, 0.0
    %v6697 = vmax.f32 %v6649, 0.0
    %v6698 = vmax.f32 %v6650, 0.0
    %v6699 = vmax.f32 %v6651, 0.0
    %v6700 = vmax.f32 %v6652, 0.0
    %v6701 = vmax.f32 %v6653, 0.0
    %v6702 = vmax.f32 %v6654, 0.0
    %v6703 = vmax.f32 %v6655, 0.0
    %v6704 = vmax.f32 %v6656, 0.0
    %v6705 = vmax.f32 %v6657, 0.0
    %v6706 = vmax.f32 %v6658, 0.0
    %v6707 = vmax.f32 %v6659, 0.0
    %v6708 = vmax.f32 %v6660, 0.0
    %v6709 = vmax.f32 %v6661, 0.0
    %v6710 = vmax.f32 %v6662, 0.0
    %v6711 = vmax.f32 %v6663, 0.0
    %v6712 = vmax.f32 %v6664, 0.0
    %v6713 = vmax.f32 %v6665, 0.0
    %v6714 = vmax.f32 %v6666, 0.0
    %v6715 = vmax.f32 %v6667, 0.0
    %v6716 = vmax.f32 %v6668, 0.0
    %v6717 = vmax.f32 %v6669, 0.0
    %v6718 = vmax.f32 %v6670, 0.0
    %v6719 = vmax.f32 %v6671, 0.0
    %v6720 = vmax.f32 %v6672, 0.0
    %v6721 = vmax.f32 %v6673, 0.0
    %v6722 = vmax.f32 %v6674, 0.0
    %v6723 = vmax.f32 %v6675, 0.0
    %v6724 = vmax.f32 %v6676, 0.0
    %v6725 = vmax.f32 %v6677, 0.0
    %v6726 = vmax.f32 %v6678, 0.0
    %v6727 = vmax.f32 %v6679, 0.0
    %v6728 = vmax.f32 %v6680, 0.0
    %v6729 = vmax.f32 %v6681, 0.0
    %v6730 = vmax.f32 %v6682, 0.0
    %v6731 = vmax.f32 %v6683, 0.0
    %v6732 = vmax.f32 %v6684, 0.0
    %v6733 = vmax.f32 %v6685, 0.0
    %v6734 = vmax.f32 %v6686, 0.0
    %v6735 = vmax.f32 %v6687, 0.0
    %v6736 = vmax.f32 %v6688, 0.0
    %v6737 = vmax.f32 %v6689, 0.0
    %v6738 = vmax.f32 %v6690, 0.0
    %v6739 = vmax.f32 %v6691, 0.0
    %v6740 = vmax.f32 %v6692, 0.0
    %v6741 = vmax.f32 %v6693, 0.0
    %v6742 = vmax.f32 %v6694, 0.0
    %6743 = vst [vmem:[%s7] sm:$0xff] %v6695
    %6744 = vst [vmem:[%s7 + $0x8] sm:$0xff] %v6696
    %6745 = vst [vmem:[%s7 + $0x10] sm:$0xff] %v6697
    %6746 = vst [vmem:[%s7 + $0x18] sm:$0xff] %v6698
    %6747 = vst [vmem:[%s7 + $0x20] sm:$0xff] %v6699
    %6748 = vst [vmem:[%s7 + $0x28] sm:$0xff] %v6700
    %6749 = vst [vmem:[%s7 + $0x30] sm:$0xff] %v6701
    %6750 = vst [vmem:[%s7 + $0x38] sm:$0xff] %v6702
    %6751 = vst [vmem:[%s7 + $0x40] sm:$0xff] %v6703
    %6752 = vst [vmem:[%s7 + $0x48] sm:$0xff] %v6704
    %6753 = vst [vmem:[%s7 + $0x50] sm:$0xff] %v6705
    %6754 = vst [vmem:[%s7 + $0x58] sm:$0xff] %v6706
    %6755 = vst [vmem:[%s7 + $0x60] sm:$0xff] %v6707
    %6756 = vst [vmem:[%s7 + $0x68] sm:$0xff] %v6708
    %6757 = vst [vmem:[%s7 + $0x70] sm:$0xff] %v6709
    %6758 = vst [vmem:[%s7 + $0x78] sm:$0xff] %v6710
    %6759 = vst [vmem:[%s7 + $0x80] sm:$0xff] %v6711
    %6760 = vst [vmem:[%s7 + $0x88] sm:$0xff] %v6712
    %6761 = vst [vmem:[%s7 + $0x90] sm:$0xff] %v6713
    %6762 = vst [vmem:[%s7 + $0x98] sm:$0xff] %v6714
    %6763 = vst [vmem:[%s7 + $0xa0] sm:$0xff] %v6715
    %6764 = vst [vmem:[%s7 + $0xa8] sm:$0xff] %v6716
    %6765 = vst [vmem:[%s7 + $0xb0] sm:$0xff] %v6717
    %6766 = vst [vmem:[%s7 + $0xb8] sm:$0xff] %v6718
    %6767 = vst [vmem:[%s7 + $0xc0] sm:$0xff] %v6719
    %6768 = vst [vmem:[%s7 + $0xc8] sm:$0xff] %v6720
    %6769 = vst [vmem:[%s7 + $0xd0] sm:$0xff] %v6721
    %6770 = vst [vmem:[%s7 + $0xd8] sm:$0xff] %v6722
    %6771 = vst [vmem:[%s7 + $0xe0] sm:$0xff] %v6723
    %6772 = vst [vmem:[%s7 + $0xe8] sm:$0xff] %v6724
    %6773 = vst [vmem:[%s7 + $0xf0] sm:$0xff] %v6725
    %6774 = vst [vmem:[%s7 + $0xf8] sm:$0xff] %v6726
    %6775 = vst [vmem:[%s7 + $0x100] sm:$0xff] %v6727
    %6776 = vst [vmem:[%s7 + $0x108] sm:$0xff] %v6728
    %6777 = vst [vmem:[%s7 + $0x110] sm:$0xff] %v6729
    %6778 = vst [vmem:[%s7 + $0x118] sm:$0xff] %v6730
    %6779 = vst [vmem:[%s7 + $0x120] sm:$0xff] %v6731
    %6780 = vst [vmem:[%s7 + $0x128] sm:$0xff] %v6732
    %6781 = vst [vmem:[%s7 + $0x130] sm:$0xff] %v6733
    %6782 = vst [vmem:[%s7 + $0x138] sm:$0xff] %v6734
    %6783 = vst [vmem:[%s7 + $0x140] sm:$0xff] %v6735
    %6784 = vst [vmem:[%s7 + $0x148] sm:$0xff] %v6736
    %6785 = vst [vmem:[%s7 + $0x150] sm:$0xff] %v6737
    %6786 = vst [vmem:[%s7 + $0x158] sm:$0xff] %v6738
    %6787 = vst [vmem:[%s7 + $0x160] sm:$0xff] %v6739
    %6788 = vst [vmem:[%s7 + $0x168] sm:$0xff] %v6740
    %6789 = vst [vmem:[%s7 + $0x170] sm:$0xff] %v6741
    %6790 = vst [vmem:[%s7 + $0x178] sm:$0xff] %v6742
    %v6791 = vpack.c.bf16 %v6698, %v6695
    %v6792 = vpack.c.bf16 %v6699, %v6696
    %v6793 = vpack.c.bf16 %v6700, %v6697
    %v6794 = vpack.c.bf16 %v6704, %v6701
    %v6795 = vpack.c.bf16 %v6705, %v6702
    %v6796 = vpack.c.bf16 %v6706, %v6703
    %v6797 = vpack.c.bf16 %v6710, %v6707
    %v6798 = vpack.c.bf16 %v6711, %v6708
    %v6799 = vpack.c.bf16 %v6712, %v6709
    %v6800 = vpack.c.bf16 %v6716, %v6713
    %v6801 = vpack.c.bf16 %v6717, %v6714
    %v6802 = vpack.c.bf16 %v6718, %v6715
    %v6803 = vpack.c.bf16 %v6722, %v6719
    %v6804 = vpack.c.bf16 %v6723, %v6720
    %v6805 = vpack.c.bf16 %v6724, %v6721
    %v6806 = vpack.c.bf16 %v6728, %v6725
    %v6807 = vpack.c.bf16 %v6729, %v6726
    %v6808 = vpack.c.bf16 %v6730, %v6727
    %v6809 = vpack.c.bf16 %v6734, %v6731
    %v6810 = vpack.c.bf16 %v6735, %v6732
    %v6811 = vpack.c.bf16 %v6736, %v6733
    %v6812 = vpack.c.bf16 %v6740, %v6737
    %v6813 = vpack.c.bf16 %v6741, %v6738
    %v6814 = vpack.c.bf16 %v6742, %v6739
    %v6815 = vld [vmem:[#allocation9] sm:$0xf]
    %v6816 = vld [vmem:[#allocation9 + $0x4] sm:$0xf]
    %v6817 = vld [vmem:[#allocation9 + $0x8] sm:$0xf]
    %v6818 = vld [vmem:[#allocation9 + $0xc] sm:$0xf]
    %v6819 = vld [vmem:[#allocation9 + $0x10] sm:$0xf]
    %v6820 = vld [vmem:[#allocation9 + $0x14] sm:$0xf]
    %v6821 = vld [vmem:[#allocation9 + $0x18] sm:$0xf]
    %v6822 = vld [vmem:[#allocation9 + $0x1c] sm:$0xf]
    %v6823 = vld [vmem:[#allocation9 + $0x20] sm:$0xf]
    %v6824 = vld [vmem:[#allocation9 + $0x24] sm:$0xf]
    %v6825 = vld [vmem:[#allocation9 + $0x28] sm:$0xf]
    %v6826 = vld [vmem:[#allocation9 + $0x2c] sm:$0xf]
    %v6827 = vld [vmem:[#allocation9 + $0x30] sm:$0xf]
    %v6828 = vld [vmem:[#allocation9 + $0x34] sm:$0xf]
    %v6829 = vld [vmem:[#allocation9 + $0x38] sm:$0xf]
    %v6830 = vld [vmem:[#allocation9 + $0x3c] sm:$0xf]
    %v6831 = vld [vmem:[#allocation9 + $0x40] sm:$0xf]
    %v6832 = vld [vmem:[#allocation9 + $0x44] sm:$0xf]
    %v6833 = vld [vmem:[#allocation9 + $0x48] sm:$0xf]
    %v6834 = vld [vmem:[#allocation9 + $0x4c] sm:$0xf]
    %v6835 = vld [vmem:[#allocation9 + $0x50] sm:$0xf]
    %v6836 = vld [vmem:[#allocation9 + $0x54] sm:$0xf]
    %v6837 = vld [vmem:[#allocation9 + $0x58] sm:$0xf]
    %v6838 = vld [vmem:[#allocation9 + $0x5c] sm:$0xf]
    %v6839 = vld [vmem:[#allocation9 + $0x60] sm:$0xf]
    %v6840 = vld [vmem:[#allocation9 + $0x64] sm:$0xf]
    %v6841 = vld [vmem:[#allocation9 + $0x68] sm:$0xf]
    %v6842 = vld [vmem:[#allocation9 + $0x6c] sm:$0xf]
    %v6843 = vld [vmem:[#allocation9 + $0x70] sm:$0xf]
    %v6844 = vld [vmem:[#allocation9 + $0x74] sm:$0xf]
    %v6845 = vld [vmem:[#allocation9 + $0x78] sm:$0xf]
    %v6846 = vld [vmem:[#allocation9 + $0x7c] sm:$0xf]
    %v6847 = vld [vmem:[#allocation9 + $0x80] sm:$0xf]
    %v6848 = vld [vmem:[#allocation9 + $0x84] sm:$0xf]
    %v6849 = vld [vmem:[#allocation9 + $0x88] sm:$0xf]
    %v6850 = vld [vmem:[#allocation9 + $0x8c] sm:$0xf]
    %v6851 = vld [vmem:[#allocation9 + $0x90] sm:$0xf]
    %v6852 = vld [vmem:[#allocation9 + $0x94] sm:$0xf]
    %v6853 = vld [vmem:[#allocation9 + $0x98] sm:$0xf]
    %v6854 = vld [vmem:[#allocation9 + $0x9c] sm:$0xf]
    %v6855 = vld [vmem:[#allocation9 + $0xa0] sm:$0xf]
    %v6856 = vld [vmem:[#allocation9 + $0xa4] sm:$0xf]
    %v6857 = vld [vmem:[#allocation9 + $0xa8] sm:$0xf]
    %v6858 = vld [vmem:[#allocation9 + $0xac] sm:$0xf]
    %v6859 = vld [vmem:[#allocation9 + $0xb0] sm:$0xf]
    %v6860 = vld [vmem:[#allocation9 + $0xb4] sm:$0xf]
    %v6861 = vld [vmem:[#allocation9 + $0xb8] sm:$0xf]
    %v6862 = vld [vmem:[#allocation9 + $0xbc] sm:$0xf]
    %v6863 = vld [vmem:[#allocation12] sm:$0x1]
    %v6864 = vperm.slane %v6863, 0
    %v6913 = vunpack.c.l.b16 %v6815
    %v6914 = vunpack.c.l.b16 %v6816
    %v6915 = vunpack.c.l.b16 %v6817
    %v6916 = vunpack.c.l.b16 %v6818
    %v6917 = vunpack.c.l.b16 %v6819
    %v6918 = vunpack.c.l.b16 %v6820
    %v6919 = vunpack.c.l.b16 %v6821
    %v6920 = vunpack.c.l.b16 %v6822
    %v6921 = vunpack.c.l.b16 %v6823
    %v6922 = vunpack.c.l.b16 %v6824
    %v6923 = vunpack.c.l.b16 %v6825
    %v6924 = vunpack.c.l.b16 %v6826
    %v6925 = vunpack.c.l.b16 %v6827
    %v6926 = vunpack.c.l.b16 %v6828
    %v6927 = vunpack.c.l.b16 %v6829
    %v6928 = vunpack.c.l.b16 %v6830
    %v6929 = vunpack.c.l.b16 %v6831
    %v6930 = vunpack.c.l.b16 %v6832
    %v6931 = vunpack.c.l.b16 %v6833
    %v6932 = vunpack.c.l.b16 %v6834
    %v6933 = vunpack.c.l.b16 %v6835
    %v6934 = vunpack.c.l.b16 %v6836
    %v6935 = vunpack.c.l.b16 %v6837
    %v6936 = vunpack.c.l.b16 %v6838
    %v6937 = vunpack.c.l.b16 %v6839
    %v6938 = vunpack.c.l.b16 %v6840
    %v6939 = vunpack.c.l.b16 %v6841
    %v6940 = vunpack.c.l.b16 %v6842
    %v6941 = vunpack.c.l.b16 %v6843
    %v6942 = vunpack.c.l.b16 %v6844
    %v6943 = vunpack.c.l.b16 %v6845
    %v6944 = vunpack.c.l.b16 %v6846
    %v6945 = vunpack.c.l.b16 %v6847
    %v6946 = vunpack.c.l.b16 %v6848
    %v6947 = vunpack.c.l.b16 %v6849
    %v6948 = vunpack.c.l.b16 %v6850
    %v6949 = vunpack.c.l.b16 %v6851
    %v6950 = vunpack.c.l.b16 %v6852
    %v6951 = vunpack.c.l.b16 %v6853
    %v6952 = vunpack.c.l.b16 %v6854
    %v6953 = vunpack.c.l.b16 %v6855
    %v6954 = vunpack.c.l.b16 %v6856
    %v6955 = vunpack.c.l.b16 %v6857
    %v6956 = vunpack.c.l.b16 %v6858
    %v6957 = vunpack.c.l.b16 %v6859
    %v6958 = vunpack.c.l.b16 %v6860
    %v6959 = vunpack.c.l.b16 %v6861
    %v6960 = vunpack.c.l.b16 %v6862
    %v6961 = vpack.c.b16 %v6914, %v6913
    %v6962 = vpack.c.b16 %v6916, %v6915
    %v6963 = vpack.c.b16 %v6918, %v6917
    %v6964 = vpack.c.b16 %v6920, %v6919
    %v6965 = vpack.c.b16 %v6922, %v6921
    %v6966 = vpack.c.b16 %v6924, %v6923
    %v6967 = vpack.c.b16 %v6926, %v6925
    %v6968 = vpack.c.b16 %v6928, %v6927
    %v6969 = vpack.c.b16 %v6930, %v6929
    %v6970 = vpack.c.b16 %v6932, %v6931
    %v6971 = vpack.c.b16 %v6934, %v6933
    %v6972 = vpack.c.b16 %v6936, %v6935
    %v6973 = vpack.c.b16 %v6938, %v6937
    %v6974 = vpack.c.b16 %v6940, %v6939
    %v6975 = vpack.c.b16 %v6942, %v6941
    %v6976 = vpack.c.b16 %v6944, %v6943
    %v6977 = vpack.c.b16 %v6946, %v6945
    %v6978 = vpack.c.b16 %v6948, %v6947
    %v6979 = vpack.c.b16 %v6950, %v6949
    %v6980 = vpack.c.b16 %v6952, %v6951
    %v6981 = vpack.c.b16 %v6954, %v6953
    %v6982 = vpack.c.b16 %v6956, %v6955
    %v6983 = vpack.c.b16 %v6958, %v6957
    %v6984 = vpack.c.b16 %v6960, %v6959
    %7009 = vmatpush.bf16.msra.mxu0 %v6968
    %7010 = vmatpush.bf16.msra.mxu0 %v6967
    %7011 = vmatpush.bf16.msra.mxu0 %v6966
    %7012 = vmatpush.bf16.msra.mxu0 %v6965
    %7013 = vmatpush.bf16.msra.mxu0 %v6964
    %7014 = vmatpush.bf16.msra.mxu0 %v6963
    %7015 = vmatpush.bf16.msra.mxu0 %v6962
    %7016 = vmatpush.bf16.msra.mxu0 %v6961
    %7017 = vmatmul.bf16.gmra.mxu0 %v6791
    %v7018 = vpop.f32.mrf.mxu0
    %v7019 = vadd.f32 %v6864, %v7018
    %v7020 = vpop.f32.mrf.mxu0
    %v7021 = vadd.f32 %v6864, %v7020
    %7022 = vmatmul.bf16.gmra.mxu0 %v6794
    %v7023 = vpop.f32.mrf.mxu0
    %v7024 = vadd.f32 %v6864, %v7023
    %v7025 = vpop.f32.mrf.mxu0
    %v7026 = vadd.f32 %v6864, %v7025
    %7027 = vmatmul.bf16.gmra.mxu0 %v6797
    %v7028 = vpop.f32.mrf.mxu0
    %v7029 = vadd.f32 %v6864, %v7028
    %v7030 = vpop.f32.mrf.mxu0
    %v7031 = vadd.f32 %v6864, %v7030
    %7032 = vmatmul.bf16.gmra.mxu0 %v6800
    %v7033 = vpop.f32.mrf.mxu0
    %v7034 = vadd.f32 %v6864, %v7033
    %v7035 = vpop.f32.mrf.mxu0
    %v7036 = vadd.f32 %v6864, %v7035
    %7037 = vmatmul.bf16.gmra.mxu0 %v6803
    %v7038 = vpop.f32.mrf.mxu0
    %v7039 = vadd.f32 %v6864, %v7038
    %v7040 = vpop.f32.mrf.mxu0
    %v7041 = vadd.f32 %v6864, %v7040
    %7042 = vmatmul.bf16.gmra.mxu0 %v6806
    %v7043 = vpop.f32.mrf.mxu0
    %v7044 = vadd.f32 %v6864, %v7043
    %v7045 = vpop.f32.mrf.mxu0
    %v7046 = vadd.f32 %v6864, %v7045
    %7047 = vmatmul.bf16.gmra.mxu0 %v6809
    %v7048 = vpop.f32.mrf.mxu0
    %v7049 = vadd.f32 %v6864, %v7048
    %v7050 = vpop.f32.mrf.mxu0
    %v7051 = vadd.f32 %v6864, %v7050
    %7052 = vmatmul.bf16.gmra.mxu0 %v6812
    %v7053 = vpop.f32.mrf.mxu0
    %v7054 = vadd.f32 %v6864, %v7053
    %v7055 = vpop.f32.mrf.mxu0
    %v7056 = vadd.f32 %v6864, %v7055
    %7057 = vdwg.mxu0
    %7058 = vmatpush.bf16.msra.mxu0 %v6976
    %7059 = vmatpush.bf16.msra.mxu0 %v6975
    %7060 = vmatpush.bf16.msra.mxu0 %v6974
    %7061 = vmatpush.bf16.msra.mxu0 %v6973
    %7062 = vmatpush.bf16.msra.mxu0 %v6972
    %7063 = vmatpush.bf16.msra.mxu0 %v6971
    %7064 = vmatpush.bf16.msra.mxu0 %v6970
    %7065 = vmatpush.bf16.msra.mxu0 %v6969
    %7066 = vmatmul.bf16.gmra.mxu0 %v6792
    %v7067 = vpop.f32.mrf.mxu0
    %v7068 = vadd.f32 %v7019, %v7067
    %v7069 = vpop.f32.mrf.mxu0
    %v7070 = vadd.f32 %v7021, %v7069
    %7071 = vmatmul.bf16.gmra.mxu0 %v6795
    %v7072 = vpop.f32.mrf.mxu0
    %v7073 = vadd.f32 %v7024, %v7072
    %v7074 = vpop.f32.mrf.mxu0
    %v7075 = vadd.f32 %v7026, %v7074
    %7076 = vmatmul.bf16.gmra.mxu0 %v6798
    %v7077 = vpop.f32.mrf.mxu0
    %v7078 = vadd.f32 %v7029, %v7077
    %v7079 = vpop.f32.mrf.mxu0
    %v7080 = vadd.f32 %v7031, %v7079
    %7081 = vmatmul.bf16.gmra.mxu0 %v6801
    %v7082 = vpop.f32.mrf.mxu0
    %v7083 = vadd.f32 %v7034, %v7082
    %v7084 = vpop.f32.mrf.mxu0
    %v7085 = vadd.f32 %v7036, %v7084
    %7086 = vmatmul.bf16.gmra.mxu0 %v6804
    %v7087 = vpop.f32.mrf.mxu0
    %v7088 = vadd.f32 %v7039, %v7087
    %v7089 = vpop.f32.mrf.mxu0
    %v7090 = vadd.f32 %v7041, %v7089
    %7091 = vmatmul.bf16.gmra.mxu0 %v6807
    %v7092 = vpop.f32.mrf.mxu0
    %v7093 = vadd.f32 %v7044, %v7092
    %v7094 = vpop.f32.mrf.mxu0
    %v7095 = vadd.f32 %v7046, %v7094
    %7096 = vmatmul.bf16.gmra.mxu0 %v6810
    %v7097 = vpop.f32.mrf.mxu0
    %v7098 = vadd.f32 %v7049, %v7097
    %v7099 = vpop.f32.mrf.mxu0
    %v7100 = vadd.f32 %v7051, %v7099
    %7101 = vmatmul.bf16.gmra.mxu0 %v6813
    %v7102 = vpop.f32.mrf.mxu0
    %v7103 = vadd.f32 %v7054, %v7102
    %v7104 = vpop.f32.mrf.mxu0
    %v7105 = vadd.f32 %v7056, %v7104
    %7106 = vdwg.mxu0
    %7107 = vmatpush.bf16.msra.mxu0 %v6984
    %7108 = vmatpush.bf16.msra.mxu0 %v6983
    %7109 = vmatpush.bf16.msra.mxu0 %v6982
    %7110 = vmatpush.bf16.msra.mxu0 %v6981
    %7111 = vmatpush.bf16.msra.mxu0 %v6980
    %7112 = vmatpush.bf16.msra.mxu0 %v6979
    %7113 = vmatpush.bf16.msra.mxu0 %v6978
    %7114 = vmatpush.bf16.msra.mxu0 %v6977
    %7115 = vmatmul.bf16.gmra.mxu0 %v6793
    %v7116 = vpop.f32.mrf.mxu0
    %v7117 = vadd.f32 %v7068, %v7116
    %v7118 = vpop.f32.mrf.mxu0
    %v7119 = vadd.f32 %v7070, %v7118
    %7120 = vmatmul.bf16.gmra.mxu0 %v6796
    %v7121 = vpop.f32.mrf.mxu0
    %v7122 = vadd.f32 %v7073, %v7121
    %v7123 = vpop.f32.mrf.mxu0
    %v7124 = vadd.f32 %v7075, %v7123
    %7125 = vmatmul.bf16.gmra.mxu0 %v6799
    %v7126 = vpop.f32.mrf.mxu0
    %v7127 = vadd.f32 %v7078, %v7126
    %v7128 = vpop.f32.mrf.mxu0
    %v7129 = vadd.f32 %v7080, %v7128
    %7130 = vmatmul.bf16.gmra.mxu0 %v6802
    %v7131 = vpop.f32.mrf.mxu0
    %v7132 = vadd.f32 %v7083, %v7131
    %v7133 = vpop.f32.mrf.mxu0
    %v7134 = vadd.f32 %v7085, %v7133
    %7135 = vmatmul.bf16.gmra.mxu0 %v6805
    %v7136 = vpop.f32.mrf.mxu0
    %v7137 = vadd.f32 %v7088, %v7136
    %v7138 = vpop.f32.mrf.mxu0
    %v7139 = vadd.f32 %v7090, %v7138
    %7140 = vmatmul.bf16.gmra.mxu0 %v6808
    %v7141 = vpop.f32.mrf.mxu0
    %v7142 = vadd.f32 %v7093, %v7141
    %v7143 = vpop.f32.mrf.mxu0
    %v7144 = vadd.f32 %v7095, %v7143
    %7145 = vmatmul.bf16.gmra.mxu0 %v6811
    %v7146 = vpop.f32.mrf.mxu0
    %v7147 = vadd.f32 %v7098, %v7146
    %v7148 = vpop.f32.mrf.mxu0
    %v7149 = vadd.f32 %v7100, %v7148
    %7150 = vmatmul.bf16.gmra.mxu0 %v6814
    %v7151 = vpop.f32.mrf.mxu0
    %v7152 = vadd.f32 %v7103, %v7151
    %v7153 = vpop.f32.mrf.mxu0
    %v7154 = vadd.f32 %v7105, %v7153
    %7155 = vdwg.mxu0
    %vm7156 = vcmp.gt.f32.partialorder %v7117, 0.0
    %vm7157 = vcmp.gt.f32.partialorder %v7119, 0.0
    %vm7158 = vcmp.gt.f32.partialorder %v7122, 0.0
    %vm7159 = vcmp.gt.f32.partialorder %v7124, 0.0
    %vm7160 = vcmp.gt.f32.partialorder %v7127, 0.0
    %vm7161 = vcmp.gt.f32.partialorder %v7129, 0.0
    %vm7162 = vcmp.gt.f32.partialorder %v7132, 0.0
    %vm7163 = vcmp.gt.f32.partialorder %v7134, 0.0
    %vm7164 = vcmp.gt.f32.partialorder %v7137, 0.0
    %vm7165 = vcmp.gt.f32.partialorder %v7139, 0.0
    %vm7166 = vcmp.gt.f32.partialorder %v7142, 0.0
    %vm7167 = vcmp.gt.f32.partialorder %v7144, 0.0
    %vm7168 = vcmp.gt.f32.partialorder %v7147, 0.0
    %vm7169 = vcmp.gt.f32.partialorder %v7149, 0.0
    %vm7170 = vcmp.gt.f32.partialorder %v7152, 0.0
    %vm7171 = vcmp.gt.f32.partialorder %v7154, 0.0
    %v7172 = vmul.f32 %v7117, 0.25
    %v7173 = vmul.f32 %v7119, 0.25
    %v7174 = vmul.f32 %v7122, 0.25
    %v7175 = vmul.f32 %v7124, 0.25
    %v7176 = vmul.f32 %v7127, 0.25
    %v7177 = vmul.f32 %v7129, 0.25
    %v7178 = vmul.f32 %v7132, 0.25
    %v7179 = vmul.f32 %v7134, 0.25
    %v7180 = vmul.f32 %v7137, 0.25
    %v7181 = vmul.f32 %v7139, 0.25
    %v7182 = vmul.f32 %v7142, 0.25
    %v7183 = vmul.f32 %v7144, 0.25
    %v7184 = vmul.f32 %v7147, 0.25
    %v7185 = vmul.f32 %v7149, 0.25
    %v7186 = vmul.f32 %v7152, 0.25
    %v7187 = vmul.f32 %v7154, 0.25
    %v7188 = vsel %vm7156, %v7117, %v7172
    %v7189 = vsel %vm7157, %v7119, %v7173
    %v7190 = vsel %vm7158, %v7122, %v7174
    %v7191 = vsel %vm7159, %v7124, %v7175
    %v7192 = vsel %vm7160, %v7127, %v7176
    %v7193 = vsel %vm7161, %v7129, %v7177
    %v7194 = vsel %vm7162, %v7132, %v7178
    %v7195 = vsel %vm7163, %v7134, %v7179
    %v7196 = vsel %vm7164, %v7137, %v7180
    %v7197 = vsel %vm7165, %v7139, %v7181
    %v7198 = vsel %vm7166, %v7142, %v7182
    %v7199 = vsel %vm7167, %v7144, %v7183
    %v7200 = vsel %vm7168, %v7147, %v7184
    %v7201 = vsel %vm7169, %v7149, %v7185
    %v7202 = vsel %vm7170, %v7152, %v7186
    %v7203 = vsel %vm7171, %v7154, %v7187
    %v7204 = vpack.c.bf16 %v7189, %v7188
    %v7205 = vpack.c.bf16 %v7191, %v7190
    %v7206 = vpack.c.bf16 %v7193, %v7192
    %v7207 = vpack.c.bf16 %v7195, %v7194
    %v7208 = vpack.c.bf16 %v7197, %v7196
    %v7209 = vpack.c.bf16 %v7199, %v7198
    %v7210 = vpack.c.bf16 %v7201, %v7200
    %v7211 = vpack.c.bf16 %v7203, %v7202
    %v7212 = vld [vmem:[#allocation10] sm:$0xf]
    %v7213 = vld [vmem:[#allocation10 + $0x4] sm:$0xf]
    %v7214 = vld [vmem:[#allocation10 + $0x8] sm:$0xf]
    %v7215 = vld [vmem:[#allocation10 + $0xc] sm:$0xf]
    %v7216 = vld [vmem:[#allocation10 + $0x10] sm:$0xf]
    %v7217 = vld [vmem:[#allocation10 + $0x14] sm:$0xf]
    %v7218 = vld [vmem:[#allocation10 + $0x18] sm:$0xf]
    %v7219 = vld [vmem:[#allocation10 + $0x1c] sm:$0xf]
    %v7220 = vld [vmem:[#allocation10 + $0x20] sm:$0xf]
    %v7221 = vld [vmem:[#allocation10 + $0x24] sm:$0xf]
    %v7222 = vld [vmem:[#allocation10 + $0x28] sm:$0xf]
    %v7223 = vld [vmem:[#allocation10 + $0x2c] sm:$0xf]
    %v7224 = vld [vmem:[#allocation10 + $0x30] sm:$0xf]
    %v7225 = vld [vmem:[#allocation10 + $0x34] sm:$0xf]
    %v7226 = vld [vmem:[#allocation10 + $0x38] sm:$0xf]
    %v7227 = vld [vmem:[#allocation10 + $0x3c] sm:$0xf]
    %v7228 = vld [vmem:[#allocation12 + $0x1] sm:$0x1]
    %v7229 = vperm.slane %v7228, 0
    %v7246 = vunpack.c.l.b16 %v7212
    %v7247 = vunpack.c.l.b16 %v7213
    %v7248 = vunpack.c.l.b16 %v7214
    %v7249 = vunpack.c.l.b16 %v7215
    %v7250 = vunpack.c.l.b16 %v7216
    %v7251 = vunpack.c.l.b16 %v7217
    %v7252 = vunpack.c.l.b16 %v7218
    %v7253 = vunpack.c.l.b16 %v7219
    %v7254 = vunpack.c.l.b16 %v7220
    %v7255 = vunpack.c.l.b16 %v7221
    %v7256 = vunpack.c.l.b16 %v7222
    %v7257 = vunpack.c.l.b16 %v7223
    %v7258 = vunpack.c.l.b16 %v7224
    %v7259 = vunpack.c.l.b16 %v7225
    %v7260 = vunpack.c.l.b16 %v7226
    %v7261 = vunpack.c.l.b16 %v7227
    %v7262 = vpack.c.b16 %v7247, %v7246
    %v7263 = vpack.c.b16 %v7249, %v7248
    %v7264 = vpack.c.b16 %v7251, %v7250
    %v7265 = vpack.c.b16 %v7253, %v7252
    %v7266 = vpack.c.b16 %v7255, %v7254
    %v7267 = vpack.c.b16 %v7257, %v7256
    %v7268 = vpack.c.b16 %v7259, %v7258
    %v7269 = vpack.c.b16 %v7261, %v7260
    %7278 = vmatpush.bf16.msra.mxu0 %v7269
    %7279 = vmatpush.bf16.msra.mxu0 %v7268
    %7280 = vmatpush.bf16.msra.mxu0 %v7267
    %7281 = vmatpush.bf16.msra.mxu0 %v7266
    %7282 = vmatpush.bf16.msra.mxu0 %v7265
    %7283 = vmatpush.bf16.msra.mxu0 %v7264
    %7284 = vmatpush.bf16.msra.mxu0 %v7263
    %7285 = vmatpush.bf16.msra.mxu0 %v7262
    %7286 = vmatmul.bf16.gmra.mxu0 %v7204
    %v7287 = vpop.f32.mrf.mxu0
    %v7288 = vadd.f32 %v7229, %v7287
    %v7289 = vpop.f32.mrf.mxu0
    %v7290 = vadd.f32 %v7229, %v7289
    %7291 = vmatmul.bf16.gmra.mxu0 %v7205
    %v7292 = vpop.f32.mrf.mxu0
    %v7293 = vadd.f32 %v7229, %v7292
    %v7294 = vpop.f32.mrf.mxu0
    %v7295 = vadd.f32 %v7229, %v7294
    %7296 = vmatmul.bf16.gmra.mxu0 %v7206
    %v7297 = vpop.f32.mrf.mxu0
    %v7298 = vadd.f32 %v7229, %v7297
    %v7299 = vpop.f32.mrf.mxu0
    %v7300 = vadd.f32 %v7229, %v7299
    %7301 = vmatmul.bf16.gmra.mxu0 %v7207
    %v7302 = vpop.f32.mrf.mxu0
    %v7303 = vadd.f32 %v7229, %v7302
    %v7304 = vpop.f32.mrf.mxu0
    %v7305 = vadd.f32 %v7229, %v7304
    %7306 = vmatmul.bf16.gmra.mxu0 %v7208
    %v7307 = vpop.f32.mrf.mxu0
    %v7308 = vadd.f32 %v7229, %v7307
    %v7309 = vpop.f32.mrf.mxu0
    %v7310 = vadd.f32 %v7229, %v7309
    %7311 = vmatmul.bf16.gmra.mxu0 %v7209
    %v7312 = vpop.f32.mrf.mxu0
    %v7313 = vadd.f32 %v7229, %v7312
    %v7314 = vpop.f32.mrf.mxu0
    %v7315 = vadd.f32 %v7229, %v7314
    %7316 = vmatmul.bf16.gmra.mxu0 %v7210
    %v7317 = vpop.f32.mrf.mxu0
    %v7318 = vadd.f32 %v7229, %v7317
    %v7319 = vpop.f32.mrf.mxu0
    %v7320 = vadd.f32 %v7229, %v7319
    %7321 = vmatmul.bf16.gmra.mxu0 %v7211
    %v7322 = vpop.f32.mrf.mxu0
    %v7323 = vadd.f32 %v7229, %v7322
    %v7324 = vpop.f32.mrf.mxu0
    %v7325 = vadd.f32 %v7229, %v7324
    %7326 = vdwg.mxu0
    %7327 = vst [vmem:[%s8] sm:$0xff] %v7288
    %7328 = vst [vmem:[%s8 + $0x8] sm:$0xff] %v7290
    %7329 = vst [vmem:[%s8 + $0x10] sm:$0xff] %v7293
    %7330 = vst [vmem:[%s8 + $0x18] sm:$0xff] %v7295
    %7331 = vst [vmem:[%s8 + $0x20] sm:$0xff] %v7298
    %7332 = vst [vmem:[%s8 + $0x28] sm:$0xff] %v7300
    %7333 = vst [vmem:[%s8 + $0x30] sm:$0xff] %v7303
    %7334 = vst [vmem:[%s8 + $0x38] sm:$0xff] %v7305
    %7335 = vst [vmem:[%s8 + $0x40] sm:$0xff] %v7308
    %7336 = vst [vmem:[%s8 + $0x48] sm:$0xff] %v7310
    %7337 = vst [vmem:[%s8 + $0x50] sm:$0xff] %v7313
    %7338 = vst [vmem:[%s8 + $0x58] sm:$0xff] %v7315
    %7339 = vst [vmem:[%s8 + $0x60] sm:$0xff] %v7318
    %7340 = vst [vmem:[%s8 + $0x68] sm:$0xff] %v7320
    %7341 = vst [vmem:[%s8 + $0x70] sm:$0xff] %v7323
    %7342 = vst [vmem:[%s8 + $0x78] sm:$0xff] %v7325
    // Predicated region
    $region58: #{mogonet_forward.1} parent=1 // pred_check
      _
    $region59: #{mogonet_forward.1} parent=1 // pred_check_branch
      %7344 = sbr.rel (0) target = $region61
    $region60: #{mogonet_forward.1} parent=1 // pred_region
      _
    $region61: #{mogonet_forward.1} parent=1 // pred_fallthru
      _
    // Predicated region
    $region62: #{mogonet_forward.1} parent=1 // pred_check
      _
    $region63: #{mogonet_forward.1} parent=1 // pred_check_branch
      %7346 = sbr.rel (0) target = $region65
    $region64: #{mogonet_forward.1} parent=1 // pred_region
      _
    $region65: #{mogonet_forward.1} parent=1 // pred_fallthru
      _
    // Predicated region
    $region66: #{mogonet_forward.1} parent=1 // pred_check
      _
    $region67: #{mogonet_forward.1} parent=1 // pred_check_branch
      %7348 = sbr.rel (0) target = $region69
    $region68: #{mogonet_forward.1} parent=1 // pred_region
      _
    $region69: #{mogonet_forward.1} parent=1 // pred_fallthru
      _
    // Predicated region
    $region70: #{mogonet_forward.1} parent=1 // pred_check
      _
    $region71: #{mogonet_forward.1} parent=1 // pred_check_branch
      %7350 = sbr.rel (0) target = $region73
    $region72: #{mogonet_forward.1} parent=1 // pred_region
      _
    $region73: #{mogonet_forward.1} parent=1 // pred_fallthru
      _
    %7351 = vsyncpa [#allocation3], 1
    %7352 = vsyncpa [#allocation5], 1
    %7353 = vsyncpa [#allocation8], 1
    %7354 = vsyncpa [#allocation11], 1

</llo_original>
